<compile_context>
chip_gen: v6e
topology: v6e:2x2x1
jax: 0.10.0
libtpu: 0.0.40
codegen_flags: <defaults>
</compile_context>

<pallas_src>
import jax
import jax.numpy as jnp
from jax.experimental import pallas as pl
from jax.experimental.pallas import tpu as pltpu

H = W = 96
CIN, COUT = 3, 12
K = 3
POOL_HW = 32                      # floor((96 - 2)/3) + 1
NPIX = POOL_HW * POOL_HW          # 1024 pooled pixels
FEAT = COUT * NPIX                # 12288
HID = 64
OUT = 3
PATCH = 4 * 4 * CIN               # 48: 4x4 input window per pooled pixel
KDIM = PATCH + 1                  # +1 ones-row that carries the conv bias
CROWS = 4 * 16                    # 64 conv-matrix rows: 4 offsets x 16 (12 + pad)


def _fused_kernel(p_ref, wc_ref, w1_ref, b1_ref, w2_ref, b2_ref, o_ref):
    """Single grid step: whole forward pass for image 0.

    p_ref : (49, 1024)      stride-3 4x4 patches of image 0 (+ ones row)
    wc_ref: (64, 49)        conv weights; row o*16 + c (o = pool offset, c = channel)
    w1_ref: (12, 1024, 64)  fc1 weight, pre-transposed (channel, pixel, hidden), bf16
    b1_ref: (1, 64)  w2_ref: (64, 3)  b2_ref: (1, 3)  o_ref: (1, 3)
    """
    # conv (+bias via ones-row) for all 12 channels at the 4 pool-window
    # offsets: ONE MXU matmul.
    y = jnp.dot(wc_ref[...], p_ref[...], preferred_element_type=jnp.float32)  # (64,1024)

    # MaxPool(2, stride=3) = max over the four 16-row offset groups (sublane-
    # tile aligned slices), then ReLU (commutes with max).  Rows 0..11 are the
    # 12 conv channels in torch (C,H,W) flatten order; 12..15 are zero pad.
    pooled = jnp.maximum(
        jnp.maximum(jnp.maximum(y[0:16, :], y[16:32, :]),
                    jnp.maximum(y[32:48, :], y[48:64, :])), 0.0)
    pooled = pooled.astype(jnp.bfloat16)                                       # (16,1024)

    # fc1: 12 per-channel (1,1024)x(1024,64) bf16 matmuls, f32 accumulation.
    # w1_ref is pre-transposed, so LHS has K in lanes and RHS has K in
    # sublanes (MXU-native) -- no in-kernel relayout or transpose.
    h = b1_ref[...]                                                            # (1,64) f32
    for c in range(COUT):
        h = h + jnp.dot(pooled[c:c + 1, :], w1_ref[c],
                        preferred_element_type=jnp.float32)
    h = jnp.maximum(h, 0.0)                                                    # relu(fc1)

    # fc2 (pre-transposed weight) + per-element tanh / sigmoid / sigmoid.
    yo = jnp.dot(h, w2_ref[...], preferred_element_type=jnp.float32) + b2_ref[...]  # (1,3)
    idx = jax.lax.broadcasted_iota(jnp.int32, (1, OUT), 1)
    sig = 1.0 / (1.0 + jnp.exp(-yo))
    o_ref[...] = jnp.where(idx == 0, jnp.tanh(yo), sig).astype(o_ref.dtype)


def _build_patches(x0):
    """(3,96,96) -> (49,1024): row r*12+s*3+ci, col i*32+j = xpad[ci, 3i+r, 3j+s].

    Only the 4x4 input window feeding each pooled output cell is kept
    (pool stride 3, conv pad 1), plus a ones-row for the conv bias.
    """
    xpad = jnp.pad(x0, ((0, 0), (1, 1), (1, 1)))                          # (3, 98, 98)
    parts = [xpad[:, r:r + 96:3, s:s + 96:3] for r in range(4) for s in range(4)]
    p = jnp.stack(parts, axis=0).reshape(PATCH, NPIX)                     # (48, 1024)
    return jnp.concatenate([p, jnp.ones((1, NPIX), x0.dtype)], axis=0)    # (49, 1024)


def _build_conv_matrix(wc, bc):
    """(12,3,3,3),(12,) -> (64,49): row o*16 + c, o = pool offset 0..3, c channel.

    Column 48 carries the conv bias (multiplied by the patches' ones-row);
    channel rows 12..15 of each offset group are zero padding.
    """
    def emb(yr, xr):
        wp = jnp.pad(wc, ((0, 0), (0, 0), (yr, 1 - yr), (xr, 1 - xr)))    # (12,3,4,4)
        return wp.transpose(0, 2, 3, 1).reshape(COUT, PATCH)              # k = ry*12+rx*3+ci
    w4 = jnp.stack([emb(yr, xr) for yr, xr in ((0, 0), (0, 1), (1, 0), (1, 1))],
                   axis=0)                                                # (4, 12, 48)
    bias = jnp.broadcast_to(bc[None, :, None], (4, COUT, 1))              # (4, 12, 1)
    wb = jnp.concatenate([w4, bias], axis=2)                              # (4, 12, 49)
    wb = jnp.pad(wb, ((0, 0), (0, 4), (0, 0)))                            # (4, 16, 49)
    return wb.reshape(CROWS, KDIM)                                        # (64, 49)


def prepare_params(params):
    """One-time parameter preparation (outside the per-call path):
    conv-weight restack, fc1 pre-transpose + bf16 cast, fc2 pre-transpose."""
    wc, bc, w1, b1, w2, b2 = (params[k] for k in
                              ("conv_w", "conv_b", "fc1_w", "fc1_b", "fc2_w", "fc2_b"))
    return {
        "conv_mat": _build_conv_matrix(wc, bc),                                   # (64,49) f32
        "fc1_wt": w1.reshape(HID, COUT, NPIX).transpose(1, 2, 0)
                    .astype(jnp.bfloat16),                                        # (12,1024,64)
        "fc1_b": b1.reshape(1, HID),                                              # (1,64) f32
        "fc2_wt": w2.T,                                                           # (64,3) f32
        "fc2_b": b2.reshape(1, OUT),                                              # (1,3) f32
    }


@jax.jit
def convnet_forward(x, prep):
    # The module output depends only on image 0 (fc2(x)[0]); skip the rest.
    patches = _build_patches(x[0])          # tiny glue: ~200 KB, stride-3 decimation

    out = pl.pallas_call(
        _fused_kernel,
        out_shape=jax.ShapeDtypeStruct((1, OUT), jnp.float32),
        grid_spec=pltpu.PrefetchScalarGridSpec(
            num_scalar_prefetch=0,
            grid=(1,),                                              # single fused step
            in_specs=[
                pl.BlockSpec((KDIM, NPIX), lambda i: (0, 0)),       # patches
                pl.BlockSpec((CROWS, KDIM), lambda i: (0, 0)),      # conv matrix
                pl.BlockSpec((COUT, NPIX, HID), lambda i: (0, 0, 0)),  # fc1 weight (bf16)
                pl.BlockSpec((1, HID), lambda i: (0, 0)),           # fc1 bias
                pl.BlockSpec((HID, OUT), lambda i: (0, 0)),         # fc2 weight (pre-T)
                pl.BlockSpec((1, OUT), lambda i: (0, 0)),           # fc2 bias
            ],
            out_specs=pl.BlockSpec((1, OUT), lambda i: (0, 0)),
        ),
        compiler_params=pltpu.CompilerParams(
            dimension_semantics=("arbitrary",)),
    )(patches, prep["conv_mat"], prep["fc1_wt"],
      prep["fc1_b"], prep["fc2_wt"], prep["fc2_b"])
    return out.reshape(OUT)


def _reference_forward(x, params):
    """Pure-JAX reference mirroring the PyTorch forward (sanity check)."""
    wc, bc, w1, b1, w2, b2 = (params[k] for k in
                              ("conv_w", "conv_b", "fc1_w", "fc1_b", "fc2_w", "fc2_b"))
    c = jax.lax.conv_general_dilated(x, wc, window_strides=(1, 1),
                                     padding=((1, 1), (1, 1)),
                                     dimension_numbers=("NCHW", "OIHW", "NCHW"))
    c = jnp.maximum(c + bc[None, :, None, None], 0.0)
    p = jax.lax.reduce_window(c, -jnp.inf, jax.lax.max,
                              window_dimensions=(1, 1, 2, 2),
                              window_strides=(1, 1, 3, 3),
                              padding="VALID")
    f = p.reshape(x.shape[0], FEAT)
    h = jnp.maximum(f @ w1.T + b1, 0.0)
    y = (h @ w2.T + b2)[0]
    return jnp.array([jnp.tanh(y[0]), jax.nn.sigmoid(y[1]), jax.nn.sigmoid(y[2])])


def _init_params(key):
    ks = jax.random.split(key, 6)
    def u(k, shape, fan_in):
        bound = 1.0 / jnp.sqrt(fan_in)
        return jax.random.uniform(k, shape, jnp.float32, -bound, bound)
    return {
        "conv_w": u(ks[0], (COUT, CIN, K, K), CIN * K * K),
        "conv_b": u(ks[1], (COUT,), CIN * K * K),
        "fc1_w": u(ks[2], (HID, FEAT), FEAT),
        "fc1_b": u(ks[3], (HID,), FEAT),
        "fc2_w": u(ks[4], (OUT, HID), HID),
        "fc2_b": u(ks[5], (OUT,), HID),
    }


if __name__ == "__main__":
    key = jax.random.PRNGKey(0)
    k_x, k_p = jax.random.split(key)
    x = jax.random.normal(k_x, (2, CIN, H, W), jnp.float32)   # NCHW, like PyTorch
    params = _init_params(k_p)
    prep = prepare_params(params)                             # one-time weight prep

    out = jax.block_until_ready(convnet_forward(x, prep))
    ref = jax.block_until_ready(_reference_forward(x, params))

    assert out.shape == (OUT,) and out.dtype == jnp.float32
    assert bool(jnp.all(jnp.isfinite(out)))
    assert bool(jnp.allclose(out, ref, rtol=2e-2, atol=2e-2)), (out, ref)
    print("KERNEL_OK")
</pallas_src>

<mosaic_0001>
module attributes {stable_mosaic.version = 11 : i64} {
  func.func @_fused_kernel(%arg0: i32, %arg1: memref<49x1024xf32, #tpu.memory_space<vmem>>, %arg2: memref<64x49xf32, #tpu.memory_space<vmem>>, %arg3: memref<12x1024x64xbf16, #tpu.memory_space<vmem>>, %arg4: memref<1x64xf32, #tpu.memory_space<vmem>>, %arg5: memref<64x3xf32, #tpu.memory_space<vmem>>, %arg6: memref<1x3xf32, #tpu.memory_space<vmem>>, %arg7: memref<1x3xf32, #tpu.memory_space<vmem>>) attributes {dimension_semantics = [#tpu.dimension_semantics<arbitrary>], iteration_bounds = array<i64: 1>, scalar_prefetch = 0 : i64, scratch_operands = 0 : i64, tpu.core_type = #tpu.core_type<tc>, window_params = [{pipeline_mode = #tpu.pipeline_mode<synchronous>, transform_indices = @transform_0, window_bounds = array<i64: 49, 1024>}, {pipeline_mode = #tpu.pipeline_mode<synchronous>, transform_indices = @transform_1, window_bounds = array<i64: 64, 49>}, {pipeline_mode = #tpu.pipeline_mode<synchronous>, transform_indices = @transform_2, window_bounds = array<i64: 12, 1024, 64>}, {pipeline_mode = #tpu.pipeline_mode<synchronous>, transform_indices = @transform_3, window_bounds = array<i64: 1, 64>}, {pipeline_mode = #tpu.pipeline_mode<synchronous>, transform_indices = @transform_4, window_bounds = array<i64: 64, 3>}, {pipeline_mode = #tpu.pipeline_mode<synchronous>, transform_indices = @transform_5, window_bounds = array<i64: 1, 3>}, {pipeline_mode = #tpu.pipeline_mode<synchronous>, transform_indices = @transform_6, window_bounds = array<i64: 1, 3>}]} {
    %c0 = arith.constant 0 : index
    %c0_0 = arith.constant 0 : index
    %0 = vector.load %arg2[%c0, %c0_0] : memref<64x49xf32, #tpu.memory_space<vmem>>, vector<64x49xf32>
    %c0_1 = arith.constant 0 : index
    %c0_2 = arith.constant 0 : index
    %1 = vector.load %arg1[%c0_1, %c0_2] : memref<49x1024xf32, #tpu.memory_space<vmem>>, vector<49x1024xf32>
    %cst = arith.constant dense<0.000000e+00> : vector<64x1024xf32>
    %2 = tpu.matmul %0, %1, %cst {dimension_numbers = #tpu.dot_dimension_numbers<[1], [0], [0], [1], [0, 0, 1, 1], [], []>} : vector<64x49xf32>, vector<49x1024xf32>, vector<64x1024xf32> -> vector<64x1024xf32>
    %3 = vector.extract_strided_slice %2 {offsets = [0, 0], sizes = [16, 1024], strides = [1, 1]} : vector<64x1024xf32> to vector<16x1024xf32>
    %4 = vector.extract_strided_slice %2 {offsets = [16, 0], sizes = [16, 1024], strides = [1, 1]} : vector<64x1024xf32> to vector<16x1024xf32>
    %5 = arith.maximumf %3, %4 : vector<16x1024xf32>
    %6 = vector.extract_strided_slice %2 {offsets = [32, 0], sizes = [16, 1024], strides = [1, 1]} : vector<64x1024xf32> to vector<16x1024xf32>
    %7 = vector.extract_strided_slice %2 {offsets = [48, 0], sizes = [16, 1024], strides = [1, 1]} : vector<64x1024xf32> to vector<16x1024xf32>
    %8 = arith.maximumf %6, %7 : vector<16x1024xf32>
    %9 = arith.maximumf %5, %8 : vector<16x1024xf32>
    %cst_3 = arith.constant 0.000000e+00 : f32
    %10 = vector.broadcast %cst_3 : f32 to vector<16x1024xf32>
    %11 = arith.maximumf %9, %10 : vector<16x1024xf32>
    %12 = arith.truncf %11 : vector<16x1024xf32> to vector<16x1024xbf16>
    %c0_4 = arith.constant 0 : index
    %c0_5 = arith.constant 0 : index
    %13 = vector.load %arg4[%c0_4, %c0_5] : memref<1x64xf32, #tpu.memory_space<vmem>>, vector<1x64xf32>
    %14 = vector.extract_strided_slice %12 {offsets = [0, 0], sizes = [1, 1024], strides = [1, 1]} : vector<16x1024xbf16> to vector<1x1024xbf16>
    %c0_6 = arith.constant 0 : index
    %c0_7 = arith.constant 0 : index
    %c0_8 = arith.constant 0 : index
    %15 = vector.load %arg3[%c0_6, %c0_7, %c0_8] : memref<12x1024x64xbf16, #tpu.memory_space<vmem>>, vector<1x1024x64xbf16>
    %16 = vector.shape_cast %15 : vector<1x1024x64xbf16> to vector<1024x64xbf16>
    %cst_9 = arith.constant dense<0.000000e+00> : vector<1x64xf32>
    %17 = tpu.matmul %14, %16, %cst_9 {dimension_numbers = #tpu.dot_dimension_numbers<[1], [0], [0], [1], [0, 0, 1, 1], [], []>} : vector<1x1024xbf16>, vector<1024x64xbf16>, vector<1x64xf32> -> vector<1x64xf32>
    %18 = arith.addf %13, %17 : vector<1x64xf32>
    %19 = vector.extract_strided_slice %12 {offsets = [1, 0], sizes = [1, 1024], strides = [1, 1]} : vector<16x1024xbf16> to vector<1x1024xbf16>
    %c1 = arith.constant 1 : index
    %c0_10 = arith.constant 0 : index
    %c0_11 = arith.constant 0 : index
    %20 = vector.load %arg3[%c1, %c0_10, %c0_11] : memref<12x1024x64xbf16, #tpu.memory_space<vmem>>, vector<1x1024x64xbf16>
    %21 = vector.shape_cast %20 : vector<1x1024x64xbf16> to vector<1024x64xbf16>
    %cst_12 = arith.constant dense<0.000000e+00> : vector<1x64xf32>
    %22 = tpu.matmul %19, %21, %cst_12 {dimension_numbers = #tpu.dot_dimension_numbers<[1], [0], [0], [1], [0, 0, 1, 1], [], []>} : vector<1x1024xbf16>, vector<1024x64xbf16>, vector<1x64xf32> -> vector<1x64xf32>
    %23 = arith.addf %18, %22 : vector<1x64xf32>
    %24 = vector.extract_strided_slice %12 {offsets = [2, 0], sizes = [1, 1024], strides = [1, 1]} : vector<16x1024xbf16> to vector<1x1024xbf16>
    %c2 = arith.constant 2 : index
    %c0_13 = arith.constant 0 : index
    %c0_14 = arith.constant 0 : index
    %25 = vector.load %arg3[%c2, %c0_13, %c0_14] : memref<12x1024x64xbf16, #tpu.memory_space<vmem>>, vector<1x1024x64xbf16>
    %26 = vector.shape_cast %25 : vector<1x1024x64xbf16> to vector<1024x64xbf16>
    %cst_15 = arith.constant dense<0.000000e+00> : vector<1x64xf32>
    %27 = tpu.matmul %24, %26, %cst_15 {dimension_numbers = #tpu.dot_dimension_numbers<[1], [0], [0], [1], [0, 0, 1, 1], [], []>} : vector<1x1024xbf16>, vector<1024x64xbf16>, vector<1x64xf32> -> vector<1x64xf32>
    %28 = arith.addf %23, %27 : vector<1x64xf32>
    %29 = vector.extract_strided_slice %12 {offsets = [3, 0], sizes = [1, 1024], strides = [1, 1]} : vector<16x1024xbf16> to vector<1x1024xbf16>
    %c3 = arith.constant 3 : index
    %c0_16 = arith.constant 0 : index
    %c0_17 = arith.constant 0 : index
    %30 = vector.load %arg3[%c3, %c0_16, %c0_17] : memref<12x1024x64xbf16, #tpu.memory_space<vmem>>, vector<1x1024x64xbf16>
    %31 = vector.shape_cast %30 : vector<1x1024x64xbf16> to vector<1024x64xbf16>
    %cst_18 = arith.constant dense<0.000000e+00> : vector<1x64xf32>
    %32 = tpu.matmul %29, %31, %cst_18 {dimension_numbers = #tpu.dot_dimension_numbers<[1], [0], [0], [1], [0, 0, 1, 1], [], []>} : vector<1x1024xbf16>, vector<1024x64xbf16>, vector<1x64xf32> -> vector<1x64xf32>
    %33 = arith.addf %28, %32 : vector<1x64xf32>
    %34 = vector.extract_strided_slice %12 {offsets = [4, 0], sizes = [1, 1024], strides = [1, 1]} : vector<16x1024xbf16> to vector<1x1024xbf16>
    %c4 = arith.constant 4 : index
    %c0_19 = arith.constant 0 : index
    %c0_20 = arith.constant 0 : index
    %35 = vector.load %arg3[%c4, %c0_19, %c0_20] : memref<12x1024x64xbf16, #tpu.memory_space<vmem>>, vector<1x1024x64xbf16>
    %36 = vector.shape_cast %35 : vector<1x1024x64xbf16> to vector<1024x64xbf16>
    %cst_21 = arith.constant dense<0.000000e+00> : vector<1x64xf32>
    %37 = tpu.matmul %34, %36, %cst_21 {dimension_numbers = #tpu.dot_dimension_numbers<[1], [0], [0], [1], [0, 0, 1, 1], [], []>} : vector<1x1024xbf16>, vector<1024x64xbf16>, vector<1x64xf32> -> vector<1x64xf32>
    %38 = arith.addf %33, %37 : vector<1x64xf32>
    %39 = vector.extract_strided_slice %12 {offsets = [5, 0], sizes = [1, 1024], strides = [1, 1]} : vector<16x1024xbf16> to vector<1x1024xbf16>
    %c5 = arith.constant 5 : index
    %c0_22 = arith.constant 0 : index
    %c0_23 = arith.constant 0 : index
    %40 = vector.load %arg3[%c5, %c0_22, %c0_23] : memref<12x1024x64xbf16, #tpu.memory_space<vmem>>, vector<1x1024x64xbf16>
    %41 = vector.shape_cast %40 : vector<1x1024x64xbf16> to vector<1024x64xbf16>
    %cst_24 = arith.constant dense<0.000000e+00> : vector<1x64xf32>
    %42 = tpu.matmul %39, %41, %cst_24 {dimension_numbers = #tpu.dot_dimension_numbers<[1], [0], [0], [1], [0, 0, 1, 1], [], []>} : vector<1x1024xbf16>, vector<1024x64xbf16>, vector<1x64xf32> -> vector<1x64xf32>
    %43 = arith.addf %38, %42 : vector<1x64xf32>
    %44 = vector.extract_strided_slice %12 {offsets = [6, 0], sizes = [1, 1024], strides = [1, 1]} : vector<16x1024xbf16> to vector<1x1024xbf16>
    %c6 = arith.constant 6 : index
    %c0_25 = arith.constant 0 : index
    %c0_26 = arith.constant 0 : index
    %45 = vector.load %arg3[%c6, %c0_25, %c0_26] : memref<12x1024x64xbf16, #tpu.memory_space<vmem>>, vector<1x1024x64xbf16>
    %46 = vector.shape_cast %45 : vector<1x1024x64xbf16> to vector<1024x64xbf16>
    %cst_27 = arith.constant dense<0.000000e+00> : vector<1x64xf32>
    %47 = tpu.matmul %44, %46, %cst_27 {dimension_numbers = #tpu.dot_dimension_numbers<[1], [0], [0], [1], [0, 0, 1, 1], [], []>} : vector<1x1024xbf16>, vector<1024x64xbf16>, vector<1x64xf32> -> vector<1x64xf32>
    %48 = arith.addf %43, %47 : vector<1x64xf32>
    %49 = vector.extract_strided_slice %12 {offsets = [7, 0], sizes = [1, 1024], strides = [1, 1]} : vector<16x1024xbf16> to vector<1x1024xbf16>
    %c7 = arith.constant 7 : index
    %c0_28 = arith.constant 0 : index
    %c0_29 = arith.constant 0 : index
    %50 = vector.load %arg3[%c7, %c0_28, %c0_29] : memref<12x1024x64xbf16, #tpu.memory_space<vmem>>, vector<1x1024x64xbf16>
    %51 = vector.shape_cast %50 : vector<1x1024x64xbf16> to vector<1024x64xbf16>
    %cst_30 = arith.constant dense<0.000000e+00> : vector<1x64xf32>
    %52 = tpu.matmul %49, %51, %cst_30 {dimension_numbers = #tpu.dot_dimension_numbers<[1], [0], [0], [1], [0, 0, 1, 1], [], []>} : vector<1x1024xbf16>, vector<1024x64xbf16>, vector<1x64xf32> -> vector<1x64xf32>
    %53 = arith.addf %48, %52 : vector<1x64xf32>
    %54 = vector.extract_strided_slice %12 {offsets = [8, 0], sizes = [1, 1024], strides = [1, 1]} : vector<16x1024xbf16> to vector<1x1024xbf16>
    %c8 = arith.constant 8 : index
    %c0_31 = arith.constant 0 : index
    %c0_32 = arith.constant 0 : index
    %55 = vector.load %arg3[%c8, %c0_31, %c0_32] : memref<12x1024x64xbf16, #tpu.memory_space<vmem>>, vector<1x1024x64xbf16>
    %56 = vector.shape_cast %55 : vector<1x1024x64xbf16> to vector<1024x64xbf16>
    %cst_33 = arith.constant dense<0.000000e+00> : vector<1x64xf32>
    %57 = tpu.matmul %54, %56, %cst_33 {dimension_numbers = #tpu.dot_dimension_numbers<[1], [0], [0], [1], [0, 0, 1, 1], [], []>} : vector<1x1024xbf16>, vector<1024x64xbf16>, vector<1x64xf32> -> vector<1x64xf32>
    %58 = arith.addf %53, %57 : vector<1x64xf32>
    %59 = vector.extract_strided_slice %12 {offsets = [9, 0], sizes = [1, 1024], strides = [1, 1]} : vector<16x1024xbf16> to vector<1x1024xbf16>
    %c9 = arith.constant 9 : index
    %c0_34 = arith.constant 0 : index
    %c0_35 = arith.constant 0 : index
    %60 = vector.load %arg3[%c9, %c0_34, %c0_35] : memref<12x1024x64xbf16, #tpu.memory_space<vmem>>, vector<1x1024x64xbf16>
    %61 = vector.shape_cast %60 : vector<1x1024x64xbf16> to vector<1024x64xbf16>
    %cst_36 = arith.constant dense<0.000000e+00> : vector<1x64xf32>
    %62 = tpu.matmul %59, %61, %cst_36 {dimension_numbers = #tpu.dot_dimension_numbers<[1], [0], [0], [1], [0, 0, 1, 1], [], []>} : vector<1x1024xbf16>, vector<1024x64xbf16>, vector<1x64xf32> -> vector<1x64xf32>
    %63 = arith.addf %58, %62 : vector<1x64xf32>
    %64 = vector.extract_strided_slice %12 {offsets = [10, 0], sizes = [1, 1024], strides = [1, 1]} : vector<16x1024xbf16> to vector<1x1024xbf16>
    %c10 = arith.constant 10 : index
    %c0_37 = arith.constant 0 : index
    %c0_38 = arith.constant 0 : index
    %65 = vector.load %arg3[%c10, %c0_37, %c0_38] : memref<12x1024x64xbf16, #tpu.memory_space<vmem>>, vector<1x1024x64xbf16>
    %66 = vector.shape_cast %65 : vector<1x1024x64xbf16> to vector<1024x64xbf16>
    %cst_39 = arith.constant dense<0.000000e+00> : vector<1x64xf32>
    %67 = tpu.matmul %64, %66, %cst_39 {dimension_numbers = #tpu.dot_dimension_numbers<[1], [0], [0], [1], [0, 0, 1, 1], [], []>} : vector<1x1024xbf16>, vector<1024x64xbf16>, vector<1x64xf32> -> vector<1x64xf32>
    %68 = arith.addf %63, %67 : vector<1x64xf32>
    %69 = vector.extract_strided_slice %12 {offsets = [11, 0], sizes = [1, 1024], strides = [1, 1]} : vector<16x1024xbf16> to vector<1x1024xbf16>
    %c11 = arith.constant 11 : index
    %c0_40 = arith.constant 0 : index
    %c0_41 = arith.constant 0 : index
    %70 = vector.load %arg3[%c11, %c0_40, %c0_41] : memref<12x1024x64xbf16, #tpu.memory_space<vmem>>, vector<1x1024x64xbf16>
    %71 = vector.shape_cast %70 : vector<1x1024x64xbf16> to vector<1024x64xbf16>
    %cst_42 = arith.constant dense<0.000000e+00> : vector<1x64xf32>
    %72 = tpu.matmul %69, %71, %cst_42 {dimension_numbers = #tpu.dot_dimension_numbers<[1], [0], [0], [1], [0, 0, 1, 1], [], []>} : vector<1x1024xbf16>, vector<1024x64xbf16>, vector<1x64xf32> -> vector<1x64xf32>
    %73 = arith.addf %68, %72 : vector<1x64xf32>
    %cst_43 = arith.constant 0.000000e+00 : f32
    %74 = vector.broadcast %cst_43 : f32 to vector<1x64xf32>
    %75 = arith.maximumf %73, %74 : vector<1x64xf32>
    %c0_44 = arith.constant 0 : index
    %c0_45 = arith.constant 0 : index
    %76 = vector.load %arg5[%c0_44, %c0_45] : memref<64x3xf32, #tpu.memory_space<vmem>>, vector<64x3xf32>
    %cst_46 = arith.constant dense<0.000000e+00> : vector<1x3xf32>
    %77 = tpu.matmul %75, %76, %cst_46 {dimension_numbers = #tpu.dot_dimension_numbers<[1], [0], [0], [1], [0, 0, 1, 1], [], []>} : vector<1x64xf32>, vector<64x3xf32>, vector<1x3xf32> -> vector<1x3xf32>
    %c0_47 = arith.constant 0 : index
    %c0_48 = arith.constant 0 : index
    %78 = vector.load %arg6[%c0_47, %c0_48] : memref<1x3xf32, #tpu.memory_space<vmem>>, vector<1x3xf32>
    %79 = arith.addf %77, %78 : vector<1x3xf32>
    %80 = tpu.iota {dimensions = array<i32: 1>} : vector<1x3xi32>
    %cst_49 = arith.constant 0.000000e+00 : f32
    %81 = vector.broadcast %cst_49 : f32 to vector<1x3xf32>
    %82 = arith.subf %81, %79 : vector<1x3xf32>
    %83 = math.exp %82 : vector<1x3xf32>
    %cst_50 = arith.constant 1.000000e+00 : f32
    %84 = vector.broadcast %cst_50 : f32 to vector<1x3xf32>
    %85 = arith.addf %84, %83 : vector<1x3xf32>
    %cst_51 = arith.constant 1.000000e+00 : f32
    %86 = vector.broadcast %cst_51 : f32 to vector<1x3xf32>
    %87 = arith.divf %86, %85 : vector<1x3xf32>
    %c0_i32 = arith.constant 0 : i32
    %88 = vector.broadcast %c0_i32 : i32 to vector<1x3xi32>
    %89 = arith.cmpi eq, %80, %88 : vector<1x3xi32>
    %90 = math.tanh %79 : vector<1x3xf32>
    %91 = arith.select %89, %90, %87 : vector<1x3xi1>, vector<1x3xf32>
    %c0_52 = arith.constant 0 : index
    %c0_53 = arith.constant 0 : index
    %92 = vector.load %arg7[%c0_52, %c0_53] : memref<1x3xf32, #tpu.memory_space<vmem>>, vector<1x3xf32>
    tpu.vector_store %arg7[%c0_52, %c0_53], %91 {strides = array<i32>} : memref<1x3xf32, #tpu.memory_space<vmem>>, vector<1x3xf32>,
    return
  }
  func.func @transform_0(%arg0: i32) -> (i32, i32) {
    %c0_i32 = arith.constant 0 : i32
    %c0_i32_0 = arith.constant 0 : i32
    %c0_i32_1 = arith.constant 0 : i32
    return %c0_i32, %c0_i32_0 : i32, i32
  }
  func.func @transform_1(%arg0: i32) -> (i32, i32) {
    %c0_i32 = arith.constant 0 : i32
    %c0_i32_0 = arith.constant 0 : i32
    %c0_i32_1 = arith.constant 0 : i32
    return %c0_i32, %c0_i32_0 : i32, i32
  }
  func.func @transform_2(%arg0: i32) -> (i32, i32, i32) {
    %c0_i32 = arith.constant 0 : i32
    %c0_i32_0 = arith.constant 0 : i32
    %c0_i32_1 = arith.constant 0 : i32
    %c0_i32_2 = arith.constant 0 : i32
    return %c0_i32, %c0_i32_0, %c0_i32_1 : i32, i32, i32
  }
  func.func @transform_3(%arg0: i32) -> (i32, i32) {
    %c0_i32 = arith.constant 0 : i32
    %c0_i32_0 = arith.constant 0 : i32
    %c0_i32_1 = arith.constant 0 : i32
    return %c0_i32, %c0_i32_0 : i32, i32
  }
  func.func @transform_4(%arg0: i32) -> (i32, i32) {
    %c0_i32 = arith.constant 0 : i32
    %c0_i32_0 = arith.constant 0 : i32
    %c0_i32_1 = arith.constant 0 : i32
    return %c0_i32, %c0_i32_0 : i32, i32
  }
  func.func @transform_5(%arg0: i32) -> (i32, i32) {
    %c0_i32 = arith.constant 0 : i32
    %c0_i32_0 = arith.constant 0 : i32
    %c0_i32_1 = arith.constant 0 : i32
    return %c0_i32, %c0_i32_0 : i32, i32
  }
  func.func @transform_6(%arg0: i32) -> (i32, i32) {
    %c0_i32 = arith.constant 0 : i32
    %c0_i32_0 = arith.constant 0 : i32
    %c0_i32_1 = arith.constant 0 : i32
    return %c0_i32, %c0_i32_0 : i32, i32
  }
}

</mosaic_0001>

<llo_original>
// kernel: convnet_forward.1
$region0: #{convnet_forward.1}
  #allocation0 [shape = 'u32[]', space=smem, size = 0x4, offset = 0x4, fixed_abs, tag = 'smem constant byte address 0x4 - core index']
  #allocation1 [shape = 'u32[144,128]{1,0:T(1,128)}', space=vmem, size = 0x12000, scoped, tag = 'internal scratch']
  %s0 = inlined_call_operand.vmem [shape: f32[49,1024], index: 0, kind: input, shape index: {}]
  %s1 = inlined_call_operand.vmem [shape: f32[64,49], index: 1, kind: input, shape index: {}]
  %s2 = inlined_call_operand.vmem [shape: bf16[12,1024,64], index: 2, kind: input, shape index: {}]
  %s3 = inlined_call_operand.vmem [shape: f32[1,64], index: 3, kind: input, shape index: {}]
  %s4 = inlined_call_operand.vmem [shape: f32[64,3], index: 4, kind: input, shape index: {}]
  %s5 = inlined_call_operand.vmem [shape: f32[1,3], index: 5, kind: input, shape index: {}]
  %s6 = inlined_call_operand.hbm [shape: f32[1,3], index: 6, kind: output, shape index: {}]
  %s7 = sld [smem:[#allocation0]]
  $region34: #{convnet_forward.1} parent=0
    _
  %s9 = ssub.s32 1, %s7
  %s10 = scalar_select 0, %s9, %s7
  $region1: #{convnet_forward.1} parent=0
    #allocation2 [shape = 'u8[512]{0}', space=vmem, size = 0x400, scoped, tag = 'output window, operand 0, single buffered']
    #allocation3 [shape = 's32[1]{0}', space=sflag, size = 0x4, scoped, tag = 'scoped memory for convnet_forward.1']
    %11 = vsyncpa [#allocation3], 0
    // Predicated region
    $region2: #{convnet_forward.1} parent=1 // pred_check
      _
    $region3: #{convnet_forward.1} parent=1 // pred_check_branch
      %13 = sbr.rel (0) target = $region5
    $region4: #{convnet_forward.1} parent=1 // pred_region
      _
    $region5: #{convnet_forward.1} parent=1 // pred_fallthru
      _
    // Predicated region
    $region6: #{convnet_forward.1} parent=1 // pred_check
      _
    $region7: #{convnet_forward.1} parent=1 // pred_check_branch
      %15 = sbr.rel (0) target = $region9
    $region8: #{convnet_forward.1} parent=1 // pred_region
      _
    $region9: #{convnet_forward.1} parent=1 // pred_fallthru
      _
    // Predicated region
    $region10: #{convnet_forward.1} parent=1 // pred_check
      _
    $region11: #{convnet_forward.1} parent=1 // pred_check_branch
      %17 = sbr.rel (0) target = $region13
    $region12: #{convnet_forward.1} parent=1 // pred_region
      _
    $region13: #{convnet_forward.1} parent=1 // pred_fallthru
      _
    // Predicated region
    $region14: #{convnet_forward.1} parent=1 // pred_check
      _
    $region15: #{convnet_forward.1} parent=1 // pred_check_branch
      %19 = sbr.rel (0) target = $region17
    $region16: #{convnet_forward.1} parent=1 // pred_region
      _
    $region17: #{convnet_forward.1} parent=1 // pred_fallthru
      _
    // Predicated region
    $region18: #{convnet_forward.1} parent=1 // pred_check
      _
    $region19: #{convnet_forward.1} parent=1 // pred_check_branch
      %21 = sbr.rel (0) target = $region21
    $region20: #{convnet_forward.1} parent=1 // pred_region
      _
    $region21: #{convnet_forward.1} parent=1 // pred_fallthru
      _
    // Predicated region
    $region22: #{convnet_forward.1} parent=1 // pred_check
      _
    $region23: #{convnet_forward.1} parent=1 // pred_check_branch
      %23 = sbr.rel (0) target = $region25
    $region24: #{convnet_forward.1} parent=1 // pred_region
      _
    $region25: #{convnet_forward.1} parent=1 // pred_fallthru
      _
    %v25 = vld [vmem:[%s1] sm:$0xff]
    %v26 = vld [vmem:[%s1 + $0x8] sm:$0xff]
    %v27 = vld [vmem:[%s1 + $0x10] sm:$0xff]
    %v28 = vld [vmem:[%s1 + $0x18] sm:$0xff]
    %v29 = vld [vmem:[%s1 + $0x20] sm:$0xff]
    %v30 = vld [vmem:[%s1 + $0x28] sm:$0xff]
    %v31 = vld [vmem:[%s1 + $0x30] sm:$0xff]
    %v32 = vld [vmem:[%s1 + $0x38] sm:$0xff]
    %v33 = vld [vmem:[%s0] sm:$0xff]
    %v34 = vld [vmem:[%s0 + $0x8] sm:$0xff]
    %v35 = vld [vmem:[%s0 + $0x10] sm:$0xff]
    %v36 = vld [vmem:[%s0 + $0x18] sm:$0xff]
    %v37 = vld [vmem:[%s0 + $0x20] sm:$0xff]
    %v38 = vld [vmem:[%s0 + $0x28] sm:$0xff]
    %v39 = vld [vmem:[%s0 + $0x30] sm:$0xff]
    %v40 = vld [vmem:[%s0 + $0x38] sm:$0xff]
    %v41 = vld [vmem:[%s0 + $0x40] sm:$0xff]
    %v42 = vld [vmem:[%s0 + $0x48] sm:$0xff]
    %v43 = vld [vmem:[%s0 + $0x50] sm:$0xff]
    %v44 = vld [vmem:[%s0 + $0x58] sm:$0xff]
    %v45 = vld [vmem:[%s0 + $0x60] sm:$0xff]
    %v46 = vld [vmem:[%s0 + $0x68] sm:$0xff]
    %v47 = vld [vmem:[%s0 + $0x70] sm:$0xff]
    %v48 = vld [vmem:[%s0 + $0x78] sm:$0xff]
    %v49 = vld [vmem:[%s0 + $0x80] sm:$0xff]
    %v50 = vld [vmem:[%s0 + $0x88] sm:$0xff]
    %v51 = vld [vmem:[%s0 + $0x90] sm:$0xff]
    %v52 = vld [vmem:[%s0 + $0x98] sm:$0xff]
    %v53 = vld [vmem:[%s0 + $0xa0] sm:$0xff]
    %v54 = vld [vmem:[%s0 + $0xa8] sm:$0xff]
    %v55 = vld [vmem:[%s0 + $0xb0] sm:$0xff]
    %v56 = vld [vmem:[%s0 + $0xb8] sm:$0xff]
    %v57 = vld [vmem:[%s0 + $0xc0] sm:$0xff]
    %v58 = vld [vmem:[%s0 + $0xc8] sm:$0xff]
    %v59 = vld [vmem:[%s0 + $0xd0] sm:$0xff]
    %v60 = vld [vmem:[%s0 + $0xd8] sm:$0xff]
    %v61 = vld [vmem:[%s0 + $0xe0] sm:$0xff]
    %v62 = vld [vmem:[%s0 + $0xe8] sm:$0xff]
    %v63 = vld [vmem:[%s0 + $0xf0] sm:$0xff]
    %v64 = vld [vmem:[%s0 + $0xf8] sm:$0xff]
    %v65 = vld [vmem:[%s0 + $0x100] sm:$0xff]
    %v66 = vld [vmem:[%s0 + $0x108] sm:$0xff]
    %v67 = vld [vmem:[%s0 + $0x110] sm:$0xff]
    %v68 = vld [vmem:[%s0 + $0x118] sm:$0xff]
    %v69 = vld [vmem:[%s0 + $0x120] sm:$0xff]
    %v70 = vld [vmem:[%s0 + $0x128] sm:$0xff]
    %v71 = vld [vmem:[%s0 + $0x130] sm:$0xff]
    %v72 = vld [vmem:[%s0 + $0x138] sm:$0xff]
    %v73 = vld [vmem:[%s0 + $0x140] sm:$0xff]
    %v74 = vld [vmem:[%s0 + $0x148] sm:$0xff]
    %v75 = vld [vmem:[%s0 + $0x150] sm:$0xff]
    %v76 = vld [vmem:[%s0 + $0x158] sm:$0xff]
    %v77 = vld [vmem:[%s0 + $0x160] sm:$0xff]
    %v78 = vld [vmem:[%s0 + $0x168] sm:$0xff]
    %v79 = vld [vmem:[%s0 + $0x170] sm:$0xff]
    %v80 = vld [vmem:[%s0 + $0x178] sm:$0xff]
    %v81 = vld [vmem:[%s0 + $0x180] sm:$0x1]
    %v82 = vld [vmem:[%s0 + $0x188] sm:$0x1]
    %v83 = vld [vmem:[%s0 + $0x190] sm:$0x1]
    %v84 = vld [vmem:[%s0 + $0x198] sm:$0x1]
    %v85 = vld [vmem:[%s0 + $0x1a0] sm:$0x1]
    %v86 = vld [vmem:[%s0 + $0x1a8] sm:$0x1]
    %v87 = vld [vmem:[%s0 + $0x1b0] sm:$0x1]
    %v88 = vld [vmem:[%s0 + $0x1b8] sm:$0x1]
    %vm89 = vcmask 400384
    %v91 = vsel %vm89, %v25, 0
    %v94 = vsel %vm89, %v26, 0
    %v97 = vsel %vm89, %v27, 0
    %v100 = vsel %vm89, %v28, 0
    %v103 = vsel %vm89, %v29, 0
    %v106 = vsel %vm89, %v30, 0
    %v109 = vsel %vm89, %v31, 0
    %v112 = vsel %vm89, %v32, 0
    %vm114 = vcmask 1040384
    %v116 = vsel %vm114, %v81, 0
    %v119 = vsel %vm114, %v82, 0
    %v122 = vsel %vm114, %v83, 0
    %v125 = vsel %vm114, %v84, 0
    %v128 = vsel %vm114, %v85, 0
    %v131 = vsel %vm114, %v86, 0
    %v134 = vsel %vm114, %v87, 0
    %v137 = vsel %vm114, %v88, 0
    %139 = vmatprep.subr.mxu0 0.0
    %140 = vmatpush1.msra.mxu0 0.0
    %141 = vmatprep.subr.mxu0 0.0
    %142 = vmatpush1.msra.mxu0 0.0
    %143 = vmatprep.subr.mxu0 0.0
    %144 = vmatpush1.msra.mxu0 0.0
    %145 = vmatprep.subr.mxu0 0.0
    %146 = vmatpush1.msra.mxu0 0.0
    %147 = vmatprep.subr.mxu0 0.0
    %148 = vmatpush1.msra.mxu0 0.0
    %149 = vmatprep.subr.mxu0 0.0
    %150 = vmatpush1.msra.mxu0 0.0
    %151 = vmatprep.subr.mxu0 0.0
    %152 = vmatpush1.msra.mxu0 0.0
    %153 = vmatprep.subr.mxu0 0.0
    %154 = vmatpush1.msra.mxu0 0.0
    %155 = vmatprep.subr.mxu0 0.0
    %156 = vmatpush1.msra.mxu0 0.0
    %157 = vmatprep.subr.mxu0 %v119
    %158 = vmatpush1.msra.mxu0 %v116
    %159 = vmatprep.subr.mxu0 %v74
    %160 = vmatpush1.msra.mxu0 %v73
    %161 = vmatprep.subr.mxu0 %v66
    %162 = vmatpush1.msra.mxu0 %v65
    %163 = vmatprep.subr.mxu0 %v58
    %164 = vmatpush1.msra.mxu0 %v57
    %165 = vmatprep.subr.mxu0 %v50
    %166 = vmatpush1.msra.mxu0 %v49
    %167 = vmatprep.subr.mxu0 %v42
    %168 = vmatpush1.msra.mxu0 %v41
    %169 = vmatprep.subr.mxu0 %v34
    %170 = vmatpush1.msra.mxu0 %v33
    %171 = vmatprep.subr.mxu0 0.0
    %172 = vmatpush2.msra.mxu0 0.0
    %173 = vmatprep.subr.mxu0 0.0
    %174 = vmatpush2.msra.mxu0 0.0
    %175 = vmatprep.subr.mxu0 0.0
    %176 = vmatpush2.msra.mxu0 0.0
    %177 = vmatprep.subr.mxu0 0.0
    %178 = vmatpush2.msra.mxu0 0.0
    %179 = vmatprep.subr.mxu0 0.0
    %180 = vmatpush2.msra.mxu0 0.0
    %181 = vmatprep.subr.mxu0 0.0
    %182 = vmatpush2.msra.mxu0 0.0
    %183 = vmatprep.subr.mxu0 0.0
    %184 = vmatpush2.msra.mxu0 0.0
    %185 = vmatprep.subr.mxu0 0.0
    %186 = vmatpush2.msra.mxu0 0.0
    %187 = vmatprep.subr.mxu0 0.0
    %188 = vmatpush2.msra.mxu0 0.0
    %189 = vmatprep.subr.mxu0 0.0
    %190 = vmatpush2.msra.mxu0 0.0
    %191 = vmatprep.subr.mxu0 0.0
    %192 = vmatpush2.msra.mxu0 0.0
    %193 = vmatprep.subr.mxu0 0.0
    %194 = vmatpush2.msra.mxu0 0.0
    %195 = vmatprep.subr.mxu0 0.0
    %196 = vmatpush2.msra.mxu0 0.0
    %197 = vmatprep.subr.mxu0 0.0
    %198 = vmatpush2.msra.mxu0 0.0
    %199 = vmatprep.subr.mxu0 0.0
    %200 = vmatpush2.msra.mxu0 0.0
    %201 = vmatprep.subr.mxu0 0.0
    %202 = vmatpush2.msra.mxu0 0.0
    %203 = vmatprep.mubr.f32.mxu0 0.0
    %204 = vmatmul.mubr.f32.gmra.mxu0 %v91
    %v205 = vpop.f32.mrf.mxu0
    %v206 = vadd.f32 0.0, %v205
    %v207 = vpop.f32.mrf.mxu0
    %v208 = vadd.f32 0.0, %v207
    %209 = vmatprep.mubr.f32.mxu0 0.0
    %210 = vmatmul.mubr.f32.gmra.mxu0 %v94
    %v211 = vpop.f32.mrf.mxu0
    %v212 = vadd.f32 0.0, %v211
    %v213 = vpop.f32.mrf.mxu0
    %v214 = vadd.f32 0.0, %v213
    %215 = vmatprep.mubr.f32.mxu0 0.0
    %216 = vmatmul.mubr.f32.gmra.mxu0 %v97
    %v217 = vpop.f32.mrf.mxu0
    %v218 = vadd.f32 0.0, %v217
    %v219 = vpop.f32.mrf.mxu0
    %v220 = vadd.f32 0.0, %v219
    %221 = vmatprep.mubr.f32.mxu0 0.0
    %222 = vmatmul.mubr.f32.gmra.mxu0 %v100
    %v223 = vpop.f32.mrf.mxu0
    %v224 = vadd.f32 0.0, %v223
    %v225 = vpop.f32.mrf.mxu0
    %v226 = vadd.f32 0.0, %v225
    %227 = vmatprep.mubr.f32.mxu0 0.0
    %228 = vmatmul.mubr.f32.gmra.mxu0 %v103
    %v229 = vpop.f32.mrf.mxu0
    %v230 = vadd.f32 0.0, %v229
    %v231 = vpop.f32.mrf.mxu0
    %v232 = vadd.f32 0.0, %v231
    %233 = vmatprep.mubr.f32.mxu0 0.0
    %234 = vmatmul.mubr.f32.gmra.mxu0 %v106
    %v235 = vpop.f32.mrf.mxu0
    %v236 = vadd.f32 0.0, %v235
    %v237 = vpop.f32.mrf.mxu0
    %v238 = vadd.f32 0.0, %v237
    %239 = vmatprep.mubr.f32.mxu0 0.0
    %240 = vmatmul.mubr.f32.gmra.mxu0 %v109
    %v241 = vpop.f32.mrf.mxu0
    %v242 = vadd.f32 0.0, %v241
    %v243 = vpop.f32.mrf.mxu0
    %v244 = vadd.f32 0.0, %v243
    %245 = vmatprep.mubr.f32.mxu0 0.0
    %246 = vmatmul.mubr.f32.gmra.mxu0 %v112
    %v247 = vpop.f32.mrf.mxu0
    %v248 = vadd.f32 0.0, %v247
    %v249 = vpop.f32.mrf.mxu0
    %v250 = vadd.f32 0.0, %v249
    %251 = vdwg.mxu0
    %252 = vmatprep.subr.mxu0 0.0
    %253 = vmatpush1.msra.mxu0 0.0
    %254 = vmatprep.subr.mxu0 0.0
    %255 = vmatpush1.msra.mxu0 0.0
    %256 = vmatprep.subr.mxu0 0.0
    %257 = vmatpush1.msra.mxu0 0.0
    %258 = vmatprep.subr.mxu0 0.0
    %259 = vmatpush1.msra.mxu0 0.0
    %260 = vmatprep.subr.mxu0 0.0
    %261 = vmatpush1.msra.mxu0 0.0
    %262 = vmatprep.subr.mxu0 0.0
    %263 = vmatpush1.msra.mxu0 0.0
    %264 = vmatprep.subr.mxu0 0.0
    %265 = vmatpush1.msra.mxu0 0.0
    %266 = vmatprep.subr.mxu0 0.0
    %267 = vmatpush1.msra.mxu0 0.0
    %268 = vmatprep.subr.mxu0 0.0
    %269 = vmatpush1.msra.mxu0 0.0
    %270 = vmatprep.subr.mxu0 %v125
    %271 = vmatpush1.msra.mxu0 %v122
    %272 = vmatprep.subr.mxu0 %v76
    %273 = vmatpush1.msra.mxu0 %v75
    %274 = vmatprep.subr.mxu0 %v68
    %275 = vmatpush1.msra.mxu0 %v67
    %276 = vmatprep.subr.mxu0 %v60
    %277 = vmatpush1.msra.mxu0 %v59
    %278 = vmatprep.subr.mxu0 %v52
    %279 = vmatpush1.msra.mxu0 %v51
    %280 = vmatprep.subr.mxu0 %v44
    %281 = vmatpush1.msra.mxu0 %v43
    %282 = vmatprep.subr.mxu0 %v36
    %283 = vmatpush1.msra.mxu0 %v35
    %284 = vmatprep.subr.mxu0 0.0
    %285 = vmatpush2.msra.mxu0 0.0
    %286 = vmatprep.subr.mxu0 0.0
    %287 = vmatpush2.msra.mxu0 0.0
    %288 = vmatprep.subr.mxu0 0.0
    %289 = vmatpush2.msra.mxu0 0.0
    %290 = vmatprep.subr.mxu0 0.0
    %291 = vmatpush2.msra.mxu0 0.0
    %292 = vmatprep.subr.mxu0 0.0
    %293 = vmatpush2.msra.mxu0 0.0
    %294 = vmatprep.subr.mxu0 0.0
    %295 = vmatpush2.msra.mxu0 0.0
    %296 = vmatprep.subr.mxu0 0.0
    %297 = vmatpush2.msra.mxu0 0.0
    %298 = vmatprep.subr.mxu0 0.0
    %299 = vmatpush2.msra.mxu0 0.0
    %300 = vmatprep.subr.mxu0 0.0
    %301 = vmatpush2.msra.mxu0 0.0
    %302 = vmatprep.subr.mxu0 0.0
    %303 = vmatpush2.msra.mxu0 0.0
    %304 = vmatprep.subr.mxu0 0.0
    %305 = vmatpush2.msra.mxu0 0.0
    %306 = vmatprep.subr.mxu0 0.0
    %307 = vmatpush2.msra.mxu0 0.0
    %308 = vmatprep.subr.mxu0 0.0
    %309 = vmatpush2.msra.mxu0 0.0
    %310 = vmatprep.subr.mxu0 0.0
    %311 = vmatpush2.msra.mxu0 0.0
    %312 = vmatprep.subr.mxu0 0.0
    %313 = vmatpush2.msra.mxu0 0.0
    %314 = vmatprep.subr.mxu0 0.0
    %315 = vmatpush2.msra.mxu0 0.0
    %316 = vmatprep.mubr.f32.mxu0 0.0
    %317 = vmatmul.mubr.f32.gmra.mxu0 %v91
    %v318 = vpop.f32.mrf.mxu0
    %v319 = vadd.f32 0.0, %v318
    %v320 = vpop.f32.mrf.mxu0
    %v321 = vadd.f32 0.0, %v320
    %322 = vmatprep.mubr.f32.mxu0 0.0
    %323 = vmatmul.mubr.f32.gmra.mxu0 %v94
    %v324 = vpop.f32.mrf.mxu0
    %v325 = vadd.f32 0.0, %v324
    %v326 = vpop.f32.mrf.mxu0
    %v327 = vadd.f32 0.0, %v326
    %328 = vmatprep.mubr.f32.mxu0 0.0
    %329 = vmatmul.mubr.f32.gmra.mxu0 %v97
    %v330 = vpop.f32.mrf.mxu0
    %v331 = vadd.f32 0.0, %v330
    %v332 = vpop.f32.mrf.mxu0
    %v333 = vadd.f32 0.0, %v332
    %334 = vmatprep.mubr.f32.mxu0 0.0
    %335 = vmatmul.mubr.f32.gmra.mxu0 %v100
    %v336 = vpop.f32.mrf.mxu0
    %v337 = vadd.f32 0.0, %v336
    %v338 = vpop.f32.mrf.mxu0
    %v339 = vadd.f32 0.0, %v338
    %340 = vmatprep.mubr.f32.mxu0 0.0
    %341 = vmatmul.mubr.f32.gmra.mxu0 %v103
    %v342 = vpop.f32.mrf.mxu0
    %v343 = vadd.f32 0.0, %v342
    %v344 = vpop.f32.mrf.mxu0
    %v345 = vadd.f32 0.0, %v344
    %346 = vmatprep.mubr.f32.mxu0 0.0
    %347 = vmatmul.mubr.f32.gmra.mxu0 %v106
    %v348 = vpop.f32.mrf.mxu0
    %v349 = vadd.f32 0.0, %v348
    %v350 = vpop.f32.mrf.mxu0
    %v351 = vadd.f32 0.0, %v350
    %352 = vmatprep.mubr.f32.mxu0 0.0
    %353 = vmatmul.mubr.f32.gmra.mxu0 %v109
    %v354 = vpop.f32.mrf.mxu0
    %v355 = vadd.f32 0.0, %v354
    %v356 = vpop.f32.mrf.mxu0
    %v357 = vadd.f32 0.0, %v356
    %358 = vmatprep.mubr.f32.mxu0 0.0
    %359 = vmatmul.mubr.f32.gmra.mxu0 %v112
    %v360 = vpop.f32.mrf.mxu0
    %v361 = vadd.f32 0.0, %v360
    %v362 = vpop.f32.mrf.mxu0
    %v363 = vadd.f32 0.0, %v362
    %364 = vdwg.mxu0
    %365 = vmatprep.subr.mxu0 0.0
    %366 = vmatpush1.msra.mxu0 0.0
    %367 = vmatprep.subr.mxu0 0.0
    %368 = vmatpush1.msra.mxu0 0.0
    %369 = vmatprep.subr.mxu0 0.0
    %370 = vmatpush1.msra.mxu0 0.0
    %371 = vmatprep.subr.mxu0 0.0
    %372 = vmatpush1.msra.mxu0 0.0
    %373 = vmatprep.subr.mxu0 0.0
    %374 = vmatpush1.msra.mxu0 0.0
    %375 = vmatprep.subr.mxu0 0.0
    %376 = vmatpush1.msra.mxu0 0.0
    %377 = vmatprep.subr.mxu0 0.0
    %378 = vmatpush1.msra.mxu0 0.0
    %379 = vmatprep.subr.mxu0 0.0
    %380 = vmatpush1.msra.mxu0 0.0
    %381 = vmatprep.subr.mxu0 0.0
    %382 = vmatpush1.msra.mxu0 0.0
    %383 = vmatprep.subr.mxu0 %v131
    %384 = vmatpush1.msra.mxu0 %v128
    %385 = vmatprep.subr.mxu0 %v78
    %386 = vmatpush1.msra.mxu0 %v77
    %387 = vmatprep.subr.mxu0 %v70
    %388 = vmatpush1.msra.mxu0 %v69
    %389 = vmatprep.subr.mxu0 %v62
    %390 = vmatpush1.msra.mxu0 %v61
    %391 = vmatprep.subr.mxu0 %v54
    %392 = vmatpush1.msra.mxu0 %v53
    %393 = vmatprep.subr.mxu0 %v46
    %394 = vmatpush1.msra.mxu0 %v45
    %395 = vmatprep.subr.mxu0 %v38
    %396 = vmatpush1.msra.mxu0 %v37
    %397 = vmatprep.subr.mxu0 0.0
    %398 = vmatpush2.msra.mxu0 0.0
    %399 = vmatprep.subr.mxu0 0.0
    %400 = vmatpush2.msra.mxu0 0.0
    %401 = vmatprep.subr.mxu0 0.0
    %402 = vmatpush2.msra.mxu0 0.0
    %403 = vmatprep.subr.mxu0 0.0
    %404 = vmatpush2.msra.mxu0 0.0
    %405 = vmatprep.subr.mxu0 0.0
    %406 = vmatpush2.msra.mxu0 0.0
    %407 = vmatprep.subr.mxu0 0.0
    %408 = vmatpush2.msra.mxu0 0.0
    %409 = vmatprep.subr.mxu0 0.0
    %410 = vmatpush2.msra.mxu0 0.0
    %411 = vmatprep.subr.mxu0 0.0
    %412 = vmatpush2.msra.mxu0 0.0
    %413 = vmatprep.subr.mxu0 0.0
    %414 = vmatpush2.msra.mxu0 0.0
    %415 = vmatprep.subr.mxu0 0.0
    %416 = vmatpush2.msra.mxu0 0.0
    %417 = vmatprep.subr.mxu0 0.0
    %418 = vmatpush2.msra.mxu0 0.0
    %419 = vmatprep.subr.mxu0 0.0
    %420 = vmatpush2.msra.mxu0 0.0
    %421 = vmatprep.subr.mxu0 0.0
    %422 = vmatpush2.msra.mxu0 0.0
    %423 = vmatprep.subr.mxu0 0.0
    %424 = vmatpush2.msra.mxu0 0.0
    %425 = vmatprep.subr.mxu0 0.0
    %426 = vmatpush2.msra.mxu0 0.0
    %427 = vmatprep.subr.mxu0 0.0
    %428 = vmatpush2.msra.mxu0 0.0
    %429 = vmatprep.mubr.f32.mxu0 0.0
    %430 = vmatmul.mubr.f32.gmra.mxu0 %v91
    %v431 = vpop.f32.mrf.mxu0
    %v432 = vadd.f32 0.0, %v431
    %v433 = vpop.f32.mrf.mxu0
    %v434 = vadd.f32 0.0, %v433
    %435 = vmatprep.mubr.f32.mxu0 0.0
    %436 = vmatmul.mubr.f32.gmra.mxu0 %v94
    %v437 = vpop.f32.mrf.mxu0
    %v438 = vadd.f32 0.0, %v437
    %v439 = vpop.f32.mrf.mxu0
    %v440 = vadd.f32 0.0, %v439
    %441 = vmatprep.mubr.f32.mxu0 0.0
    %442 = vmatmul.mubr.f32.gmra.mxu0 %v97
    %v443 = vpop.f32.mrf.mxu0
    %v444 = vadd.f32 0.0, %v443
    %v445 = vpop.f32.mrf.mxu0
    %v446 = vadd.f32 0.0, %v445
    %447 = vmatprep.mubr.f32.mxu0 0.0
    %448 = vmatmul.mubr.f32.gmra.mxu0 %v100
    %v449 = vpop.f32.mrf.mxu0
    %v450 = vadd.f32 0.0, %v449
    %v451 = vpop.f32.mrf.mxu0
    %v452 = vadd.f32 0.0, %v451
    %453 = vmatprep.mubr.f32.mxu0 0.0
    %454 = vmatmul.mubr.f32.gmra.mxu0 %v103
    %v455 = vpop.f32.mrf.mxu0
    %v456 = vadd.f32 0.0, %v455
    %v457 = vpop.f32.mrf.mxu0
    %v458 = vadd.f32 0.0, %v457
    %459 = vmatprep.mubr.f32.mxu0 0.0
    %460 = vmatmul.mubr.f32.gmra.mxu0 %v106
    %v461 = vpop.f32.mrf.mxu0
    %v462 = vadd.f32 0.0, %v461
    %v463 = vpop.f32.mrf.mxu0
    %v464 = vadd.f32 0.0, %v463
    %465 = vmatprep.mubr.f32.mxu0 0.0
    %466 = vmatmul.mubr.f32.gmra.mxu0 %v109
    %v467 = vpop.f32.mrf.mxu0
    %v468 = vadd.f32 0.0, %v467
    %v469 = vpop.f32.mrf.mxu0
    %v470 = vadd.f32 0.0, %v469
    %471 = vmatprep.mubr.f32.mxu0 0.0
    %472 = vmatmul.mubr.f32.gmra.mxu0 %v112
    %v473 = vpop.f32.mrf.mxu0
    %v474 = vadd.f32 0.0, %v473
    %v475 = vpop.f32.mrf.mxu0
    %v476 = vadd.f32 0.0, %v475
    %477 = vdwg.mxu0
    %478 = vmatprep.subr.mxu0 0.0
    %479 = vmatpush1.msra.mxu0 0.0
    %480 = vmatprep.subr.mxu0 0.0
    %481 = vmatpush1.msra.mxu0 0.0
    %482 = vmatprep.subr.mxu0 0.0
    %483 = vmatpush1.msra.mxu0 0.0
    %484 = vmatprep.subr.mxu0 0.0
    %485 = vmatpush1.msra.mxu0 0.0
    %486 = vmatprep.subr.mxu0 0.0
    %487 = vmatpush1.msra.mxu0 0.0
    %488 = vmatprep.subr.mxu0 0.0
    %489 = vmatpush1.msra.mxu0 0.0
    %490 = vmatprep.subr.mxu0 0.0
    %491 = vmatpush1.msra.mxu0 0.0
    %492 = vmatprep.subr.mxu0 0.0
    %493 = vmatpush1.msra.mxu0 0.0
    %494 = vmatprep.subr.mxu0 0.0
    %495 = vmatpush1.msra.mxu0 0.0
    %496 = vmatprep.subr.mxu0 %v137
    %497 = vmatpush1.msra.mxu0 %v134
    %498 = vmatprep.subr.mxu0 %v80
    %499 = vmatpush1.msra.mxu0 %v79
    %500 = vmatprep.subr.mxu0 %v72
    %501 = vmatpush1.msra.mxu0 %v71
    %502 = vmatprep.subr.mxu0 %v64
    %503 = vmatpush1.msra.mxu0 %v63
    %504 = vmatprep.subr.mxu0 %v56
    %505 = vmatpush1.msra.mxu0 %v55
    %506 = vmatprep.subr.mxu0 %v48
    %507 = vmatpush1.msra.mxu0 %v47
    %508 = vmatprep.subr.mxu0 %v40
    %509 = vmatpush1.msra.mxu0 %v39
    %510 = vmatprep.subr.mxu0 0.0
    %511 = vmatpush2.msra.mxu0 0.0
    %512 = vmatprep.subr.mxu0 0.0
    %513 = vmatpush2.msra.mxu0 0.0
    %514 = vmatprep.subr.mxu0 0.0
    %515 = vmatpush2.msra.mxu0 0.0
    %516 = vmatprep.subr.mxu0 0.0
    %517 = vmatpush2.msra.mxu0 0.0
    %518 = vmatprep.subr.mxu0 0.0
    %519 = vmatpush2.msra.mxu0 0.0
    %520 = vmatprep.subr.mxu0 0.0
    %521 = vmatpush2.msra.mxu0 0.0
    %522 = vmatprep.subr.mxu0 0.0
    %523 = vmatpush2.msra.mxu0 0.0
    %524 = vmatprep.subr.mxu0 0.0
    %525 = vmatpush2.msra.mxu0 0.0
    %526 = vmatprep.subr.mxu0 0.0
    %527 = vmatpush2.msra.mxu0 0.0
    %528 = vmatprep.subr.mxu0 0.0
    %529 = vmatpush2.msra.mxu0 0.0
    %530 = vmatprep.subr.mxu0 0.0
    %531 = vmatpush2.msra.mxu0 0.0
    %532 = vmatprep.subr.mxu0 0.0
    %533 = vmatpush2.msra.mxu0 0.0
    %534 = vmatprep.subr.mxu0 0.0
    %535 = vmatpush2.msra.mxu0 0.0
    %536 = vmatprep.subr.mxu0 0.0
    %537 = vmatpush2.msra.mxu0 0.0
    %538 = vmatprep.subr.mxu0 0.0
    %539 = vmatpush2.msra.mxu0 0.0
    %540 = vmatprep.subr.mxu0 0.0
    %541 = vmatpush2.msra.mxu0 0.0
    %542 = vmatprep.mubr.f32.mxu0 0.0
    %543 = vmatmul.mubr.f32.gmra.mxu0 %v91
    %v544 = vpop.f32.mrf.mxu0
    %v545 = vadd.f32 0.0, %v544
    %v546 = vpop.f32.mrf.mxu0
    %v547 = vadd.f32 0.0, %v546
    %548 = vmatprep.mubr.f32.mxu0 0.0
    %549 = vmatmul.mubr.f32.gmra.mxu0 %v94
    %v550 = vpop.f32.mrf.mxu0
    %v551 = vadd.f32 0.0, %v550
    %v552 = vpop.f32.mrf.mxu0
    %v553 = vadd.f32 0.0, %v552
    %554 = vmatprep.mubr.f32.mxu0 0.0
    %555 = vmatmul.mubr.f32.gmra.mxu0 %v97
    %v556 = vpop.f32.mrf.mxu0
    %v557 = vadd.f32 0.0, %v556
    %v558 = vpop.f32.mrf.mxu0
    %v559 = vadd.f32 0.0, %v558
    %560 = vmatprep.mubr.f32.mxu0 0.0
    %561 = vmatmul.mubr.f32.gmra.mxu0 %v100
    %v562 = vpop.f32.mrf.mxu0
    %v563 = vadd.f32 0.0, %v562
    %v564 = vpop.f32.mrf.mxu0
    %v565 = vadd.f32 0.0, %v564
    %566 = vmatprep.mubr.f32.mxu0 0.0
    %567 = vmatmul.mubr.f32.gmra.mxu0 %v103
    %v568 = vpop.f32.mrf.mxu0
    %v569 = vadd.f32 0.0, %v568
    %v570 = vpop.f32.mrf.mxu0
    %v571 = vadd.f32 0.0, %v570
    %572 = vmatprep.mubr.f32.mxu0 0.0
    %573 = vmatmul.mubr.f32.gmra.mxu0 %v106
    %v574 = vpop.f32.mrf.mxu0
    %v575 = vadd.f32 0.0, %v574
    %v576 = vpop.f32.mrf.mxu0
    %v577 = vadd.f32 0.0, %v576
    %578 = vmatprep.mubr.f32.mxu0 0.0
    %579 = vmatmul.mubr.f32.gmra.mxu0 %v109
    %v580 = vpop.f32.mrf.mxu0
    %v581 = vadd.f32 0.0, %v580
    %v582 = vpop.f32.mrf.mxu0
    %v583 = vadd.f32 0.0, %v582
    %584 = vmatprep.mubr.f32.mxu0 0.0
    %585 = vmatmul.mubr.f32.gmra.mxu0 %v112
    %v586 = vpop.f32.mrf.mxu0
    %v587 = vadd.f32 0.0, %v586
    %v588 = vpop.f32.mrf.mxu0
    %v589 = vadd.f32 0.0, %v588
    %590 = vdwg.mxu0
    %v591 = vmax.f32 %v206, %v218
    %v592 = vmax.f32 %v208, %v220
    %v593 = vmax.f32 %v319, %v331
    %v594 = vmax.f32 %v321, %v333
    %v595 = vmax.f32 %v432, %v444
    %v596 = vmax.f32 %v434, %v446
    %v597 = vmax.f32 %v545, %v557
    %v598 = vmax.f32 %v547, %v559
    %v599 = vmax.f32 %v212, %v224
    %v600 = vmax.f32 %v214, %v226
    %v601 = vmax.f32 %v325, %v337
    %v602 = vmax.f32 %v327, %v339
    %v603 = vmax.f32 %v438, %v450
    %v604 = vmax.f32 %v440, %v452
    %v605 = vmax.f32 %v551, %v563
    %v606 = vmax.f32 %v553, %v565
    %v607 = vmax.f32 %v230, %v242
    %v608 = vmax.f32 %v232, %v244
    %v609 = vmax.f32 %v343, %v355
    %v610 = vmax.f32 %v345, %v357
    %v611 = vmax.f32 %v456, %v468
    %v612 = vmax.f32 %v458, %v470
    %v613 = vmax.f32 %v569, %v581
    %v614 = vmax.f32 %v571, %v583
    %v615 = vmax.f32 %v236, %v248
    %v616 = vmax.f32 %v238, %v250
    %v617 = vmax.f32 %v349, %v361
    %v618 = vmax.f32 %v351, %v363
    %v619 = vmax.f32 %v462, %v474
    %v620 = vmax.f32 %v464, %v476
    %v621 = vmax.f32 %v575, %v587
    %v622 = vmax.f32 %v577, %v589
    %v623 = vmax.f32 %v591, %v607
    %v624 = vmax.f32 %v592, %v608
    %v625 = vmax.f32 %v593, %v609
    %v626 = vmax.f32 %v594, %v610
    %v627 = vmax.f32 %v595, %v611
    %v628 = vmax.f32 %v596, %v612
    %v629 = vmax.f32 %v597, %v613
    %v630 = vmax.f32 %v598, %v614
    %v631 = vmax.f32 %v599, %v615
    %v632 = vmax.f32 %v600, %v616
    %v633 = vmax.f32 %v601, %v617
    %v634 = vmax.f32 %v602, %v618
    %v635 = vmax.f32 %v603, %v619
    %v636 = vmax.f32 %v604, %v620
    %v637 = vmax.f32 %v605, %v621
    %v638 = vmax.f32 %v606, %v622
    %v639 = vmax.f32 %v623, 0.0
    %v640 = vmax.f32 %v624, 0.0
    %v641 = vmax.f32 %v625, 0.0
    %v642 = vmax.f32 %v626, 0.0
    %v643 = vmax.f32 %v627, 0.0
    %v644 = vmax.f32 %v628, 0.0
    %v645 = vmax.f32 %v629, 0.0
    %v646 = vmax.f32 %v630, 0.0
    %v647 = vmax.f32 %v631, 0.0
    %v648 = vmax.f32 %v632, 0.0
    %v649 = vmax.f32 %v633, 0.0
    %v650 = vmax.f32 %v634, 0.0
    %v651 = vmax.f32 %v635, 0.0
    %v652 = vmax.f32 %v636, 0.0
    %v653 = vmax.f32 %v637, 0.0
    %v654 = vmax.f32 %v638, 0.0
    %v655 = vpack.c.bf16 %v647, %v639
    %v656 = vpack.c.bf16 %v648, %v640
    %v657 = vpack.c.bf16 %v649, %v641
    %v658 = vpack.c.bf16 %v650, %v642
    %v659 = vpack.c.bf16 %v651, %v643
    %v660 = vpack.c.bf16 %v652, %v644
    %v661 = vpack.c.bf16 %v653, %v645
    %v662 = vpack.c.bf16 %v654, %v646
    %v663 = vld [vmem:[%s3] sm:$0x1]
    %v664 = vld [vmem:[%s2] sm:$0xf]
    %v665 = vld [vmem:[%s2 + $0x4] sm:$0xf]
    %v666 = vld [vmem:[%s2 + $0x8] sm:$0xf]
    %v667 = vld [vmem:[%s2 + $0xc] sm:$0xf]
    %v668 = vld [vmem:[%s2 + $0x10] sm:$0xf]
    %v669 = vld [vmem:[%s2 + $0x14] sm:$0xf]
    %v670 = vld [vmem:[%s2 + $0x18] sm:$0xf]
    %v671 = vld [vmem:[%s2 + $0x1c] sm:$0xf]
    %v672 = vld [vmem:[%s2 + $0x20] sm:$0xf]
    %v673 = vld [vmem:[%s2 + $0x24] sm:$0xf]
    %v674 = vld [vmem:[%s2 + $0x28] sm:$0xf]
    %v675 = vld [vmem:[%s2 + $0x2c] sm:$0xf]
    %v676 = vld [vmem:[%s2 + $0x30] sm:$0xf]
    %v677 = vld [vmem:[%s2 + $0x34] sm:$0xf]
    %v678 = vld [vmem:[%s2 + $0x38] sm:$0xf]
    %v679 = vld [vmem:[%s2 + $0x3c] sm:$0xf]
    %v680 = vld [vmem:[%s2 + $0x40] sm:$0xf]
    %v681 = vld [vmem:[%s2 + $0x44] sm:$0xf]
    %v682 = vld [vmem:[%s2 + $0x48] sm:$0xf]
    %v683 = vld [vmem:[%s2 + $0x4c] sm:$0xf]
    %v684 = vld [vmem:[%s2 + $0x50] sm:$0xf]
    %v685 = vld [vmem:[%s2 + $0x54] sm:$0xf]
    %v686 = vld [vmem:[%s2 + $0x58] sm:$0xf]
    %v687 = vld [vmem:[%s2 + $0x5c] sm:$0xf]
    %v688 = vld [vmem:[%s2 + $0x60] sm:$0xf]
    %v689 = vld [vmem:[%s2 + $0x64] sm:$0xf]
    %v690 = vld [vmem:[%s2 + $0x68] sm:$0xf]
    %v691 = vld [vmem:[%s2 + $0x6c] sm:$0xf]
    %v692 = vld [vmem:[%s2 + $0x70] sm:$0xf]
    %v693 = vld [vmem:[%s2 + $0x74] sm:$0xf]
    %v694 = vld [vmem:[%s2 + $0x78] sm:$0xf]
    %v695 = vld [vmem:[%s2 + $0x7c] sm:$0xf]
    %v696 = vld [vmem:[%s2 + $0x80] sm:$0xf]
    %v697 = vld [vmem:[%s2 + $0x84] sm:$0xf]
    %v698 = vld [vmem:[%s2 + $0x88] sm:$0xf]
    %v699 = vld [vmem:[%s2 + $0x8c] sm:$0xf]
    %v700 = vld [vmem:[%s2 + $0x90] sm:$0xf]
    %v701 = vld [vmem:[%s2 + $0x94] sm:$0xf]
    %v702 = vld [vmem:[%s2 + $0x98] sm:$0xf]
    %v703 = vld [vmem:[%s2 + $0x9c] sm:$0xf]
    %v704 = vld [vmem:[%s2 + $0xa0] sm:$0xf]
    %v705 = vld [vmem:[%s2 + $0xa4] sm:$0xf]
    %v706 = vld [vmem:[%s2 + $0xa8] sm:$0xf]
    %v707 = vld [vmem:[%s2 + $0xac] sm:$0xf]
    %v708 = vld [vmem:[%s2 + $0xb0] sm:$0xf]
    %v709 = vld [vmem:[%s2 + $0xb4] sm:$0xf]
    %v710 = vld [vmem:[%s2 + $0xb8] sm:$0xf]
    %v711 = vld [vmem:[%s2 + $0xbc] sm:$0xf]
    %v712 = vld [vmem:[%s2 + $0xc0] sm:$0xf]
    %v713 = vld [vmem:[%s2 + $0xc4] sm:$0xf]
    %v714 = vld [vmem:[%s2 + $0xc8] sm:$0xf]
    %v715 = vld [vmem:[%s2 + $0xcc] sm:$0xf]
    %v716 = vld [vmem:[%s2 + $0xd0] sm:$0xf]
    %v717 = vld [vmem:[%s2 + $0xd4] sm:$0xf]
    %v718 = vld [vmem:[%s2 + $0xd8] sm:$0xf]
    %v719 = vld [vmem:[%s2 + $0xdc] sm:$0xf]
    %v720 = vld [vmem:[%s2 + $0xe0] sm:$0xf]
    %v721 = vld [vmem:[%s2 + $0xe4] sm:$0xf]
    %v722 = vld [vmem:[%s2 + $0xe8] sm:$0xf]
    %v723 = vld [vmem:[%s2 + $0xec] sm:$0xf]
    %v724 = vld [vmem:[%s2 + $0xf0] sm:$0xf]
    %v725 = vld [vmem:[%s2 + $0xf4] sm:$0xf]
    %v726 = vld [vmem:[%s2 + $0xf8] sm:$0xf]
    %v727 = vld [vmem:[%s2 + $0xfc] sm:$0xf]
    %v728 = vld [vmem:[%s2 + $0x100] sm:$0xf]
    %v729 = vld [vmem:[%s2 + $0x104] sm:$0xf]
    %v730 = vld [vmem:[%s2 + $0x108] sm:$0xf]
    %v731 = vld [vmem:[%s2 + $0x10c] sm:$0xf]
    %v732 = vld [vmem:[%s2 + $0x110] sm:$0xf]
    %v733 = vld [vmem:[%s2 + $0x114] sm:$0xf]
    %v734 = vld [vmem:[%s2 + $0x118] sm:$0xf]
    %v735 = vld [vmem:[%s2 + $0x11c] sm:$0xf]
    %v736 = vld [vmem:[%s2 + $0x120] sm:$0xf]
    %v737 = vld [vmem:[%s2 + $0x124] sm:$0xf]
    %v738 = vld [vmem:[%s2 + $0x128] sm:$0xf]
    %v739 = vld [vmem:[%s2 + $0x12c] sm:$0xf]
    %v740 = vld [vmem:[%s2 + $0x130] sm:$0xf]
    %v741 = vld [vmem:[%s2 + $0x134] sm:$0xf]
    %v742 = vld [vmem:[%s2 + $0x138] sm:$0xf]
    %v743 = vld [vmem:[%s2 + $0x13c] sm:$0xf]
    %v744 = vld [vmem:[%s2 + $0x140] sm:$0xf]
    %v745 = vld [vmem:[%s2 + $0x144] sm:$0xf]
    %v746 = vld [vmem:[%s2 + $0x148] sm:$0xf]
    %v747 = vld [vmem:[%s2 + $0x14c] sm:$0xf]
    %v748 = vld [vmem:[%s2 + $0x150] sm:$0xf]
    %v749 = vld [vmem:[%s2 + $0x154] sm:$0xf]
    %v750 = vld [vmem:[%s2 + $0x158] sm:$0xf]
    %v751 = vld [vmem:[%s2 + $0x15c] sm:$0xf]
    %v752 = vld [vmem:[%s2 + $0x160] sm:$0xf]
    %v753 = vld [vmem:[%s2 + $0x164] sm:$0xf]
    %v754 = vld [vmem:[%s2 + $0x168] sm:$0xf]
    %v755 = vld [vmem:[%s2 + $0x16c] sm:$0xf]
    %v756 = vld [vmem:[%s2 + $0x170] sm:$0xf]
    %v757 = vld [vmem:[%s2 + $0x174] sm:$0xf]
    %v758 = vld [vmem:[%s2 + $0x178] sm:$0xf]
    %v759 = vld [vmem:[%s2 + $0x17c] sm:$0xf]
    %v760 = vld [vmem:[%s2 + $0x180] sm:$0xf]
    %v761 = vld [vmem:[%s2 + $0x184] sm:$0xf]
    %v762 = vld [vmem:[%s2 + $0x188] sm:$0xf]
    %v763 = vld [vmem:[%s2 + $0x18c] sm:$0xf]
    %v764 = vld [vmem:[%s2 + $0x190] sm:$0xf]
    %v765 = vld [vmem:[%s2 + $0x194] sm:$0xf]
    %v766 = vld [vmem:[%s2 + $0x198] sm:$0xf]
    %v767 = vld [vmem:[%s2 + $0x19c] sm:$0xf]
    %v768 = vld [vmem:[%s2 + $0x1a0] sm:$0xf]
    %v769 = vld [vmem:[%s2 + $0x1a4] sm:$0xf]
    %v770 = vld [vmem:[%s2 + $0x1a8] sm:$0xf]
    %v771 = vld [vmem:[%s2 + $0x1ac] sm:$0xf]
    %v772 = vld [vmem:[%s2 + $0x1b0] sm:$0xf]
    %v773 = vld [vmem:[%s2 + $0x1b4] sm:$0xf]
    %v774 = vld [vmem:[%s2 + $0x1b8] sm:$0xf]
    %v775 = vld [vmem:[%s2 + $0x1bc] sm:$0xf]
    %v776 = vld [vmem:[%s2 + $0x1c0] sm:$0xf]
    %v777 = vld [vmem:[%s2 + $0x1c4] sm:$0xf]
    %v778 = vld [vmem:[%s2 + $0x1c8] sm:$0xf]
    %v779 = vld [vmem:[%s2 + $0x1cc] sm:$0xf]
    %v780 = vld [vmem:[%s2 + $0x1d0] sm:$0xf]
    %v781 = vld [vmem:[%s2 + $0x1d4] sm:$0xf]
    %v782 = vld [vmem:[%s2 + $0x1d8] sm:$0xf]
    %v783 = vld [vmem:[%s2 + $0x1dc] sm:$0xf]
    %v784 = vld [vmem:[%s2 + $0x1e0] sm:$0xf]
    %v785 = vld [vmem:[%s2 + $0x1e4] sm:$0xf]
    %v786 = vld [vmem:[%s2 + $0x1e8] sm:$0xf]
    %v787 = vld [vmem:[%s2 + $0x1ec] sm:$0xf]
    %v788 = vld [vmem:[%s2 + $0x1f0] sm:$0xf]
    %v789 = vld [vmem:[%s2 + $0x1f4] sm:$0xf]
    %v790 = vld [vmem:[%s2 + $0x1f8] sm:$0xf]
    %v791 = vld [vmem:[%s2 + $0x1fc] sm:$0xf]
    %v920 = vunpack.c.l.b16 %v664
    %v921 = vunpack.c.l.b16 %v665
    %v922 = vunpack.c.l.b16 %v666
    %v923 = vunpack.c.l.b16 %v667
    %v924 = vunpack.c.l.b16 %v668
    %v925 = vunpack.c.l.b16 %v669
    %v926 = vunpack.c.l.b16 %v670
    %v927 = vunpack.c.l.b16 %v671
    %v928 = vunpack.c.l.b16 %v672
    %v929 = vunpack.c.l.b16 %v673
    %v930 = vunpack.c.l.b16 %v674
    %v931 = vunpack.c.l.b16 %v675
    %v932 = vunpack.c.l.b16 %v676
    %v933 = vunpack.c.l.b16 %v677
    %v934 = vunpack.c.l.b16 %v678
    %v935 = vunpack.c.l.b16 %v679
    %v936 = vunpack.c.l.b16 %v680
    %v937 = vunpack.c.l.b16 %v681
    %v938 = vunpack.c.l.b16 %v682
    %v939 = vunpack.c.l.b16 %v683
    %v940 = vunpack.c.l.b16 %v684
    %v941 = vunpack.c.l.b16 %v685
    %v942 = vunpack.c.l.b16 %v686
    %v943 = vunpack.c.l.b16 %v687
    %v944 = vunpack.c.l.b16 %v688
    %v945 = vunpack.c.l.b16 %v689
    %v946 = vunpack.c.l.b16 %v690
    %v947 = vunpack.c.l.b16 %v691
    %v948 = vunpack.c.l.b16 %v692
    %v949 = vunpack.c.l.b16 %v693
    %v950 = vunpack.c.l.b16 %v694
    %v951 = vunpack.c.l.b16 %v695
    %v952 = vunpack.c.l.b16 %v696
    %v953 = vunpack.c.l.b16 %v697
    %v954 = vunpack.c.l.b16 %v698
    %v955 = vunpack.c.l.b16 %v699
    %v956 = vunpack.c.l.b16 %v700
    %v957 = vunpack.c.l.b16 %v701
    %v958 = vunpack.c.l.b16 %v702
    %v959 = vunpack.c.l.b16 %v703
    %v960 = vunpack.c.l.b16 %v704
    %v961 = vunpack.c.l.b16 %v705
    %v962 = vunpack.c.l.b16 %v706
    %v963 = vunpack.c.l.b16 %v707
    %v964 = vunpack.c.l.b16 %v708
    %v965 = vunpack.c.l.b16 %v709
    %v966 = vunpack.c.l.b16 %v710
    %v967 = vunpack.c.l.b16 %v711
    %v968 = vunpack.c.l.b16 %v712
    %v969 = vunpack.c.l.b16 %v713
    %v970 = vunpack.c.l.b16 %v714
    %v971 = vunpack.c.l.b16 %v715
    %v972 = vunpack.c.l.b16 %v716
    %v973 = vunpack.c.l.b16 %v717
    %v974 = vunpack.c.l.b16 %v718
    %v975 = vunpack.c.l.b16 %v719
    %v976 = vunpack.c.l.b16 %v720
    %v977 = vunpack.c.l.b16 %v721
    %v978 = vunpack.c.l.b16 %v722
    %v979 = vunpack.c.l.b16 %v723
    %v980 = vunpack.c.l.b16 %v724
    %v981 = vunpack.c.l.b16 %v725
    %v982 = vunpack.c.l.b16 %v726
    %v983 = vunpack.c.l.b16 %v727
    %v984 = vunpack.c.l.b16 %v728
    %v985 = vunpack.c.l.b16 %v729
    %v986 = vunpack.c.l.b16 %v730
    %v987 = vunpack.c.l.b16 %v731
    %v988 = vunpack.c.l.b16 %v732
    %v989 = vunpack.c.l.b16 %v733
    %v990 = vunpack.c.l.b16 %v734
    %v991 = vunpack.c.l.b16 %v735
    %v992 = vunpack.c.l.b16 %v736
    %v993 = vunpack.c.l.b16 %v737
    %v994 = vunpack.c.l.b16 %v738
    %v995 = vunpack.c.l.b16 %v739
    %v996 = vunpack.c.l.b16 %v740
    %v997 = vunpack.c.l.b16 %v741
    %v998 = vunpack.c.l.b16 %v742
    %v999 = vunpack.c.l.b16 %v743
    %v1000 = vunpack.c.l.b16 %v744
    %v1001 = vunpack.c.l.b16 %v745
    %v1002 = vunpack.c.l.b16 %v746
    %v1003 = vunpack.c.l.b16 %v747
    %v1004 = vunpack.c.l.b16 %v748
    %v1005 = vunpack.c.l.b16 %v749
    %v1006 = vunpack.c.l.b16 %v750
    %v1007 = vunpack.c.l.b16 %v751
    %v1008 = vunpack.c.l.b16 %v752
    %v1009 = vunpack.c.l.b16 %v753
    %v1010 = vunpack.c.l.b16 %v754
    %v1011 = vunpack.c.l.b16 %v755
    %v1012 = vunpack.c.l.b16 %v756
    %v1013 = vunpack.c.l.b16 %v757
    %v1014 = vunpack.c.l.b16 %v758
    %v1015 = vunpack.c.l.b16 %v759
    %v1016 = vunpack.c.l.b16 %v760
    %v1017 = vunpack.c.l.b16 %v761
    %v1018 = vunpack.c.l.b16 %v762
    %v1019 = vunpack.c.l.b16 %v763
    %v1020 = vunpack.c.l.b16 %v764
    %v1021 = vunpack.c.l.b16 %v765
    %v1022 = vunpack.c.l.b16 %v766
    %v1023 = vunpack.c.l.b16 %v767
    %v1024 = vunpack.c.l.b16 %v768
    %v1025 = vunpack.c.l.b16 %v769
    %v1026 = vunpack.c.l.b16 %v770
    %v1027 = vunpack.c.l.b16 %v771
    %v1028 = vunpack.c.l.b16 %v772
    %v1029 = vunpack.c.l.b16 %v773
    %v1030 = vunpack.c.l.b16 %v774
    %v1031 = vunpack.c.l.b16 %v775
    %v1032 = vunpack.c.l.b16 %v776
    %v1033 = vunpack.c.l.b16 %v777
    %v1034 = vunpack.c.l.b16 %v778
    %v1035 = vunpack.c.l.b16 %v779
    %v1036 = vunpack.c.l.b16 %v780
    %v1037 = vunpack.c.l.b16 %v781
    %v1038 = vunpack.c.l.b16 %v782
    %v1039 = vunpack.c.l.b16 %v783
    %v1040 = vunpack.c.l.b16 %v784
    %v1041 = vunpack.c.l.b16 %v785
    %v1042 = vunpack.c.l.b16 %v786
    %v1043 = vunpack.c.l.b16 %v787
    %v1044 = vunpack.c.l.b16 %v788
    %v1045 = vunpack.c.l.b16 %v789
    %v1046 = vunpack.c.l.b16 %v790
    %v1047 = vunpack.c.l.b16 %v791
    %v1048 = vpack.c.b16 %v921, %v920
    %v1049 = vpack.c.b16 %v923, %v922
    %v1050 = vpack.c.b16 %v925, %v924
    %v1051 = vpack.c.b16 %v927, %v926
    %v1052 = vpack.c.b16 %v929, %v928
    %v1053 = vpack.c.b16 %v931, %v930
    %v1054 = vpack.c.b16 %v933, %v932
    %v1055 = vpack.c.b16 %v935, %v934
    %v1056 = vpack.c.b16 %v937, %v936
    %v1057 = vpack.c.b16 %v939, %v938
    %v1058 = vpack.c.b16 %v941, %v940
    %v1059 = vpack.c.b16 %v943, %v942
    %v1060 = vpack.c.b16 %v945, %v944
    %v1061 = vpack.c.b16 %v947, %v946
    %v1062 = vpack.c.b16 %v949, %v948
    %v1063 = vpack.c.b16 %v951, %v950
    %v1064 = vpack.c.b16 %v953, %v952
    %v1065 = vpack.c.b16 %v955, %v954
    %v1066 = vpack.c.b16 %v957, %v956
    %v1067 = vpack.c.b16 %v959, %v958
    %v1068 = vpack.c.b16 %v961, %v960
    %v1069 = vpack.c.b16 %v963, %v962
    %v1070 = vpack.c.b16 %v965, %v964
    %v1071 = vpack.c.b16 %v967, %v966
    %v1072 = vpack.c.b16 %v969, %v968
    %v1073 = vpack.c.b16 %v971, %v970
    %v1074 = vpack.c.b16 %v973, %v972
    %v1075 = vpack.c.b16 %v975, %v974
    %v1076 = vpack.c.b16 %v977, %v976
    %v1077 = vpack.c.b16 %v979, %v978
    %v1078 = vpack.c.b16 %v981, %v980
    %v1079 = vpack.c.b16 %v983, %v982
    %v1080 = vpack.c.b16 %v985, %v984
    %v1081 = vpack.c.b16 %v987, %v986
    %v1082 = vpack.c.b16 %v989, %v988
    %v1083 = vpack.c.b16 %v991, %v990
    %v1084 = vpack.c.b16 %v993, %v992
    %v1085 = vpack.c.b16 %v995, %v994
    %v1086 = vpack.c.b16 %v997, %v996
    %v1087 = vpack.c.b16 %v999, %v998
    %v1088 = vpack.c.b16 %v1001, %v1000
    %v1089 = vpack.c.b16 %v1003, %v1002
    %v1090 = vpack.c.b16 %v1005, %v1004
    %v1091 = vpack.c.b16 %v1007, %v1006
    %v1092 = vpack.c.b16 %v1009, %v1008
    %v1093 = vpack.c.b16 %v1011, %v1010
    %v1094 = vpack.c.b16 %v1013, %v1012
    %v1095 = vpack.c.b16 %v1015, %v1014
    %v1096 = vpack.c.b16 %v1017, %v1016
    %v1097 = vpack.c.b16 %v1019, %v1018
    %v1098 = vpack.c.b16 %v1021, %v1020
    %v1099 = vpack.c.b16 %v1023, %v1022
    %v1100 = vpack.c.b16 %v1025, %v1024
    %v1101 = vpack.c.b16 %v1027, %v1026
    %v1102 = vpack.c.b16 %v1029, %v1028
    %v1103 = vpack.c.b16 %v1031, %v1030
    %v1104 = vpack.c.b16 %v1033, %v1032
    %v1105 = vpack.c.b16 %v1035, %v1034
    %v1106 = vpack.c.b16 %v1037, %v1036
    %v1107 = vpack.c.b16 %v1039, %v1038
    %v1108 = vpack.c.b16 %v1041, %v1040
    %v1109 = vpack.c.b16 %v1043, %v1042
    %v1110 = vpack.c.b16 %v1045, %v1044
    %v1111 = vpack.c.b16 %v1047, %v1046
    %1176 = vmatprep.subr.bf16.mxu0 0
    %1177 = vmatpush1.bf16.msra.mxu0 %v1055
    %1178 = vmatprep.subr.bf16.mxu0 0
    %1179 = vmatpush1.bf16.msra.mxu0 %v1054
    %1180 = vmatprep.subr.bf16.mxu0 0
    %1181 = vmatpush1.bf16.msra.mxu0 %v1053
    %1182 = vmatprep.subr.bf16.mxu0 0
    %1183 = vmatpush1.bf16.msra.mxu0 %v1052
    %1184 = vmatprep.subr.bf16.mxu0 0
    %1185 = vmatpush1.bf16.msra.mxu0 %v1051
    %1186 = vmatprep.subr.bf16.mxu0 0
    %1187 = vmatpush1.bf16.msra.mxu0 %v1050
    %1188 = vmatprep.subr.bf16.mxu0 0
    %1189 = vmatpush1.bf16.msra.mxu0 %v1049
    %1190 = vmatprep.subr.bf16.mxu0 0
    %1191 = vmatpush1.bf16.msra.mxu0 %v1048
    %1192 = vmatprep.subr.bf16.mxu0 0
    %1193 = vmatpush2.bf16.msra.mxu0 %v1063
    %1194 = vmatprep.subr.bf16.mxu0 0
    %1195 = vmatpush2.bf16.msra.mxu0 %v1062
    %1196 = vmatprep.subr.bf16.mxu0 0
    %1197 = vmatpush2.bf16.msra.mxu0 %v1061
    %1198 = vmatprep.subr.bf16.mxu0 0
    %1199 = vmatpush2.bf16.msra.mxu0 %v1060
    %1200 = vmatprep.subr.bf16.mxu0 0
    %1201 = vmatpush2.bf16.msra.mxu0 %v1059
    %1202 = vmatprep.subr.bf16.mxu0 0
    %1203 = vmatpush2.bf16.msra.mxu0 %v1058
    %1204 = vmatprep.subr.bf16.mxu0 0
    %1205 = vmatpush2.bf16.msra.mxu0 %v1057
    %1206 = vmatprep.subr.bf16.mxu0 0
    %1207 = vmatpush2.bf16.msra.mxu0 %v1056
    %1208 = vmatprep.mubr.bf16.mxu0 %v656
    %1209 = vmatmul.mubr.bf16.gmra.mxu0 %v655
    %v1210 = vpop.f32.mrf.mxu0
    %v1211 = vadd.f32 0.0, %v1210
    %v1212 = vpop.f32.mrf.mxu0
    %v1213 = vpop.f32.mrf.mxu0
    %v1214 = vpop.f32.mrf.mxu0
    %1215 = vdwg.mxu0
    %1216 = vmatprep.subr.bf16.mxu0 0
    %1217 = vmatpush1.bf16.msra.mxu0 %v1071
    %1218 = vmatprep.subr.bf16.mxu0 0
    %1219 = vmatpush1.bf16.msra.mxu0 %v1070
    %1220 = vmatprep.subr.bf16.mxu0 0
    %1221 = vmatpush1.bf16.msra.mxu0 %v1069
    %1222 = vmatprep.subr.bf16.mxu0 0
    %1223 = vmatpush1.bf16.msra.mxu0 %v1068
    %1224 = vmatprep.subr.bf16.mxu0 0
    %1225 = vmatpush1.bf16.msra.mxu0 %v1067
    %1226 = vmatprep.subr.bf16.mxu0 0
    %1227 = vmatpush1.bf16.msra.mxu0 %v1066
    %1228 = vmatprep.subr.bf16.mxu0 0
    %1229 = vmatpush1.bf16.msra.mxu0 %v1065
    %1230 = vmatprep.subr.bf16.mxu0 0
    %1231 = vmatpush1.bf16.msra.mxu0 %v1064
    %1232 = vmatprep.subr.bf16.mxu0 0
    %1233 = vmatpush2.bf16.msra.mxu0 %v1079
    %1234 = vmatprep.subr.bf16.mxu0 0
    %1235 = vmatpush2.bf16.msra.mxu0 %v1078
    %1236 = vmatprep.subr.bf16.mxu0 0
    %1237 = vmatpush2.bf16.msra.mxu0 %v1077
    %1238 = vmatprep.subr.bf16.mxu0 0
    %1239 = vmatpush2.bf16.msra.mxu0 %v1076
    %1240 = vmatprep.subr.bf16.mxu0 0
    %1241 = vmatpush2.bf16.msra.mxu0 %v1075
    %1242 = vmatprep.subr.bf16.mxu0 0
    %1243 = vmatpush2.bf16.msra.mxu0 %v1074
    %1244 = vmatprep.subr.bf16.mxu0 0
    %1245 = vmatpush2.bf16.msra.mxu0 %v1073
    %1246 = vmatprep.subr.bf16.mxu0 0
    %1247 = vmatpush2.bf16.msra.mxu0 %v1072
    %1248 = vmatprep.mubr.bf16.mxu0 %v658
    %1249 = vmatmul.mubr.bf16.gmra.mxu0 %v657
    %v1250 = vpop.f32.mrf.mxu0
    %v1251 = vadd.f32 %v1211, %v1250
    %v1252 = vpop.f32.mrf.mxu0
    %v1253 = vpop.f32.mrf.mxu0
    %v1254 = vpop.f32.mrf.mxu0
    %1255 = vdwg.mxu0
    %1256 = vmatprep.subr.bf16.mxu0 0
    %1257 = vmatpush1.bf16.msra.mxu0 %v1087
    %1258 = vmatprep.subr.bf16.mxu0 0
    %1259 = vmatpush1.bf16.msra.mxu0 %v1086
    %1260 = vmatprep.subr.bf16.mxu0 0
    %1261 = vmatpush1.bf16.msra.mxu0 %v1085
    %1262 = vmatprep.subr.bf16.mxu0 0
    %1263 = vmatpush1.bf16.msra.mxu0 %v1084
    %1264 = vmatprep.subr.bf16.mxu0 0
    %1265 = vmatpush1.bf16.msra.mxu0 %v1083
    %1266 = vmatprep.subr.bf16.mxu0 0
    %1267 = vmatpush1.bf16.msra.mxu0 %v1082
    %1268 = vmatprep.subr.bf16.mxu0 0
    %1269 = vmatpush1.bf16.msra.mxu0 %v1081
    %1270 = vmatprep.subr.bf16.mxu0 0
    %1271 = vmatpush1.bf16.msra.mxu0 %v1080
    %1272 = vmatprep.subr.bf16.mxu0 0
    %1273 = vmatpush2.bf16.msra.mxu0 %v1095
    %1274 = vmatprep.subr.bf16.mxu0 0
    %1275 = vmatpush2.bf16.msra.mxu0 %v1094
    %1276 = vmatprep.subr.bf16.mxu0 0
    %1277 = vmatpush2.bf16.msra.mxu0 %v1093
    %1278 = vmatprep.subr.bf16.mxu0 0
    %1279 = vmatpush2.bf16.msra.mxu0 %v1092
    %1280 = vmatprep.subr.bf16.mxu0 0
    %1281 = vmatpush2.bf16.msra.mxu0 %v1091
    %1282 = vmatprep.subr.bf16.mxu0 0
    %1283 = vmatpush2.bf16.msra.mxu0 %v1090
    %1284 = vmatprep.subr.bf16.mxu0 0
    %1285 = vmatpush2.bf16.msra.mxu0 %v1089
    %1286 = vmatprep.subr.bf16.mxu0 0
    %1287 = vmatpush2.bf16.msra.mxu0 %v1088
    %1288 = vmatprep.mubr.bf16.mxu0 %v660
    %1289 = vmatmul.mubr.bf16.gmra.mxu0 %v659
    %v1290 = vpop.f32.mrf.mxu0
    %v1291 = vadd.f32 %v1251, %v1290
    %v1292 = vpop.f32.mrf.mxu0
    %v1293 = vpop.f32.mrf.mxu0
    %v1294 = vpop.f32.mrf.mxu0
    %1295 = vdwg.mxu0
    %1296 = vmatprep.subr.bf16.mxu0 0
    %1297 = vmatpush1.bf16.msra.mxu0 %v1103
    %1298 = vmatprep.subr.bf16.mxu0 0
    %1299 = vmatpush1.bf16.msra.mxu0 %v1102
    %1300 = vmatprep.subr.bf16.mxu0 0
    %1301 = vmatpush1.bf16.msra.mxu0 %v1101
    %1302 = vmatprep.subr.bf16.mxu0 0
    %1303 = vmatpush1.bf16.msra.mxu0 %v1100
    %1304 = vmatprep.subr.bf16.mxu0 0
    %1305 = vmatpush1.bf16.msra.mxu0 %v1099
    %1306 = vmatprep.subr.bf16.mxu0 0
    %1307 = vmatpush1.bf16.msra.mxu0 %v1098
    %1308 = vmatprep.subr.bf16.mxu0 0
    %1309 = vmatpush1.bf16.msra.mxu0 %v1097
    %1310 = vmatprep.subr.bf16.mxu0 0
    %1311 = vmatpush1.bf16.msra.mxu0 %v1096
    %1312 = vmatprep.subr.bf16.mxu0 0
    %1313 = vmatpush2.bf16.msra.mxu0 %v1111
    %1314 = vmatprep.subr.bf16.mxu0 0
    %1315 = vmatpush2.bf16.msra.mxu0 %v1110
    %1316 = vmatprep.subr.bf16.mxu0 0
    %1317 = vmatpush2.bf16.msra.mxu0 %v1109
    %1318 = vmatprep.subr.bf16.mxu0 0
    %1319 = vmatpush2.bf16.msra.mxu0 %v1108
    %1320 = vmatprep.subr.bf16.mxu0 0
    %1321 = vmatpush2.bf16.msra.mxu0 %v1107
    %1322 = vmatprep.subr.bf16.mxu0 0
    %1323 = vmatpush2.bf16.msra.mxu0 %v1106
    %1324 = vmatprep.subr.bf16.mxu0 0
    %1325 = vmatpush2.bf16.msra.mxu0 %v1105
    %1326 = vmatprep.subr.bf16.mxu0 0
    %1327 = vmatpush2.bf16.msra.mxu0 %v1104
    %1328 = vmatprep.mubr.bf16.mxu0 %v662
    %1329 = vmatmul.mubr.bf16.gmra.mxu0 %v661
    %v1330 = vpop.f32.mrf.mxu0
    %v1331 = vadd.f32 %v1291, %v1330
    %v1332 = vpop.f32.mrf.mxu0
    %v1333 = vpop.f32.mrf.mxu0
    %v1334 = vpop.f32.mrf.mxu0
    %1335 = vdwg.mxu0
    %v1336 = vadd.f32 %v663, %v1331
    %s1337 = scalar_lea.vmem %s2, 512
    %v1338 = vld [vmem:[%s1337] sm:$0xf]
    %v1339 = vld [vmem:[%s1337 + $0x4] sm:$0xf]
    %v1340 = vld [vmem:[%s1337 + $0x8] sm:$0xf]
    %v1341 = vld [vmem:[%s1337 + $0xc] sm:$0xf]
    %v1342 = vld [vmem:[%s1337 + $0x10] sm:$0xf]
    %v1343 = vld [vmem:[%s1337 + $0x14] sm:$0xf]
    %v1344 = vld [vmem:[%s1337 + $0x18] sm:$0xf]
    %v1345 = vld [vmem:[%s1337 + $0x1c] sm:$0xf]
    %v1346 = vld [vmem:[%s1337 + $0x20] sm:$0xf]
    %v1347 = vld [vmem:[%s1337 + $0x24] sm:$0xf]
    %v1348 = vld [vmem:[%s1337 + $0x28] sm:$0xf]
    %v1349 = vld [vmem:[%s1337 + $0x2c] sm:$0xf]
    %v1350 = vld [vmem:[%s1337 + $0x30] sm:$0xf]
    %v1351 = vld [vmem:[%s1337 + $0x34] sm:$0xf]
    %v1352 = vld [vmem:[%s1337 + $0x38] sm:$0xf]
    %v1353 = vld [vmem:[%s1337 + $0x3c] sm:$0xf]
    %v1354 = vld [vmem:[%s1337 + $0x40] sm:$0xf]
    %v1355 = vld [vmem:[%s1337 + $0x44] sm:$0xf]
    %v1356 = vld [vmem:[%s1337 + $0x48] sm:$0xf]
    %v1357 = vld [vmem:[%s1337 + $0x4c] sm:$0xf]
    %v1358 = vld [vmem:[%s1337 + $0x50] sm:$0xf]
    %v1359 = vld [vmem:[%s1337 + $0x54] sm:$0xf]
    %v1360 = vld [vmem:[%s1337 + $0x58] sm:$0xf]
    %v1361 = vld [vmem:[%s1337 + $0x5c] sm:$0xf]
    %v1362 = vld [vmem:[%s1337 + $0x60] sm:$0xf]
    %v1363 = vld [vmem:[%s1337 + $0x64] sm:$0xf]
    %v1364 = vld [vmem:[%s1337 + $0x68] sm:$0xf]
    %v1365 = vld [vmem:[%s1337 + $0x6c] sm:$0xf]
    %v1366 = vld [vmem:[%s1337 + $0x70] sm:$0xf]
    %v1367 = vld [vmem:[%s1337 + $0x74] sm:$0xf]
    %v1368 = vld [vmem:[%s1337 + $0x78] sm:$0xf]
    %v1369 = vld [vmem:[%s1337 + $0x7c] sm:$0xf]
    %v1370 = vld [vmem:[%s1337 + $0x80] sm:$0xf]
    %v1371 = vld [vmem:[%s1337 + $0x84] sm:$0xf]
    %v1372 = vld [vmem:[%s1337 + $0x88] sm:$0xf]
    %v1373 = vld [vmem:[%s1337 + $0x8c] sm:$0xf]
    %v1374 = vld [vmem:[%s1337 + $0x90] sm:$0xf]
    %v1375 = vld [vmem:[%s1337 + $0x94] sm:$0xf]
    %v1376 = vld [vmem:[%s1337 + $0x98] sm:$0xf]
    %v1377 = vld [vmem:[%s1337 + $0x9c] sm:$0xf]
    %v1378 = vld [vmem:[%s1337 + $0xa0] sm:$0xf]
    %v1379 = vld [vmem:[%s1337 + $0xa4] sm:$0xf]
    %v1380 = vld [vmem:[%s1337 + $0xa8] sm:$0xf]
    %v1381 = vld [vmem:[%s1337 + $0xac] sm:$0xf]
    %v1382 = vld [vmem:[%s1337 + $0xb0] sm:$0xf]
    %v1383 = vld [vmem:[%s1337 + $0xb4] sm:$0xf]
    %v1384 = vld [vmem:[%s1337 + $0xb8] sm:$0xf]
    %v1385 = vld [vmem:[%s1337 + $0xbc] sm:$0xf]
    %v1386 = vld [vmem:[%s1337 + $0xc0] sm:$0xf]
    %v1387 = vld [vmem:[%s1337 + $0xc4] sm:$0xf]
    %v1388 = vld [vmem:[%s1337 + $0xc8] sm:$0xf]
    %v1389 = vld [vmem:[%s1337 + $0xcc] sm:$0xf]
    %v1390 = vld [vmem:[%s1337 + $0xd0] sm:$0xf]
    %v1391 = vld [vmem:[%s1337 + $0xd4] sm:$0xf]
    %v1392 = vld [vmem:[%s1337 + $0xd8] sm:$0xf]
    %v1393 = vld [vmem:[%s1337 + $0xdc] sm:$0xf]
    %v1394 = vld [vmem:[%s1337 + $0xe0] sm:$0xf]
    %v1395 = vld [vmem:[%s1337 + $0xe4] sm:$0xf]
    %v1396 = vld [vmem:[%s1337 + $0xe8] sm:$0xf]
    %v1397 = vld [vmem:[%s1337 + $0xec] sm:$0xf]
    %v1398 = vld [vmem:[%s1337 + $0xf0] sm:$0xf]
    %v1399 = vld [vmem:[%s1337 + $0xf4] sm:$0xf]
    %v1400 = vld [vmem:[%s1337 + $0xf8] sm:$0xf]
    %v1401 = vld [vmem:[%s1337 + $0xfc] sm:$0xf]
    %v1402 = vld [vmem:[%s1337 + $0x100] sm:$0xf]
    %v1403 = vld [vmem:[%s1337 + $0x104] sm:$0xf]
    %v1404 = vld [vmem:[%s1337 + $0x108] sm:$0xf]
    %v1405 = vld [vmem:[%s1337 + $0x10c] sm:$0xf]
    %v1406 = vld [vmem:[%s1337 + $0x110] sm:$0xf]
    %v1407 = vld [vmem:[%s1337 + $0x114] sm:$0xf]
    %v1408 = vld [vmem:[%s1337 + $0x118] sm:$0xf]
    %v1409 = vld [vmem:[%s1337 + $0x11c] sm:$0xf]
    %v1410 = vld [vmem:[%s1337 + $0x120] sm:$0xf]
    %v1411 = vld [vmem:[%s1337 + $0x124] sm:$0xf]
    %v1412 = vld [vmem:[%s1337 + $0x128] sm:$0xf]
    %v1413 = vld [vmem:[%s1337 + $0x12c] sm:$0xf]
    %v1414 = vld [vmem:[%s1337 + $0x130] sm:$0xf]
    %v1415 = vld [vmem:[%s1337 + $0x134] sm:$0xf]
    %v1416 = vld [vmem:[%s1337 + $0x138] sm:$0xf]
    %v1417 = vld [vmem:[%s1337 + $0x13c] sm:$0xf]
    %v1418 = vld [vmem:[%s1337 + $0x140] sm:$0xf]
    %v1419 = vld [vmem:[%s1337 + $0x144] sm:$0xf]
    %v1420 = vld [vmem:[%s1337 + $0x148] sm:$0xf]
    %v1421 = vld [vmem:[%s1337 + $0x14c] sm:$0xf]
    %v1422 = vld [vmem:[%s1337 + $0x150] sm:$0xf]
    %v1423 = vld [vmem:[%s1337 + $0x154] sm:$0xf]
    %v1424 = vld [vmem:[%s1337 + $0x158] sm:$0xf]
    %v1425 = vld [vmem:[%s1337 + $0x15c] sm:$0xf]
    %v1426 = vld [vmem:[%s1337 + $0x160] sm:$0xf]
    %v1427 = vld [vmem:[%s1337 + $0x164] sm:$0xf]
    %v1428 = vld [vmem:[%s1337 + $0x168] sm:$0xf]
    %v1429 = vld [vmem:[%s1337 + $0x16c] sm:$0xf]
    %v1430 = vld [vmem:[%s1337 + $0x170] sm:$0xf]
    %v1431 = vld [vmem:[%s1337 + $0x174] sm:$0xf]
    %v1432 = vld [vmem:[%s1337 + $0x178] sm:$0xf]
    %v1433 = vld [vmem:[%s1337 + $0x17c] sm:$0xf]
    %v1434 = vld [vmem:[%s1337 + $0x180] sm:$0xf]
    %v1435 = vld [vmem:[%s1337 + $0x184] sm:$0xf]
    %v1436 = vld [vmem:[%s1337 + $0x188] sm:$0xf]
    %v1437 = vld [vmem:[%s1337 + $0x18c] sm:$0xf]
    %v1438 = vld [vmem:[%s1337 + $0x190] sm:$0xf]
    %v1439 = vld [vmem:[%s1337 + $0x194] sm:$0xf]
    %v1440 = vld [vmem:[%s1337 + $0x198] sm:$0xf]
    %v1441 = vld [vmem:[%s1337 + $0x19c] sm:$0xf]
    %v1442 = vld [vmem:[%s1337 + $0x1a0] sm:$0xf]
    %v1443 = vld [vmem:[%s1337 + $0x1a4] sm:$0xf]
    %v1444 = vld [vmem:[%s1337 + $0x1a8] sm:$0xf]
    %v1445 = vld [vmem:[%s1337 + $0x1ac] sm:$0xf]
    %v1446 = vld [vmem:[%s1337 + $0x1b0] sm:$0xf]
    %v1447 = vld [vmem:[%s1337 + $0x1b4] sm:$0xf]
    %v1448 = vld [vmem:[%s1337 + $0x1b8] sm:$0xf]
    %v1449 = vld [vmem:[%s1337 + $0x1bc] sm:$0xf]
    %v1450 = vld [vmem:[%s1337 + $0x1c0] sm:$0xf]
    %v1451 = vld [vmem:[%s1337 + $0x1c4] sm:$0xf]
    %v1452 = vld [vmem:[%s1337 + $0x1c8] sm:$0xf]
    %v1453 = vld [vmem:[%s1337 + $0x1cc] sm:$0xf]
    %v1454 = vld [vmem:[%s1337 + $0x1d0] sm:$0xf]
    %v1455 = vld [vmem:[%s1337 + $0x1d4] sm:$0xf]
    %v1456 = vld [vmem:[%s1337 + $0x1d8] sm:$0xf]
    %v1457 = vld [vmem:[%s1337 + $0x1dc] sm:$0xf]
    %v1458 = vld [vmem:[%s1337 + $0x1e0] sm:$0xf]
    %v1459 = vld [vmem:[%s1337 + $0x1e4] sm:$0xf]
    %v1460 = vld [vmem:[%s1337 + $0x1e8] sm:$0xf]
    %v1461 = vld [vmem:[%s1337 + $0x1ec] sm:$0xf]
    %v1462 = vld [vmem:[%s1337 + $0x1f0] sm:$0xf]
    %v1463 = vld [vmem:[%s1337 + $0x1f4] sm:$0xf]
    %v1464 = vld [vmem:[%s1337 + $0x1f8] sm:$0xf]
    %v1465 = vld [vmem:[%s1337 + $0x1fc] sm:$0xf]
    %v1467 = vshrl.u32 %v655, 16
    %v1470 = vshrl.u32 %v656, 16
    %v1473 = vshrl.u32 %v657, 16
    %v1476 = vshrl.u32 %v658, 16
    %v1479 = vshrl.u32 %v659, 16
    %v1482 = vshrl.u32 %v660, 16
    %v1485 = vshrl.u32 %v661, 16
    %v1488 = vshrl.u32 %v662, 16
    %v1626 = vunpack.c.l.b16 %v1338
    %v1627 = vunpack.c.l.b16 %v1339
    %v1628 = vunpack.c.l.b16 %v1340
    %v1629 = vunpack.c.l.b16 %v1341
    %v1630 = vunpack.c.l.b16 %v1342
    %v1631 = vunpack.c.l.b16 %v1343
    %v1632 = vunpack.c.l.b16 %v1344
    %v1633 = vunpack.c.l.b16 %v1345
    %v1634 = vunpack.c.l.b16 %v1346
    %v1635 = vunpack.c.l.b16 %v1347
    %v1636 = vunpack.c.l.b16 %v1348
    %v1637 = vunpack.c.l.b16 %v1349
    %v1638 = vunpack.c.l.b16 %v1350
    %v1639 = vunpack.c.l.b16 %v1351
    %v1640 = vunpack.c.l.b16 %v1352
    %v1641 = vunpack.c.l.b16 %v1353
    %v1642 = vunpack.c.l.b16 %v1354
    %v1643 = vunpack.c.l.b16 %v1355
    %v1644 = vunpack.c.l.b16 %v1356
    %v1645 = vunpack.c.l.b16 %v1357
    %v1646 = vunpack.c.l.b16 %v1358
    %v1647 = vunpack.c.l.b16 %v1359
    %v1648 = vunpack.c.l.b16 %v1360
    %v1649 = vunpack.c.l.b16 %v1361
    %v1650 = vunpack.c.l.b16 %v1362
    %v1651 = vunpack.c.l.b16 %v1363
    %v1652 = vunpack.c.l.b16 %v1364
    %v1653 = vunpack.c.l.b16 %v1365
    %v1654 = vunpack.c.l.b16 %v1366
    %v1655 = vunpack.c.l.b16 %v1367
    %v1656 = vunpack.c.l.b16 %v1368
    %v1657 = vunpack.c.l.b16 %v1369
    %v1658 = vunpack.c.l.b16 %v1370
    %v1659 = vunpack.c.l.b16 %v1371
    %v1660 = vunpack.c.l.b16 %v1372
    %v1661 = vunpack.c.l.b16 %v1373
    %v1662 = vunpack.c.l.b16 %v1374
    %v1663 = vunpack.c.l.b16 %v1375
    %v1664 = vunpack.c.l.b16 %v1376
    %v1665 = vunpack.c.l.b16 %v1377
    %v1666 = vunpack.c.l.b16 %v1378
    %v1667 = vunpack.c.l.b16 %v1379
    %v1668 = vunpack.c.l.b16 %v1380
    %v1669 = vunpack.c.l.b16 %v1381
    %v1670 = vunpack.c.l.b16 %v1382
    %v1671 = vunpack.c.l.b16 %v1383
    %v1672 = vunpack.c.l.b16 %v1384
    %v1673 = vunpack.c.l.b16 %v1385
    %v1674 = vunpack.c.l.b16 %v1386
    %v1675 = vunpack.c.l.b16 %v1387
    %v1676 = vunpack.c.l.b16 %v1388
    %v1677 = vunpack.c.l.b16 %v1389
    %v1678 = vunpack.c.l.b16 %v1390
    %v1679 = vunpack.c.l.b16 %v1391
    %v1680 = vunpack.c.l.b16 %v1392
    %v1681 = vunpack.c.l.b16 %v1393
    %v1682 = vunpack.c.l.b16 %v1394
    %v1683 = vunpack.c.l.b16 %v1395
    %v1684 = vunpack.c.l.b16 %v1396
    %v1685 = vunpack.c.l.b16 %v1397
    %v1686 = vunpack.c.l.b16 %v1398
    %v1687 = vunpack.c.l.b16 %v1399
    %v1688 = vunpack.c.l.b16 %v1400
    %v1689 = vunpack.c.l.b16 %v1401
    %v1690 = vunpack.c.l.b16 %v1402
    %v1691 = vunpack.c.l.b16 %v1403
    %v1692 = vunpack.c.l.b16 %v1404
    %v1693 = vunpack.c.l.b16 %v1405
    %v1694 = vunpack.c.l.b16 %v1406
    %v1695 = vunpack.c.l.b16 %v1407
    %v1696 = vunpack.c.l.b16 %v1408
    %v1697 = vunpack.c.l.b16 %v1409
    %v1698 = vunpack.c.l.b16 %v1410
    %v1699 = vunpack.c.l.b16 %v1411
    %v1700 = vunpack.c.l.b16 %v1412
    %v1701 = vunpack.c.l.b16 %v1413
    %v1702 = vunpack.c.l.b16 %v1414
    %v1703 = vunpack.c.l.b16 %v1415
    %v1704 = vunpack.c.l.b16 %v1416
    %v1705 = vunpack.c.l.b16 %v1417
    %v1706 = vunpack.c.l.b16 %v1418
    %v1707 = vunpack.c.l.b16 %v1419
    %v1708 = vunpack.c.l.b16 %v1420
    %v1709 = vunpack.c.l.b16 %v1421
    %v1710 = vunpack.c.l.b16 %v1422
    %v1711 = vunpack.c.l.b16 %v1423
    %v1712 = vunpack.c.l.b16 %v1424
    %v1713 = vunpack.c.l.b16 %v1425
    %v1714 = vunpack.c.l.b16 %v1426
    %v1715 = vunpack.c.l.b16 %v1427
    %v1716 = vunpack.c.l.b16 %v1428
    %v1717 = vunpack.c.l.b16 %v1429
    %v1718 = vunpack.c.l.b16 %v1430
    %v1719 = vunpack.c.l.b16 %v1431
    %v1720 = vunpack.c.l.b16 %v1432
    %v1721 = vunpack.c.l.b16 %v1433
    %v1722 = vunpack.c.l.b16 %v1434
    %v1723 = vunpack.c.l.b16 %v1435
    %v1724 = vunpack.c.l.b16 %v1436
    %v1725 = vunpack.c.l.b16 %v1437
    %v1726 = vunpack.c.l.b16 %v1438
    %v1727 = vunpack.c.l.b16 %v1439
    %v1728 = vunpack.c.l.b16 %v1440
    %v1729 = vunpack.c.l.b16 %v1441
    %v1730 = vunpack.c.l.b16 %v1442
    %v1731 = vunpack.c.l.b16 %v1443
    %v1732 = vunpack.c.l.b16 %v1444
    %v1733 = vunpack.c.l.b16 %v1445
    %v1734 = vunpack.c.l.b16 %v1446
    %v1735 = vunpack.c.l.b16 %v1447
    %v1736 = vunpack.c.l.b16 %v1448
    %v1737 = vunpack.c.l.b16 %v1449
    %v1738 = vunpack.c.l.b16 %v1450
    %v1739 = vunpack.c.l.b16 %v1451
    %v1740 = vunpack.c.l.b16 %v1452
    %v1741 = vunpack.c.l.b16 %v1453
    %v1742 = vunpack.c.l.b16 %v1454
    %v1743 = vunpack.c.l.b16 %v1455
    %v1744 = vunpack.c.l.b16 %v1456
    %v1745 = vunpack.c.l.b16 %v1457
    %v1746 = vunpack.c.l.b16 %v1458
    %v1747 = vunpack.c.l.b16 %v1459
    %v1748 = vunpack.c.l.b16 %v1460
    %v1749 = vunpack.c.l.b16 %v1461
    %v1750 = vunpack.c.l.b16 %v1462
    %v1751 = vunpack.c.l.b16 %v1463
    %v1752 = vunpack.c.l.b16 %v1464
    %v1753 = vunpack.c.l.b16 %v1465
    %v1754 = vpack.c.b16 %v1627, %v1626
    %v1755 = vpack.c.b16 %v1629, %v1628
    %v1756 = vpack.c.b16 %v1631, %v1630
    %v1757 = vpack.c.b16 %v1633, %v1632
    %v1758 = vpack.c.b16 %v1635, %v1634
    %v1759 = vpack.c.b16 %v1637, %v1636
    %v1760 = vpack.c.b16 %v1639, %v1638
    %v1761 = vpack.c.b16 %v1641, %v1640
    %v1762 = vpack.c.b16 %v1643, %v1642
    %v1763 = vpack.c.b16 %v1645, %v1644
    %v1764 = vpack.c.b16 %v1647, %v1646
    %v1765 = vpack.c.b16 %v1649, %v1648
    %v1766 = vpack.c.b16 %v1651, %v1650
    %v1767 = vpack.c.b16 %v1653, %v1652
    %v1768 = vpack.c.b16 %v1655, %v1654
    %v1769 = vpack.c.b16 %v1657, %v1656
    %v1770 = vpack.c.b16 %v1659, %v1658
    %v1771 = vpack.c.b16 %v1661, %v1660
    %v1772 = vpack.c.b16 %v1663, %v1662
    %v1773 = vpack.c.b16 %v1665, %v1664
    %v1774 = vpack.c.b16 %v1667, %v1666
    %v1775 = vpack.c.b16 %v1669, %v1668
    %v1776 = vpack.c.b16 %v1671, %v1670
    %v1777 = vpack.c.b16 %v1673, %v1672
    %v1778 = vpack.c.b16 %v1675, %v1674
    %v1779 = vpack.c.b16 %v1677, %v1676
    %v1780 = vpack.c.b16 %v1679, %v1678
    %v1781 = vpack.c.b16 %v1681, %v1680
    %v1782 = vpack.c.b16 %v1683, %v1682
    %v1783 = vpack.c.b16 %v1685, %v1684
    %v1784 = vpack.c.b16 %v1687, %v1686
    %v1785 = vpack.c.b16 %v1689, %v1688
    %v1786 = vpack.c.b16 %v1691, %v1690
    %v1787 = vpack.c.b16 %v1693, %v1692
    %v1788 = vpack.c.b16 %v1695, %v1694
    %v1789 = vpack.c.b16 %v1697, %v1696
    %v1790 = vpack.c.b16 %v1699, %v1698
    %v1791 = vpack.c.b16 %v1701, %v1700
    %v1792 = vpack.c.b16 %v1703, %v1702
    %v1793 = vpack.c.b16 %v1705, %v1704
    %v1794 = vpack.c.b16 %v1707, %v1706
    %v1795 = vpack.c.b16 %v1709, %v1708
    %v1796 = vpack.c.b16 %v1711, %v1710
    %v1797 = vpack.c.b16 %v1713, %v1712
    %v1798 = vpack.c.b16 %v1715, %v1714
    %v1799 = vpack.c.b16 %v1717, %v1716
    %v1800 = vpack.c.b16 %v1719, %v1718
    %v1801 = vpack.c.b16 %v1721, %v1720
    %v1802 = vpack.c.b16 %v1723, %v1722
    %v1803 = vpack.c.b16 %v1725, %v1724
    %v1804 = vpack.c.b16 %v1727, %v1726
    %v1805 = vpack.c.b16 %v1729, %v1728
    %v1806 = vpack.c.b16 %v1731, %v1730
    %v1807 = vpack.c.b16 %v1733, %v1732
    %v1808 = vpack.c.b16 %v1735, %v1734
    %v1809 = vpack.c.b16 %v1737, %v1736
    %v1810 = vpack.c.b16 %v1739, %v1738
    %v1811 = vpack.c.b16 %v1741, %v1740
    %v1812 = vpack.c.b16 %v1743, %v1742
    %v1813 = vpack.c.b16 %v1745, %v1744
    %v1814 = vpack.c.b16 %v1747, %v1746
    %v1815 = vpack.c.b16 %v1749, %v1748
    %v1816 = vpack.c.b16 %v1751, %v1750
    %v1817 = vpack.c.b16 %v1753, %v1752
    %1882 = vmatprep.subr.bf16.mxu0 0
    %1883 = vmatpush1.bf16.msra.mxu0 %v1761
    %1884 = vmatprep.subr.bf16.mxu0 0
    %1885 = vmatpush1.bf16.msra.mxu0 %v1760
    %1886 = vmatprep.subr.bf16.mxu0 0
    %1887 = vmatpush1.bf16.msra.mxu0 %v1759
    %1888 = vmatprep.subr.bf16.mxu0 0
    %1889 = vmatpush1.bf16.msra.mxu0 %v1758
    %1890 = vmatprep.subr.bf16.mxu0 0
    %1891 = vmatpush1.bf16.msra.mxu0 %v1757
    %1892 = vmatprep.subr.bf16.mxu0 0
    %1893 = vmatpush1.bf16.msra.mxu0 %v1756
    %1894 = vmatprep.subr.bf16.mxu0 0
    %1895 = vmatpush1.bf16.msra.mxu0 %v1755
    %1896 = vmatprep.subr.bf16.mxu0 0
    %1897 = vmatpush1.bf16.msra.mxu0 %v1754
    %1898 = vmatprep.subr.bf16.mxu0 0
    %1899 = vmatpush2.bf16.msra.mxu0 %v1769
    %1900 = vmatprep.subr.bf16.mxu0 0
    %1901 = vmatpush2.bf16.msra.mxu0 %v1768
    %1902 = vmatprep.subr.bf16.mxu0 0
    %1903 = vmatpush2.bf16.msra.mxu0 %v1767
    %1904 = vmatprep.subr.bf16.mxu0 0
    %1905 = vmatpush2.bf16.msra.mxu0 %v1766
    %1906 = vmatprep.subr.bf16.mxu0 0
    %1907 = vmatpush2.bf16.msra.mxu0 %v1765
    %1908 = vmatprep.subr.bf16.mxu0 0
    %1909 = vmatpush2.bf16.msra.mxu0 %v1764
    %1910 = vmatprep.subr.bf16.mxu0 0
    %1911 = vmatpush2.bf16.msra.mxu0 %v1763
    %1912 = vmatprep.subr.bf16.mxu0 0
    %1913 = vmatpush2.bf16.msra.mxu0 %v1762
    %1914 = vmatprep.mubr.bf16.mxu0 %v1470
    %1915 = vmatmul.mubr.bf16.gmra.mxu0 %v1467
    %v1916 = vpop.f32.mrf.mxu0
    %v1917 = vadd.f32 0.0, %v1916
    %v1918 = vpop.f32.mrf.mxu0
    %v1919 = vpop.f32.mrf.mxu0
    %v1920 = vpop.f32.mrf.mxu0
    %1921 = vdwg.mxu0
    %1922 = vmatprep.subr.bf16.mxu0 0
    %1923 = vmatpush1.bf16.msra.mxu0 %v1777
    %1924 = vmatprep.subr.bf16.mxu0 0
    %1925 = vmatpush1.bf16.msra.mxu0 %v1776
    %1926 = vmatprep.subr.bf16.mxu0 0
    %1927 = vmatpush1.bf16.msra.mxu0 %v1775
    %1928 = vmatprep.subr.bf16.mxu0 0
    %1929 = vmatpush1.bf16.msra.mxu0 %v1774
    %1930 = vmatprep.subr.bf16.mxu0 0
    %1931 = vmatpush1.bf16.msra.mxu0 %v1773
    %1932 = vmatprep.subr.bf16.mxu0 0
    %1933 = vmatpush1.bf16.msra.mxu0 %v1772
    %1934 = vmatprep.subr.bf16.mxu0 0
    %1935 = vmatpush1.bf16.msra.mxu0 %v1771
    %1936 = vmatprep.subr.bf16.mxu0 0
    %1937 = vmatpush1.bf16.msra.mxu0 %v1770
    %1938 = vmatprep.subr.bf16.mxu0 0
    %1939 = vmatpush2.bf16.msra.mxu0 %v1785
    %1940 = vmatprep.subr.bf16.mxu0 0
    %1941 = vmatpush2.bf16.msra.mxu0 %v1784
    %1942 = vmatprep.subr.bf16.mxu0 0
    %1943 = vmatpush2.bf16.msra.mxu0 %v1783
    %1944 = vmatprep.subr.bf16.mxu0 0
    %1945 = vmatpush2.bf16.msra.mxu0 %v1782
    %1946 = vmatprep.subr.bf16.mxu0 0
    %1947 = vmatpush2.bf16.msra.mxu0 %v1781
    %1948 = vmatprep.subr.bf16.mxu0 0
    %1949 = vmatpush2.bf16.msra.mxu0 %v1780
    %1950 = vmatprep.subr.bf16.mxu0 0
    %1951 = vmatpush2.bf16.msra.mxu0 %v1779
    %1952 = vmatprep.subr.bf16.mxu0 0
    %1953 = vmatpush2.bf16.msra.mxu0 %v1778
    %1954 = vmatprep.mubr.bf16.mxu0 %v1476
    %1955 = vmatmul.mubr.bf16.gmra.mxu0 %v1473
    %v1956 = vpop.f32.mrf.mxu0
    %v1957 = vadd.f32 %v1917, %v1956
    %v1958 = vpop.f32.mrf.mxu0
    %v1959 = vpop.f32.mrf.mxu0
    %v1960 = vpop.f32.mrf.mxu0
    %1961 = vdwg.mxu0
    %1962 = vmatprep.subr.bf16.mxu0 0
    %1963 = vmatpush1.bf16.msra.mxu0 %v1793
    %1964 = vmatprep.subr.bf16.mxu0 0
    %1965 = vmatpush1.bf16.msra.mxu0 %v1792
    %1966 = vmatprep.subr.bf16.mxu0 0
    %1967 = vmatpush1.bf16.msra.mxu0 %v1791
    %1968 = vmatprep.subr.bf16.mxu0 0
    %1969 = vmatpush1.bf16.msra.mxu0 %v1790
    %1970 = vmatprep.subr.bf16.mxu0 0
    %1971 = vmatpush1.bf16.msra.mxu0 %v1789
    %1972 = vmatprep.subr.bf16.mxu0 0
    %1973 = vmatpush1.bf16.msra.mxu0 %v1788
    %1974 = vmatprep.subr.bf16.mxu0 0
    %1975 = vmatpush1.bf16.msra.mxu0 %v1787
    %1976 = vmatprep.subr.bf16.mxu0 0
    %1977 = vmatpush1.bf16.msra.mxu0 %v1786
    %1978 = vmatprep.subr.bf16.mxu0 0
    %1979 = vmatpush2.bf16.msra.mxu0 %v1801
    %1980 = vmatprep.subr.bf16.mxu0 0
    %1981 = vmatpush2.bf16.msra.mxu0 %v1800
    %1982 = vmatprep.subr.bf16.mxu0 0
    %1983 = vmatpush2.bf16.msra.mxu0 %v1799
    %1984 = vmatprep.subr.bf16.mxu0 0
    %1985 = vmatpush2.bf16.msra.mxu0 %v1798
    %1986 = vmatprep.subr.bf16.mxu0 0
    %1987 = vmatpush2.bf16.msra.mxu0 %v1797
    %1988 = vmatprep.subr.bf16.mxu0 0
    %1989 = vmatpush2.bf16.msra.mxu0 %v1796
    %1990 = vmatprep.subr.bf16.mxu0 0
    %1991 = vmatpush2.bf16.msra.mxu0 %v1795
    %1992 = vmatprep.subr.bf16.mxu0 0
    %1993 = vmatpush2.bf16.msra.mxu0 %v1794
    %1994 = vmatprep.mubr.bf16.mxu0 %v1482
    %1995 = vmatmul.mubr.bf16.gmra.mxu0 %v1479
    %v1996 = vpop.f32.mrf.mxu0
    %v1997 = vadd.f32 %v1957, %v1996
    %v1998 = vpop.f32.mrf.mxu0
    %v1999 = vpop.f32.mrf.mxu0
    %v2000 = vpop.f32.mrf.mxu0
    %2001 = vdwg.mxu0
    %2002 = vmatprep.subr.bf16.mxu0 0
    %2003 = vmatpush1.bf16.msra.mxu0 %v1809
    %2004 = vmatprep.subr.bf16.mxu0 0
    %2005 = vmatpush1.bf16.msra.mxu0 %v1808
    %2006 = vmatprep.subr.bf16.mxu0 0
    %2007 = vmatpush1.bf16.msra.mxu0 %v1807
    %2008 = vmatprep.subr.bf16.mxu0 0
    %2009 = vmatpush1.bf16.msra.mxu0 %v1806
    %2010 = vmatprep.subr.bf16.mxu0 0
    %2011 = vmatpush1.bf16.msra.mxu0 %v1805
    %2012 = vmatprep.subr.bf16.mxu0 0
    %2013 = vmatpush1.bf16.msra.mxu0 %v1804
    %2014 = vmatprep.subr.bf16.mxu0 0
    %2015 = vmatpush1.bf16.msra.mxu0 %v1803
    %2016 = vmatprep.subr.bf16.mxu0 0
    %2017 = vmatpush1.bf16.msra.mxu0 %v1802
    %2018 = vmatprep.subr.bf16.mxu0 0
    %2019 = vmatpush2.bf16.msra.mxu0 %v1817
    %2020 = vmatprep.subr.bf16.mxu0 0
    %2021 = vmatpush2.bf16.msra.mxu0 %v1816
    %2022 = vmatprep.subr.bf16.mxu0 0
    %2023 = vmatpush2.bf16.msra.mxu0 %v1815
    %2024 = vmatprep.subr.bf16.mxu0 0
    %2025 = vmatpush2.bf16.msra.mxu0 %v1814
    %2026 = vmatprep.subr.bf16.mxu0 0
    %2027 = vmatpush2.bf16.msra.mxu0 %v1813
    %2028 = vmatprep.subr.bf16.mxu0 0
    %2029 = vmatpush2.bf16.msra.mxu0 %v1812
    %2030 = vmatprep.subr.bf16.mxu0 0
    %2031 = vmatpush2.bf16.msra.mxu0 %v1811
    %2032 = vmatprep.subr.bf16.mxu0 0
    %2033 = vmatpush2.bf16.msra.mxu0 %v1810
    %2034 = vmatprep.mubr.bf16.mxu0 %v1488
    %2035 = vmatmul.mubr.bf16.gmra.mxu0 %v1485
    %v2036 = vpop.f32.mrf.mxu0
    %v2037 = vadd.f32 %v1997, %v2036
    %v2038 = vpop.f32.mrf.mxu0
    %v2039 = vpop.f32.mrf.mxu0
    %v2040 = vpop.f32.mrf.mxu0
    %2041 = vdwg.mxu0
    %v2042 = vadd.f32 %v1336, %v2037
    %s2043 = scalar_lea.vmem %s2, 1024
    %v2044 = vld [vmem:[%s2043] sm:$0xf]
    %v2045 = vld [vmem:[%s2043 + $0x4] sm:$0xf]
    %v2046 = vld [vmem:[%s2043 + $0x8] sm:$0xf]
    %v2047 = vld [vmem:[%s2043 + $0xc] sm:$0xf]
    %v2048 = vld [vmem:[%s2043 + $0x10] sm:$0xf]
    %v2049 = vld [vmem:[%s2043 + $0x14] sm:$0xf]
    %v2050 = vld [vmem:[%s2043 + $0x18] sm:$0xf]
    %v2051 = vld [vmem:[%s2043 + $0x1c] sm:$0xf]
    %v2052 = vld [vmem:[%s2043 + $0x20] sm:$0xf]
    %v2053 = vld [vmem:[%s2043 + $0x24] sm:$0xf]
    %v2054 = vld [vmem:[%s2043 + $0x28] sm:$0xf]
    %v2055 = vld [vmem:[%s2043 + $0x2c] sm:$0xf]
    %v2056 = vld [vmem:[%s2043 + $0x30] sm:$0xf]
    %v2057 = vld [vmem:[%s2043 + $0x34] sm:$0xf]
    %v2058 = vld [vmem:[%s2043 + $0x38] sm:$0xf]
    %v2059 = vld [vmem:[%s2043 + $0x3c] sm:$0xf]
    %v2060 = vld [vmem:[%s2043 + $0x40] sm:$0xf]
    %v2061 = vld [vmem:[%s2043 + $0x44] sm:$0xf]
    %v2062 = vld [vmem:[%s2043 + $0x48] sm:$0xf]
    %v2063 = vld [vmem:[%s2043 + $0x4c] sm:$0xf]
    %v2064 = vld [vmem:[%s2043 + $0x50] sm:$0xf]
    %v2065 = vld [vmem:[%s2043 + $0x54] sm:$0xf]
    %v2066 = vld [vmem:[%s2043 + $0x58] sm:$0xf]
    %v2067 = vld [vmem:[%s2043 + $0x5c] sm:$0xf]
    %v2068 = vld [vmem:[%s2043 + $0x60] sm:$0xf]
    %v2069 = vld [vmem:[%s2043 + $0x64] sm:$0xf]
    %v2070 = vld [vmem:[%s2043 + $0x68] sm:$0xf]
    %v2071 = vld [vmem:[%s2043 + $0x6c] sm:$0xf]
    %v2072 = vld [vmem:[%s2043 + $0x70] sm:$0xf]
    %v2073 = vld [vmem:[%s2043 + $0x74] sm:$0xf]
    %v2074 = vld [vmem:[%s2043 + $0x78] sm:$0xf]
    %v2075 = vld [vmem:[%s2043 + $0x7c] sm:$0xf]
    %v2076 = vld [vmem:[%s2043 + $0x80] sm:$0xf]
    %v2077 = vld [vmem:[%s2043 + $0x84] sm:$0xf]
    %v2078 = vld [vmem:[%s2043 + $0x88] sm:$0xf]
    %v2079 = vld [vmem:[%s2043 + $0x8c] sm:$0xf]
    %v2080 = vld [vmem:[%s2043 + $0x90] sm:$0xf]
    %v2081 = vld [vmem:[%s2043 + $0x94] sm:$0xf]
    %v2082 = vld [vmem:[%s2043 + $0x98] sm:$0xf]
    %v2083 = vld [vmem:[%s2043 + $0x9c] sm:$0xf]
    %v2084 = vld [vmem:[%s2043 + $0xa0] sm:$0xf]
    %v2085 = vld [vmem:[%s2043 + $0xa4] sm:$0xf]
    %v2086 = vld [vmem:[%s2043 + $0xa8] sm:$0xf]
    %v2087 = vld [vmem:[%s2043 + $0xac] sm:$0xf]
    %v2088 = vld [vmem:[%s2043 + $0xb0] sm:$0xf]
    %v2089 = vld [vmem:[%s2043 + $0xb4] sm:$0xf]
    %v2090 = vld [vmem:[%s2043 + $0xb8] sm:$0xf]
    %v2091 = vld [vmem:[%s2043 + $0xbc] sm:$0xf]
    %v2092 = vld [vmem:[%s2043 + $0xc0] sm:$0xf]
    %v2093 = vld [vmem:[%s2043 + $0xc4] sm:$0xf]
    %v2094 = vld [vmem:[%s2043 + $0xc8] sm:$0xf]
    %v2095 = vld [vmem:[%s2043 + $0xcc] sm:$0xf]
    %v2096 = vld [vmem:[%s2043 + $0xd0] sm:$0xf]
    %v2097 = vld [vmem:[%s2043 + $0xd4] sm:$0xf]
    %v2098 = vld [vmem:[%s2043 + $0xd8] sm:$0xf]
    %v2099 = vld [vmem:[%s2043 + $0xdc] sm:$0xf]
    %v2100 = vld [vmem:[%s2043 + $0xe0] sm:$0xf]
    %v2101 = vld [vmem:[%s2043 + $0xe4] sm:$0xf]
    %v2102 = vld [vmem:[%s2043 + $0xe8] sm:$0xf]
    %v2103 = vld [vmem:[%s2043 + $0xec] sm:$0xf]
    %v2104 = vld [vmem:[%s2043 + $0xf0] sm:$0xf]
    %v2105 = vld [vmem:[%s2043 + $0xf4] sm:$0xf]
    %v2106 = vld [vmem:[%s2043 + $0xf8] sm:$0xf]
    %v2107 = vld [vmem:[%s2043 + $0xfc] sm:$0xf]
    %v2108 = vld [vmem:[%s2043 + $0x100] sm:$0xf]
    %v2109 = vld [vmem:[%s2043 + $0x104] sm:$0xf]
    %v2110 = vld [vmem:[%s2043 + $0x108] sm:$0xf]
    %v2111 = vld [vmem:[%s2043 + $0x10c] sm:$0xf]
    %v2112 = vld [vmem:[%s2043 + $0x110] sm:$0xf]
    %v2113 = vld [vmem:[%s2043 + $0x114] sm:$0xf]
    %v2114 = vld [vmem:[%s2043 + $0x118] sm:$0xf]
    %v2115 = vld [vmem:[%s2043 + $0x11c] sm:$0xf]
    %v2116 = vld [vmem:[%s2043 + $0x120] sm:$0xf]
    %v2117 = vld [vmem:[%s2043 + $0x124] sm:$0xf]
    %v2118 = vld [vmem:[%s2043 + $0x128] sm:$0xf]
    %v2119 = vld [vmem:[%s2043 + $0x12c] sm:$0xf]
    %v2120 = vld [vmem:[%s2043 + $0x130] sm:$0xf]
    %v2121 = vld [vmem:[%s2043 + $0x134] sm:$0xf]
    %v2122 = vld [vmem:[%s2043 + $0x138] sm:$0xf]
    %v2123 = vld [vmem:[%s2043 + $0x13c] sm:$0xf]
    %v2124 = vld [vmem:[%s2043 + $0x140] sm:$0xf]
    %v2125 = vld [vmem:[%s2043 + $0x144] sm:$0xf]
    %v2126 = vld [vmem:[%s2043 + $0x148] sm:$0xf]
    %v2127 = vld [vmem:[%s2043 + $0x14c] sm:$0xf]
    %v2128 = vld [vmem:[%s2043 + $0x150] sm:$0xf]
    %v2129 = vld [vmem:[%s2043 + $0x154] sm:$0xf]
    %v2130 = vld [vmem:[%s2043 + $0x158] sm:$0xf]
    %v2131 = vld [vmem:[%s2043 + $0x15c] sm:$0xf]
    %v2132 = vld [vmem:[%s2043 + $0x160] sm:$0xf]
    %v2133 = vld [vmem:[%s2043 + $0x164] sm:$0xf]
    %v2134 = vld [vmem:[%s2043 + $0x168] sm:$0xf]
    %v2135 = vld [vmem:[%s2043 + $0x16c] sm:$0xf]
    %v2136 = vld [vmem:[%s2043 + $0x170] sm:$0xf]
    %v2137 = vld [vmem:[%s2043 + $0x174] sm:$0xf]
    %v2138 = vld [vmem:[%s2043 + $0x178] sm:$0xf]
    %v2139 = vld [vmem:[%s2043 + $0x17c] sm:$0xf]
    %v2140 = vld [vmem:[%s2043 + $0x180] sm:$0xf]
    %v2141 = vld [vmem:[%s2043 + $0x184] sm:$0xf]
    %v2142 = vld [vmem:[%s2043 + $0x188] sm:$0xf]
    %v2143 = vld [vmem:[%s2043 + $0x18c] sm:$0xf]
    %v2144 = vld [vmem:[%s2043 + $0x190] sm:$0xf]
    %v2145 = vld [vmem:[%s2043 + $0x194] sm:$0xf]
    %v2146 = vld [vmem:[%s2043 + $0x198] sm:$0xf]
    %v2147 = vld [vmem:[%s2043 + $0x19c] sm:$0xf]
    %v2148 = vld [vmem:[%s2043 + $0x1a0] sm:$0xf]
    %v2149 = vld [vmem:[%s2043 + $0x1a4] sm:$0xf]
    %v2150 = vld [vmem:[%s2043 + $0x1a8] sm:$0xf]
    %v2151 = vld [vmem:[%s2043 + $0x1ac] sm:$0xf]
    %v2152 = vld [vmem:[%s2043 + $0x1b0] sm:$0xf]
    %v2153 = vld [vmem:[%s2043 + $0x1b4] sm:$0xf]
    %v2154 = vld [vmem:[%s2043 + $0x1b8] sm:$0xf]
    %v2155 = vld [vmem:[%s2043 + $0x1bc] sm:$0xf]
    %v2156 = vld [vmem:[%s2043 + $0x1c0] sm:$0xf]
    %v2157 = vld [vmem:[%s2043 + $0x1c4] sm:$0xf]
    %v2158 = vld [vmem:[%s2043 + $0x1c8] sm:$0xf]
    %v2159 = vld [vmem:[%s2043 + $0x1cc] sm:$0xf]
    %v2160 = vld [vmem:[%s2043 + $0x1d0] sm:$0xf]
    %v2161 = vld [vmem:[%s2043 + $0x1d4] sm:$0xf]
    %v2162 = vld [vmem:[%s2043 + $0x1d8] sm:$0xf]
    %v2163 = vld [vmem:[%s2043 + $0x1dc] sm:$0xf]
    %v2164 = vld [vmem:[%s2043 + $0x1e0] sm:$0xf]
    %v2165 = vld [vmem:[%s2043 + $0x1e4] sm:$0xf]
    %v2166 = vld [vmem:[%s2043 + $0x1e8] sm:$0xf]
    %v2167 = vld [vmem:[%s2043 + $0x1ec] sm:$0xf]
    %v2168 = vld [vmem:[%s2043 + $0x1f0] sm:$0xf]
    %v2169 = vld [vmem:[%s2043 + $0x1f4] sm:$0xf]
    %v2170 = vld [vmem:[%s2043 + $0x1f8] sm:$0xf]
    %v2171 = vld [vmem:[%s2043 + $0x1fc] sm:$0xf]
    %v2180 = vrot.slane %v655, 1
    %v2181 = vrot.slane %v656, 1
    %v2182 = vrot.slane %v657, 1
    %v2183 = vrot.slane %v658, 1
    %v2184 = vrot.slane %v659, 1
    %v2185 = vrot.slane %v660, 1
    %v2186 = vrot.slane %v661, 1
    %v2187 = vrot.slane %v662, 1
    %v2324 = vunpack.c.l.b16 %v2044
    %v2325 = vunpack.c.l.b16 %v2045
    %v2326 = vunpack.c.l.b16 %v2046
    %v2327 = vunpack.c.l.b16 %v2047
    %v2328 = vunpack.c.l.b16 %v2048
    %v2329 = vunpack.c.l.b16 %v2049
    %v2330 = vunpack.c.l.b16 %v2050
    %v2331 = vunpack.c.l.b16 %v2051
    %v2332 = vunpack.c.l.b16 %v2052
    %v2333 = vunpack.c.l.b16 %v2053
    %v2334 = vunpack.c.l.b16 %v2054
    %v2335 = vunpack.c.l.b16 %v2055
    %v2336 = vunpack.c.l.b16 %v2056
    %v2337 = vunpack.c.l.b16 %v2057
    %v2338 = vunpack.c.l.b16 %v2058
    %v2339 = vunpack.c.l.b16 %v2059
    %v2340 = vunpack.c.l.b16 %v2060
    %v2341 = vunpack.c.l.b16 %v2061
    %v2342 = vunpack.c.l.b16 %v2062
    %v2343 = vunpack.c.l.b16 %v2063
    %v2344 = vunpack.c.l.b16 %v2064
    %v2345 = vunpack.c.l.b16 %v2065
    %v2346 = vunpack.c.l.b16 %v2066
    %v2347 = vunpack.c.l.b16 %v2067
    %v2348 = vunpack.c.l.b16 %v2068
    %v2349 = vunpack.c.l.b16 %v2069
    %v2350 = vunpack.c.l.b16 %v2070
    %v2351 = vunpack.c.l.b16 %v2071
    %v2352 = vunpack.c.l.b16 %v2072
    %v2353 = vunpack.c.l.b16 %v2073
    %v2354 = vunpack.c.l.b16 %v2074
    %v2355 = vunpack.c.l.b16 %v2075
    %v2356 = vunpack.c.l.b16 %v2076
    %v2357 = vunpack.c.l.b16 %v2077
    %v2358 = vunpack.c.l.b16 %v2078
    %v2359 = vunpack.c.l.b16 %v2079
    %v2360 = vunpack.c.l.b16 %v2080
    %v2361 = vunpack.c.l.b16 %v2081
    %v2362 = vunpack.c.l.b16 %v2082
    %v2363 = vunpack.c.l.b16 %v2083
    %v2364 = vunpack.c.l.b16 %v2084
    %v2365 = vunpack.c.l.b16 %v2085
    %v2366 = vunpack.c.l.b16 %v2086
    %v2367 = vunpack.c.l.b16 %v2087
    %v2368 = vunpack.c.l.b16 %v2088
    %v2369 = vunpack.c.l.b16 %v2089
    %v2370 = vunpack.c.l.b16 %v2090
    %v2371 = vunpack.c.l.b16 %v2091
    %v2372 = vunpack.c.l.b16 %v2092
    %v2373 = vunpack.c.l.b16 %v2093
    %v2374 = vunpack.c.l.b16 %v2094
    %v2375 = vunpack.c.l.b16 %v2095
    %v2376 = vunpack.c.l.b16 %v2096
    %v2377 = vunpack.c.l.b16 %v2097
    %v2378 = vunpack.c.l.b16 %v2098
    %v2379 = vunpack.c.l.b16 %v2099
    %v2380 = vunpack.c.l.b16 %v2100
    %v2381 = vunpack.c.l.b16 %v2101
    %v2382 = vunpack.c.l.b16 %v2102
    %v2383 = vunpack.c.l.b16 %v2103
    %v2384 = vunpack.c.l.b16 %v2104
    %v2385 = vunpack.c.l.b16 %v2105
    %v2386 = vunpack.c.l.b16 %v2106
    %v2387 = vunpack.c.l.b16 %v2107
    %v2388 = vunpack.c.l.b16 %v2108
    %v2389 = vunpack.c.l.b16 %v2109
    %v2390 = vunpack.c.l.b16 %v2110
    %v2391 = vunpack.c.l.b16 %v2111
    %v2392 = vunpack.c.l.b16 %v2112
    %v2393 = vunpack.c.l.b16 %v2113
    %v2394 = vunpack.c.l.b16 %v2114
    %v2395 = vunpack.c.l.b16 %v2115
    %v2396 = vunpack.c.l.b16 %v2116
    %v2397 = vunpack.c.l.b16 %v2117
    %v2398 = vunpack.c.l.b16 %v2118
    %v2399 = vunpack.c.l.b16 %v2119
    %v2400 = vunpack.c.l.b16 %v2120
    %v2401 = vunpack.c.l.b16 %v2121
    %v2402 = vunpack.c.l.b16 %v2122
    %v2403 = vunpack.c.l.b16 %v2123
    %v2404 = vunpack.c.l.b16 %v2124
    %v2405 = vunpack.c.l.b16 %v2125
    %v2406 = vunpack.c.l.b16 %v2126
    %v2407 = vunpack.c.l.b16 %v2127
    %v2408 = vunpack.c.l.b16 %v2128
    %v2409 = vunpack.c.l.b16 %v2129
    %v2410 = vunpack.c.l.b16 %v2130
    %v2411 = vunpack.c.l.b16 %v2131
    %v2412 = vunpack.c.l.b16 %v2132
    %v2413 = vunpack.c.l.b16 %v2133
    %v2414 = vunpack.c.l.b16 %v2134
    %v2415 = vunpack.c.l.b16 %v2135
    %v2416 = vunpack.c.l.b16 %v2136
    %v2417 = vunpack.c.l.b16 %v2137
    %v2418 = vunpack.c.l.b16 %v2138
    %v2419 = vunpack.c.l.b16 %v2139
    %v2420 = vunpack.c.l.b16 %v2140
    %v2421 = vunpack.c.l.b16 %v2141
    %v2422 = vunpack.c.l.b16 %v2142
    %v2423 = vunpack.c.l.b16 %v2143
    %v2424 = vunpack.c.l.b16 %v2144
    %v2425 = vunpack.c.l.b16 %v2145
    %v2426 = vunpack.c.l.b16 %v2146
    %v2427 = vunpack.c.l.b16 %v2147
    %v2428 = vunpack.c.l.b16 %v2148
    %v2429 = vunpack.c.l.b16 %v2149
    %v2430 = vunpack.c.l.b16 %v2150
    %v2431 = vunpack.c.l.b16 %v2151
    %v2432 = vunpack.c.l.b16 %v2152
    %v2433 = vunpack.c.l.b16 %v2153
    %v2434 = vunpack.c.l.b16 %v2154
    %v2435 = vunpack.c.l.b16 %v2155
    %v2436 = vunpack.c.l.b16 %v2156
    %v2437 = vunpack.c.l.b16 %v2157
    %v2438 = vunpack.c.l.b16 %v2158
    %v2439 = vunpack.c.l.b16 %v2159
    %v2440 = vunpack.c.l.b16 %v2160
    %v2441 = vunpack.c.l.b16 %v2161
    %v2442 = vunpack.c.l.b16 %v2162
    %v2443 = vunpack.c.l.b16 %v2163
    %v2444 = vunpack.c.l.b16 %v2164
    %v2445 = vunpack.c.l.b16 %v2165
    %v2446 = vunpack.c.l.b16 %v2166
    %v2447 = vunpack.c.l.b16 %v2167
    %v2448 = vunpack.c.l.b16 %v2168
    %v2449 = vunpack.c.l.b16 %v2169
    %v2450 = vunpack.c.l.b16 %v2170
    %v2451 = vunpack.c.l.b16 %v2171
    %v2452 = vpack.c.b16 %v2325, %v2324
    %v2453 = vpack.c.b16 %v2327, %v2326
    %v2454 = vpack.c.b16 %v2329, %v2328
    %v2455 = vpack.c.b16 %v2331, %v2330
    %v2456 = vpack.c.b16 %v2333, %v2332
    %v2457 = vpack.c.b16 %v2335, %v2334
    %v2458 = vpack.c.b16 %v2337, %v2336
    %v2459 = vpack.c.b16 %v2339, %v2338
    %v2460 = vpack.c.b16 %v2341, %v2340
    %v2461 = vpack.c.b16 %v2343, %v2342
    %v2462 = vpack.c.b16 %v2345, %v2344
    %v2463 = vpack.c.b16 %v2347, %v2346
    %v2464 = vpack.c.b16 %v2349, %v2348
    %v2465 = vpack.c.b16 %v2351, %v2350
    %v2466 = vpack.c.b16 %v2353, %v2352
    %v2467 = vpack.c.b16 %v2355, %v2354
    %v2468 = vpack.c.b16 %v2357, %v2356
    %v2469 = vpack.c.b16 %v2359, %v2358
    %v2470 = vpack.c.b16 %v2361, %v2360
    %v2471 = vpack.c.b16 %v2363, %v2362
    %v2472 = vpack.c.b16 %v2365, %v2364
    %v2473 = vpack.c.b16 %v2367, %v2366
    %v2474 = vpack.c.b16 %v2369, %v2368
    %v2475 = vpack.c.b16 %v2371, %v2370
    %v2476 = vpack.c.b16 %v2373, %v2372
    %v2477 = vpack.c.b16 %v2375, %v2374
    %v2478 = vpack.c.b16 %v2377, %v2376
    %v2479 = vpack.c.b16 %v2379, %v2378
    %v2480 = vpack.c.b16 %v2381, %v2380
    %v2481 = vpack.c.b16 %v2383, %v2382
    %v2482 = vpack.c.b16 %v2385, %v2384
    %v2483 = vpack.c.b16 %v2387, %v2386
    %v2484 = vpack.c.b16 %v2389, %v2388
    %v2485 = vpack.c.b16 %v2391, %v2390
    %v2486 = vpack.c.b16 %v2393, %v2392
    %v2487 = vpack.c.b16 %v2395, %v2394
    %v2488 = vpack.c.b16 %v2397, %v2396
    %v2489 = vpack.c.b16 %v2399, %v2398
    %v2490 = vpack.c.b16 %v2401, %v2400
    %v2491 = vpack.c.b16 %v2403, %v2402
    %v2492 = vpack.c.b16 %v2405, %v2404
    %v2493 = vpack.c.b16 %v2407, %v2406
    %v2494 = vpack.c.b16 %v2409, %v2408
    %v2495 = vpack.c.b16 %v2411, %v2410
    %v2496 = vpack.c.b16 %v2413, %v2412
    %v2497 = vpack.c.b16 %v2415, %v2414
    %v2498 = vpack.c.b16 %v2417, %v2416
    %v2499 = vpack.c.b16 %v2419, %v2418
    %v2500 = vpack.c.b16 %v2421, %v2420
    %v2501 = vpack.c.b16 %v2423, %v2422
    %v2502 = vpack.c.b16 %v2425, %v2424
    %v2503 = vpack.c.b16 %v2427, %v2426
    %v2504 = vpack.c.b16 %v2429, %v2428
    %v2505 = vpack.c.b16 %v2431, %v2430
    %v2506 = vpack.c.b16 %v2433, %v2432
    %v2507 = vpack.c.b16 %v2435, %v2434
    %v2508 = vpack.c.b16 %v2437, %v2436
    %v2509 = vpack.c.b16 %v2439, %v2438
    %v2510 = vpack.c.b16 %v2441, %v2440
    %v2511 = vpack.c.b16 %v2443, %v2442
    %v2512 = vpack.c.b16 %v2445, %v2444
    %v2513 = vpack.c.b16 %v2447, %v2446
    %v2514 = vpack.c.b16 %v2449, %v2448
    %v2515 = vpack.c.b16 %v2451, %v2450
    %2580 = vmatprep.subr.bf16.mxu0 0
    %2581 = vmatpush1.bf16.msra.mxu0 %v2459
    %2582 = vmatprep.subr.bf16.mxu0 0
    %2583 = vmatpush1.bf16.msra.mxu0 %v2458
    %2584 = vmatprep.subr.bf16.mxu0 0
    %2585 = vmatpush1.bf16.msra.mxu0 %v2457
    %2586 = vmatprep.subr.bf16.mxu0 0
    %2587 = vmatpush1.bf16.msra.mxu0 %v2456
    %2588 = vmatprep.subr.bf16.mxu0 0
    %2589 = vmatpush1.bf16.msra.mxu0 %v2455
    %2590 = vmatprep.subr.bf16.mxu0 0
    %2591 = vmatpush1.bf16.msra.mxu0 %v2454
    %2592 = vmatprep.subr.bf16.mxu0 0
    %2593 = vmatpush1.bf16.msra.mxu0 %v2453
    %2594 = vmatprep.subr.bf16.mxu0 0
    %2595 = vmatpush1.bf16.msra.mxu0 %v2452
    %2596 = vmatprep.subr.bf16.mxu0 0
    %2597 = vmatpush2.bf16.msra.mxu0 %v2467
    %2598 = vmatprep.subr.bf16.mxu0 0
    %2599 = vmatpush2.bf16.msra.mxu0 %v2466
    %2600 = vmatprep.subr.bf16.mxu0 0
    %2601 = vmatpush2.bf16.msra.mxu0 %v2465
    %2602 = vmatprep.subr.bf16.mxu0 0
    %2603 = vmatpush2.bf16.msra.mxu0 %v2464
    %2604 = vmatprep.subr.bf16.mxu0 0
    %2605 = vmatpush2.bf16.msra.mxu0 %v2463
    %2606 = vmatprep.subr.bf16.mxu0 0
    %2607 = vmatpush2.bf16.msra.mxu0 %v2462
    %2608 = vmatprep.subr.bf16.mxu0 0
    %2609 = vmatpush2.bf16.msra.mxu0 %v2461
    %2610 = vmatprep.subr.bf16.mxu0 0
    %2611 = vmatpush2.bf16.msra.mxu0 %v2460
    %2612 = vmatprep.mubr.bf16.mxu0 %v2181
    %2613 = vmatmul.mubr.bf16.gmra.mxu0 %v2180
    %v2614 = vpop.f32.mrf.mxu0
    %v2615 = vadd.f32 0.0, %v2614
    %v2616 = vpop.f32.mrf.mxu0
    %v2617 = vpop.f32.mrf.mxu0
    %v2618 = vpop.f32.mrf.mxu0
    %2619 = vdwg.mxu0
    %2620 = vmatprep.subr.bf16.mxu0 0
    %2621 = vmatpush1.bf16.msra.mxu0 %v2475
    %2622 = vmatprep.subr.bf16.mxu0 0
    %2623 = vmatpush1.bf16.msra.mxu0 %v2474
    %2624 = vmatprep.subr.bf16.mxu0 0
    %2625 = vmatpush1.bf16.msra.mxu0 %v2473
    %2626 = vmatprep.subr.bf16.mxu0 0
    %2627 = vmatpush1.bf16.msra.mxu0 %v2472
    %2628 = vmatprep.subr.bf16.mxu0 0
    %2629 = vmatpush1.bf16.msra.mxu0 %v2471
    %2630 = vmatprep.subr.bf16.mxu0 0
    %2631 = vmatpush1.bf16.msra.mxu0 %v2470
    %2632 = vmatprep.subr.bf16.mxu0 0
    %2633 = vmatpush1.bf16.msra.mxu0 %v2469
    %2634 = vmatprep.subr.bf16.mxu0 0
    %2635 = vmatpush1.bf16.msra.mxu0 %v2468
    %2636 = vmatprep.subr.bf16.mxu0 0
    %2637 = vmatpush2.bf16.msra.mxu0 %v2483
    %2638 = vmatprep.subr.bf16.mxu0 0
    %2639 = vmatpush2.bf16.msra.mxu0 %v2482
    %2640 = vmatprep.subr.bf16.mxu0 0
    %2641 = vmatpush2.bf16.msra.mxu0 %v2481
    %2642 = vmatprep.subr.bf16.mxu0 0
    %2643 = vmatpush2.bf16.msra.mxu0 %v2480
    %2644 = vmatprep.subr.bf16.mxu0 0
    %2645 = vmatpush2.bf16.msra.mxu0 %v2479
    %2646 = vmatprep.subr.bf16.mxu0 0
    %2647 = vmatpush2.bf16.msra.mxu0 %v2478
    %2648 = vmatprep.subr.bf16.mxu0 0
    %2649 = vmatpush2.bf16.msra.mxu0 %v2477
    %2650 = vmatprep.subr.bf16.mxu0 0
    %2651 = vmatpush2.bf16.msra.mxu0 %v2476
    %2652 = vmatprep.mubr.bf16.mxu0 %v2183
    %2653 = vmatmul.mubr.bf16.gmra.mxu0 %v2182
    %v2654 = vpop.f32.mrf.mxu0
    %v2655 = vadd.f32 %v2615, %v2654
    %v2656 = vpop.f32.mrf.mxu0
    %v2657 = vpop.f32.mrf.mxu0
    %v2658 = vpop.f32.mrf.mxu0
    %2659 = vdwg.mxu0
    %2660 = vmatprep.subr.bf16.mxu0 0
    %2661 = vmatpush1.bf16.msra.mxu0 %v2491
    %2662 = vmatprep.subr.bf16.mxu0 0
    %2663 = vmatpush1.bf16.msra.mxu0 %v2490
    %2664 = vmatprep.subr.bf16.mxu0 0
    %2665 = vmatpush1.bf16.msra.mxu0 %v2489
    %2666 = vmatprep.subr.bf16.mxu0 0
    %2667 = vmatpush1.bf16.msra.mxu0 %v2488
    %2668 = vmatprep.subr.bf16.mxu0 0
    %2669 = vmatpush1.bf16.msra.mxu0 %v2487
    %2670 = vmatprep.subr.bf16.mxu0 0
    %2671 = vmatpush1.bf16.msra.mxu0 %v2486
    %2672 = vmatprep.subr.bf16.mxu0 0
    %2673 = vmatpush1.bf16.msra.mxu0 %v2485
    %2674 = vmatprep.subr.bf16.mxu0 0
    %2675 = vmatpush1.bf16.msra.mxu0 %v2484
    %2676 = vmatprep.subr.bf16.mxu0 0
    %2677 = vmatpush2.bf16.msra.mxu0 %v2499
    %2678 = vmatprep.subr.bf16.mxu0 0
    %2679 = vmatpush2.bf16.msra.mxu0 %v2498
    %2680 = vmatprep.subr.bf16.mxu0 0
    %2681 = vmatpush2.bf16.msra.mxu0 %v2497
    %2682 = vmatprep.subr.bf16.mxu0 0
    %2683 = vmatpush2.bf16.msra.mxu0 %v2496
    %2684 = vmatprep.subr.bf16.mxu0 0
    %2685 = vmatpush2.bf16.msra.mxu0 %v2495
    %2686 = vmatprep.subr.bf16.mxu0 0
    %2687 = vmatpush2.bf16.msra.mxu0 %v2494
    %2688 = vmatprep.subr.bf16.mxu0 0
    %2689 = vmatpush2.bf16.msra.mxu0 %v2493
    %2690 = vmatprep.subr.bf16.mxu0 0
    %2691 = vmatpush2.bf16.msra.mxu0 %v2492
    %2692 = vmatprep.mubr.bf16.mxu0 %v2185
    %2693 = vmatmul.mubr.bf16.gmra.mxu0 %v2184
    %v2694 = vpop.f32.mrf.mxu0
    %v2695 = vadd.f32 %v2655, %v2694
    %v2696 = vpop.f32.mrf.mxu0
    %v2697 = vpop.f32.mrf.mxu0
    %v2698 = vpop.f32.mrf.mxu0
    %2699 = vdwg.mxu0
    %2700 = vmatprep.subr.bf16.mxu0 0
    %2701 = vmatpush1.bf16.msra.mxu0 %v2507
    %2702 = vmatprep.subr.bf16.mxu0 0
    %2703 = vmatpush1.bf16.msra.mxu0 %v2506
    %2704 = vmatprep.subr.bf16.mxu0 0
    %2705 = vmatpush1.bf16.msra.mxu0 %v2505
    %2706 = vmatprep.subr.bf16.mxu0 0
    %2707 = vmatpush1.bf16.msra.mxu0 %v2504
    %2708 = vmatprep.subr.bf16.mxu0 0
    %2709 = vmatpush1.bf16.msra.mxu0 %v2503
    %2710 = vmatprep.subr.bf16.mxu0 0
    %2711 = vmatpush1.bf16.msra.mxu0 %v2502
    %2712 = vmatprep.subr.bf16.mxu0 0
    %2713 = vmatpush1.bf16.msra.mxu0 %v2501
    %2714 = vmatprep.subr.bf16.mxu0 0
    %2715 = vmatpush1.bf16.msra.mxu0 %v2500
    %2716 = vmatprep.subr.bf16.mxu0 0
    %2717 = vmatpush2.bf16.msra.mxu0 %v2515
    %2718 = vmatprep.subr.bf16.mxu0 0
    %2719 = vmatpush2.bf16.msra.mxu0 %v2514
    %2720 = vmatprep.subr.bf16.mxu0 0
    %2721 = vmatpush2.bf16.msra.mxu0 %v2513
    %2722 = vmatprep.subr.bf16.mxu0 0
    %2723 = vmatpush2.bf16.msra.mxu0 %v2512
    %2724 = vmatprep.subr.bf16.mxu0 0
    %2725 = vmatpush2.bf16.msra.mxu0 %v2511
    %2726 = vmatprep.subr.bf16.mxu0 0
    %2727 = vmatpush2.bf16.msra.mxu0 %v2510
    %2728 = vmatprep.subr.bf16.mxu0 0
    %2729 = vmatpush2.bf16.msra.mxu0 %v2509
    %2730 = vmatprep.subr.bf16.mxu0 0
    %2731 = vmatpush2.bf16.msra.mxu0 %v2508
    %2732 = vmatprep.mubr.bf16.mxu0 %v2187
    %2733 = vmatmul.mubr.bf16.gmra.mxu0 %v2186
    %v2734 = vpop.f32.mrf.mxu0
    %v2735 = vadd.f32 %v2695, %v2734
    %v2736 = vpop.f32.mrf.mxu0
    %v2737 = vpop.f32.mrf.mxu0
    %v2738 = vpop.f32.mrf.mxu0
    %2739 = vdwg.mxu0
    %v2740 = vadd.f32 %v2042, %v2735
    %s2741 = scalar_lea.vmem %s2, 1536
    %v2742 = vld [vmem:[%s2741] sm:$0xf]
    %v2743 = vld [vmem:[%s2741 + $0x4] sm:$0xf]
    %v2744 = vld [vmem:[%s2741 + $0x8] sm:$0xf]
    %v2745 = vld [vmem:[%s2741 + $0xc] sm:$0xf]
    %v2746 = vld [vmem:[%s2741 + $0x10] sm:$0xf]
    %v2747 = vld [vmem:[%s2741 + $0x14] sm:$0xf]
    %v2748 = vld [vmem:[%s2741 + $0x18] sm:$0xf]
    %v2749 = vld [vmem:[%s2741 + $0x1c] sm:$0xf]
    %v2750 = vld [vmem:[%s2741 + $0x20] sm:$0xf]
    %v2751 = vld [vmem:[%s2741 + $0x24] sm:$0xf]
    %v2752 = vld [vmem:[%s2741 + $0x28] sm:$0xf]
    %v2753 = vld [vmem:[%s2741 + $0x2c] sm:$0xf]
    %v2754 = vld [vmem:[%s2741 + $0x30] sm:$0xf]
    %v2755 = vld [vmem:[%s2741 + $0x34] sm:$0xf]
    %v2756 = vld [vmem:[%s2741 + $0x38] sm:$0xf]
    %v2757 = vld [vmem:[%s2741 + $0x3c] sm:$0xf]
    %v2758 = vld [vmem:[%s2741 + $0x40] sm:$0xf]
    %v2759 = vld [vmem:[%s2741 + $0x44] sm:$0xf]
    %v2760 = vld [vmem:[%s2741 + $0x48] sm:$0xf]
    %v2761 = vld [vmem:[%s2741 + $0x4c] sm:$0xf]
    %v2762 = vld [vmem:[%s2741 + $0x50] sm:$0xf]
    %v2763 = vld [vmem:[%s2741 + $0x54] sm:$0xf]
    %v2764 = vld [vmem:[%s2741 + $0x58] sm:$0xf]
    %v2765 = vld [vmem:[%s2741 + $0x5c] sm:$0xf]
    %v2766 = vld [vmem:[%s2741 + $0x60] sm:$0xf]
    %v2767 = vld [vmem:[%s2741 + $0x64] sm:$0xf]
    %v2768 = vld [vmem:[%s2741 + $0x68] sm:$0xf]
    %v2769 = vld [vmem:[%s2741 + $0x6c] sm:$0xf]
    %v2770 = vld [vmem:[%s2741 + $0x70] sm:$0xf]
    %v2771 = vld [vmem:[%s2741 + $0x74] sm:$0xf]
    %v2772 = vld [vmem:[%s2741 + $0x78] sm:$0xf]
    %v2773 = vld [vmem:[%s2741 + $0x7c] sm:$0xf]
    %v2774 = vld [vmem:[%s2741 + $0x80] sm:$0xf]
    %v2775 = vld [vmem:[%s2741 + $0x84] sm:$0xf]
    %v2776 = vld [vmem:[%s2741 + $0x88] sm:$0xf]
    %v2777 = vld [vmem:[%s2741 + $0x8c] sm:$0xf]
    %v2778 = vld [vmem:[%s2741 + $0x90] sm:$0xf]
    %v2779 = vld [vmem:[%s2741 + $0x94] sm:$0xf]
    %v2780 = vld [vmem:[%s2741 + $0x98] sm:$0xf]
    %v2781 = vld [vmem:[%s2741 + $0x9c] sm:$0xf]
    %v2782 = vld [vmem:[%s2741 + $0xa0] sm:$0xf]
    %v2783 = vld [vmem:[%s2741 + $0xa4] sm:$0xf]
    %v2784 = vld [vmem:[%s2741 + $0xa8] sm:$0xf]
    %v2785 = vld [vmem:[%s2741 + $0xac] sm:$0xf]
    %v2786 = vld [vmem:[%s2741 + $0xb0] sm:$0xf]
    %v2787 = vld [vmem:[%s2741 + $0xb4] sm:$0xf]
    %v2788 = vld [vmem:[%s2741 + $0xb8] sm:$0xf]
    %v2789 = vld [vmem:[%s2741 + $0xbc] sm:$0xf]
    %v2790 = vld [vmem:[%s2741 + $0xc0] sm:$0xf]
    %v2791 = vld [vmem:[%s2741 + $0xc4] sm:$0xf]
    %v2792 = vld [vmem:[%s2741 + $0xc8] sm:$0xf]
    %v2793 = vld [vmem:[%s2741 + $0xcc] sm:$0xf]
    %v2794 = vld [vmem:[%s2741 + $0xd0] sm:$0xf]
    %v2795 = vld [vmem:[%s2741 + $0xd4] sm:$0xf]
    %v2796 = vld [vmem:[%s2741 + $0xd8] sm:$0xf]
    %v2797 = vld [vmem:[%s2741 + $0xdc] sm:$0xf]
    %v2798 = vld [vmem:[%s2741 + $0xe0] sm:$0xf]
    %v2799 = vld [vmem:[%s2741 + $0xe4] sm:$0xf]
    %v2800 = vld [vmem:[%s2741 + $0xe8] sm:$0xf]
    %v2801 = vld [vmem:[%s2741 + $0xec] sm:$0xf]
    %v2802 = vld [vmem:[%s2741 + $0xf0] sm:$0xf]
    %v2803 = vld [vmem:[%s2741 + $0xf4] sm:$0xf]
    %v2804 = vld [vmem:[%s2741 + $0xf8] sm:$0xf]
    %v2805 = vld [vmem:[%s2741 + $0xfc] sm:$0xf]
    %v2806 = vld [vmem:[%s2741 + $0x100] sm:$0xf]
    %v2807 = vld [vmem:[%s2741 + $0x104] sm:$0xf]
    %v2808 = vld [vmem:[%s2741 + $0x108] sm:$0xf]
    %v2809 = vld [vmem:[%s2741 + $0x10c] sm:$0xf]
    %v2810 = vld [vmem:[%s2741 + $0x110] sm:$0xf]
    %v2811 = vld [vmem:[%s2741 + $0x114] sm:$0xf]
    %v2812 = vld [vmem:[%s2741 + $0x118] sm:$0xf]
    %v2813 = vld [vmem:[%s2741 + $0x11c] sm:$0xf]
    %v2814 = vld [vmem:[%s2741 + $0x120] sm:$0xf]
    %v2815 = vld [vmem:[%s2741 + $0x124] sm:$0xf]
    %v2816 = vld [vmem:[%s2741 + $0x128] sm:$0xf]
    %v2817 = vld [vmem:[%s2741 + $0x12c] sm:$0xf]
    %v2818 = vld [vmem:[%s2741 + $0x130] sm:$0xf]
    %v2819 = vld [vmem:[%s2741 + $0x134] sm:$0xf]
    %v2820 = vld [vmem:[%s2741 + $0x138] sm:$0xf]
    %v2821 = vld [vmem:[%s2741 + $0x13c] sm:$0xf]
    %v2822 = vld [vmem:[%s2741 + $0x140] sm:$0xf]
    %v2823 = vld [vmem:[%s2741 + $0x144] sm:$0xf]
    %v2824 = vld [vmem:[%s2741 + $0x148] sm:$0xf]
    %v2825 = vld [vmem:[%s2741 + $0x14c] sm:$0xf]
    %v2826 = vld [vmem:[%s2741 + $0x150] sm:$0xf]
    %v2827 = vld [vmem:[%s2741 + $0x154] sm:$0xf]
    %v2828 = vld [vmem:[%s2741 + $0x158] sm:$0xf]
    %v2829 = vld [vmem:[%s2741 + $0x15c] sm:$0xf]
    %v2830 = vld [vmem:[%s2741 + $0x160] sm:$0xf]
    %v2831 = vld [vmem:[%s2741 + $0x164] sm:$0xf]
    %v2832 = vld [vmem:[%s2741 + $0x168] sm:$0xf]
    %v2833 = vld [vmem:[%s2741 + $0x16c] sm:$0xf]
    %v2834 = vld [vmem:[%s2741 + $0x170] sm:$0xf]
    %v2835 = vld [vmem:[%s2741 + $0x174] sm:$0xf]
    %v2836 = vld [vmem:[%s2741 + $0x178] sm:$0xf]
    %v2837 = vld [vmem:[%s2741 + $0x17c] sm:$0xf]
    %v2838 = vld [vmem:[%s2741 + $0x180] sm:$0xf]
    %v2839 = vld [vmem:[%s2741 + $0x184] sm:$0xf]
    %v2840 = vld [vmem:[%s2741 + $0x188] sm:$0xf]
    %v2841 = vld [vmem:[%s2741 + $0x18c] sm:$0xf]
    %v2842 = vld [vmem:[%s2741 + $0x190] sm:$0xf]
    %v2843 = vld [vmem:[%s2741 + $0x194] sm:$0xf]
    %v2844 = vld [vmem:[%s2741 + $0x198] sm:$0xf]
    %v2845 = vld [vmem:[%s2741 + $0x19c] sm:$0xf]
    %v2846 = vld [vmem:[%s2741 + $0x1a0] sm:$0xf]
    %v2847 = vld [vmem:[%s2741 + $0x1a4] sm:$0xf]
    %v2848 = vld [vmem:[%s2741 + $0x1a8] sm:$0xf]
    %v2849 = vld [vmem:[%s2741 + $0x1ac] sm:$0xf]
    %v2850 = vld [vmem:[%s2741 + $0x1b0] sm:$0xf]
    %v2851 = vld [vmem:[%s2741 + $0x1b4] sm:$0xf]
    %v2852 = vld [vmem:[%s2741 + $0x1b8] sm:$0xf]
    %v2853 = vld [vmem:[%s2741 + $0x1bc] sm:$0xf]
    %v2854 = vld [vmem:[%s2741 + $0x1c0] sm:$0xf]
    %v2855 = vld [vmem:[%s2741 + $0x1c4] sm:$0xf]
    %v2856 = vld [vmem:[%s2741 + $0x1c8] sm:$0xf]
    %v2857 = vld [vmem:[%s2741 + $0x1cc] sm:$0xf]
    %v2858 = vld [vmem:[%s2741 + $0x1d0] sm:$0xf]
    %v2859 = vld [vmem:[%s2741 + $0x1d4] sm:$0xf]
    %v2860 = vld [vmem:[%s2741 + $0x1d8] sm:$0xf]
    %v2861 = vld [vmem:[%s2741 + $0x1dc] sm:$0xf]
    %v2862 = vld [vmem:[%s2741 + $0x1e0] sm:$0xf]
    %v2863 = vld [vmem:[%s2741 + $0x1e4] sm:$0xf]
    %v2864 = vld [vmem:[%s2741 + $0x1e8] sm:$0xf]
    %v2865 = vld [vmem:[%s2741 + $0x1ec] sm:$0xf]
    %v2866 = vld [vmem:[%s2741 + $0x1f0] sm:$0xf]
    %v2867 = vld [vmem:[%s2741 + $0x1f4] sm:$0xf]
    %v2868 = vld [vmem:[%s2741 + $0x1f8] sm:$0xf]
    %v2869 = vld [vmem:[%s2741 + $0x1fc] sm:$0xf]
    %v2870 = vrot.slane %v1467, 1
    %v2871 = vrot.slane %v1470, 1
    %v2872 = vrot.slane %v1473, 1
    %v2873 = vrot.slane %v1476, 1
    %v2874 = vrot.slane %v1479, 1
    %v2875 = vrot.slane %v1482, 1
    %v2876 = vrot.slane %v1485, 1
    %v2877 = vrot.slane %v1488, 1
    %v3014 = vunpack.c.l.b16 %v2742
    %v3015 = vunpack.c.l.b16 %v2743
    %v3016 = vunpack.c.l.b16 %v2744
    %v3017 = vunpack.c.l.b16 %v2745
    %v3018 = vunpack.c.l.b16 %v2746
    %v3019 = vunpack.c.l.b16 %v2747
    %v3020 = vunpack.c.l.b16 %v2748
    %v3021 = vunpack.c.l.b16 %v2749
    %v3022 = vunpack.c.l.b16 %v2750
    %v3023 = vunpack.c.l.b16 %v2751
    %v3024 = vunpack.c.l.b16 %v2752
    %v3025 = vunpack.c.l.b16 %v2753
    %v3026 = vunpack.c.l.b16 %v2754
    %v3027 = vunpack.c.l.b16 %v2755
    %v3028 = vunpack.c.l.b16 %v2756
    %v3029 = vunpack.c.l.b16 %v2757
    %v3030 = vunpack.c.l.b16 %v2758
    %v3031 = vunpack.c.l.b16 %v2759
    %v3032 = vunpack.c.l.b16 %v2760
    %v3033 = vunpack.c.l.b16 %v2761
    %v3034 = vunpack.c.l.b16 %v2762
    %v3035 = vunpack.c.l.b16 %v2763
    %v3036 = vunpack.c.l.b16 %v2764
    %v3037 = vunpack.c.l.b16 %v2765
    %v3038 = vunpack.c.l.b16 %v2766
    %v3039 = vunpack.c.l.b16 %v2767
    %v3040 = vunpack.c.l.b16 %v2768
    %v3041 = vunpack.c.l.b16 %v2769
    %v3042 = vunpack.c.l.b16 %v2770
    %v3043 = vunpack.c.l.b16 %v2771
    %v3044 = vunpack.c.l.b16 %v2772
    %v3045 = vunpack.c.l.b16 %v2773
    %v3046 = vunpack.c.l.b16 %v2774
    %v3047 = vunpack.c.l.b16 %v2775
    %v3048 = vunpack.c.l.b16 %v2776
    %v3049 = vunpack.c.l.b16 %v2777
    %v3050 = vunpack.c.l.b16 %v2778
    %v3051 = vunpack.c.l.b16 %v2779
    %v3052 = vunpack.c.l.b16 %v2780
    %v3053 = vunpack.c.l.b16 %v2781
    %v3054 = vunpack.c.l.b16 %v2782
    %v3055 = vunpack.c.l.b16 %v2783
    %v3056 = vunpack.c.l.b16 %v2784
    %v3057 = vunpack.c.l.b16 %v2785
    %v3058 = vunpack.c.l.b16 %v2786
    %v3059 = vunpack.c.l.b16 %v2787
    %v3060 = vunpack.c.l.b16 %v2788
    %v3061 = vunpack.c.l.b16 %v2789
    %v3062 = vunpack.c.l.b16 %v2790
    %v3063 = vunpack.c.l.b16 %v2791
    %v3064 = vunpack.c.l.b16 %v2792
    %v3065 = vunpack.c.l.b16 %v2793
    %v3066 = vunpack.c.l.b16 %v2794
    %v3067 = vunpack.c.l.b16 %v2795
    %v3068 = vunpack.c.l.b16 %v2796
    %v3069 = vunpack.c.l.b16 %v2797
    %v3070 = vunpack.c.l.b16 %v2798
    %v3071 = vunpack.c.l.b16 %v2799
    %v3072 = vunpack.c.l.b16 %v2800
    %v3073 = vunpack.c.l.b16 %v2801
    %v3074 = vunpack.c.l.b16 %v2802
    %v3075 = vunpack.c.l.b16 %v2803
    %v3076 = vunpack.c.l.b16 %v2804
    %v3077 = vunpack.c.l.b16 %v2805
    %v3078 = vunpack.c.l.b16 %v2806
    %v3079 = vunpack.c.l.b16 %v2807
    %v3080 = vunpack.c.l.b16 %v2808
    %v3081 = vunpack.c.l.b16 %v2809
    %v3082 = vunpack.c.l.b16 %v2810
    %v3083 = vunpack.c.l.b16 %v2811
    %v3084 = vunpack.c.l.b16 %v2812
    %v3085 = vunpack.c.l.b16 %v2813
    %v3086 = vunpack.c.l.b16 %v2814
    %v3087 = vunpack.c.l.b16 %v2815
    %v3088 = vunpack.c.l.b16 %v2816
    %v3089 = vunpack.c.l.b16 %v2817
    %v3090 = vunpack.c.l.b16 %v2818
    %v3091 = vunpack.c.l.b16 %v2819
    %v3092 = vunpack.c.l.b16 %v2820
    %v3093 = vunpack.c.l.b16 %v2821
    %v3094 = vunpack.c.l.b16 %v2822
    %v3095 = vunpack.c.l.b16 %v2823
    %v3096 = vunpack.c.l.b16 %v2824
    %v3097 = vunpack.c.l.b16 %v2825
    %v3098 = vunpack.c.l.b16 %v2826
    %v3099 = vunpack.c.l.b16 %v2827
    %v3100 = vunpack.c.l.b16 %v2828
    %v3101 = vunpack.c.l.b16 %v2829
    %v3102 = vunpack.c.l.b16 %v2830
    %v3103 = vunpack.c.l.b16 %v2831
    %v3104 = vunpack.c.l.b16 %v2832
    %v3105 = vunpack.c.l.b16 %v2833
    %v3106 = vunpack.c.l.b16 %v2834
    %v3107 = vunpack.c.l.b16 %v2835
    %v3108 = vunpack.c.l.b16 %v2836
    %v3109 = vunpack.c.l.b16 %v2837
    %v3110 = vunpack.c.l.b16 %v2838
    %v3111 = vunpack.c.l.b16 %v2839
    %v3112 = vunpack.c.l.b16 %v2840
    %v3113 = vunpack.c.l.b16 %v2841
    %v3114 = vunpack.c.l.b16 %v2842
    %v3115 = vunpack.c.l.b16 %v2843
    %v3116 = vunpack.c.l.b16 %v2844
    %v3117 = vunpack.c.l.b16 %v2845
    %v3118 = vunpack.c.l.b16 %v2846
    %v3119 = vunpack.c.l.b16 %v2847
    %v3120 = vunpack.c.l.b16 %v2848
    %v3121 = vunpack.c.l.b16 %v2849
    %v3122 = vunpack.c.l.b16 %v2850
    %v3123 = vunpack.c.l.b16 %v2851
    %v3124 = vunpack.c.l.b16 %v2852
    %v3125 = vunpack.c.l.b16 %v2853
    %v3126 = vunpack.c.l.b16 %v2854
    %v3127 = vunpack.c.l.b16 %v2855
    %v3128 = vunpack.c.l.b16 %v2856
    %v3129 = vunpack.c.l.b16 %v2857
    %v3130 = vunpack.c.l.b16 %v2858
    %v3131 = vunpack.c.l.b16 %v2859
    %v3132 = vunpack.c.l.b16 %v2860
    %v3133 = vunpack.c.l.b16 %v2861
    %v3134 = vunpack.c.l.b16 %v2862
    %v3135 = vunpack.c.l.b16 %v2863
    %v3136 = vunpack.c.l.b16 %v2864
    %v3137 = vunpack.c.l.b16 %v2865
    %v3138 = vunpack.c.l.b16 %v2866
    %v3139 = vunpack.c.l.b16 %v2867
    %v3140 = vunpack.c.l.b16 %v2868
    %v3141 = vunpack.c.l.b16 %v2869
    %v3142 = vpack.c.b16 %v3015, %v3014
    %v3143 = vpack.c.b16 %v3017, %v3016
    %v3144 = vpack.c.b16 %v3019, %v3018
    %v3145 = vpack.c.b16 %v3021, %v3020
    %v3146 = vpack.c.b16 %v3023, %v3022
    %v3147 = vpack.c.b16 %v3025, %v3024
    %v3148 = vpack.c.b16 %v3027, %v3026
    %v3149 = vpack.c.b16 %v3029, %v3028
    %v3150 = vpack.c.b16 %v3031, %v3030
    %v3151 = vpack.c.b16 %v3033, %v3032
    %v3152 = vpack.c.b16 %v3035, %v3034
    %v3153 = vpack.c.b16 %v3037, %v3036
    %v3154 = vpack.c.b16 %v3039, %v3038
    %v3155 = vpack.c.b16 %v3041, %v3040
    %v3156 = vpack.c.b16 %v3043, %v3042
    %v3157 = vpack.c.b16 %v3045, %v3044
    %v3158 = vpack.c.b16 %v3047, %v3046
    %v3159 = vpack.c.b16 %v3049, %v3048
    %v3160 = vpack.c.b16 %v3051, %v3050
    %v3161 = vpack.c.b16 %v3053, %v3052
    %v3162 = vpack.c.b16 %v3055, %v3054
    %v3163 = vpack.c.b16 %v3057, %v3056
    %v3164 = vpack.c.b16 %v3059, %v3058
    %v3165 = vpack.c.b16 %v3061, %v3060
    %v3166 = vpack.c.b16 %v3063, %v3062
    %v3167 = vpack.c.b16 %v3065, %v3064
    %v3168 = vpack.c.b16 %v3067, %v3066
    %v3169 = vpack.c.b16 %v3069, %v3068
    %v3170 = vpack.c.b16 %v3071, %v3070
    %v3171 = vpack.c.b16 %v3073, %v3072
    %v3172 = vpack.c.b16 %v3075, %v3074
    %v3173 = vpack.c.b16 %v3077, %v3076
    %v3174 = vpack.c.b16 %v3079, %v3078
    %v3175 = vpack.c.b16 %v3081, %v3080
    %v3176 = vpack.c.b16 %v3083, %v3082
    %v3177 = vpack.c.b16 %v3085, %v3084
    %v3178 = vpack.c.b16 %v3087, %v3086
    %v3179 = vpack.c.b16 %v3089, %v3088
    %v3180 = vpack.c.b16 %v3091, %v3090
    %v3181 = vpack.c.b16 %v3093, %v3092
    %v3182 = vpack.c.b16 %v3095, %v3094
    %v3183 = vpack.c.b16 %v3097, %v3096
    %v3184 = vpack.c.b16 %v3099, %v3098
    %v3185 = vpack.c.b16 %v3101, %v3100
    %v3186 = vpack.c.b16 %v3103, %v3102
    %v3187 = vpack.c.b16 %v3105, %v3104
    %v3188 = vpack.c.b16 %v3107, %v3106
    %v3189 = vpack.c.b16 %v3109, %v3108
    %v3190 = vpack.c.b16 %v3111, %v3110
    %v3191 = vpack.c.b16 %v3113, %v3112
    %v3192 = vpack.c.b16 %v3115, %v3114
    %v3193 = vpack.c.b16 %v3117, %v3116
    %v3194 = vpack.c.b16 %v3119, %v3118
    %v3195 = vpack.c.b16 %v3121, %v3120
    %v3196 = vpack.c.b16 %v3123, %v3122
    %v3197 = vpack.c.b16 %v3125, %v3124
    %v3198 = vpack.c.b16 %v3127, %v3126
    %v3199 = vpack.c.b16 %v3129, %v3128
    %v3200 = vpack.c.b16 %v3131, %v3130
    %v3201 = vpack.c.b16 %v3133, %v3132
    %v3202 = vpack.c.b16 %v3135, %v3134
    %v3203 = vpack.c.b16 %v3137, %v3136
    %v3204 = vpack.c.b16 %v3139, %v3138
    %v3205 = vpack.c.b16 %v3141, %v3140
    %3270 = vmatprep.subr.bf16.mxu0 0
    %3271 = vmatpush1.bf16.msra.mxu0 %v3149
    %3272 = vmatprep.subr.bf16.mxu0 0
    %3273 = vmatpush1.bf16.msra.mxu0 %v3148
    %3274 = vmatprep.subr.bf16.mxu0 0
    %3275 = vmatpush1.bf16.msra.mxu0 %v3147
    %3276 = vmatprep.subr.bf16.mxu0 0
    %3277 = vmatpush1.bf16.msra.mxu0 %v3146
    %3278 = vmatprep.subr.bf16.mxu0 0
    %3279 = vmatpush1.bf16.msra.mxu0 %v3145
    %3280 = vmatprep.subr.bf16.mxu0 0
    %3281 = vmatpush1.bf16.msra.mxu0 %v3144
    %3282 = vmatprep.subr.bf16.mxu0 0
    %3283 = vmatpush1.bf16.msra.mxu0 %v3143
    %3284 = vmatprep.subr.bf16.mxu0 0
    %3285 = vmatpush1.bf16.msra.mxu0 %v3142
    %3286 = vmatprep.subr.bf16.mxu0 0
    %3287 = vmatpush2.bf16.msra.mxu0 %v3157
    %3288 = vmatprep.subr.bf16.mxu0 0
    %3289 = vmatpush2.bf16.msra.mxu0 %v3156
    %3290 = vmatprep.subr.bf16.mxu0 0
    %3291 = vmatpush2.bf16.msra.mxu0 %v3155
    %3292 = vmatprep.subr.bf16.mxu0 0
    %3293 = vmatpush2.bf16.msra.mxu0 %v3154
    %3294 = vmatprep.subr.bf16.mxu0 0
    %3295 = vmatpush2.bf16.msra.mxu0 %v3153
    %3296 = vmatprep.subr.bf16.mxu0 0
    %3297 = vmatpush2.bf16.msra.mxu0 %v3152
    %3298 = vmatprep.subr.bf16.mxu0 0
    %3299 = vmatpush2.bf16.msra.mxu0 %v3151
    %3300 = vmatprep.subr.bf16.mxu0 0
    %3301 = vmatpush2.bf16.msra.mxu0 %v3150
    %3302 = vmatprep.mubr.bf16.mxu0 %v2871
    %3303 = vmatmul.mubr.bf16.gmra.mxu0 %v2870
    %v3304 = vpop.f32.mrf.mxu0
    %v3305 = vadd.f32 0.0, %v3304
    %v3306 = vpop.f32.mrf.mxu0
    %v3307 = vpop.f32.mrf.mxu0
    %v3308 = vpop.f32.mrf.mxu0
    %3309 = vdwg.mxu0
    %3310 = vmatprep.subr.bf16.mxu0 0
    %3311 = vmatpush1.bf16.msra.mxu0 %v3165
    %3312 = vmatprep.subr.bf16.mxu0 0
    %3313 = vmatpush1.bf16.msra.mxu0 %v3164
    %3314 = vmatprep.subr.bf16.mxu0 0
    %3315 = vmatpush1.bf16.msra.mxu0 %v3163
    %3316 = vmatprep.subr.bf16.mxu0 0
    %3317 = vmatpush1.bf16.msra.mxu0 %v3162
    %3318 = vmatprep.subr.bf16.mxu0 0
    %3319 = vmatpush1.bf16.msra.mxu0 %v3161
    %3320 = vmatprep.subr.bf16.mxu0 0
    %3321 = vmatpush1.bf16.msra.mxu0 %v3160
    %3322 = vmatprep.subr.bf16.mxu0 0
    %3323 = vmatpush1.bf16.msra.mxu0 %v3159
    %3324 = vmatprep.subr.bf16.mxu0 0
    %3325 = vmatpush1.bf16.msra.mxu0 %v3158
    %3326 = vmatprep.subr.bf16.mxu0 0
    %3327 = vmatpush2.bf16.msra.mxu0 %v3173
    %3328 = vmatprep.subr.bf16.mxu0 0
    %3329 = vmatpush2.bf16.msra.mxu0 %v3172
    %3330 = vmatprep.subr.bf16.mxu0 0
    %3331 = vmatpush2.bf16.msra.mxu0 %v3171
    %3332 = vmatprep.subr.bf16.mxu0 0
    %3333 = vmatpush2.bf16.msra.mxu0 %v3170
    %3334 = vmatprep.subr.bf16.mxu0 0
    %3335 = vmatpush2.bf16.msra.mxu0 %v3169
    %3336 = vmatprep.subr.bf16.mxu0 0
    %3337 = vmatpush2.bf16.msra.mxu0 %v3168
    %3338 = vmatprep.subr.bf16.mxu0 0
    %3339 = vmatpush2.bf16.msra.mxu0 %v3167
    %3340 = vmatprep.subr.bf16.mxu0 0
    %3341 = vmatpush2.bf16.msra.mxu0 %v3166
    %3342 = vmatprep.mubr.bf16.mxu0 %v2873
    %3343 = vmatmul.mubr.bf16.gmra.mxu0 %v2872
    %v3344 = vpop.f32.mrf.mxu0
    %v3345 = vadd.f32 %v3305, %v3344
    %v3346 = vpop.f32.mrf.mxu0
    %v3347 = vpop.f32.mrf.mxu0
    %v3348 = vpop.f32.mrf.mxu0
    %3349 = vdwg.mxu0
    %3350 = vmatprep.subr.bf16.mxu0 0
    %3351 = vmatpush1.bf16.msra.mxu0 %v3181
    %3352 = vmatprep.subr.bf16.mxu0 0
    %3353 = vmatpush1.bf16.msra.mxu0 %v3180
    %3354 = vmatprep.subr.bf16.mxu0 0
    %3355 = vmatpush1.bf16.msra.mxu0 %v3179
    %3356 = vmatprep.subr.bf16.mxu0 0
    %3357 = vmatpush1.bf16.msra.mxu0 %v3178
    %3358 = vmatprep.subr.bf16.mxu0 0
    %3359 = vmatpush1.bf16.msra.mxu0 %v3177
    %3360 = vmatprep.subr.bf16.mxu0 0
    %3361 = vmatpush1.bf16.msra.mxu0 %v3176
    %3362 = vmatprep.subr.bf16.mxu0 0
    %3363 = vmatpush1.bf16.msra.mxu0 %v3175
    %3364 = vmatprep.subr.bf16.mxu0 0
    %3365 = vmatpush1.bf16.msra.mxu0 %v3174
    %3366 = vmatprep.subr.bf16.mxu0 0
    %3367 = vmatpush2.bf16.msra.mxu0 %v3189
    %3368 = vmatprep.subr.bf16.mxu0 0
    %3369 = vmatpush2.bf16.msra.mxu0 %v3188
    %3370 = vmatprep.subr.bf16.mxu0 0
    %3371 = vmatpush2.bf16.msra.mxu0 %v3187
    %3372 = vmatprep.subr.bf16.mxu0 0
    %3373 = vmatpush2.bf16.msra.mxu0 %v3186
    %3374 = vmatprep.subr.bf16.mxu0 0
    %3375 = vmatpush2.bf16.msra.mxu0 %v3185
    %3376 = vmatprep.subr.bf16.mxu0 0
    %3377 = vmatpush2.bf16.msra.mxu0 %v3184
    %3378 = vmatprep.subr.bf16.mxu0 0
    %3379 = vmatpush2.bf16.msra.mxu0 %v3183
    %3380 = vmatprep.subr.bf16.mxu0 0
    %3381 = vmatpush2.bf16.msra.mxu0 %v3182
    %3382 = vmatprep.mubr.bf16.mxu0 %v2875
    %3383 = vmatmul.mubr.bf16.gmra.mxu0 %v2874
    %v3384 = vpop.f32.mrf.mxu0
    %v3385 = vadd.f32 %v3345, %v3384
    %v3386 = vpop.f32.mrf.mxu0
    %v3387 = vpop.f32.mrf.mxu0
    %v3388 = vpop.f32.mrf.mxu0
    %3389 = vdwg.mxu0
    %3390 = vmatprep.subr.bf16.mxu0 0
    %3391 = vmatpush1.bf16.msra.mxu0 %v3197
    %3392 = vmatprep.subr.bf16.mxu0 0
    %3393 = vmatpush1.bf16.msra.mxu0 %v3196
    %3394 = vmatprep.subr.bf16.mxu0 0
    %3395 = vmatpush1.bf16.msra.mxu0 %v3195
    %3396 = vmatprep.subr.bf16.mxu0 0
    %3397 = vmatpush1.bf16.msra.mxu0 %v3194
    %3398 = vmatprep.subr.bf16.mxu0 0
    %3399 = vmatpush1.bf16.msra.mxu0 %v3193
    %3400 = vmatprep.subr.bf16.mxu0 0
    %3401 = vmatpush1.bf16.msra.mxu0 %v3192
    %3402 = vmatprep.subr.bf16.mxu0 0
    %3403 = vmatpush1.bf16.msra.mxu0 %v3191
    %3404 = vmatprep.subr.bf16.mxu0 0
    %3405 = vmatpush1.bf16.msra.mxu0 %v3190
    %3406 = vmatprep.subr.bf16.mxu0 0
    %3407 = vmatpush2.bf16.msra.mxu0 %v3205
    %3408 = vmatprep.subr.bf16.mxu0 0
    %3409 = vmatpush2.bf16.msra.mxu0 %v3204
    %3410 = vmatprep.subr.bf16.mxu0 0
    %3411 = vmatpush2.bf16.msra.mxu0 %v3203
    %3412 = vmatprep.subr.bf16.mxu0 0
    %3413 = vmatpush2.bf16.msra.mxu0 %v3202
    %3414 = vmatprep.subr.bf16.mxu0 0
    %3415 = vmatpush2.bf16.msra.mxu0 %v3201
    %3416 = vmatprep.subr.bf16.mxu0 0
    %3417 = vmatpush2.bf16.msra.mxu0 %v3200
    %3418 = vmatprep.subr.bf16.mxu0 0
    %3419 = vmatpush2.bf16.msra.mxu0 %v3199
    %3420 = vmatprep.subr.bf16.mxu0 0
    %3421 = vmatpush2.bf16.msra.mxu0 %v3198
    %3422 = vmatprep.mubr.bf16.mxu0 %v2877
    %3423 = vmatmul.mubr.bf16.gmra.mxu0 %v2876
    %v3424 = vpop.f32.mrf.mxu0
    %v3425 = vadd.f32 %v3385, %v3424
    %v3426 = vpop.f32.mrf.mxu0
    %v3427 = vpop.f32.mrf.mxu0
    %v3428 = vpop.f32.mrf.mxu0
    %3429 = vdwg.mxu0
    %v3430 = vadd.f32 %v2740, %v3425
    %s3431 = scalar_lea.vmem %s2, 2048
    %v3432 = vld [vmem:[%s3431] sm:$0xf]
    %v3433 = vld [vmem:[%s3431 + $0x4] sm:$0xf]
    %v3434 = vld [vmem:[%s3431 + $0x8] sm:$0xf]
    %v3435 = vld [vmem:[%s3431 + $0xc] sm:$0xf]
    %v3436 = vld [vmem:[%s3431 + $0x10] sm:$0xf]
    %v3437 = vld [vmem:[%s3431 + $0x14] sm:$0xf]
    %v3438 = vld [vmem:[%s3431 + $0x18] sm:$0xf]
    %v3439 = vld [vmem:[%s3431 + $0x1c] sm:$0xf]
    %v3440 = vld [vmem:[%s3431 + $0x20] sm:$0xf]
    %v3441 = vld [vmem:[%s3431 + $0x24] sm:$0xf]
    %v3442 = vld [vmem:[%s3431 + $0x28] sm:$0xf]
    %v3443 = vld [vmem:[%s3431 + $0x2c] sm:$0xf]
    %v3444 = vld [vmem:[%s3431 + $0x30] sm:$0xf]
    %v3445 = vld [vmem:[%s3431 + $0x34] sm:$0xf]
    %v3446 = vld [vmem:[%s3431 + $0x38] sm:$0xf]
    %v3447 = vld [vmem:[%s3431 + $0x3c] sm:$0xf]
    %v3448 = vld [vmem:[%s3431 + $0x40] sm:$0xf]
    %v3449 = vld [vmem:[%s3431 + $0x44] sm:$0xf]
    %v3450 = vld [vmem:[%s3431 + $0x48] sm:$0xf]
    %v3451 = vld [vmem:[%s3431 + $0x4c] sm:$0xf]
    %v3452 = vld [vmem:[%s3431 + $0x50] sm:$0xf]
    %v3453 = vld [vmem:[%s3431 + $0x54] sm:$0xf]
    %v3454 = vld [vmem:[%s3431 + $0x58] sm:$0xf]
    %v3455 = vld [vmem:[%s3431 + $0x5c] sm:$0xf]
    %v3456 = vld [vmem:[%s3431 + $0x60] sm:$0xf]
    %v3457 = vld [vmem:[%s3431 + $0x64] sm:$0xf]
    %v3458 = vld [vmem:[%s3431 + $0x68] sm:$0xf]
    %v3459 = vld [vmem:[%s3431 + $0x6c] sm:$0xf]
    %v3460 = vld [vmem:[%s3431 + $0x70] sm:$0xf]
    %v3461 = vld [vmem:[%s3431 + $0x74] sm:$0xf]
    %v3462 = vld [vmem:[%s3431 + $0x78] sm:$0xf]
    %v3463 = vld [vmem:[%s3431 + $0x7c] sm:$0xf]
    %v3464 = vld [vmem:[%s3431 + $0x80] sm:$0xf]
    %v3465 = vld [vmem:[%s3431 + $0x84] sm:$0xf]
    %v3466 = vld [vmem:[%s3431 + $0x88] sm:$0xf]
    %v3467 = vld [vmem:[%s3431 + $0x8c] sm:$0xf]
    %v3468 = vld [vmem:[%s3431 + $0x90] sm:$0xf]
    %v3469 = vld [vmem:[%s3431 + $0x94] sm:$0xf]
    %v3470 = vld [vmem:[%s3431 + $0x98] sm:$0xf]
    %v3471 = vld [vmem:[%s3431 + $0x9c] sm:$0xf]
    %v3472 = vld [vmem:[%s3431 + $0xa0] sm:$0xf]
    %v3473 = vld [vmem:[%s3431 + $0xa4] sm:$0xf]
    %v3474 = vld [vmem:[%s3431 + $0xa8] sm:$0xf]
    %v3475 = vld [vmem:[%s3431 + $0xac] sm:$0xf]
    %v3476 = vld [vmem:[%s3431 + $0xb0] sm:$0xf]
    %v3477 = vld [vmem:[%s3431 + $0xb4] sm:$0xf]
    %v3478 = vld [vmem:[%s3431 + $0xb8] sm:$0xf]
    %v3479 = vld [vmem:[%s3431 + $0xbc] sm:$0xf]
    %v3480 = vld [vmem:[%s3431 + $0xc0] sm:$0xf]
    %v3481 = vld [vmem:[%s3431 + $0xc4] sm:$0xf]
    %v3482 = vld [vmem:[%s3431 + $0xc8] sm:$0xf]
    %v3483 = vld [vmem:[%s3431 + $0xcc] sm:$0xf]
    %v3484 = vld [vmem:[%s3431 + $0xd0] sm:$0xf]
    %v3485 = vld [vmem:[%s3431 + $0xd4] sm:$0xf]
    %v3486 = vld [vmem:[%s3431 + $0xd8] sm:$0xf]
    %v3487 = vld [vmem:[%s3431 + $0xdc] sm:$0xf]
    %v3488 = vld [vmem:[%s3431 + $0xe0] sm:$0xf]
    %v3489 = vld [vmem:[%s3431 + $0xe4] sm:$0xf]
    %v3490 = vld [vmem:[%s3431 + $0xe8] sm:$0xf]
    %v3491 = vld [vmem:[%s3431 + $0xec] sm:$0xf]
    %v3492 = vld [vmem:[%s3431 + $0xf0] sm:$0xf]
    %v3493 = vld [vmem:[%s3431 + $0xf4] sm:$0xf]
    %v3494 = vld [vmem:[%s3431 + $0xf8] sm:$0xf]
    %v3495 = vld [vmem:[%s3431 + $0xfc] sm:$0xf]
    %v3496 = vld [vmem:[%s3431 + $0x100] sm:$0xf]
    %v3497 = vld [vmem:[%s3431 + $0x104] sm:$0xf]
    %v3498 = vld [vmem:[%s3431 + $0x108] sm:$0xf]
    %v3499 = vld [vmem:[%s3431 + $0x10c] sm:$0xf]
    %v3500 = vld [vmem:[%s3431 + $0x110] sm:$0xf]
    %v3501 = vld [vmem:[%s3431 + $0x114] sm:$0xf]
    %v3502 = vld [vmem:[%s3431 + $0x118] sm:$0xf]
    %v3503 = vld [vmem:[%s3431 + $0x11c] sm:$0xf]
    %v3504 = vld [vmem:[%s3431 + $0x120] sm:$0xf]
    %v3505 = vld [vmem:[%s3431 + $0x124] sm:$0xf]
    %v3506 = vld [vmem:[%s3431 + $0x128] sm:$0xf]
    %v3507 = vld [vmem:[%s3431 + $0x12c] sm:$0xf]
    %v3508 = vld [vmem:[%s3431 + $0x130] sm:$0xf]
    %v3509 = vld [vmem:[%s3431 + $0x134] sm:$0xf]
    %v3510 = vld [vmem:[%s3431 + $0x138] sm:$0xf]
    %v3511 = vld [vmem:[%s3431 + $0x13c] sm:$0xf]
    %v3512 = vld [vmem:[%s3431 + $0x140] sm:$0xf]
    %v3513 = vld [vmem:[%s3431 + $0x144] sm:$0xf]
    %v3514 = vld [vmem:[%s3431 + $0x148] sm:$0xf]
    %v3515 = vld [vmem:[%s3431 + $0x14c] sm:$0xf]
    %v3516 = vld [vmem:[%s3431 + $0x150] sm:$0xf]
    %v3517 = vld [vmem:[%s3431 + $0x154] sm:$0xf]
    %v3518 = vld [vmem:[%s3431 + $0x158] sm:$0xf]
    %v3519 = vld [vmem:[%s3431 + $0x15c] sm:$0xf]
    %v3520 = vld [vmem:[%s3431 + $0x160] sm:$0xf]
    %v3521 = vld [vmem:[%s3431 + $0x164] sm:$0xf]
    %v3522 = vld [vmem:[%s3431 + $0x168] sm:$0xf]
    %v3523 = vld [vmem:[%s3431 + $0x16c] sm:$0xf]
    %v3524 = vld [vmem:[%s3431 + $0x170] sm:$0xf]
    %v3525 = vld [vmem:[%s3431 + $0x174] sm:$0xf]
    %v3526 = vld [vmem:[%s3431 + $0x178] sm:$0xf]
    %v3527 = vld [vmem:[%s3431 + $0x17c] sm:$0xf]
    %v3528 = vld [vmem:[%s3431 + $0x180] sm:$0xf]
    %v3529 = vld [vmem:[%s3431 + $0x184] sm:$0xf]
    %v3530 = vld [vmem:[%s3431 + $0x188] sm:$0xf]
    %v3531 = vld [vmem:[%s3431 + $0x18c] sm:$0xf]
    %v3532 = vld [vmem:[%s3431 + $0x190] sm:$0xf]
    %v3533 = vld [vmem:[%s3431 + $0x194] sm:$0xf]
    %v3534 = vld [vmem:[%s3431 + $0x198] sm:$0xf]
    %v3535 = vld [vmem:[%s3431 + $0x19c] sm:$0xf]
    %v3536 = vld [vmem:[%s3431 + $0x1a0] sm:$0xf]
    %v3537 = vld [vmem:[%s3431 + $0x1a4] sm:$0xf]
    %v3538 = vld [vmem:[%s3431 + $0x1a8] sm:$0xf]
    %v3539 = vld [vmem:[%s3431 + $0x1ac] sm:$0xf]
    %v3540 = vld [vmem:[%s3431 + $0x1b0] sm:$0xf]
    %v3541 = vld [vmem:[%s3431 + $0x1b4] sm:$0xf]
    %v3542 = vld [vmem:[%s3431 + $0x1b8] sm:$0xf]
    %v3543 = vld [vmem:[%s3431 + $0x1bc] sm:$0xf]
    %v3544 = vld [vmem:[%s3431 + $0x1c0] sm:$0xf]
    %v3545 = vld [vmem:[%s3431 + $0x1c4] sm:$0xf]
    %v3546 = vld [vmem:[%s3431 + $0x1c8] sm:$0xf]
    %v3547 = vld [vmem:[%s3431 + $0x1cc] sm:$0xf]
    %v3548 = vld [vmem:[%s3431 + $0x1d0] sm:$0xf]
    %v3549 = vld [vmem:[%s3431 + $0x1d4] sm:$0xf]
    %v3550 = vld [vmem:[%s3431 + $0x1d8] sm:$0xf]
    %v3551 = vld [vmem:[%s3431 + $0x1dc] sm:$0xf]
    %v3552 = vld [vmem:[%s3431 + $0x1e0] sm:$0xf]
    %v3553 = vld [vmem:[%s3431 + $0x1e4] sm:$0xf]
    %v3554 = vld [vmem:[%s3431 + $0x1e8] sm:$0xf]
    %v3555 = vld [vmem:[%s3431 + $0x1ec] sm:$0xf]
    %v3556 = vld [vmem:[%s3431 + $0x1f0] sm:$0xf]
    %v3557 = vld [vmem:[%s3431 + $0x1f4] sm:$0xf]
    %v3558 = vld [vmem:[%s3431 + $0x1f8] sm:$0xf]
    %v3559 = vld [vmem:[%s3431 + $0x1fc] sm:$0xf]
    %v3560 = vrot.slane %v655, 2
    %v3561 = vrot.slane %v656, 2
    %v3562 = vrot.slane %v657, 2
    %v3563 = vrot.slane %v658, 2
    %v3564 = vrot.slane %v659, 2
    %v3565 = vrot.slane %v660, 2
    %v3566 = vrot.slane %v661, 2
    %v3567 = vrot.slane %v662, 2
    %v3704 = vunpack.c.l.b16 %v3432
    %v3705 = vunpack.c.l.b16 %v3433
    %v3706 = vunpack.c.l.b16 %v3434
    %v3707 = vunpack.c.l.b16 %v3435
    %v3708 = vunpack.c.l.b16 %v3436
    %v3709 = vunpack.c.l.b16 %v3437
    %v3710 = vunpack.c.l.b16 %v3438
    %v3711 = vunpack.c.l.b16 %v3439
    %v3712 = vunpack.c.l.b16 %v3440
    %v3713 = vunpack.c.l.b16 %v3441
    %v3714 = vunpack.c.l.b16 %v3442
    %v3715 = vunpack.c.l.b16 %v3443
    %v3716 = vunpack.c.l.b16 %v3444
    %v3717 = vunpack.c.l.b16 %v3445
    %v3718 = vunpack.c.l.b16 %v3446
    %v3719 = vunpack.c.l.b16 %v3447
    %v3720 = vunpack.c.l.b16 %v3448
    %v3721 = vunpack.c.l.b16 %v3449
    %v3722 = vunpack.c.l.b16 %v3450
    %v3723 = vunpack.c.l.b16 %v3451
    %v3724 = vunpack.c.l.b16 %v3452
    %v3725 = vunpack.c.l.b16 %v3453
    %v3726 = vunpack.c.l.b16 %v3454
    %v3727 = vunpack.c.l.b16 %v3455
    %v3728 = vunpack.c.l.b16 %v3456
    %v3729 = vunpack.c.l.b16 %v3457
    %v3730 = vunpack.c.l.b16 %v3458
    %v3731 = vunpack.c.l.b16 %v3459
    %v3732 = vunpack.c.l.b16 %v3460
    %v3733 = vunpack.c.l.b16 %v3461
    %v3734 = vunpack.c.l.b16 %v3462
    %v3735 = vunpack.c.l.b16 %v3463
    %v3736 = vunpack.c.l.b16 %v3464
    %v3737 = vunpack.c.l.b16 %v3465
    %v3738 = vunpack.c.l.b16 %v3466
    %v3739 = vunpack.c.l.b16 %v3467
    %v3740 = vunpack.c.l.b16 %v3468
    %v3741 = vunpack.c.l.b16 %v3469
    %v3742 = vunpack.c.l.b16 %v3470
    %v3743 = vunpack.c.l.b16 %v3471
    %v3744 = vunpack.c.l.b16 %v3472
    %v3745 = vunpack.c.l.b16 %v3473
    %v3746 = vunpack.c.l.b16 %v3474
    %v3747 = vunpack.c.l.b16 %v3475
    %v3748 = vunpack.c.l.b16 %v3476
    %v3749 = vunpack.c.l.b16 %v3477
    %v3750 = vunpack.c.l.b16 %v3478
    %v3751 = vunpack.c.l.b16 %v3479
    %v3752 = vunpack.c.l.b16 %v3480
    %v3753 = vunpack.c.l.b16 %v3481
    %v3754 = vunpack.c.l.b16 %v3482
    %v3755 = vunpack.c.l.b16 %v3483
    %v3756 = vunpack.c.l.b16 %v3484
    %v3757 = vunpack.c.l.b16 %v3485
    %v3758 = vunpack.c.l.b16 %v3486
    %v3759 = vunpack.c.l.b16 %v3487
    %v3760 = vunpack.c.l.b16 %v3488
    %v3761 = vunpack.c.l.b16 %v3489
    %v3762 = vunpack.c.l.b16 %v3490
    %v3763 = vunpack.c.l.b16 %v3491
    %v3764 = vunpack.c.l.b16 %v3492
    %v3765 = vunpack.c.l.b16 %v3493
    %v3766 = vunpack.c.l.b16 %v3494
    %v3767 = vunpack.c.l.b16 %v3495
    %v3768 = vunpack.c.l.b16 %v3496
    %v3769 = vunpack.c.l.b16 %v3497
    %v3770 = vunpack.c.l.b16 %v3498
    %v3771 = vunpack.c.l.b16 %v3499
    %v3772 = vunpack.c.l.b16 %v3500
    %v3773 = vunpack.c.l.b16 %v3501
    %v3774 = vunpack.c.l.b16 %v3502
    %v3775 = vunpack.c.l.b16 %v3503
    %v3776 = vunpack.c.l.b16 %v3504
    %v3777 = vunpack.c.l.b16 %v3505
    %v3778 = vunpack.c.l.b16 %v3506
    %v3779 = vunpack.c.l.b16 %v3507
    %v3780 = vunpack.c.l.b16 %v3508
    %v3781 = vunpack.c.l.b16 %v3509
    %v3782 = vunpack.c.l.b16 %v3510
    %v3783 = vunpack.c.l.b16 %v3511
    %v3784 = vunpack.c.l.b16 %v3512
    %v3785 = vunpack.c.l.b16 %v3513
    %v3786 = vunpack.c.l.b16 %v3514
    %v3787 = vunpack.c.l.b16 %v3515
    %v3788 = vunpack.c.l.b16 %v3516
    %v3789 = vunpack.c.l.b16 %v3517
    %v3790 = vunpack.c.l.b16 %v3518
    %v3791 = vunpack.c.l.b16 %v3519
    %v3792 = vunpack.c.l.b16 %v3520
    %v3793 = vunpack.c.l.b16 %v3521
    %v3794 = vunpack.c.l.b16 %v3522
    %v3795 = vunpack.c.l.b16 %v3523
    %v3796 = vunpack.c.l.b16 %v3524
    %v3797 = vunpack.c.l.b16 %v3525
    %v3798 = vunpack.c.l.b16 %v3526
    %v3799 = vunpack.c.l.b16 %v3527
    %v3800 = vunpack.c.l.b16 %v3528
    %v3801 = vunpack.c.l.b16 %v3529
    %v3802 = vunpack.c.l.b16 %v3530
    %v3803 = vunpack.c.l.b16 %v3531
    %v3804 = vunpack.c.l.b16 %v3532
    %v3805 = vunpack.c.l.b16 %v3533
    %v3806 = vunpack.c.l.b16 %v3534
    %v3807 = vunpack.c.l.b16 %v3535
    %v3808 = vunpack.c.l.b16 %v3536
    %v3809 = vunpack.c.l.b16 %v3537
    %v3810 = vunpack.c.l.b16 %v3538
    %v3811 = vunpack.c.l.b16 %v3539
    %v3812 = vunpack.c.l.b16 %v3540
    %v3813 = vunpack.c.l.b16 %v3541
    %v3814 = vunpack.c.l.b16 %v3542
    %v3815 = vunpack.c.l.b16 %v3543
    %v3816 = vunpack.c.l.b16 %v3544
    %v3817 = vunpack.c.l.b16 %v3545
    %v3818 = vunpack.c.l.b16 %v3546
    %v3819 = vunpack.c.l.b16 %v3547
    %v3820 = vunpack.c.l.b16 %v3548
    %v3821 = vunpack.c.l.b16 %v3549
    %v3822 = vunpack.c.l.b16 %v3550
    %v3823 = vunpack.c.l.b16 %v3551
    %v3824 = vunpack.c.l.b16 %v3552
    %v3825 = vunpack.c.l.b16 %v3553
    %v3826 = vunpack.c.l.b16 %v3554
    %v3827 = vunpack.c.l.b16 %v3555
    %v3828 = vunpack.c.l.b16 %v3556
    %v3829 = vunpack.c.l.b16 %v3557
    %v3830 = vunpack.c.l.b16 %v3558
    %v3831 = vunpack.c.l.b16 %v3559
    %v3832 = vpack.c.b16 %v3705, %v3704
    %v3833 = vpack.c.b16 %v3707, %v3706
    %v3834 = vpack.c.b16 %v3709, %v3708
    %v3835 = vpack.c.b16 %v3711, %v3710
    %v3836 = vpack.c.b16 %v3713, %v3712
    %v3837 = vpack.c.b16 %v3715, %v3714
    %v3838 = vpack.c.b16 %v3717, %v3716
    %v3839 = vpack.c.b16 %v3719, %v3718
    %v3840 = vpack.c.b16 %v3721, %v3720
    %v3841 = vpack.c.b16 %v3723, %v3722
    %v3842 = vpack.c.b16 %v3725, %v3724
    %v3843 = vpack.c.b16 %v3727, %v3726
    %v3844 = vpack.c.b16 %v3729, %v3728
    %v3845 = vpack.c.b16 %v3731, %v3730
    %v3846 = vpack.c.b16 %v3733, %v3732
    %v3847 = vpack.c.b16 %v3735, %v3734
    %v3848 = vpack.c.b16 %v3737, %v3736
    %v3849 = vpack.c.b16 %v3739, %v3738
    %v3850 = vpack.c.b16 %v3741, %v3740
    %v3851 = vpack.c.b16 %v3743, %v3742
    %v3852 = vpack.c.b16 %v3745, %v3744
    %v3853 = vpack.c.b16 %v3747, %v3746
    %v3854 = vpack.c.b16 %v3749, %v3748
    %v3855 = vpack.c.b16 %v3751, %v3750
    %v3856 = vpack.c.b16 %v3753, %v3752
    %v3857 = vpack.c.b16 %v3755, %v3754
    %v3858 = vpack.c.b16 %v3757, %v3756
    %v3859 = vpack.c.b16 %v3759, %v3758
    %v3860 = vpack.c.b16 %v3761, %v3760
    %v3861 = vpack.c.b16 %v3763, %v3762
    %v3862 = vpack.c.b16 %v3765, %v3764
    %v3863 = vpack.c.b16 %v3767, %v3766
    %v3864 = vpack.c.b16 %v3769, %v3768
    %v3865 = vpack.c.b16 %v3771, %v3770
    %v3866 = vpack.c.b16 %v3773, %v3772
    %v3867 = vpack.c.b16 %v3775, %v3774
    %v3868 = vpack.c.b16 %v3777, %v3776
    %v3869 = vpack.c.b16 %v3779, %v3778
    %v3870 = vpack.c.b16 %v3781, %v3780
    %v3871 = vpack.c.b16 %v3783, %v3782
    %v3872 = vpack.c.b16 %v3785, %v3784
    %v3873 = vpack.c.b16 %v3787, %v3786
    %v3874 = vpack.c.b16 %v3789, %v3788
    %v3875 = vpack.c.b16 %v3791, %v3790
    %v3876 = vpack.c.b16 %v3793, %v3792
    %v3877 = vpack.c.b16 %v3795, %v3794
    %v3878 = vpack.c.b16 %v3797, %v3796
    %v3879 = vpack.c.b16 %v3799, %v3798
    %v3880 = vpack.c.b16 %v3801, %v3800
    %v3881 = vpack.c.b16 %v3803, %v3802
    %v3882 = vpack.c.b16 %v3805, %v3804
    %v3883 = vpack.c.b16 %v3807, %v3806
    %v3884 = vpack.c.b16 %v3809, %v3808
    %v3885 = vpack.c.b16 %v3811, %v3810
    %v3886 = vpack.c.b16 %v3813, %v3812
    %v3887 = vpack.c.b16 %v3815, %v3814
    %v3888 = vpack.c.b16 %v3817, %v3816
    %v3889 = vpack.c.b16 %v3819, %v3818
    %v3890 = vpack.c.b16 %v3821, %v3820
    %v3891 = vpack.c.b16 %v3823, %v3822
    %v3892 = vpack.c.b16 %v3825, %v3824
    %v3893 = vpack.c.b16 %v3827, %v3826
    %v3894 = vpack.c.b16 %v3829, %v3828
    %v3895 = vpack.c.b16 %v3831, %v3830
    %3960 = vmatprep.subr.bf16.mxu0 0
    %3961 = vmatpush1.bf16.msra.mxu0 %v3839
    %3962 = vmatprep.subr.bf16.mxu0 0
    %3963 = vmatpush1.bf16.msra.mxu0 %v3838
    %3964 = vmatprep.subr.bf16.mxu0 0
    %3965 = vmatpush1.bf16.msra.mxu0 %v3837
    %3966 = vmatprep.subr.bf16.mxu0 0
    %3967 = vmatpush1.bf16.msra.mxu0 %v3836
    %3968 = vmatprep.subr.bf16.mxu0 0
    %3969 = vmatpush1.bf16.msra.mxu0 %v3835
    %3970 = vmatprep.subr.bf16.mxu0 0
    %3971 = vmatpush1.bf16.msra.mxu0 %v3834
    %3972 = vmatprep.subr.bf16.mxu0 0
    %3973 = vmatpush1.bf16.msra.mxu0 %v3833
    %3974 = vmatprep.subr.bf16.mxu0 0
    %3975 = vmatpush1.bf16.msra.mxu0 %v3832
    %3976 = vmatprep.subr.bf16.mxu0 0
    %3977 = vmatpush2.bf16.msra.mxu0 %v3847
    %3978 = vmatprep.subr.bf16.mxu0 0
    %3979 = vmatpush2.bf16.msra.mxu0 %v3846
    %3980 = vmatprep.subr.bf16.mxu0 0
    %3981 = vmatpush2.bf16.msra.mxu0 %v3845
    %3982 = vmatprep.subr.bf16.mxu0 0
    %3983 = vmatpush2.bf16.msra.mxu0 %v3844
    %3984 = vmatprep.subr.bf16.mxu0 0
    %3985 = vmatpush2.bf16.msra.mxu0 %v3843
    %3986 = vmatprep.subr.bf16.mxu0 0
    %3987 = vmatpush2.bf16.msra.mxu0 %v3842
    %3988 = vmatprep.subr.bf16.mxu0 0
    %3989 = vmatpush2.bf16.msra.mxu0 %v3841
    %3990 = vmatprep.subr.bf16.mxu0 0
    %3991 = vmatpush2.bf16.msra.mxu0 %v3840
    %3992 = vmatprep.mubr.bf16.mxu0 %v3561
    %3993 = vmatmul.mubr.bf16.gmra.mxu0 %v3560
    %v3994 = vpop.f32.mrf.mxu0
    %v3995 = vadd.f32 0.0, %v3994
    %v3996 = vpop.f32.mrf.mxu0
    %v3997 = vpop.f32.mrf.mxu0
    %v3998 = vpop.f32.mrf.mxu0
    %3999 = vdwg.mxu0
    %4000 = vmatprep.subr.bf16.mxu0 0
    %4001 = vmatpush1.bf16.msra.mxu0 %v3855
    %4002 = vmatprep.subr.bf16.mxu0 0
    %4003 = vmatpush1.bf16.msra.mxu0 %v3854
    %4004 = vmatprep.subr.bf16.mxu0 0
    %4005 = vmatpush1.bf16.msra.mxu0 %v3853
    %4006 = vmatprep.subr.bf16.mxu0 0
    %4007 = vmatpush1.bf16.msra.mxu0 %v3852
    %4008 = vmatprep.subr.bf16.mxu0 0
    %4009 = vmatpush1.bf16.msra.mxu0 %v3851
    %4010 = vmatprep.subr.bf16.mxu0 0
    %4011 = vmatpush1.bf16.msra.mxu0 %v3850
    %4012 = vmatprep.subr.bf16.mxu0 0
    %4013 = vmatpush1.bf16.msra.mxu0 %v3849
    %4014 = vmatprep.subr.bf16.mxu0 0
    %4015 = vmatpush1.bf16.msra.mxu0 %v3848
    %4016 = vmatprep.subr.bf16.mxu0 0
    %4017 = vmatpush2.bf16.msra.mxu0 %v3863
    %4018 = vmatprep.subr.bf16.mxu0 0
    %4019 = vmatpush2.bf16.msra.mxu0 %v3862
    %4020 = vmatprep.subr.bf16.mxu0 0
    %4021 = vmatpush2.bf16.msra.mxu0 %v3861
    %4022 = vmatprep.subr.bf16.mxu0 0
    %4023 = vmatpush2.bf16.msra.mxu0 %v3860
    %4024 = vmatprep.subr.bf16.mxu0 0
    %4025 = vmatpush2.bf16.msra.mxu0 %v3859
    %4026 = vmatprep.subr.bf16.mxu0 0
    %4027 = vmatpush2.bf16.msra.mxu0 %v3858
    %4028 = vmatprep.subr.bf16.mxu0 0
    %4029 = vmatpush2.bf16.msra.mxu0 %v3857
    %4030 = vmatprep.subr.bf16.mxu0 0
    %4031 = vmatpush2.bf16.msra.mxu0 %v3856
    %4032 = vmatprep.mubr.bf16.mxu0 %v3563
    %4033 = vmatmul.mubr.bf16.gmra.mxu0 %v3562
    %v4034 = vpop.f32.mrf.mxu0
    %v4035 = vadd.f32 %v3995, %v4034
    %v4036 = vpop.f32.mrf.mxu0
    %v4037 = vpop.f32.mrf.mxu0
    %v4038 = vpop.f32.mrf.mxu0
    %4039 = vdwg.mxu0
    %4040 = vmatprep.subr.bf16.mxu0 0
    %4041 = vmatpush1.bf16.msra.mxu0 %v3871
    %4042 = vmatprep.subr.bf16.mxu0 0
    %4043 = vmatpush1.bf16.msra.mxu0 %v3870
    %4044 = vmatprep.subr.bf16.mxu0 0
    %4045 = vmatpush1.bf16.msra.mxu0 %v3869
    %4046 = vmatprep.subr.bf16.mxu0 0
    %4047 = vmatpush1.bf16.msra.mxu0 %v3868
    %4048 = vmatprep.subr.bf16.mxu0 0
    %4049 = vmatpush1.bf16.msra.mxu0 %v3867
    %4050 = vmatprep.subr.bf16.mxu0 0
    %4051 = vmatpush1.bf16.msra.mxu0 %v3866
    %4052 = vmatprep.subr.bf16.mxu0 0
    %4053 = vmatpush1.bf16.msra.mxu0 %v3865
    %4054 = vmatprep.subr.bf16.mxu0 0
    %4055 = vmatpush1.bf16.msra.mxu0 %v3864
    %4056 = vmatprep.subr.bf16.mxu0 0
    %4057 = vmatpush2.bf16.msra.mxu0 %v3879
    %4058 = vmatprep.subr.bf16.mxu0 0
    %4059 = vmatpush2.bf16.msra.mxu0 %v3878
    %4060 = vmatprep.subr.bf16.mxu0 0
    %4061 = vmatpush2.bf16.msra.mxu0 %v3877
    %4062 = vmatprep.subr.bf16.mxu0 0
    %4063 = vmatpush2.bf16.msra.mxu0 %v3876
    %4064 = vmatprep.subr.bf16.mxu0 0
    %4065 = vmatpush2.bf16.msra.mxu0 %v3875
    %4066 = vmatprep.subr.bf16.mxu0 0
    %4067 = vmatpush2.bf16.msra.mxu0 %v3874
    %4068 = vmatprep.subr.bf16.mxu0 0
    %4069 = vmatpush2.bf16.msra.mxu0 %v3873
    %4070 = vmatprep.subr.bf16.mxu0 0
    %4071 = vmatpush2.bf16.msra.mxu0 %v3872
    %4072 = vmatprep.mubr.bf16.mxu0 %v3565
    %4073 = vmatmul.mubr.bf16.gmra.mxu0 %v3564
    %v4074 = vpop.f32.mrf.mxu0
    %v4075 = vadd.f32 %v4035, %v4074
    %v4076 = vpop.f32.mrf.mxu0
    %v4077 = vpop.f32.mrf.mxu0
    %v4078 = vpop.f32.mrf.mxu0
    %4079 = vdwg.mxu0
    %4080 = vmatprep.subr.bf16.mxu0 0
    %4081 = vmatpush1.bf16.msra.mxu0 %v3887
    %4082 = vmatprep.subr.bf16.mxu0 0
    %4083 = vmatpush1.bf16.msra.mxu0 %v3886
    %4084 = vmatprep.subr.bf16.mxu0 0
    %4085 = vmatpush1.bf16.msra.mxu0 %v3885
    %4086 = vmatprep.subr.bf16.mxu0 0
    %4087 = vmatpush1.bf16.msra.mxu0 %v3884
    %4088 = vmatprep.subr.bf16.mxu0 0
    %4089 = vmatpush1.bf16.msra.mxu0 %v3883
    %4090 = vmatprep.subr.bf16.mxu0 0
    %4091 = vmatpush1.bf16.msra.mxu0 %v3882
    %4092 = vmatprep.subr.bf16.mxu0 0
    %4093 = vmatpush1.bf16.msra.mxu0 %v3881
    %4094 = vmatprep.subr.bf16.mxu0 0
    %4095 = vmatpush1.bf16.msra.mxu0 %v3880
    %4096 = vmatprep.subr.bf16.mxu0 0
    %4097 = vmatpush2.bf16.msra.mxu0 %v3895
    %4098 = vmatprep.subr.bf16.mxu0 0
    %4099 = vmatpush2.bf16.msra.mxu0 %v3894
    %4100 = vmatprep.subr.bf16.mxu0 0
    %4101 = vmatpush2.bf16.msra.mxu0 %v3893
    %4102 = vmatprep.subr.bf16.mxu0 0
    %4103 = vmatpush2.bf16.msra.mxu0 %v3892
    %4104 = vmatprep.subr.bf16.mxu0 0
    %4105 = vmatpush2.bf16.msra.mxu0 %v3891
    %4106 = vmatprep.subr.bf16.mxu0 0
    %4107 = vmatpush2.bf16.msra.mxu0 %v3890
    %4108 = vmatprep.subr.bf16.mxu0 0
    %4109 = vmatpush2.bf16.msra.mxu0 %v3889
    %4110 = vmatprep.subr.bf16.mxu0 0
    %4111 = vmatpush2.bf16.msra.mxu0 %v3888
    %4112 = vmatprep.mubr.bf16.mxu0 %v3567
    %4113 = vmatmul.mubr.bf16.gmra.mxu0 %v3566
    %v4114 = vpop.f32.mrf.mxu0
    %v4115 = vadd.f32 %v4075, %v4114
    %v4116 = vpop.f32.mrf.mxu0
    %v4117 = vpop.f32.mrf.mxu0
    %v4118 = vpop.f32.mrf.mxu0
    %4119 = vdwg.mxu0
    %v4120 = vadd.f32 %v3430, %v4115
    %s4121 = scalar_lea.vmem %s2, 2560
    %v4122 = vld [vmem:[%s4121] sm:$0xf]
    %v4123 = vld [vmem:[%s4121 + $0x4] sm:$0xf]
    %v4124 = vld [vmem:[%s4121 + $0x8] sm:$0xf]
    %v4125 = vld [vmem:[%s4121 + $0xc] sm:$0xf]
    %v4126 = vld [vmem:[%s4121 + $0x10] sm:$0xf]
    %v4127 = vld [vmem:[%s4121 + $0x14] sm:$0xf]
    %v4128 = vld [vmem:[%s4121 + $0x18] sm:$0xf]
    %v4129 = vld [vmem:[%s4121 + $0x1c] sm:$0xf]
    %v4130 = vld [vmem:[%s4121 + $0x20] sm:$0xf]
    %v4131 = vld [vmem:[%s4121 + $0x24] sm:$0xf]
    %v4132 = vld [vmem:[%s4121 + $0x28] sm:$0xf]
    %v4133 = vld [vmem:[%s4121 + $0x2c] sm:$0xf]
    %v4134 = vld [vmem:[%s4121 + $0x30] sm:$0xf]
    %v4135 = vld [vmem:[%s4121 + $0x34] sm:$0xf]
    %v4136 = vld [vmem:[%s4121 + $0x38] sm:$0xf]
    %v4137 = vld [vmem:[%s4121 + $0x3c] sm:$0xf]
    %v4138 = vld [vmem:[%s4121 + $0x40] sm:$0xf]
    %v4139 = vld [vmem:[%s4121 + $0x44] sm:$0xf]
    %v4140 = vld [vmem:[%s4121 + $0x48] sm:$0xf]
    %v4141 = vld [vmem:[%s4121 + $0x4c] sm:$0xf]
    %v4142 = vld [vmem:[%s4121 + $0x50] sm:$0xf]
    %v4143 = vld [vmem:[%s4121 + $0x54] sm:$0xf]
    %v4144 = vld [vmem:[%s4121 + $0x58] sm:$0xf]
    %v4145 = vld [vmem:[%s4121 + $0x5c] sm:$0xf]
    %v4146 = vld [vmem:[%s4121 + $0x60] sm:$0xf]
    %v4147 = vld [vmem:[%s4121 + $0x64] sm:$0xf]
    %v4148 = vld [vmem:[%s4121 + $0x68] sm:$0xf]
    %v4149 = vld [vmem:[%s4121 + $0x6c] sm:$0xf]
    %v4150 = vld [vmem:[%s4121 + $0x70] sm:$0xf]
    %v4151 = vld [vmem:[%s4121 + $0x74] sm:$0xf]
    %v4152 = vld [vmem:[%s4121 + $0x78] sm:$0xf]
    %v4153 = vld [vmem:[%s4121 + $0x7c] sm:$0xf]
    %v4154 = vld [vmem:[%s4121 + $0x80] sm:$0xf]
    %v4155 = vld [vmem:[%s4121 + $0x84] sm:$0xf]
    %v4156 = vld [vmem:[%s4121 + $0x88] sm:$0xf]
    %v4157 = vld [vmem:[%s4121 + $0x8c] sm:$0xf]
    %v4158 = vld [vmem:[%s4121 + $0x90] sm:$0xf]
    %v4159 = vld [vmem:[%s4121 + $0x94] sm:$0xf]
    %v4160 = vld [vmem:[%s4121 + $0x98] sm:$0xf]
    %v4161 = vld [vmem:[%s4121 + $0x9c] sm:$0xf]
    %v4162 = vld [vmem:[%s4121 + $0xa0] sm:$0xf]
    %v4163 = vld [vmem:[%s4121 + $0xa4] sm:$0xf]
    %v4164 = vld [vmem:[%s4121 + $0xa8] sm:$0xf]
    %v4165 = vld [vmem:[%s4121 + $0xac] sm:$0xf]
    %v4166 = vld [vmem:[%s4121 + $0xb0] sm:$0xf]
    %v4167 = vld [vmem:[%s4121 + $0xb4] sm:$0xf]
    %v4168 = vld [vmem:[%s4121 + $0xb8] sm:$0xf]
    %v4169 = vld [vmem:[%s4121 + $0xbc] sm:$0xf]
    %v4170 = vld [vmem:[%s4121 + $0xc0] sm:$0xf]
    %v4171 = vld [vmem:[%s4121 + $0xc4] sm:$0xf]
    %v4172 = vld [vmem:[%s4121 + $0xc8] sm:$0xf]
    %v4173 = vld [vmem:[%s4121 + $0xcc] sm:$0xf]
    %v4174 = vld [vmem:[%s4121 + $0xd0] sm:$0xf]
    %v4175 = vld [vmem:[%s4121 + $0xd4] sm:$0xf]
    %v4176 = vld [vmem:[%s4121 + $0xd8] sm:$0xf]
    %v4177 = vld [vmem:[%s4121 + $0xdc] sm:$0xf]
    %v4178 = vld [vmem:[%s4121 + $0xe0] sm:$0xf]
    %v4179 = vld [vmem:[%s4121 + $0xe4] sm:$0xf]
    %v4180 = vld [vmem:[%s4121 + $0xe8] sm:$0xf]
    %v4181 = vld [vmem:[%s4121 + $0xec] sm:$0xf]
    %v4182 = vld [vmem:[%s4121 + $0xf0] sm:$0xf]
    %v4183 = vld [vmem:[%s4121 + $0xf4] sm:$0xf]
    %v4184 = vld [vmem:[%s4121 + $0xf8] sm:$0xf]
    %v4185 = vld [vmem:[%s4121 + $0xfc] sm:$0xf]
    %v4186 = vld [vmem:[%s4121 + $0x100] sm:$0xf]
    %v4187 = vld [vmem:[%s4121 + $0x104] sm:$0xf]
    %v4188 = vld [vmem:[%s4121 + $0x108] sm:$0xf]
    %v4189 = vld [vmem:[%s4121 + $0x10c] sm:$0xf]
    %v4190 = vld [vmem:[%s4121 + $0x110] sm:$0xf]
    %v4191 = vld [vmem:[%s4121 + $0x114] sm:$0xf]
    %v4192 = vld [vmem:[%s4121 + $0x118] sm:$0xf]
    %v4193 = vld [vmem:[%s4121 + $0x11c] sm:$0xf]
    %v4194 = vld [vmem:[%s4121 + $0x120] sm:$0xf]
    %v4195 = vld [vmem:[%s4121 + $0x124] sm:$0xf]
    %v4196 = vld [vmem:[%s4121 + $0x128] sm:$0xf]
    %v4197 = vld [vmem:[%s4121 + $0x12c] sm:$0xf]
    %v4198 = vld [vmem:[%s4121 + $0x130] sm:$0xf]
    %v4199 = vld [vmem:[%s4121 + $0x134] sm:$0xf]
    %v4200 = vld [vmem:[%s4121 + $0x138] sm:$0xf]
    %v4201 = vld [vmem:[%s4121 + $0x13c] sm:$0xf]
    %v4202 = vld [vmem:[%s4121 + $0x140] sm:$0xf]
    %v4203 = vld [vmem:[%s4121 + $0x144] sm:$0xf]
    %v4204 = vld [vmem:[%s4121 + $0x148] sm:$0xf]
    %v4205 = vld [vmem:[%s4121 + $0x14c] sm:$0xf]
    %v4206 = vld [vmem:[%s4121 + $0x150] sm:$0xf]
    %v4207 = vld [vmem:[%s4121 + $0x154] sm:$0xf]
    %v4208 = vld [vmem:[%s4121 + $0x158] sm:$0xf]
    %v4209 = vld [vmem:[%s4121 + $0x15c] sm:$0xf]
    %v4210 = vld [vmem:[%s4121 + $0x160] sm:$0xf]
    %v4211 = vld [vmem:[%s4121 + $0x164] sm:$0xf]
    %v4212 = vld [vmem:[%s4121 + $0x168] sm:$0xf]
    %v4213 = vld [vmem:[%s4121 + $0x16c] sm:$0xf]
    %v4214 = vld [vmem:[%s4121 + $0x170] sm:$0xf]
    %v4215 = vld [vmem:[%s4121 + $0x174] sm:$0xf]
    %v4216 = vld [vmem:[%s4121 + $0x178] sm:$0xf]
    %v4217 = vld [vmem:[%s4121 + $0x17c] sm:$0xf]
    %v4218 = vld [vmem:[%s4121 + $0x180] sm:$0xf]
    %v4219 = vld [vmem:[%s4121 + $0x184] sm:$0xf]
    %v4220 = vld [vmem:[%s4121 + $0x188] sm:$0xf]
    %v4221 = vld [vmem:[%s4121 + $0x18c] sm:$0xf]
    %v4222 = vld [vmem:[%s4121 + $0x190] sm:$0xf]
    %v4223 = vld [vmem:[%s4121 + $0x194] sm:$0xf]
    %v4224 = vld [vmem:[%s4121 + $0x198] sm:$0xf]
    %v4225 = vld [vmem:[%s4121 + $0x19c] sm:$0xf]
    %v4226 = vld [vmem:[%s4121 + $0x1a0] sm:$0xf]
    %v4227 = vld [vmem:[%s4121 + $0x1a4] sm:$0xf]
    %v4228 = vld [vmem:[%s4121 + $0x1a8] sm:$0xf]
    %v4229 = vld [vmem:[%s4121 + $0x1ac] sm:$0xf]
    %v4230 = vld [vmem:[%s4121 + $0x1b0] sm:$0xf]
    %v4231 = vld [vmem:[%s4121 + $0x1b4] sm:$0xf]
    %v4232 = vld [vmem:[%s4121 + $0x1b8] sm:$0xf]
    %v4233 = vld [vmem:[%s4121 + $0x1bc] sm:$0xf]
    %v4234 = vld [vmem:[%s4121 + $0x1c0] sm:$0xf]
    %v4235 = vld [vmem:[%s4121 + $0x1c4] sm:$0xf]
    %v4236 = vld [vmem:[%s4121 + $0x1c8] sm:$0xf]
    %v4237 = vld [vmem:[%s4121 + $0x1cc] sm:$0xf]
    %v4238 = vld [vmem:[%s4121 + $0x1d0] sm:$0xf]
    %v4239 = vld [vmem:[%s4121 + $0x1d4] sm:$0xf]
    %v4240 = vld [vmem:[%s4121 + $0x1d8] sm:$0xf]
    %v4241 = vld [vmem:[%s4121 + $0x1dc] sm:$0xf]
    %v4242 = vld [vmem:[%s4121 + $0x1e0] sm:$0xf]
    %v4243 = vld [vmem:[%s4121 + $0x1e4] sm:$0xf]
    %v4244 = vld [vmem:[%s4121 + $0x1e8] sm:$0xf]
    %v4245 = vld [vmem:[%s4121 + $0x1ec] sm:$0xf]
    %v4246 = vld [vmem:[%s4121 + $0x1f0] sm:$0xf]
    %v4247 = vld [vmem:[%s4121 + $0x1f4] sm:$0xf]
    %v4248 = vld [vmem:[%s4121 + $0x1f8] sm:$0xf]
    %v4249 = vld [vmem:[%s4121 + $0x1fc] sm:$0xf]
    %v4250 = vrot.slane %v1467, 2
    %v4251 = vrot.slane %v1470, 2
    %v4252 = vrot.slane %v1473, 2
    %v4253 = vrot.slane %v1476, 2
    %v4254 = vrot.slane %v1479, 2
    %v4255 = vrot.slane %v1482, 2
    %v4256 = vrot.slane %v1485, 2
    %v4257 = vrot.slane %v1488, 2
    %v4394 = vunpack.c.l.b16 %v4122
    %v4395 = vunpack.c.l.b16 %v4123
    %v4396 = vunpack.c.l.b16 %v4124
    %v4397 = vunpack.c.l.b16 %v4125
    %v4398 = vunpack.c.l.b16 %v4126
    %v4399 = vunpack.c.l.b16 %v4127
    %v4400 = vunpack.c.l.b16 %v4128
    %v4401 = vunpack.c.l.b16 %v4129
    %v4402 = vunpack.c.l.b16 %v4130
    %v4403 = vunpack.c.l.b16 %v4131
    %v4404 = vunpack.c.l.b16 %v4132
    %v4405 = vunpack.c.l.b16 %v4133
    %v4406 = vunpack.c.l.b16 %v4134
    %v4407 = vunpack.c.l.b16 %v4135
    %v4408 = vunpack.c.l.b16 %v4136
    %v4409 = vunpack.c.l.b16 %v4137
    %v4410 = vunpack.c.l.b16 %v4138
    %v4411 = vunpack.c.l.b16 %v4139
    %v4412 = vunpack.c.l.b16 %v4140
    %v4413 = vunpack.c.l.b16 %v4141
    %v4414 = vunpack.c.l.b16 %v4142
    %v4415 = vunpack.c.l.b16 %v4143
    %v4416 = vunpack.c.l.b16 %v4144
    %v4417 = vunpack.c.l.b16 %v4145
    %v4418 = vunpack.c.l.b16 %v4146
    %v4419 = vunpack.c.l.b16 %v4147
    %v4420 = vunpack.c.l.b16 %v4148
    %v4421 = vunpack.c.l.b16 %v4149
    %v4422 = vunpack.c.l.b16 %v4150
    %v4423 = vunpack.c.l.b16 %v4151
    %v4424 = vunpack.c.l.b16 %v4152
    %v4425 = vunpack.c.l.b16 %v4153
    %v4426 = vunpack.c.l.b16 %v4154
    %v4427 = vunpack.c.l.b16 %v4155
    %v4428 = vunpack.c.l.b16 %v4156
    %v4429 = vunpack.c.l.b16 %v4157
    %v4430 = vunpack.c.l.b16 %v4158
    %v4431 = vunpack.c.l.b16 %v4159
    %v4432 = vunpack.c.l.b16 %v4160
    %v4433 = vunpack.c.l.b16 %v4161
    %v4434 = vunpack.c.l.b16 %v4162
    %v4435 = vunpack.c.l.b16 %v4163
    %v4436 = vunpack.c.l.b16 %v4164
    %v4437 = vunpack.c.l.b16 %v4165
    %v4438 = vunpack.c.l.b16 %v4166
    %v4439 = vunpack.c.l.b16 %v4167
    %v4440 = vunpack.c.l.b16 %v4168
    %v4441 = vunpack.c.l.b16 %v4169
    %v4442 = vunpack.c.l.b16 %v4170
    %v4443 = vunpack.c.l.b16 %v4171
    %v4444 = vunpack.c.l.b16 %v4172
    %v4445 = vunpack.c.l.b16 %v4173
    %v4446 = vunpack.c.l.b16 %v4174
    %v4447 = vunpack.c.l.b16 %v4175
    %v4448 = vunpack.c.l.b16 %v4176
    %v4449 = vunpack.c.l.b16 %v4177
    %v4450 = vunpack.c.l.b16 %v4178
    %v4451 = vunpack.c.l.b16 %v4179
    %v4452 = vunpack.c.l.b16 %v4180
    %v4453 = vunpack.c.l.b16 %v4181
    %v4454 = vunpack.c.l.b16 %v4182
    %v4455 = vunpack.c.l.b16 %v4183
    %v4456 = vunpack.c.l.b16 %v4184
    %v4457 = vunpack.c.l.b16 %v4185
    %v4458 = vunpack.c.l.b16 %v4186
    %v4459 = vunpack.c.l.b16 %v4187
    %v4460 = vunpack.c.l.b16 %v4188
    %v4461 = vunpack.c.l.b16 %v4189
    %v4462 = vunpack.c.l.b16 %v4190
    %v4463 = vunpack.c.l.b16 %v4191
    %v4464 = vunpack.c.l.b16 %v4192
    %v4465 = vunpack.c.l.b16 %v4193
    %v4466 = vunpack.c.l.b16 %v4194
    %v4467 = vunpack.c.l.b16 %v4195
    %v4468 = vunpack.c.l.b16 %v4196
    %v4469 = vunpack.c.l.b16 %v4197
    %v4470 = vunpack.c.l.b16 %v4198
    %v4471 = vunpack.c.l.b16 %v4199
    %v4472 = vunpack.c.l.b16 %v4200
    %v4473 = vunpack.c.l.b16 %v4201
    %v4474 = vunpack.c.l.b16 %v4202
    %v4475 = vunpack.c.l.b16 %v4203
    %v4476 = vunpack.c.l.b16 %v4204
    %v4477 = vunpack.c.l.b16 %v4205
    %v4478 = vunpack.c.l.b16 %v4206
    %v4479 = vunpack.c.l.b16 %v4207
    %v4480 = vunpack.c.l.b16 %v4208
    %v4481 = vunpack.c.l.b16 %v4209
    %v4482 = vunpack.c.l.b16 %v4210
    %v4483 = vunpack.c.l.b16 %v4211
    %v4484 = vunpack.c.l.b16 %v4212
    %v4485 = vunpack.c.l.b16 %v4213
    %v4486 = vunpack.c.l.b16 %v4214
    %v4487 = vunpack.c.l.b16 %v4215
    %v4488 = vunpack.c.l.b16 %v4216
    %v4489 = vunpack.c.l.b16 %v4217
    %v4490 = vunpack.c.l.b16 %v4218
    %v4491 = vunpack.c.l.b16 %v4219
    %v4492 = vunpack.c.l.b16 %v4220
    %v4493 = vunpack.c.l.b16 %v4221
    %v4494 = vunpack.c.l.b16 %v4222
    %v4495 = vunpack.c.l.b16 %v4223
    %v4496 = vunpack.c.l.b16 %v4224
    %v4497 = vunpack.c.l.b16 %v4225
    %v4498 = vunpack.c.l.b16 %v4226
    %v4499 = vunpack.c.l.b16 %v4227
    %v4500 = vunpack.c.l.b16 %v4228
    %v4501 = vunpack.c.l.b16 %v4229
    %v4502 = vunpack.c.l.b16 %v4230
    %v4503 = vunpack.c.l.b16 %v4231
    %v4504 = vunpack.c.l.b16 %v4232
    %v4505 = vunpack.c.l.b16 %v4233
    %v4506 = vunpack.c.l.b16 %v4234
    %v4507 = vunpack.c.l.b16 %v4235
    %v4508 = vunpack.c.l.b16 %v4236
    %v4509 = vunpack.c.l.b16 %v4237
    %v4510 = vunpack.c.l.b16 %v4238
    %v4511 = vunpack.c.l.b16 %v4239
    %v4512 = vunpack.c.l.b16 %v4240
    %v4513 = vunpack.c.l.b16 %v4241
    %v4514 = vunpack.c.l.b16 %v4242
    %v4515 = vunpack.c.l.b16 %v4243
    %v4516 = vunpack.c.l.b16 %v4244
    %v4517 = vunpack.c.l.b16 %v4245
    %v4518 = vunpack.c.l.b16 %v4246
    %v4519 = vunpack.c.l.b16 %v4247
    %v4520 = vunpack.c.l.b16 %v4248
    %v4521 = vunpack.c.l.b16 %v4249
    %v4522 = vpack.c.b16 %v4395, %v4394
    %v4523 = vpack.c.b16 %v4397, %v4396
    %v4524 = vpack.c.b16 %v4399, %v4398
    %v4525 = vpack.c.b16 %v4401, %v4400
    %v4526 = vpack.c.b16 %v4403, %v4402
    %v4527 = vpack.c.b16 %v4405, %v4404
    %v4528 = vpack.c.b16 %v4407, %v4406
    %v4529 = vpack.c.b16 %v4409, %v4408
    %v4530 = vpack.c.b16 %v4411, %v4410
    %v4531 = vpack.c.b16 %v4413, %v4412
    %v4532 = vpack.c.b16 %v4415, %v4414
    %v4533 = vpack.c.b16 %v4417, %v4416
    %v4534 = vpack.c.b16 %v4419, %v4418
    %v4535 = vpack.c.b16 %v4421, %v4420
    %v4536 = vpack.c.b16 %v4423, %v4422
    %v4537 = vpack.c.b16 %v4425, %v4424
    %v4538 = vpack.c.b16 %v4427, %v4426
    %v4539 = vpack.c.b16 %v4429, %v4428
    %v4540 = vpack.c.b16 %v4431, %v4430
    %v4541 = vpack.c.b16 %v4433, %v4432
    %v4542 = vpack.c.b16 %v4435, %v4434
    %v4543 = vpack.c.b16 %v4437, %v4436
    %v4544 = vpack.c.b16 %v4439, %v4438
    %v4545 = vpack.c.b16 %v4441, %v4440
    %v4546 = vpack.c.b16 %v4443, %v4442
    %v4547 = vpack.c.b16 %v4445, %v4444
    %v4548 = vpack.c.b16 %v4447, %v4446
    %v4549 = vpack.c.b16 %v4449, %v4448
    %v4550 = vpack.c.b16 %v4451, %v4450
    %v4551 = vpack.c.b16 %v4453, %v4452
    %v4552 = vpack.c.b16 %v4455, %v4454
    %v4553 = vpack.c.b16 %v4457, %v4456
    %v4554 = vpack.c.b16 %v4459, %v4458
    %v4555 = vpack.c.b16 %v4461, %v4460
    %v4556 = vpack.c.b16 %v4463, %v4462
    %v4557 = vpack.c.b16 %v4465, %v4464
    %v4558 = vpack.c.b16 %v4467, %v4466
    %v4559 = vpack.c.b16 %v4469, %v4468
    %v4560 = vpack.c.b16 %v4471, %v4470
    %v4561 = vpack.c.b16 %v4473, %v4472
    %v4562 = vpack.c.b16 %v4475, %v4474
    %v4563 = vpack.c.b16 %v4477, %v4476
    %v4564 = vpack.c.b16 %v4479, %v4478
    %v4565 = vpack.c.b16 %v4481, %v4480
    %v4566 = vpack.c.b16 %v4483, %v4482
    %v4567 = vpack.c.b16 %v4485, %v4484
    %v4568 = vpack.c.b16 %v4487, %v4486
    %v4569 = vpack.c.b16 %v4489, %v4488
    %v4570 = vpack.c.b16 %v4491, %v4490
    %v4571 = vpack.c.b16 %v4493, %v4492
    %v4572 = vpack.c.b16 %v4495, %v4494
    %v4573 = vpack.c.b16 %v4497, %v4496
    %v4574 = vpack.c.b16 %v4499, %v4498
    %v4575 = vpack.c.b16 %v4501, %v4500
    %v4576 = vpack.c.b16 %v4503, %v4502
    %v4577 = vpack.c.b16 %v4505, %v4504
    %v4578 = vpack.c.b16 %v4507, %v4506
    %v4579 = vpack.c.b16 %v4509, %v4508
    %v4580 = vpack.c.b16 %v4511, %v4510
    %v4581 = vpack.c.b16 %v4513, %v4512
    %v4582 = vpack.c.b16 %v4515, %v4514
    %v4583 = vpack.c.b16 %v4517, %v4516
    %v4584 = vpack.c.b16 %v4519, %v4518
    %v4585 = vpack.c.b16 %v4521, %v4520
    %4650 = vmatprep.subr.bf16.mxu0 0
    %4651 = vmatpush1.bf16.msra.mxu0 %v4529
    %4652 = vmatprep.subr.bf16.mxu0 0
    %4653 = vmatpush1.bf16.msra.mxu0 %v4528
    %4654 = vmatprep.subr.bf16.mxu0 0
    %4655 = vmatpush1.bf16.msra.mxu0 %v4527
    %4656 = vmatprep.subr.bf16.mxu0 0
    %4657 = vmatpush1.bf16.msra.mxu0 %v4526
    %4658 = vmatprep.subr.bf16.mxu0 0
    %4659 = vmatpush1.bf16.msra.mxu0 %v4525
    %4660 = vmatprep.subr.bf16.mxu0 0
    %4661 = vmatpush1.bf16.msra.mxu0 %v4524
    %4662 = vmatprep.subr.bf16.mxu0 0
    %4663 = vmatpush1.bf16.msra.mxu0 %v4523
    %4664 = vmatprep.subr.bf16.mxu0 0
    %4665 = vmatpush1.bf16.msra.mxu0 %v4522
    %4666 = vmatprep.subr.bf16.mxu0 0
    %4667 = vmatpush2.bf16.msra.mxu0 %v4537
    %4668 = vmatprep.subr.bf16.mxu0 0
    %4669 = vmatpush2.bf16.msra.mxu0 %v4536
    %4670 = vmatprep.subr.bf16.mxu0 0
    %4671 = vmatpush2.bf16.msra.mxu0 %v4535
    %4672 = vmatprep.subr.bf16.mxu0 0
    %4673 = vmatpush2.bf16.msra.mxu0 %v4534
    %4674 = vmatprep.subr.bf16.mxu0 0
    %4675 = vmatpush2.bf16.msra.mxu0 %v4533
    %4676 = vmatprep.subr.bf16.mxu0 0
    %4677 = vmatpush2.bf16.msra.mxu0 %v4532
    %4678 = vmatprep.subr.bf16.mxu0 0
    %4679 = vmatpush2.bf16.msra.mxu0 %v4531
    %4680 = vmatprep.subr.bf16.mxu0 0
    %4681 = vmatpush2.bf16.msra.mxu0 %v4530
    %4682 = vmatprep.mubr.bf16.mxu0 %v4251
    %4683 = vmatmul.mubr.bf16.gmra.mxu0 %v4250
    %v4684 = vpop.f32.mrf.mxu0
    %v4685 = vadd.f32 0.0, %v4684
    %v4686 = vpop.f32.mrf.mxu0
    %v4687 = vpop.f32.mrf.mxu0
    %v4688 = vpop.f32.mrf.mxu0
    %4689 = vdwg.mxu0
    %4690 = vmatprep.subr.bf16.mxu0 0
    %4691 = vmatpush1.bf16.msra.mxu0 %v4545
    %4692 = vmatprep.subr.bf16.mxu0 0
    %4693 = vmatpush1.bf16.msra.mxu0 %v4544
    %4694 = vmatprep.subr.bf16.mxu0 0
    %4695 = vmatpush1.bf16.msra.mxu0 %v4543
    %4696 = vmatprep.subr.bf16.mxu0 0
    %4697 = vmatpush1.bf16.msra.mxu0 %v4542
    %4698 = vmatprep.subr.bf16.mxu0 0
    %4699 = vmatpush1.bf16.msra.mxu0 %v4541
    %4700 = vmatprep.subr.bf16.mxu0 0
    %4701 = vmatpush1.bf16.msra.mxu0 %v4540
    %4702 = vmatprep.subr.bf16.mxu0 0
    %4703 = vmatpush1.bf16.msra.mxu0 %v4539
    %4704 = vmatprep.subr.bf16.mxu0 0
    %4705 = vmatpush1.bf16.msra.mxu0 %v4538
    %4706 = vmatprep.subr.bf16.mxu0 0
    %4707 = vmatpush2.bf16.msra.mxu0 %v4553
    %4708 = vmatprep.subr.bf16.mxu0 0
    %4709 = vmatpush2.bf16.msra.mxu0 %v4552
    %4710 = vmatprep.subr.bf16.mxu0 0
    %4711 = vmatpush2.bf16.msra.mxu0 %v4551
    %4712 = vmatprep.subr.bf16.mxu0 0
    %4713 = vmatpush2.bf16.msra.mxu0 %v4550
    %4714 = vmatprep.subr.bf16.mxu0 0
    %4715 = vmatpush2.bf16.msra.mxu0 %v4549
    %4716 = vmatprep.subr.bf16.mxu0 0
    %4717 = vmatpush2.bf16.msra.mxu0 %v4548
    %4718 = vmatprep.subr.bf16.mxu0 0
    %4719 = vmatpush2.bf16.msra.mxu0 %v4547
    %4720 = vmatprep.subr.bf16.mxu0 0
    %4721 = vmatpush2.bf16.msra.mxu0 %v4546
    %4722 = vmatprep.mubr.bf16.mxu0 %v4253
    %4723 = vmatmul.mubr.bf16.gmra.mxu0 %v4252
    %v4724 = vpop.f32.mrf.mxu0
    %v4725 = vadd.f32 %v4685, %v4724
    %v4726 = vpop.f32.mrf.mxu0
    %v4727 = vpop.f32.mrf.mxu0
    %v4728 = vpop.f32.mrf.mxu0
    %4729 = vdwg.mxu0
    %4730 = vmatprep.subr.bf16.mxu0 0
    %4731 = vmatpush1.bf16.msra.mxu0 %v4561
    %4732 = vmatprep.subr.bf16.mxu0 0
    %4733 = vmatpush1.bf16.msra.mxu0 %v4560
    %4734 = vmatprep.subr.bf16.mxu0 0
    %4735 = vmatpush1.bf16.msra.mxu0 %v4559
    %4736 = vmatprep.subr.bf16.mxu0 0
    %4737 = vmatpush1.bf16.msra.mxu0 %v4558
    %4738 = vmatprep.subr.bf16.mxu0 0
    %4739 = vmatpush1.bf16.msra.mxu0 %v4557
    %4740 = vmatprep.subr.bf16.mxu0 0
    %4741 = vmatpush1.bf16.msra.mxu0 %v4556
    %4742 = vmatprep.subr.bf16.mxu0 0
    %4743 = vmatpush1.bf16.msra.mxu0 %v4555
    %4744 = vmatprep.subr.bf16.mxu0 0
    %4745 = vmatpush1.bf16.msra.mxu0 %v4554
    %4746 = vmatprep.subr.bf16.mxu0 0
    %4747 = vmatpush2.bf16.msra.mxu0 %v4569
    %4748 = vmatprep.subr.bf16.mxu0 0
    %4749 = vmatpush2.bf16.msra.mxu0 %v4568
    %4750 = vmatprep.subr.bf16.mxu0 0
    %4751 = vmatpush2.bf16.msra.mxu0 %v4567
    %4752 = vmatprep.subr.bf16.mxu0 0
    %4753 = vmatpush2.bf16.msra.mxu0 %v4566
    %4754 = vmatprep.subr.bf16.mxu0 0
    %4755 = vmatpush2.bf16.msra.mxu0 %v4565
    %4756 = vmatprep.subr.bf16.mxu0 0
    %4757 = vmatpush2.bf16.msra.mxu0 %v4564
    %4758 = vmatprep.subr.bf16.mxu0 0
    %4759 = vmatpush2.bf16.msra.mxu0 %v4563
    %4760 = vmatprep.subr.bf16.mxu0 0
    %4761 = vmatpush2.bf16.msra.mxu0 %v4562
    %4762 = vmatprep.mubr.bf16.mxu0 %v4255
    %4763 = vmatmul.mubr.bf16.gmra.mxu0 %v4254
    %v4764 = vpop.f32.mrf.mxu0
    %v4765 = vadd.f32 %v4725, %v4764
    %v4766 = vpop.f32.mrf.mxu0
    %v4767 = vpop.f32.mrf.mxu0
    %v4768 = vpop.f32.mrf.mxu0
    %4769 = vdwg.mxu0
    %4770 = vmatprep.subr.bf16.mxu0 0
    %4771 = vmatpush1.bf16.msra.mxu0 %v4577
    %4772 = vmatprep.subr.bf16.mxu0 0
    %4773 = vmatpush1.bf16.msra.mxu0 %v4576
    %4774 = vmatprep.subr.bf16.mxu0 0
    %4775 = vmatpush1.bf16.msra.mxu0 %v4575
    %4776 = vmatprep.subr.bf16.mxu0 0
    %4777 = vmatpush1.bf16.msra.mxu0 %v4574
    %4778 = vmatprep.subr.bf16.mxu0 0
    %4779 = vmatpush1.bf16.msra.mxu0 %v4573
    %4780 = vmatprep.subr.bf16.mxu0 0
    %4781 = vmatpush1.bf16.msra.mxu0 %v4572
    %4782 = vmatprep.subr.bf16.mxu0 0
    %4783 = vmatpush1.bf16.msra.mxu0 %v4571
    %4784 = vmatprep.subr.bf16.mxu0 0
    %4785 = vmatpush1.bf16.msra.mxu0 %v4570
    %4786 = vmatprep.subr.bf16.mxu0 0
    %4787 = vmatpush2.bf16.msra.mxu0 %v4585
    %4788 = vmatprep.subr.bf16.mxu0 0
    %4789 = vmatpush2.bf16.msra.mxu0 %v4584
    %4790 = vmatprep.subr.bf16.mxu0 0
    %4791 = vmatpush2.bf16.msra.mxu0 %v4583
    %4792 = vmatprep.subr.bf16.mxu0 0
    %4793 = vmatpush2.bf16.msra.mxu0 %v4582
    %4794 = vmatprep.subr.bf16.mxu0 0
    %4795 = vmatpush2.bf16.msra.mxu0 %v4581
    %4796 = vmatprep.subr.bf16.mxu0 0
    %4797 = vmatpush2.bf16.msra.mxu0 %v4580
    %4798 = vmatprep.subr.bf16.mxu0 0
    %4799 = vmatpush2.bf16.msra.mxu0 %v4579
    %4800 = vmatprep.subr.bf16.mxu0 0
    %4801 = vmatpush2.bf16.msra.mxu0 %v4578
    %4802 = vmatprep.mubr.bf16.mxu0 %v4257
    %4803 = vmatmul.mubr.bf16.gmra.mxu0 %v4256
    %v4804 = vpop.f32.mrf.mxu0
    %v4805 = vadd.f32 %v4765, %v4804
    %v4806 = vpop.f32.mrf.mxu0
    %v4807 = vpop.f32.mrf.mxu0
    %v4808 = vpop.f32.mrf.mxu0
    %4809 = vdwg.mxu0
    %v4810 = vadd.f32 %v4120, %v4805
    %s4811 = scalar_lea.vmem %s2, 3072
    %v4812 = vld [vmem:[%s4811] sm:$0xf]
    %v4813 = vld [vmem:[%s4811 + $0x4] sm:$0xf]
    %v4814 = vld [vmem:[%s4811 + $0x8] sm:$0xf]
    %v4815 = vld [vmem:[%s4811 + $0xc] sm:$0xf]
    %v4816 = vld [vmem:[%s4811 + $0x10] sm:$0xf]
    %v4817 = vld [vmem:[%s4811 + $0x14] sm:$0xf]
    %v4818 = vld [vmem:[%s4811 + $0x18] sm:$0xf]
    %v4819 = vld [vmem:[%s4811 + $0x1c] sm:$0xf]
    %v4820 = vld [vmem:[%s4811 + $0x20] sm:$0xf]
    %v4821 = vld [vmem:[%s4811 + $0x24] sm:$0xf]
    %v4822 = vld [vmem:[%s4811 + $0x28] sm:$0xf]
    %v4823 = vld [vmem:[%s4811 + $0x2c] sm:$0xf]
    %v4824 = vld [vmem:[%s4811 + $0x30] sm:$0xf]
    %v4825 = vld [vmem:[%s4811 + $0x34] sm:$0xf]
    %v4826 = vld [vmem:[%s4811 + $0x38] sm:$0xf]
    %v4827 = vld [vmem:[%s4811 + $0x3c] sm:$0xf]
    %v4828 = vld [vmem:[%s4811 + $0x40] sm:$0xf]
    %v4829 = vld [vmem:[%s4811 + $0x44] sm:$0xf]
    %v4830 = vld [vmem:[%s4811 + $0x48] sm:$0xf]
    %v4831 = vld [vmem:[%s4811 + $0x4c] sm:$0xf]
    %v4832 = vld [vmem:[%s4811 + $0x50] sm:$0xf]
    %v4833 = vld [vmem:[%s4811 + $0x54] sm:$0xf]
    %v4834 = vld [vmem:[%s4811 + $0x58] sm:$0xf]
    %v4835 = vld [vmem:[%s4811 + $0x5c] sm:$0xf]
    %v4836 = vld [vmem:[%s4811 + $0x60] sm:$0xf]
    %v4837 = vld [vmem:[%s4811 + $0x64] sm:$0xf]
    %v4838 = vld [vmem:[%s4811 + $0x68] sm:$0xf]
    %v4839 = vld [vmem:[%s4811 + $0x6c] sm:$0xf]
    %v4840 = vld [vmem:[%s4811 + $0x70] sm:$0xf]
    %v4841 = vld [vmem:[%s4811 + $0x74] sm:$0xf]
    %v4842 = vld [vmem:[%s4811 + $0x78] sm:$0xf]
    %v4843 = vld [vmem:[%s4811 + $0x7c] sm:$0xf]
    %v4844 = vld [vmem:[%s4811 + $0x80] sm:$0xf]
    %v4845 = vld [vmem:[%s4811 + $0x84] sm:$0xf]
    %v4846 = vld [vmem:[%s4811 + $0x88] sm:$0xf]
    %v4847 = vld [vmem:[%s4811 + $0x8c] sm:$0xf]
    %v4848 = vld [vmem:[%s4811 + $0x90] sm:$0xf]
    %v4849 = vld [vmem:[%s4811 + $0x94] sm:$0xf]
    %v4850 = vld [vmem:[%s4811 + $0x98] sm:$0xf]
    %v4851 = vld [vmem:[%s4811 + $0x9c] sm:$0xf]
    %v4852 = vld [vmem:[%s4811 + $0xa0] sm:$0xf]
    %v4853 = vld [vmem:[%s4811 + $0xa4] sm:$0xf]
    %v4854 = vld [vmem:[%s4811 + $0xa8] sm:$0xf]
    %v4855 = vld [vmem:[%s4811 + $0xac] sm:$0xf]
    %v4856 = vld [vmem:[%s4811 + $0xb0] sm:$0xf]
    %v4857 = vld [vmem:[%s4811 + $0xb4] sm:$0xf]
    %v4858 = vld [vmem:[%s4811 + $0xb8] sm:$0xf]
    %v4859 = vld [vmem:[%s4811 + $0xbc] sm:$0xf]
    %v4860 = vld [vmem:[%s4811 + $0xc0] sm:$0xf]
    %v4861 = vld [vmem:[%s4811 + $0xc4] sm:$0xf]
    %v4862 = vld [vmem:[%s4811 + $0xc8] sm:$0xf]
    %v4863 = vld [vmem:[%s4811 + $0xcc] sm:$0xf]
    %v4864 = vld [vmem:[%s4811 + $0xd0] sm:$0xf]
    %v4865 = vld [vmem:[%s4811 + $0xd4] sm:$0xf]
    %v4866 = vld [vmem:[%s4811 + $0xd8] sm:$0xf]
    %v4867 = vld [vmem:[%s4811 + $0xdc] sm:$0xf]
    %v4868 = vld [vmem:[%s4811 + $0xe0] sm:$0xf]
    %v4869 = vld [vmem:[%s4811 + $0xe4] sm:$0xf]
    %v4870 = vld [vmem:[%s4811 + $0xe8] sm:$0xf]
    %v4871 = vld [vmem:[%s4811 + $0xec] sm:$0xf]
    %v4872 = vld [vmem:[%s4811 + $0xf0] sm:$0xf]
    %v4873 = vld [vmem:[%s4811 + $0xf4] sm:$0xf]
    %v4874 = vld [vmem:[%s4811 + $0xf8] sm:$0xf]
    %v4875 = vld [vmem:[%s4811 + $0xfc] sm:$0xf]
    %v4876 = vld [vmem:[%s4811 + $0x100] sm:$0xf]
    %v4877 = vld [vmem:[%s4811 + $0x104] sm:$0xf]
    %v4878 = vld [vmem:[%s4811 + $0x108] sm:$0xf]
    %v4879 = vld [vmem:[%s4811 + $0x10c] sm:$0xf]
    %v4880 = vld [vmem:[%s4811 + $0x110] sm:$0xf]
    %v4881 = vld [vmem:[%s4811 + $0x114] sm:$0xf]
    %v4882 = vld [vmem:[%s4811 + $0x118] sm:$0xf]
    %v4883 = vld [vmem:[%s4811 + $0x11c] sm:$0xf]
    %v4884 = vld [vmem:[%s4811 + $0x120] sm:$0xf]
    %v4885 = vld [vmem:[%s4811 + $0x124] sm:$0xf]
    %v4886 = vld [vmem:[%s4811 + $0x128] sm:$0xf]
    %v4887 = vld [vmem:[%s4811 + $0x12c] sm:$0xf]
    %v4888 = vld [vmem:[%s4811 + $0x130] sm:$0xf]
    %v4889 = vld [vmem:[%s4811 + $0x134] sm:$0xf]
    %v4890 = vld [vmem:[%s4811 + $0x138] sm:$0xf]
    %v4891 = vld [vmem:[%s4811 + $0x13c] sm:$0xf]
    %v4892 = vld [vmem:[%s4811 + $0x140] sm:$0xf]
    %v4893 = vld [vmem:[%s4811 + $0x144] sm:$0xf]
    %v4894 = vld [vmem:[%s4811 + $0x148] sm:$0xf]
    %v4895 = vld [vmem:[%s4811 + $0x14c] sm:$0xf]
    %v4896 = vld [vmem:[%s4811 + $0x150] sm:$0xf]
    %v4897 = vld [vmem:[%s4811 + $0x154] sm:$0xf]
    %v4898 = vld [vmem:[%s4811 + $0x158] sm:$0xf]
    %v4899 = vld [vmem:[%s4811 + $0x15c] sm:$0xf]
    %v4900 = vld [vmem:[%s4811 + $0x160] sm:$0xf]
    %v4901 = vld [vmem:[%s4811 + $0x164] sm:$0xf]
    %v4902 = vld [vmem:[%s4811 + $0x168] sm:$0xf]
    %v4903 = vld [vmem:[%s4811 + $0x16c] sm:$0xf]
    %v4904 = vld [vmem:[%s4811 + $0x170] sm:$0xf]
    %v4905 = vld [vmem:[%s4811 + $0x174] sm:$0xf]
    %v4906 = vld [vmem:[%s4811 + $0x178] sm:$0xf]
    %v4907 = vld [vmem:[%s4811 + $0x17c] sm:$0xf]
    %v4908 = vld [vmem:[%s4811 + $0x180] sm:$0xf]
    %v4909 = vld [vmem:[%s4811 + $0x184] sm:$0xf]
    %v4910 = vld [vmem:[%s4811 + $0x188] sm:$0xf]
    %v4911 = vld [vmem:[%s4811 + $0x18c] sm:$0xf]
    %v4912 = vld [vmem:[%s4811 + $0x190] sm:$0xf]
    %v4913 = vld [vmem:[%s4811 + $0x194] sm:$0xf]
    %v4914 = vld [vmem:[%s4811 + $0x198] sm:$0xf]
    %v4915 = vld [vmem:[%s4811 + $0x19c] sm:$0xf]
    %v4916 = vld [vmem:[%s4811 + $0x1a0] sm:$0xf]
    %v4917 = vld [vmem:[%s4811 + $0x1a4] sm:$0xf]
    %v4918 = vld [vmem:[%s4811 + $0x1a8] sm:$0xf]
    %v4919 = vld [vmem:[%s4811 + $0x1ac] sm:$0xf]
    %v4920 = vld [vmem:[%s4811 + $0x1b0] sm:$0xf]
    %v4921 = vld [vmem:[%s4811 + $0x1b4] sm:$0xf]
    %v4922 = vld [vmem:[%s4811 + $0x1b8] sm:$0xf]
    %v4923 = vld [vmem:[%s4811 + $0x1bc] sm:$0xf]
    %v4924 = vld [vmem:[%s4811 + $0x1c0] sm:$0xf]
    %v4925 = vld [vmem:[%s4811 + $0x1c4] sm:$0xf]
    %v4926 = vld [vmem:[%s4811 + $0x1c8] sm:$0xf]
    %v4927 = vld [vmem:[%s4811 + $0x1cc] sm:$0xf]
    %v4928 = vld [vmem:[%s4811 + $0x1d0] sm:$0xf]
    %v4929 = vld [vmem:[%s4811 + $0x1d4] sm:$0xf]
    %v4930 = vld [vmem:[%s4811 + $0x1d8] sm:$0xf]
    %v4931 = vld [vmem:[%s4811 + $0x1dc] sm:$0xf]
    %v4932 = vld [vmem:[%s4811 + $0x1e0] sm:$0xf]
    %v4933 = vld [vmem:[%s4811 + $0x1e4] sm:$0xf]
    %v4934 = vld [vmem:[%s4811 + $0x1e8] sm:$0xf]
    %v4935 = vld [vmem:[%s4811 + $0x1ec] sm:$0xf]
    %v4936 = vld [vmem:[%s4811 + $0x1f0] sm:$0xf]
    %v4937 = vld [vmem:[%s4811 + $0x1f4] sm:$0xf]
    %v4938 = vld [vmem:[%s4811 + $0x1f8] sm:$0xf]
    %v4939 = vld [vmem:[%s4811 + $0x1fc] sm:$0xf]
    %v4940 = vrot.slane %v655, 3
    %v4941 = vrot.slane %v656, 3
    %v4942 = vrot.slane %v657, 3
    %v4943 = vrot.slane %v658, 3
    %v4944 = vrot.slane %v659, 3
    %v4945 = vrot.slane %v660, 3
    %v4946 = vrot.slane %v661, 3
    %v4947 = vrot.slane %v662, 3
    %v5084 = vunpack.c.l.b16 %v4812
    %v5085 = vunpack.c.l.b16 %v4813
    %v5086 = vunpack.c.l.b16 %v4814
    %v5087 = vunpack.c.l.b16 %v4815
    %v5088 = vunpack.c.l.b16 %v4816
    %v5089 = vunpack.c.l.b16 %v4817
    %v5090 = vunpack.c.l.b16 %v4818
    %v5091 = vunpack.c.l.b16 %v4819
    %v5092 = vunpack.c.l.b16 %v4820
    %v5093 = vunpack.c.l.b16 %v4821
    %v5094 = vunpack.c.l.b16 %v4822
    %v5095 = vunpack.c.l.b16 %v4823
    %v5096 = vunpack.c.l.b16 %v4824
    %v5097 = vunpack.c.l.b16 %v4825
    %v5098 = vunpack.c.l.b16 %v4826
    %v5099 = vunpack.c.l.b16 %v4827
    %v5100 = vunpack.c.l.b16 %v4828
    %v5101 = vunpack.c.l.b16 %v4829
    %v5102 = vunpack.c.l.b16 %v4830
    %v5103 = vunpack.c.l.b16 %v4831
    %v5104 = vunpack.c.l.b16 %v4832
    %v5105 = vunpack.c.l.b16 %v4833
    %v5106 = vunpack.c.l.b16 %v4834
    %v5107 = vunpack.c.l.b16 %v4835
    %v5108 = vunpack.c.l.b16 %v4836
    %v5109 = vunpack.c.l.b16 %v4837
    %v5110 = vunpack.c.l.b16 %v4838
    %v5111 = vunpack.c.l.b16 %v4839
    %v5112 = vunpack.c.l.b16 %v4840
    %v5113 = vunpack.c.l.b16 %v4841
    %v5114 = vunpack.c.l.b16 %v4842
    %v5115 = vunpack.c.l.b16 %v4843
    %v5116 = vunpack.c.l.b16 %v4844
    %v5117 = vunpack.c.l.b16 %v4845
    %v5118 = vunpack.c.l.b16 %v4846
    %v5119 = vunpack.c.l.b16 %v4847
    %v5120 = vunpack.c.l.b16 %v4848
    %v5121 = vunpack.c.l.b16 %v4849
    %v5122 = vunpack.c.l.b16 %v4850
    %v5123 = vunpack.c.l.b16 %v4851
    %v5124 = vunpack.c.l.b16 %v4852
    %v5125 = vunpack.c.l.b16 %v4853
    %v5126 = vunpack.c.l.b16 %v4854
    %v5127 = vunpack.c.l.b16 %v4855
    %v5128 = vunpack.c.l.b16 %v4856
    %v5129 = vunpack.c.l.b16 %v4857
    %v5130 = vunpack.c.l.b16 %v4858
    %v5131 = vunpack.c.l.b16 %v4859
    %v5132 = vunpack.c.l.b16 %v4860
    %v5133 = vunpack.c.l.b16 %v4861
    %v5134 = vunpack.c.l.b16 %v4862
    %v5135 = vunpack.c.l.b16 %v4863
    %v5136 = vunpack.c.l.b16 %v4864
    %v5137 = vunpack.c.l.b16 %v4865
    %v5138 = vunpack.c.l.b16 %v4866
    %v5139 = vunpack.c.l.b16 %v4867
    %v5140 = vunpack.c.l.b16 %v4868
    %v5141 = vunpack.c.l.b16 %v4869
    %v5142 = vunpack.c.l.b16 %v4870
    %v5143 = vunpack.c.l.b16 %v4871
    %v5144 = vunpack.c.l.b16 %v4872
    %v5145 = vunpack.c.l.b16 %v4873
    %v5146 = vunpack.c.l.b16 %v4874
    %v5147 = vunpack.c.l.b16 %v4875
    %v5148 = vunpack.c.l.b16 %v4876
    %v5149 = vunpack.c.l.b16 %v4877
    %v5150 = vunpack.c.l.b16 %v4878
    %v5151 = vunpack.c.l.b16 %v4879
    %v5152 = vunpack.c.l.b16 %v4880
    %v5153 = vunpack.c.l.b16 %v4881
    %v5154 = vunpack.c.l.b16 %v4882
    %v5155 = vunpack.c.l.b16 %v4883
    %v5156 = vunpack.c.l.b16 %v4884
    %v5157 = vunpack.c.l.b16 %v4885
    %v5158 = vunpack.c.l.b16 %v4886
    %v5159 = vunpack.c.l.b16 %v4887
    %v5160 = vunpack.c.l.b16 %v4888
    %v5161 = vunpack.c.l.b16 %v4889
    %v5162 = vunpack.c.l.b16 %v4890
    %v5163 = vunpack.c.l.b16 %v4891
    %v5164 = vunpack.c.l.b16 %v4892
    %v5165 = vunpack.c.l.b16 %v4893
    %v5166 = vunpack.c.l.b16 %v4894
    %v5167 = vunpack.c.l.b16 %v4895
    %v5168 = vunpack.c.l.b16 %v4896
    %v5169 = vunpack.c.l.b16 %v4897
    %v5170 = vunpack.c.l.b16 %v4898
    %v5171 = vunpack.c.l.b16 %v4899
    %v5172 = vunpack.c.l.b16 %v4900
    %v5173 = vunpack.c.l.b16 %v4901
    %v5174 = vunpack.c.l.b16 %v4902
    %v5175 = vunpack.c.l.b16 %v4903
    %v5176 = vunpack.c.l.b16 %v4904
    %v5177 = vunpack.c.l.b16 %v4905
    %v5178 = vunpack.c.l.b16 %v4906
    %v5179 = vunpack.c.l.b16 %v4907
    %v5180 = vunpack.c.l.b16 %v4908
    %v5181 = vunpack.c.l.b16 %v4909
    %v5182 = vunpack.c.l.b16 %v4910
    %v5183 = vunpack.c.l.b16 %v4911
    %v5184 = vunpack.c.l.b16 %v4912
    %v5185 = vunpack.c.l.b16 %v4913
    %v5186 = vunpack.c.l.b16 %v4914
    %v5187 = vunpack.c.l.b16 %v4915
    %v5188 = vunpack.c.l.b16 %v4916
    %v5189 = vunpack.c.l.b16 %v4917
    %v5190 = vunpack.c.l.b16 %v4918
    %v5191 = vunpack.c.l.b16 %v4919
    %v5192 = vunpack.c.l.b16 %v4920
    %v5193 = vunpack.c.l.b16 %v4921
    %v5194 = vunpack.c.l.b16 %v4922
    %v5195 = vunpack.c.l.b16 %v4923
    %v5196 = vunpack.c.l.b16 %v4924
    %v5197 = vunpack.c.l.b16 %v4925
    %v5198 = vunpack.c.l.b16 %v4926
    %v5199 = vunpack.c.l.b16 %v4927
    %v5200 = vunpack.c.l.b16 %v4928
    %v5201 = vunpack.c.l.b16 %v4929
    %v5202 = vunpack.c.l.b16 %v4930
    %v5203 = vunpack.c.l.b16 %v4931
    %v5204 = vunpack.c.l.b16 %v4932
    %v5205 = vunpack.c.l.b16 %v4933
    %v5206 = vunpack.c.l.b16 %v4934
    %v5207 = vunpack.c.l.b16 %v4935
    %v5208 = vunpack.c.l.b16 %v4936
    %v5209 = vunpack.c.l.b16 %v4937
    %v5210 = vunpack.c.l.b16 %v4938
    %v5211 = vunpack.c.l.b16 %v4939
    %v5212 = vpack.c.b16 %v5085, %v5084
    %v5213 = vpack.c.b16 %v5087, %v5086
    %v5214 = vpack.c.b16 %v5089, %v5088
    %v5215 = vpack.c.b16 %v5091, %v5090
    %v5216 = vpack.c.b16 %v5093, %v5092
    %v5217 = vpack.c.b16 %v5095, %v5094
    %v5218 = vpack.c.b16 %v5097, %v5096
    %v5219 = vpack.c.b16 %v5099, %v5098
    %v5220 = vpack.c.b16 %v5101, %v5100
    %v5221 = vpack.c.b16 %v5103, %v5102
    %v5222 = vpack.c.b16 %v5105, %v5104
    %v5223 = vpack.c.b16 %v5107, %v5106
    %v5224 = vpack.c.b16 %v5109, %v5108
    %v5225 = vpack.c.b16 %v5111, %v5110
    %v5226 = vpack.c.b16 %v5113, %v5112
    %v5227 = vpack.c.b16 %v5115, %v5114
    %v5228 = vpack.c.b16 %v5117, %v5116
    %v5229 = vpack.c.b16 %v5119, %v5118
    %v5230 = vpack.c.b16 %v5121, %v5120
    %v5231 = vpack.c.b16 %v5123, %v5122
    %v5232 = vpack.c.b16 %v5125, %v5124
    %v5233 = vpack.c.b16 %v5127, %v5126
    %v5234 = vpack.c.b16 %v5129, %v5128
    %v5235 = vpack.c.b16 %v5131, %v5130
    %v5236 = vpack.c.b16 %v5133, %v5132
    %v5237 = vpack.c.b16 %v5135, %v5134
    %v5238 = vpack.c.b16 %v5137, %v5136
    %v5239 = vpack.c.b16 %v5139, %v5138
    %v5240 = vpack.c.b16 %v5141, %v5140
    %v5241 = vpack.c.b16 %v5143, %v5142
    %v5242 = vpack.c.b16 %v5145, %v5144
    %v5243 = vpack.c.b16 %v5147, %v5146
    %v5244 = vpack.c.b16 %v5149, %v5148
    %v5245 = vpack.c.b16 %v5151, %v5150
    %v5246 = vpack.c.b16 %v5153, %v5152
    %v5247 = vpack.c.b16 %v5155, %v5154
    %v5248 = vpack.c.b16 %v5157, %v5156
    %v5249 = vpack.c.b16 %v5159, %v5158
    %v5250 = vpack.c.b16 %v5161, %v5160
    %v5251 = vpack.c.b16 %v5163, %v5162
    %v5252 = vpack.c.b16 %v5165, %v5164
    %v5253 = vpack.c.b16 %v5167, %v5166
    %v5254 = vpack.c.b16 %v5169, %v5168
    %v5255 = vpack.c.b16 %v5171, %v5170
    %v5256 = vpack.c.b16 %v5173, %v5172
    %v5257 = vpack.c.b16 %v5175, %v5174
    %v5258 = vpack.c.b16 %v5177, %v5176
    %v5259 = vpack.c.b16 %v5179, %v5178
    %v5260 = vpack.c.b16 %v5181, %v5180
    %v5261 = vpack.c.b16 %v5183, %v5182
    %v5262 = vpack.c.b16 %v5185, %v5184
    %v5263 = vpack.c.b16 %v5187, %v5186
    %v5264 = vpack.c.b16 %v5189, %v5188
    %v5265 = vpack.c.b16 %v5191, %v5190
    %v5266 = vpack.c.b16 %v5193, %v5192
    %v5267 = vpack.c.b16 %v5195, %v5194
    %v5268 = vpack.c.b16 %v5197, %v5196
    %v5269 = vpack.c.b16 %v5199, %v5198
    %v5270 = vpack.c.b16 %v5201, %v5200
    %v5271 = vpack.c.b16 %v5203, %v5202
    %v5272 = vpack.c.b16 %v5205, %v5204
    %v5273 = vpack.c.b16 %v5207, %v5206
    %v5274 = vpack.c.b16 %v5209, %v5208
    %v5275 = vpack.c.b16 %v5211, %v5210
    %5340 = vmatprep.subr.bf16.mxu0 0
    %5341 = vmatpush1.bf16.msra.mxu0 %v5219
    %5342 = vmatprep.subr.bf16.mxu0 0
    %5343 = vmatpush1.bf16.msra.mxu0 %v5218
    %5344 = vmatprep.subr.bf16.mxu0 0
    %5345 = vmatpush1.bf16.msra.mxu0 %v5217
    %5346 = vmatprep.subr.bf16.mxu0 0
    %5347 = vmatpush1.bf16.msra.mxu0 %v5216
    %5348 = vmatprep.subr.bf16.mxu0 0
    %5349 = vmatpush1.bf16.msra.mxu0 %v5215
    %5350 = vmatprep.subr.bf16.mxu0 0
    %5351 = vmatpush1.bf16.msra.mxu0 %v5214
    %5352 = vmatprep.subr.bf16.mxu0 0
    %5353 = vmatpush1.bf16.msra.mxu0 %v5213
    %5354 = vmatprep.subr.bf16.mxu0 0
    %5355 = vmatpush1.bf16.msra.mxu0 %v5212
    %5356 = vmatprep.subr.bf16.mxu0 0
    %5357 = vmatpush2.bf16.msra.mxu0 %v5227
    %5358 = vmatprep.subr.bf16.mxu0 0
    %5359 = vmatpush2.bf16.msra.mxu0 %v5226
    %5360 = vmatprep.subr.bf16.mxu0 0
    %5361 = vmatpush2.bf16.msra.mxu0 %v5225
    %5362 = vmatprep.subr.bf16.mxu0 0
    %5363 = vmatpush2.bf16.msra.mxu0 %v5224
    %5364 = vmatprep.subr.bf16.mxu0 0
    %5365 = vmatpush2.bf16.msra.mxu0 %v5223
    %5366 = vmatprep.subr.bf16.mxu0 0
    %5367 = vmatpush2.bf16.msra.mxu0 %v5222
    %5368 = vmatprep.subr.bf16.mxu0 0
    %5369 = vmatpush2.bf16.msra.mxu0 %v5221
    %5370 = vmatprep.subr.bf16.mxu0 0
    %5371 = vmatpush2.bf16.msra.mxu0 %v5220
    %5372 = vmatprep.mubr.bf16.mxu0 %v4941
    %5373 = vmatmul.mubr.bf16.gmra.mxu0 %v4940
    %v5374 = vpop.f32.mrf.mxu0
    %v5375 = vadd.f32 0.0, %v5374
    %v5376 = vpop.f32.mrf.mxu0
    %v5377 = vpop.f32.mrf.mxu0
    %v5378 = vpop.f32.mrf.mxu0
    %5379 = vdwg.mxu0
    %5380 = vmatprep.subr.bf16.mxu0 0
    %5381 = vmatpush1.bf16.msra.mxu0 %v5235
    %5382 = vmatprep.subr.bf16.mxu0 0
    %5383 = vmatpush1.bf16.msra.mxu0 %v5234
    %5384 = vmatprep.subr.bf16.mxu0 0
    %5385 = vmatpush1.bf16.msra.mxu0 %v5233
    %5386 = vmatprep.subr.bf16.mxu0 0
    %5387 = vmatpush1.bf16.msra.mxu0 %v5232
    %5388 = vmatprep.subr.bf16.mxu0 0
    %5389 = vmatpush1.bf16.msra.mxu0 %v5231
    %5390 = vmatprep.subr.bf16.mxu0 0
    %5391 = vmatpush1.bf16.msra.mxu0 %v5230
    %5392 = vmatprep.subr.bf16.mxu0 0
    %5393 = vmatpush1.bf16.msra.mxu0 %v5229
    %5394 = vmatprep.subr.bf16.mxu0 0
    %5395 = vmatpush1.bf16.msra.mxu0 %v5228
    %5396 = vmatprep.subr.bf16.mxu0 0
    %5397 = vmatpush2.bf16.msra.mxu0 %v5243
    %5398 = vmatprep.subr.bf16.mxu0 0
    %5399 = vmatpush2.bf16.msra.mxu0 %v5242
    %5400 = vmatprep.subr.bf16.mxu0 0
    %5401 = vmatpush2.bf16.msra.mxu0 %v5241
    %5402 = vmatprep.subr.bf16.mxu0 0
    %5403 = vmatpush2.bf16.msra.mxu0 %v5240
    %5404 = vmatprep.subr.bf16.mxu0 0
    %5405 = vmatpush2.bf16.msra.mxu0 %v5239
    %5406 = vmatprep.subr.bf16.mxu0 0
    %5407 = vmatpush2.bf16.msra.mxu0 %v5238
    %5408 = vmatprep.subr.bf16.mxu0 0
    %5409 = vmatpush2.bf16.msra.mxu0 %v5237
    %5410 = vmatprep.subr.bf16.mxu0 0
    %5411 = vmatpush2.bf16.msra.mxu0 %v5236
    %5412 = vmatprep.mubr.bf16.mxu0 %v4943
    %5413 = vmatmul.mubr.bf16.gmra.mxu0 %v4942
    %v5414 = vpop.f32.mrf.mxu0
    %v5415 = vadd.f32 %v5375, %v5414
    %v5416 = vpop.f32.mrf.mxu0
    %v5417 = vpop.f32.mrf.mxu0
    %v5418 = vpop.f32.mrf.mxu0
    %5419 = vdwg.mxu0
    %5420 = vmatprep.subr.bf16.mxu0 0
    %5421 = vmatpush1.bf16.msra.mxu0 %v5251
    %5422 = vmatprep.subr.bf16.mxu0 0
    %5423 = vmatpush1.bf16.msra.mxu0 %v5250
    %5424 = vmatprep.subr.bf16.mxu0 0
    %5425 = vmatpush1.bf16.msra.mxu0 %v5249
    %5426 = vmatprep.subr.bf16.mxu0 0
    %5427 = vmatpush1.bf16.msra.mxu0 %v5248
    %5428 = vmatprep.subr.bf16.mxu0 0
    %5429 = vmatpush1.bf16.msra.mxu0 %v5247
    %5430 = vmatprep.subr.bf16.mxu0 0
    %5431 = vmatpush1.bf16.msra.mxu0 %v5246
    %5432 = vmatprep.subr.bf16.mxu0 0
    %5433 = vmatpush1.bf16.msra.mxu0 %v5245
    %5434 = vmatprep.subr.bf16.mxu0 0
    %5435 = vmatpush1.bf16.msra.mxu0 %v5244
    %5436 = vmatprep.subr.bf16.mxu0 0
    %5437 = vmatpush2.bf16.msra.mxu0 %v5259
    %5438 = vmatprep.subr.bf16.mxu0 0
    %5439 = vmatpush2.bf16.msra.mxu0 %v5258
    %5440 = vmatprep.subr.bf16.mxu0 0
    %5441 = vmatpush2.bf16.msra.mxu0 %v5257
    %5442 = vmatprep.subr.bf16.mxu0 0
    %5443 = vmatpush2.bf16.msra.mxu0 %v5256
    %5444 = vmatprep.subr.bf16.mxu0 0
    %5445 = vmatpush2.bf16.msra.mxu0 %v5255
    %5446 = vmatprep.subr.bf16.mxu0 0
    %5447 = vmatpush2.bf16.msra.mxu0 %v5254
    %5448 = vmatprep.subr.bf16.mxu0 0
    %5449 = vmatpush2.bf16.msra.mxu0 %v5253
    %5450 = vmatprep.subr.bf16.mxu0 0
    %5451 = vmatpush2.bf16.msra.mxu0 %v5252
    %5452 = vmatprep.mubr.bf16.mxu0 %v4945
    %5453 = vmatmul.mubr.bf16.gmra.mxu0 %v4944
    %v5454 = vpop.f32.mrf.mxu0
    %v5455 = vadd.f32 %v5415, %v5454
    %v5456 = vpop.f32.mrf.mxu0
    %v5457 = vpop.f32.mrf.mxu0
    %v5458 = vpop.f32.mrf.mxu0
    %5459 = vdwg.mxu0
    %5460 = vmatprep.subr.bf16.mxu0 0
    %5461 = vmatpush1.bf16.msra.mxu0 %v5267
    %5462 = vmatprep.subr.bf16.mxu0 0
    %5463 = vmatpush1.bf16.msra.mxu0 %v5266
    %5464 = vmatprep.subr.bf16.mxu0 0
    %5465 = vmatpush1.bf16.msra.mxu0 %v5265
    %5466 = vmatprep.subr.bf16.mxu0 0
    %5467 = vmatpush1.bf16.msra.mxu0 %v5264
    %5468 = vmatprep.subr.bf16.mxu0 0
    %5469 = vmatpush1.bf16.msra.mxu0 %v5263
    %5470 = vmatprep.subr.bf16.mxu0 0
    %5471 = vmatpush1.bf16.msra.mxu0 %v5262
    %5472 = vmatprep.subr.bf16.mxu0 0
    %5473 = vmatpush1.bf16.msra.mxu0 %v5261
    %5474 = vmatprep.subr.bf16.mxu0 0
    %5475 = vmatpush1.bf16.msra.mxu0 %v5260
    %5476 = vmatprep.subr.bf16.mxu0 0
    %5477 = vmatpush2.bf16.msra.mxu0 %v5275
    %5478 = vmatprep.subr.bf16.mxu0 0
    %5479 = vmatpush2.bf16.msra.mxu0 %v5274
    %5480 = vmatprep.subr.bf16.mxu0 0
    %5481 = vmatpush2.bf16.msra.mxu0 %v5273
    %5482 = vmatprep.subr.bf16.mxu0 0
    %5483 = vmatpush2.bf16.msra.mxu0 %v5272
    %5484 = vmatprep.subr.bf16.mxu0 0
    %5485 = vmatpush2.bf16.msra.mxu0 %v5271
    %5486 = vmatprep.subr.bf16.mxu0 0
    %5487 = vmatpush2.bf16.msra.mxu0 %v5270
    %5488 = vmatprep.subr.bf16.mxu0 0
    %5489 = vmatpush2.bf16.msra.mxu0 %v5269
    %5490 = vmatprep.subr.bf16.mxu0 0
    %5491 = vmatpush2.bf16.msra.mxu0 %v5268
    %5492 = vmatprep.mubr.bf16.mxu0 %v4947
    %5493 = vmatmul.mubr.bf16.gmra.mxu0 %v4946
    %v5494 = vpop.f32.mrf.mxu0
    %v5495 = vadd.f32 %v5455, %v5494
    %v5496 = vpop.f32.mrf.mxu0
    %v5497 = vpop.f32.mrf.mxu0
    %v5498 = vpop.f32.mrf.mxu0
    %5499 = vdwg.mxu0
    %v5500 = vadd.f32 %v4810, %v5495
    %s5501 = scalar_lea.vmem %s2, 3584
    %v5502 = vld [vmem:[%s5501] sm:$0xf]
    %v5503 = vld [vmem:[%s5501 + $0x4] sm:$0xf]
    %v5504 = vld [vmem:[%s5501 + $0x8] sm:$0xf]
    %v5505 = vld [vmem:[%s5501 + $0xc] sm:$0xf]
    %v5506 = vld [vmem:[%s5501 + $0x10] sm:$0xf]
    %v5507 = vld [vmem:[%s5501 + $0x14] sm:$0xf]
    %v5508 = vld [vmem:[%s5501 + $0x18] sm:$0xf]
    %v5509 = vld [vmem:[%s5501 + $0x1c] sm:$0xf]
    %v5510 = vld [vmem:[%s5501 + $0x20] sm:$0xf]
    %v5511 = vld [vmem:[%s5501 + $0x24] sm:$0xf]
    %v5512 = vld [vmem:[%s5501 + $0x28] sm:$0xf]
    %v5513 = vld [vmem:[%s5501 + $0x2c] sm:$0xf]
    %v5514 = vld [vmem:[%s5501 + $0x30] sm:$0xf]
    %v5515 = vld [vmem:[%s5501 + $0x34] sm:$0xf]
    %v5516 = vld [vmem:[%s5501 + $0x38] sm:$0xf]
    %v5517 = vld [vmem:[%s5501 + $0x3c] sm:$0xf]
    %v5518 = vld [vmem:[%s5501 + $0x40] sm:$0xf]
    %v5519 = vld [vmem:[%s5501 + $0x44] sm:$0xf]
    %v5520 = vld [vmem:[%s5501 + $0x48] sm:$0xf]
    %v5521 = vld [vmem:[%s5501 + $0x4c] sm:$0xf]
    %v5522 = vld [vmem:[%s5501 + $0x50] sm:$0xf]
    %v5523 = vld [vmem:[%s5501 + $0x54] sm:$0xf]
    %v5524 = vld [vmem:[%s5501 + $0x58] sm:$0xf]
    %v5525 = vld [vmem:[%s5501 + $0x5c] sm:$0xf]
    %v5526 = vld [vmem:[%s5501 + $0x60] sm:$0xf]
    %v5527 = vld [vmem:[%s5501 + $0x64] sm:$0xf]
    %v5528 = vld [vmem:[%s5501 + $0x68] sm:$0xf]
    %v5529 = vld [vmem:[%s5501 + $0x6c] sm:$0xf]
    %v5530 = vld [vmem:[%s5501 + $0x70] sm:$0xf]
    %v5531 = vld [vmem:[%s5501 + $0x74] sm:$0xf]
    %v5532 = vld [vmem:[%s5501 + $0x78] sm:$0xf]
    %v5533 = vld [vmem:[%s5501 + $0x7c] sm:$0xf]
    %v5534 = vld [vmem:[%s5501 + $0x80] sm:$0xf]
    %v5535 = vld [vmem:[%s5501 + $0x84] sm:$0xf]
    %v5536 = vld [vmem:[%s5501 + $0x88] sm:$0xf]
    %v5537 = vld [vmem:[%s5501 + $0x8c] sm:$0xf]
    %v5538 = vld [vmem:[%s5501 + $0x90] sm:$0xf]
    %v5539 = vld [vmem:[%s5501 + $0x94] sm:$0xf]
    %v5540 = vld [vmem:[%s5501 + $0x98] sm:$0xf]
    %v5541 = vld [vmem:[%s5501 + $0x9c] sm:$0xf]
    %v5542 = vld [vmem:[%s5501 + $0xa0] sm:$0xf]
    %v5543 = vld [vmem:[%s5501 + $0xa4] sm:$0xf]
    %v5544 = vld [vmem:[%s5501 + $0xa8] sm:$0xf]
    %v5545 = vld [vmem:[%s5501 + $0xac] sm:$0xf]
    %v5546 = vld [vmem:[%s5501 + $0xb0] sm:$0xf]
    %v5547 = vld [vmem:[%s5501 + $0xb4] sm:$0xf]
    %v5548 = vld [vmem:[%s5501 + $0xb8] sm:$0xf]
    %v5549 = vld [vmem:[%s5501 + $0xbc] sm:$0xf]
    %v5550 = vld [vmem:[%s5501 + $0xc0] sm:$0xf]
    %v5551 = vld [vmem:[%s5501 + $0xc4] sm:$0xf]
    %v5552 = vld [vmem:[%s5501 + $0xc8] sm:$0xf]
    %v5553 = vld [vmem:[%s5501 + $0xcc] sm:$0xf]
    %v5554 = vld [vmem:[%s5501 + $0xd0] sm:$0xf]
    %v5555 = vld [vmem:[%s5501 + $0xd4] sm:$0xf]
    %v5556 = vld [vmem:[%s5501 + $0xd8] sm:$0xf]
    %v5557 = vld [vmem:[%s5501 + $0xdc] sm:$0xf]
    %v5558 = vld [vmem:[%s5501 + $0xe0] sm:$0xf]
    %v5559 = vld [vmem:[%s5501 + $0xe4] sm:$0xf]
    %v5560 = vld [vmem:[%s5501 + $0xe8] sm:$0xf]
    %v5561 = vld [vmem:[%s5501 + $0xec] sm:$0xf]
    %v5562 = vld [vmem:[%s5501 + $0xf0] sm:$0xf]
    %v5563 = vld [vmem:[%s5501 + $0xf4] sm:$0xf]
    %v5564 = vld [vmem:[%s5501 + $0xf8] sm:$0xf]
    %v5565 = vld [vmem:[%s5501 + $0xfc] sm:$0xf]
    %v5566 = vld [vmem:[%s5501 + $0x100] sm:$0xf]
    %v5567 = vld [vmem:[%s5501 + $0x104] sm:$0xf]
    %v5568 = vld [vmem:[%s5501 + $0x108] sm:$0xf]
    %v5569 = vld [vmem:[%s5501 + $0x10c] sm:$0xf]
    %v5570 = vld [vmem:[%s5501 + $0x110] sm:$0xf]
    %v5571 = vld [vmem:[%s5501 + $0x114] sm:$0xf]
    %v5572 = vld [vmem:[%s5501 + $0x118] sm:$0xf]
    %v5573 = vld [vmem:[%s5501 + $0x11c] sm:$0xf]
    %v5574 = vld [vmem:[%s5501 + $0x120] sm:$0xf]
    %v5575 = vld [vmem:[%s5501 + $0x124] sm:$0xf]
    %v5576 = vld [vmem:[%s5501 + $0x128] sm:$0xf]
    %v5577 = vld [vmem:[%s5501 + $0x12c] sm:$0xf]
    %v5578 = vld [vmem:[%s5501 + $0x130] sm:$0xf]
    %v5579 = vld [vmem:[%s5501 + $0x134] sm:$0xf]
    %v5580 = vld [vmem:[%s5501 + $0x138] sm:$0xf]
    %v5581 = vld [vmem:[%s5501 + $0x13c] sm:$0xf]
    %v5582 = vld [vmem:[%s5501 + $0x140] sm:$0xf]
    %v5583 = vld [vmem:[%s5501 + $0x144] sm:$0xf]
    %v5584 = vld [vmem:[%s5501 + $0x148] sm:$0xf]
    %v5585 = vld [vmem:[%s5501 + $0x14c] sm:$0xf]
    %v5586 = vld [vmem:[%s5501 + $0x150] sm:$0xf]
    %v5587 = vld [vmem:[%s5501 + $0x154] sm:$0xf]
    %v5588 = vld [vmem:[%s5501 + $0x158] sm:$0xf]
    %v5589 = vld [vmem:[%s5501 + $0x15c] sm:$0xf]
    %v5590 = vld [vmem:[%s5501 + $0x160] sm:$0xf]
    %v5591 = vld [vmem:[%s5501 + $0x164] sm:$0xf]
    %v5592 = vld [vmem:[%s5501 + $0x168] sm:$0xf]
    %v5593 = vld [vmem:[%s5501 + $0x16c] sm:$0xf]
    %v5594 = vld [vmem:[%s5501 + $0x170] sm:$0xf]
    %v5595 = vld [vmem:[%s5501 + $0x174] sm:$0xf]
    %v5596 = vld [vmem:[%s5501 + $0x178] sm:$0xf]
    %v5597 = vld [vmem:[%s5501 + $0x17c] sm:$0xf]
    %v5598 = vld [vmem:[%s5501 + $0x180] sm:$0xf]
    %v5599 = vld [vmem:[%s5501 + $0x184] sm:$0xf]
    %v5600 = vld [vmem:[%s5501 + $0x188] sm:$0xf]
    %v5601 = vld [vmem:[%s5501 + $0x18c] sm:$0xf]
    %v5602 = vld [vmem:[%s5501 + $0x190] sm:$0xf]
    %v5603 = vld [vmem:[%s5501 + $0x194] sm:$0xf]
    %v5604 = vld [vmem:[%s5501 + $0x198] sm:$0xf]
    %v5605 = vld [vmem:[%s5501 + $0x19c] sm:$0xf]
    %v5606 = vld [vmem:[%s5501 + $0x1a0] sm:$0xf]
    %v5607 = vld [vmem:[%s5501 + $0x1a4] sm:$0xf]
    %v5608 = vld [vmem:[%s5501 + $0x1a8] sm:$0xf]
    %v5609 = vld [vmem:[%s5501 + $0x1ac] sm:$0xf]
    %v5610 = vld [vmem:[%s5501 + $0x1b0] sm:$0xf]
    %v5611 = vld [vmem:[%s5501 + $0x1b4] sm:$0xf]
    %v5612 = vld [vmem:[%s5501 + $0x1b8] sm:$0xf]
    %v5613 = vld [vmem:[%s5501 + $0x1bc] sm:$0xf]
    %v5614 = vld [vmem:[%s5501 + $0x1c0] sm:$0xf]
    %v5615 = vld [vmem:[%s5501 + $0x1c4] sm:$0xf]
    %v5616 = vld [vmem:[%s5501 + $0x1c8] sm:$0xf]
    %v5617 = vld [vmem:[%s5501 + $0x1cc] sm:$0xf]
    %v5618 = vld [vmem:[%s5501 + $0x1d0] sm:$0xf]
    %v5619 = vld [vmem:[%s5501 + $0x1d4] sm:$0xf]
    %v5620 = vld [vmem:[%s5501 + $0x1d8] sm:$0xf]
    %v5621 = vld [vmem:[%s5501 + $0x1dc] sm:$0xf]
    %v5622 = vld [vmem:[%s5501 + $0x1e0] sm:$0xf]
    %v5623 = vld [vmem:[%s5501 + $0x1e4] sm:$0xf]
    %v5624 = vld [vmem:[%s5501 + $0x1e8] sm:$0xf]
    %v5625 = vld [vmem:[%s5501 + $0x1ec] sm:$0xf]
    %v5626 = vld [vmem:[%s5501 + $0x1f0] sm:$0xf]
    %v5627 = vld [vmem:[%s5501 + $0x1f4] sm:$0xf]
    %v5628 = vld [vmem:[%s5501 + $0x1f8] sm:$0xf]
    %v5629 = vld [vmem:[%s5501 + $0x1fc] sm:$0xf]
    %v5630 = vrot.slane %v1467, 3
    %v5631 = vrot.slane %v1470, 3
    %v5632 = vrot.slane %v1473, 3
    %v5633 = vrot.slane %v1476, 3
    %v5634 = vrot.slane %v1479, 3
    %v5635 = vrot.slane %v1482, 3
    %v5636 = vrot.slane %v1485, 3
    %v5637 = vrot.slane %v1488, 3
    %v5774 = vunpack.c.l.b16 %v5502
    %v5775 = vunpack.c.l.b16 %v5503
    %v5776 = vunpack.c.l.b16 %v5504
    %v5777 = vunpack.c.l.b16 %v5505
    %v5778 = vunpack.c.l.b16 %v5506
    %v5779 = vunpack.c.l.b16 %v5507
    %v5780 = vunpack.c.l.b16 %v5508
    %v5781 = vunpack.c.l.b16 %v5509
    %v5782 = vunpack.c.l.b16 %v5510
    %v5783 = vunpack.c.l.b16 %v5511
    %v5784 = vunpack.c.l.b16 %v5512
    %v5785 = vunpack.c.l.b16 %v5513
    %v5786 = vunpack.c.l.b16 %v5514
    %v5787 = vunpack.c.l.b16 %v5515
    %v5788 = vunpack.c.l.b16 %v5516
    %v5789 = vunpack.c.l.b16 %v5517
    %v5790 = vunpack.c.l.b16 %v5518
    %v5791 = vunpack.c.l.b16 %v5519
    %v5792 = vunpack.c.l.b16 %v5520
    %v5793 = vunpack.c.l.b16 %v5521
    %v5794 = vunpack.c.l.b16 %v5522
    %v5795 = vunpack.c.l.b16 %v5523
    %v5796 = vunpack.c.l.b16 %v5524
    %v5797 = vunpack.c.l.b16 %v5525
    %v5798 = vunpack.c.l.b16 %v5526
    %v5799 = vunpack.c.l.b16 %v5527
    %v5800 = vunpack.c.l.b16 %v5528
    %v5801 = vunpack.c.l.b16 %v5529
    %v5802 = vunpack.c.l.b16 %v5530
    %v5803 = vunpack.c.l.b16 %v5531
    %v5804 = vunpack.c.l.b16 %v5532
    %v5805 = vunpack.c.l.b16 %v5533
    %v5806 = vunpack.c.l.b16 %v5534
    %v5807 = vunpack.c.l.b16 %v5535
    %v5808 = vunpack.c.l.b16 %v5536
    %v5809 = vunpack.c.l.b16 %v5537
    %v5810 = vunpack.c.l.b16 %v5538
    %v5811 = vunpack.c.l.b16 %v5539
    %v5812 = vunpack.c.l.b16 %v5540
    %v5813 = vunpack.c.l.b16 %v5541
    %v5814 = vunpack.c.l.b16 %v5542
    %v5815 = vunpack.c.l.b16 %v5543
    %v5816 = vunpack.c.l.b16 %v5544
    %v5817 = vunpack.c.l.b16 %v5545
    %v5818 = vunpack.c.l.b16 %v5546
    %v5819 = vunpack.c.l.b16 %v5547
    %v5820 = vunpack.c.l.b16 %v5548
    %v5821 = vunpack.c.l.b16 %v5549
    %v5822 = vunpack.c.l.b16 %v5550
    %v5823 = vunpack.c.l.b16 %v5551
    %v5824 = vunpack.c.l.b16 %v5552
    %v5825 = vunpack.c.l.b16 %v5553
    %v5826 = vunpack.c.l.b16 %v5554
    %v5827 = vunpack.c.l.b16 %v5555
    %v5828 = vunpack.c.l.b16 %v5556
    %v5829 = vunpack.c.l.b16 %v5557
    %v5830 = vunpack.c.l.b16 %v5558
    %v5831 = vunpack.c.l.b16 %v5559
    %v5832 = vunpack.c.l.b16 %v5560
    %v5833 = vunpack.c.l.b16 %v5561
    %v5834 = vunpack.c.l.b16 %v5562
    %v5835 = vunpack.c.l.b16 %v5563
    %v5836 = vunpack.c.l.b16 %v5564
    %v5837 = vunpack.c.l.b16 %v5565
    %v5838 = vunpack.c.l.b16 %v5566
    %v5839 = vunpack.c.l.b16 %v5567
    %v5840 = vunpack.c.l.b16 %v5568
    %v5841 = vunpack.c.l.b16 %v5569
    %v5842 = vunpack.c.l.b16 %v5570
    %v5843 = vunpack.c.l.b16 %v5571
    %v5844 = vunpack.c.l.b16 %v5572
    %v5845 = vunpack.c.l.b16 %v5573
    %v5846 = vunpack.c.l.b16 %v5574
    %v5847 = vunpack.c.l.b16 %v5575
    %v5848 = vunpack.c.l.b16 %v5576
    %v5849 = vunpack.c.l.b16 %v5577
    %v5850 = vunpack.c.l.b16 %v5578
    %v5851 = vunpack.c.l.b16 %v5579
    %v5852 = vunpack.c.l.b16 %v5580
    %v5853 = vunpack.c.l.b16 %v5581
    %v5854 = vunpack.c.l.b16 %v5582
    %v5855 = vunpack.c.l.b16 %v5583
    %v5856 = vunpack.c.l.b16 %v5584
    %v5857 = vunpack.c.l.b16 %v5585
    %v5858 = vunpack.c.l.b16 %v5586
    %v5859 = vunpack.c.l.b16 %v5587
    %v5860 = vunpack.c.l.b16 %v5588
    %v5861 = vunpack.c.l.b16 %v5589
    %v5862 = vunpack.c.l.b16 %v5590
    %v5863 = vunpack.c.l.b16 %v5591
    %v5864 = vunpack.c.l.b16 %v5592
    %v5865 = vunpack.c.l.b16 %v5593
    %v5866 = vunpack.c.l.b16 %v5594
    %v5867 = vunpack.c.l.b16 %v5595
    %v5868 = vunpack.c.l.b16 %v5596
    %v5869 = vunpack.c.l.b16 %v5597
    %v5870 = vunpack.c.l.b16 %v5598
    %v5871 = vunpack.c.l.b16 %v5599
    %v5872 = vunpack.c.l.b16 %v5600
    %v5873 = vunpack.c.l.b16 %v5601
    %v5874 = vunpack.c.l.b16 %v5602
    %v5875 = vunpack.c.l.b16 %v5603
    %v5876 = vunpack.c.l.b16 %v5604
    %v5877 = vunpack.c.l.b16 %v5605
    %v5878 = vunpack.c.l.b16 %v5606
    %v5879 = vunpack.c.l.b16 %v5607
    %v5880 = vunpack.c.l.b16 %v5608
    %v5881 = vunpack.c.l.b16 %v5609
    %v5882 = vunpack.c.l.b16 %v5610
    %v5883 = vunpack.c.l.b16 %v5611
    %v5884 = vunpack.c.l.b16 %v5612
    %v5885 = vunpack.c.l.b16 %v5613
    %v5886 = vunpack.c.l.b16 %v5614
    %v5887 = vunpack.c.l.b16 %v5615
    %v5888 = vunpack.c.l.b16 %v5616
    %v5889 = vunpack.c.l.b16 %v5617
    %v5890 = vunpack.c.l.b16 %v5618
    %v5891 = vunpack.c.l.b16 %v5619
    %v5892 = vunpack.c.l.b16 %v5620
    %v5893 = vunpack.c.l.b16 %v5621
    %v5894 = vunpack.c.l.b16 %v5622
    %v5895 = vunpack.c.l.b16 %v5623
    %v5896 = vunpack.c.l.b16 %v5624
    %v5897 = vunpack.c.l.b16 %v5625
    %v5898 = vunpack.c.l.b16 %v5626
    %v5899 = vunpack.c.l.b16 %v5627
    %v5900 = vunpack.c.l.b16 %v5628
    %v5901 = vunpack.c.l.b16 %v5629
    %v5902 = vpack.c.b16 %v5775, %v5774
    %v5903 = vpack.c.b16 %v5777, %v5776
    %v5904 = vpack.c.b16 %v5779, %v5778
    %v5905 = vpack.c.b16 %v5781, %v5780
    %v5906 = vpack.c.b16 %v5783, %v5782
    %v5907 = vpack.c.b16 %v5785, %v5784
    %v5908 = vpack.c.b16 %v5787, %v5786
    %v5909 = vpack.c.b16 %v5789, %v5788
    %v5910 = vpack.c.b16 %v5791, %v5790
    %v5911 = vpack.c.b16 %v5793, %v5792
    %v5912 = vpack.c.b16 %v5795, %v5794
    %v5913 = vpack.c.b16 %v5797, %v5796
    %v5914 = vpack.c.b16 %v5799, %v5798
    %v5915 = vpack.c.b16 %v5801, %v5800
    %v5916 = vpack.c.b16 %v5803, %v5802
    %v5917 = vpack.c.b16 %v5805, %v5804
    %v5918 = vpack.c.b16 %v5807, %v5806
    %v5919 = vpack.c.b16 %v5809, %v5808
    %v5920 = vpack.c.b16 %v5811, %v5810
    %v5921 = vpack.c.b16 %v5813, %v5812
    %v5922 = vpack.c.b16 %v5815, %v5814
    %v5923 = vpack.c.b16 %v5817, %v5816
    %v5924 = vpack.c.b16 %v5819, %v5818
    %v5925 = vpack.c.b16 %v5821, %v5820
    %v5926 = vpack.c.b16 %v5823, %v5822
    %v5927 = vpack.c.b16 %v5825, %v5824
    %v5928 = vpack.c.b16 %v5827, %v5826
    %v5929 = vpack.c.b16 %v5829, %v5828
    %v5930 = vpack.c.b16 %v5831, %v5830
    %v5931 = vpack.c.b16 %v5833, %v5832
    %v5932 = vpack.c.b16 %v5835, %v5834
    %v5933 = vpack.c.b16 %v5837, %v5836
    %v5934 = vpack.c.b16 %v5839, %v5838
    %v5935 = vpack.c.b16 %v5841, %v5840
    %v5936 = vpack.c.b16 %v5843, %v5842
    %v5937 = vpack.c.b16 %v5845, %v5844
    %v5938 = vpack.c.b16 %v5847, %v5846
    %v5939 = vpack.c.b16 %v5849, %v5848
    %v5940 = vpack.c.b16 %v5851, %v5850
    %v5941 = vpack.c.b16 %v5853, %v5852
    %v5942 = vpack.c.b16 %v5855, %v5854
    %v5943 = vpack.c.b16 %v5857, %v5856
    %v5944 = vpack.c.b16 %v5859, %v5858
    %v5945 = vpack.c.b16 %v5861, %v5860
    %v5946 = vpack.c.b16 %v5863, %v5862
    %v5947 = vpack.c.b16 %v5865, %v5864
    %v5948 = vpack.c.b16 %v5867, %v5866
    %v5949 = vpack.c.b16 %v5869, %v5868
    %v5950 = vpack.c.b16 %v5871, %v5870
    %v5951 = vpack.c.b16 %v5873, %v5872
    %v5952 = vpack.c.b16 %v5875, %v5874
    %v5953 = vpack.c.b16 %v5877, %v5876
    %v5954 = vpack.c.b16 %v5879, %v5878
    %v5955 = vpack.c.b16 %v5881, %v5880
    %v5956 = vpack.c.b16 %v5883, %v5882
    %v5957 = vpack.c.b16 %v5885, %v5884
    %v5958 = vpack.c.b16 %v5887, %v5886
    %v5959 = vpack.c.b16 %v5889, %v5888
    %v5960 = vpack.c.b16 %v5891, %v5890
    %v5961 = vpack.c.b16 %v5893, %v5892
    %v5962 = vpack.c.b16 %v5895, %v5894
    %v5963 = vpack.c.b16 %v5897, %v5896
    %v5964 = vpack.c.b16 %v5899, %v5898
    %v5965 = vpack.c.b16 %v5901, %v5900
    %6030 = vmatprep.subr.bf16.mxu0 0
    %6031 = vmatpush1.bf16.msra.mxu0 %v5909
    %6032 = vmatprep.subr.bf16.mxu0 0
    %6033 = vmatpush1.bf16.msra.mxu0 %v5908
    %6034 = vmatprep.subr.bf16.mxu0 0
    %6035 = vmatpush1.bf16.msra.mxu0 %v5907
    %6036 = vmatprep.subr.bf16.mxu0 0
    %6037 = vmatpush1.bf16.msra.mxu0 %v5906
    %6038 = vmatprep.subr.bf16.mxu0 0
    %6039 = vmatpush1.bf16.msra.mxu0 %v5905
    %6040 = vmatprep.subr.bf16.mxu0 0
    %6041 = vmatpush1.bf16.msra.mxu0 %v5904
    %6042 = vmatprep.subr.bf16.mxu0 0
    %6043 = vmatpush1.bf16.msra.mxu0 %v5903
    %6044 = vmatprep.subr.bf16.mxu0 0
    %6045 = vmatpush1.bf16.msra.mxu0 %v5902
    %6046 = vmatprep.subr.bf16.mxu0 0
    %6047 = vmatpush2.bf16.msra.mxu0 %v5917
    %6048 = vmatprep.subr.bf16.mxu0 0
    %6049 = vmatpush2.bf16.msra.mxu0 %v5916
    %6050 = vmatprep.subr.bf16.mxu0 0
    %6051 = vmatpush2.bf16.msra.mxu0 %v5915
    %6052 = vmatprep.subr.bf16.mxu0 0
    %6053 = vmatpush2.bf16.msra.mxu0 %v5914
    %6054 = vmatprep.subr.bf16.mxu0 0
    %6055 = vmatpush2.bf16.msra.mxu0 %v5913
    %6056 = vmatprep.subr.bf16.mxu0 0
    %6057 = vmatpush2.bf16.msra.mxu0 %v5912
    %6058 = vmatprep.subr.bf16.mxu0 0
    %6059 = vmatpush2.bf16.msra.mxu0 %v5911
    %6060 = vmatprep.subr.bf16.mxu0 0
    %6061 = vmatpush2.bf16.msra.mxu0 %v5910
    %6062 = vmatprep.mubr.bf16.mxu0 %v5631
    %6063 = vmatmul.mubr.bf16.gmra.mxu0 %v5630
    %v6064 = vpop.f32.mrf.mxu0
    %v6065 = vadd.f32 0.0, %v6064
    %v6066 = vpop.f32.mrf.mxu0
    %v6067 = vpop.f32.mrf.mxu0
    %v6068 = vpop.f32.mrf.mxu0
    %6069 = vdwg.mxu0
    %6070 = vmatprep.subr.bf16.mxu0 0
    %6071 = vmatpush1.bf16.msra.mxu0 %v5925
    %6072 = vmatprep.subr.bf16.mxu0 0
    %6073 = vmatpush1.bf16.msra.mxu0 %v5924
    %6074 = vmatprep.subr.bf16.mxu0 0
    %6075 = vmatpush1.bf16.msra.mxu0 %v5923
    %6076 = vmatprep.subr.bf16.mxu0 0
    %6077 = vmatpush1.bf16.msra.mxu0 %v5922
    %6078 = vmatprep.subr.bf16.mxu0 0
    %6079 = vmatpush1.bf16.msra.mxu0 %v5921
    %6080 = vmatprep.subr.bf16.mxu0 0
    %6081 = vmatpush1.bf16.msra.mxu0 %v5920
    %6082 = vmatprep.subr.bf16.mxu0 0
    %6083 = vmatpush1.bf16.msra.mxu0 %v5919
    %6084 = vmatprep.subr.bf16.mxu0 0
    %6085 = vmatpush1.bf16.msra.mxu0 %v5918
    %6086 = vmatprep.subr.bf16.mxu0 0
    %6087 = vmatpush2.bf16.msra.mxu0 %v5933
    %6088 = vmatprep.subr.bf16.mxu0 0
    %6089 = vmatpush2.bf16.msra.mxu0 %v5932
    %6090 = vmatprep.subr.bf16.mxu0 0
    %6091 = vmatpush2.bf16.msra.mxu0 %v5931
    %6092 = vmatprep.subr.bf16.mxu0 0
    %6093 = vmatpush2.bf16.msra.mxu0 %v5930
    %6094 = vmatprep.subr.bf16.mxu0 0
    %6095 = vmatpush2.bf16.msra.mxu0 %v5929
    %6096 = vmatprep.subr.bf16.mxu0 0
    %6097 = vmatpush2.bf16.msra.mxu0 %v5928
    %6098 = vmatprep.subr.bf16.mxu0 0
    %6099 = vmatpush2.bf16.msra.mxu0 %v5927
    %6100 = vmatprep.subr.bf16.mxu0 0
    %6101 = vmatpush2.bf16.msra.mxu0 %v5926
    %6102 = vmatprep.mubr.bf16.mxu0 %v5633
    %6103 = vmatmul.mubr.bf16.gmra.mxu0 %v5632
    %v6104 = vpop.f32.mrf.mxu0
    %v6105 = vadd.f32 %v6065, %v6104
    %v6106 = vpop.f32.mrf.mxu0
    %v6107 = vpop.f32.mrf.mxu0
    %v6108 = vpop.f32.mrf.mxu0
    %6109 = vdwg.mxu0
    %6110 = vmatprep.subr.bf16.mxu0 0
    %6111 = vmatpush1.bf16.msra.mxu0 %v5941
    %6112 = vmatprep.subr.bf16.mxu0 0
    %6113 = vmatpush1.bf16.msra.mxu0 %v5940
    %6114 = vmatprep.subr.bf16.mxu0 0
    %6115 = vmatpush1.bf16.msra.mxu0 %v5939
    %6116 = vmatprep.subr.bf16.mxu0 0
    %6117 = vmatpush1.bf16.msra.mxu0 %v5938
    %6118 = vmatprep.subr.bf16.mxu0 0
    %6119 = vmatpush1.bf16.msra.mxu0 %v5937
    %6120 = vmatprep.subr.bf16.mxu0 0
    %6121 = vmatpush1.bf16.msra.mxu0 %v5936
    %6122 = vmatprep.subr.bf16.mxu0 0
    %6123 = vmatpush1.bf16.msra.mxu0 %v5935
    %6124 = vmatprep.subr.bf16.mxu0 0
    %6125 = vmatpush1.bf16.msra.mxu0 %v5934
    %6126 = vmatprep.subr.bf16.mxu0 0
    %6127 = vmatpush2.bf16.msra.mxu0 %v5949
    %6128 = vmatprep.subr.bf16.mxu0 0
    %6129 = vmatpush2.bf16.msra.mxu0 %v5948
    %6130 = vmatprep.subr.bf16.mxu0 0
    %6131 = vmatpush2.bf16.msra.mxu0 %v5947
    %6132 = vmatprep.subr.bf16.mxu0 0
    %6133 = vmatpush2.bf16.msra.mxu0 %v5946
    %6134 = vmatprep.subr.bf16.mxu0 0
    %6135 = vmatpush2.bf16.msra.mxu0 %v5945
    %6136 = vmatprep.subr.bf16.mxu0 0
    %6137 = vmatpush2.bf16.msra.mxu0 %v5944
    %6138 = vmatprep.subr.bf16.mxu0 0
    %6139 = vmatpush2.bf16.msra.mxu0 %v5943
    %6140 = vmatprep.subr.bf16.mxu0 0
    %6141 = vmatpush2.bf16.msra.mxu0 %v5942
    %6142 = vmatprep.mubr.bf16.mxu0 %v5635
    %6143 = vmatmul.mubr.bf16.gmra.mxu0 %v5634
    %v6144 = vpop.f32.mrf.mxu0
    %v6145 = vadd.f32 %v6105, %v6144
    %v6146 = vpop.f32.mrf.mxu0
    %v6147 = vpop.f32.mrf.mxu0
    %v6148 = vpop.f32.mrf.mxu0
    %6149 = vdwg.mxu0
    %6150 = vmatprep.subr.bf16.mxu0 0
    %6151 = vmatpush1.bf16.msra.mxu0 %v5957
    %6152 = vmatprep.subr.bf16.mxu0 0
    %6153 = vmatpush1.bf16.msra.mxu0 %v5956
    %6154 = vmatprep.subr.bf16.mxu0 0
    %6155 = vmatpush1.bf16.msra.mxu0 %v5955
    %6156 = vmatprep.subr.bf16.mxu0 0
    %6157 = vmatpush1.bf16.msra.mxu0 %v5954
    %6158 = vmatprep.subr.bf16.mxu0 0
    %6159 = vmatpush1.bf16.msra.mxu0 %v5953
    %6160 = vmatprep.subr.bf16.mxu0 0
    %6161 = vmatpush1.bf16.msra.mxu0 %v5952
    %6162 = vmatprep.subr.bf16.mxu0 0
    %6163 = vmatpush1.bf16.msra.mxu0 %v5951
    %6164 = vmatprep.subr.bf16.mxu0 0
    %6165 = vmatpush1.bf16.msra.mxu0 %v5950
    %6166 = vmatprep.subr.bf16.mxu0 0
    %6167 = vmatpush2.bf16.msra.mxu0 %v5965
    %6168 = vmatprep.subr.bf16.mxu0 0
    %6169 = vmatpush2.bf16.msra.mxu0 %v5964
    %6170 = vmatprep.subr.bf16.mxu0 0
    %6171 = vmatpush2.bf16.msra.mxu0 %v5963
    %6172 = vmatprep.subr.bf16.mxu0 0
    %6173 = vmatpush2.bf16.msra.mxu0 %v5962
    %6174 = vmatprep.subr.bf16.mxu0 0
    %6175 = vmatpush2.bf16.msra.mxu0 %v5961
    %6176 = vmatprep.subr.bf16.mxu0 0
    %6177 = vmatpush2.bf16.msra.mxu0 %v5960
    %6178 = vmatprep.subr.bf16.mxu0 0
    %6179 = vmatpush2.bf16.msra.mxu0 %v5959
    %6180 = vmatprep.subr.bf16.mxu0 0
    %6181 = vmatpush2.bf16.msra.mxu0 %v5958
    %6182 = vmatprep.mubr.bf16.mxu0 %v5637
    %6183 = vmatmul.mubr.bf16.gmra.mxu0 %v5636
    %v6184 = vpop.f32.mrf.mxu0
    %v6185 = vadd.f32 %v6145, %v6184
    %v6186 = vpop.f32.mrf.mxu0
    %v6187 = vpop.f32.mrf.mxu0
    %v6188 = vpop.f32.mrf.mxu0
    %6189 = vdwg.mxu0
    %v6190 = vadd.f32 %v5500, %v6185
    %s6191 = scalar_lea.vmem %s2, 4096
    %v6192 = vld [vmem:[%s6191] sm:$0xf]
    %v6193 = vld [vmem:[%s6191 + $0x4] sm:$0xf]
    %v6194 = vld [vmem:[%s6191 + $0x8] sm:$0xf]
    %v6195 = vld [vmem:[%s6191 + $0xc] sm:$0xf]
    %v6196 = vld [vmem:[%s6191 + $0x10] sm:$0xf]
    %v6197 = vld [vmem:[%s6191 + $0x14] sm:$0xf]
    %v6198 = vld [vmem:[%s6191 + $0x18] sm:$0xf]
    %v6199 = vld [vmem:[%s6191 + $0x1c] sm:$0xf]
    %v6200 = vld [vmem:[%s6191 + $0x20] sm:$0xf]
    %v6201 = vld [vmem:[%s6191 + $0x24] sm:$0xf]
    %v6202 = vld [vmem:[%s6191 + $0x28] sm:$0xf]
    %v6203 = vld [vmem:[%s6191 + $0x2c] sm:$0xf]
    %v6204 = vld [vmem:[%s6191 + $0x30] sm:$0xf]
    %v6205 = vld [vmem:[%s6191 + $0x34] sm:$0xf]
    %v6206 = vld [vmem:[%s6191 + $0x38] sm:$0xf]
    %v6207 = vld [vmem:[%s6191 + $0x3c] sm:$0xf]
    %v6208 = vld [vmem:[%s6191 + $0x40] sm:$0xf]
    %v6209 = vld [vmem:[%s6191 + $0x44] sm:$0xf]
    %v6210 = vld [vmem:[%s6191 + $0x48] sm:$0xf]
    %v6211 = vld [vmem:[%s6191 + $0x4c] sm:$0xf]
    %v6212 = vld [vmem:[%s6191 + $0x50] sm:$0xf]
    %v6213 = vld [vmem:[%s6191 + $0x54] sm:$0xf]
    %v6214 = vld [vmem:[%s6191 + $0x58] sm:$0xf]
    %v6215 = vld [vmem:[%s6191 + $0x5c] sm:$0xf]
    %v6216 = vld [vmem:[%s6191 + $0x60] sm:$0xf]
    %v6217 = vld [vmem:[%s6191 + $0x64] sm:$0xf]
    %v6218 = vld [vmem:[%s6191 + $0x68] sm:$0xf]
    %v6219 = vld [vmem:[%s6191 + $0x6c] sm:$0xf]
    %v6220 = vld [vmem:[%s6191 + $0x70] sm:$0xf]
    %v6221 = vld [vmem:[%s6191 + $0x74] sm:$0xf]
    %v6222 = vld [vmem:[%s6191 + $0x78] sm:$0xf]
    %v6223 = vld [vmem:[%s6191 + $0x7c] sm:$0xf]
    %v6224 = vld [vmem:[%s6191 + $0x80] sm:$0xf]
    %v6225 = vld [vmem:[%s6191 + $0x84] sm:$0xf]
    %v6226 = vld [vmem:[%s6191 + $0x88] sm:$0xf]
    %v6227 = vld [vmem:[%s6191 + $0x8c] sm:$0xf]
    %v6228 = vld [vmem:[%s6191 + $0x90] sm:$0xf]
    %v6229 = vld [vmem:[%s6191 + $0x94] sm:$0xf]
    %v6230 = vld [vmem:[%s6191 + $0x98] sm:$0xf]
    %v6231 = vld [vmem:[%s6191 + $0x9c] sm:$0xf]
    %v6232 = vld [vmem:[%s6191 + $0xa0] sm:$0xf]
    %v6233 = vld [vmem:[%s6191 + $0xa4] sm:$0xf]
    %v6234 = vld [vmem:[%s6191 + $0xa8] sm:$0xf]
    %v6235 = vld [vmem:[%s6191 + $0xac] sm:$0xf]
    %v6236 = vld [vmem:[%s6191 + $0xb0] sm:$0xf]
    %v6237 = vld [vmem:[%s6191 + $0xb4] sm:$0xf]
    %v6238 = vld [vmem:[%s6191 + $0xb8] sm:$0xf]
    %v6239 = vld [vmem:[%s6191 + $0xbc] sm:$0xf]
    %v6240 = vld [vmem:[%s6191 + $0xc0] sm:$0xf]
    %v6241 = vld [vmem:[%s6191 + $0xc4] sm:$0xf]
    %v6242 = vld [vmem:[%s6191 + $0xc8] sm:$0xf]
    %v6243 = vld [vmem:[%s6191 + $0xcc] sm:$0xf]
    %v6244 = vld [vmem:[%s6191 + $0xd0] sm:$0xf]
    %v6245 = vld [vmem:[%s6191 + $0xd4] sm:$0xf]
    %v6246 = vld [vmem:[%s6191 + $0xd8] sm:$0xf]
    %v6247 = vld [vmem:[%s6191 + $0xdc] sm:$0xf]
    %v6248 = vld [vmem:[%s6191 + $0xe0] sm:$0xf]
    %v6249 = vld [vmem:[%s6191 + $0xe4] sm:$0xf]
    %v6250 = vld [vmem:[%s6191 + $0xe8] sm:$0xf]
    %v6251 = vld [vmem:[%s6191 + $0xec] sm:$0xf]
    %v6252 = vld [vmem:[%s6191 + $0xf0] sm:$0xf]
    %v6253 = vld [vmem:[%s6191 + $0xf4] sm:$0xf]
    %v6254 = vld [vmem:[%s6191 + $0xf8] sm:$0xf]
    %v6255 = vld [vmem:[%s6191 + $0xfc] sm:$0xf]
    %v6256 = vld [vmem:[%s6191 + $0x100] sm:$0xf]
    %v6257 = vld [vmem:[%s6191 + $0x104] sm:$0xf]
    %v6258 = vld [vmem:[%s6191 + $0x108] sm:$0xf]
    %v6259 = vld [vmem:[%s6191 + $0x10c] sm:$0xf]
    %v6260 = vld [vmem:[%s6191 + $0x110] sm:$0xf]
    %v6261 = vld [vmem:[%s6191 + $0x114] sm:$0xf]
    %v6262 = vld [vmem:[%s6191 + $0x118] sm:$0xf]
    %v6263 = vld [vmem:[%s6191 + $0x11c] sm:$0xf]
    %v6264 = vld [vmem:[%s6191 + $0x120] sm:$0xf]
    %v6265 = vld [vmem:[%s6191 + $0x124] sm:$0xf]
    %v6266 = vld [vmem:[%s6191 + $0x128] sm:$0xf]
    %v6267 = vld [vmem:[%s6191 + $0x12c] sm:$0xf]
    %v6268 = vld [vmem:[%s6191 + $0x130] sm:$0xf]
    %v6269 = vld [vmem:[%s6191 + $0x134] sm:$0xf]
    %v6270 = vld [vmem:[%s6191 + $0x138] sm:$0xf]
    %v6271 = vld [vmem:[%s6191 + $0x13c] sm:$0xf]
    %v6272 = vld [vmem:[%s6191 + $0x140] sm:$0xf]
    %v6273 = vld [vmem:[%s6191 + $0x144] sm:$0xf]
    %v6274 = vld [vmem:[%s6191 + $0x148] sm:$0xf]
    %v6275 = vld [vmem:[%s6191 + $0x14c] sm:$0xf]
    %v6276 = vld [vmem:[%s6191 + $0x150] sm:$0xf]
    %v6277 = vld [vmem:[%s6191 + $0x154] sm:$0xf]
    %v6278 = vld [vmem:[%s6191 + $0x158] sm:$0xf]
    %v6279 = vld [vmem:[%s6191 + $0x15c] sm:$0xf]
    %v6280 = vld [vmem:[%s6191 + $0x160] sm:$0xf]
    %v6281 = vld [vmem:[%s6191 + $0x164] sm:$0xf]
    %v6282 = vld [vmem:[%s6191 + $0x168] sm:$0xf]
    %v6283 = vld [vmem:[%s6191 + $0x16c] sm:$0xf]
    %v6284 = vld [vmem:[%s6191 + $0x170] sm:$0xf]
    %v6285 = vld [vmem:[%s6191 + $0x174] sm:$0xf]
    %v6286 = vld [vmem:[%s6191 + $0x178] sm:$0xf]
    %v6287 = vld [vmem:[%s6191 + $0x17c] sm:$0xf]
    %v6288 = vld [vmem:[%s6191 + $0x180] sm:$0xf]
    %v6289 = vld [vmem:[%s6191 + $0x184] sm:$0xf]
    %v6290 = vld [vmem:[%s6191 + $0x188] sm:$0xf]
    %v6291 = vld [vmem:[%s6191 + $0x18c] sm:$0xf]
    %v6292 = vld [vmem:[%s6191 + $0x190] sm:$0xf]
    %v6293 = vld [vmem:[%s6191 + $0x194] sm:$0xf]
    %v6294 = vld [vmem:[%s6191 + $0x198] sm:$0xf]
    %v6295 = vld [vmem:[%s6191 + $0x19c] sm:$0xf]
    %v6296 = vld [vmem:[%s6191 + $0x1a0] sm:$0xf]
    %v6297 = vld [vmem:[%s6191 + $0x1a4] sm:$0xf]
    %v6298 = vld [vmem:[%s6191 + $0x1a8] sm:$0xf]
    %v6299 = vld [vmem:[%s6191 + $0x1ac] sm:$0xf]
    %v6300 = vld [vmem:[%s6191 + $0x1b0] sm:$0xf]
    %v6301 = vld [vmem:[%s6191 + $0x1b4] sm:$0xf]
    %v6302 = vld [vmem:[%s6191 + $0x1b8] sm:$0xf]
    %v6303 = vld [vmem:[%s6191 + $0x1bc] sm:$0xf]
    %v6304 = vld [vmem:[%s6191 + $0x1c0] sm:$0xf]
    %v6305 = vld [vmem:[%s6191 + $0x1c4] sm:$0xf]
    %v6306 = vld [vmem:[%s6191 + $0x1c8] sm:$0xf]
    %v6307 = vld [vmem:[%s6191 + $0x1cc] sm:$0xf]
    %v6308 = vld [vmem:[%s6191 + $0x1d0] sm:$0xf]
    %v6309 = vld [vmem:[%s6191 + $0x1d4] sm:$0xf]
    %v6310 = vld [vmem:[%s6191 + $0x1d8] sm:$0xf]
    %v6311 = vld [vmem:[%s6191 + $0x1dc] sm:$0xf]
    %v6312 = vld [vmem:[%s6191 + $0x1e0] sm:$0xf]
    %v6313 = vld [vmem:[%s6191 + $0x1e4] sm:$0xf]
    %v6314 = vld [vmem:[%s6191 + $0x1e8] sm:$0xf]
    %v6315 = vld [vmem:[%s6191 + $0x1ec] sm:$0xf]
    %v6316 = vld [vmem:[%s6191 + $0x1f0] sm:$0xf]
    %v6317 = vld [vmem:[%s6191 + $0x1f4] sm:$0xf]
    %v6318 = vld [vmem:[%s6191 + $0x1f8] sm:$0xf]
    %v6319 = vld [vmem:[%s6191 + $0x1fc] sm:$0xf]
    %v6320 = vrot.slane %v655, 4
    %v6321 = vrot.slane %v656, 4
    %v6322 = vrot.slane %v657, 4
    %v6323 = vrot.slane %v658, 4
    %v6324 = vrot.slane %v659, 4
    %v6325 = vrot.slane %v660, 4
    %v6326 = vrot.slane %v661, 4
    %v6327 = vrot.slane %v662, 4
    %v6464 = vunpack.c.l.b16 %v6192
    %v6465 = vunpack.c.l.b16 %v6193
    %v6466 = vunpack.c.l.b16 %v6194
    %v6467 = vunpack.c.l.b16 %v6195
    %v6468 = vunpack.c.l.b16 %v6196
    %v6469 = vunpack.c.l.b16 %v6197
    %v6470 = vunpack.c.l.b16 %v6198
    %v6471 = vunpack.c.l.b16 %v6199
    %v6472 = vunpack.c.l.b16 %v6200
    %v6473 = vunpack.c.l.b16 %v6201
    %v6474 = vunpack.c.l.b16 %v6202
    %v6475 = vunpack.c.l.b16 %v6203
    %v6476 = vunpack.c.l.b16 %v6204
    %v6477 = vunpack.c.l.b16 %v6205
    %v6478 = vunpack.c.l.b16 %v6206
    %v6479 = vunpack.c.l.b16 %v6207
    %v6480 = vunpack.c.l.b16 %v6208
    %v6481 = vunpack.c.l.b16 %v6209
    %v6482 = vunpack.c.l.b16 %v6210
    %v6483 = vunpack.c.l.b16 %v6211
    %v6484 = vunpack.c.l.b16 %v6212
    %v6485 = vunpack.c.l.b16 %v6213
    %v6486 = vunpack.c.l.b16 %v6214
    %v6487 = vunpack.c.l.b16 %v6215
    %v6488 = vunpack.c.l.b16 %v6216
    %v6489 = vunpack.c.l.b16 %v6217
    %v6490 = vunpack.c.l.b16 %v6218
    %v6491 = vunpack.c.l.b16 %v6219
    %v6492 = vunpack.c.l.b16 %v6220
    %v6493 = vunpack.c.l.b16 %v6221
    %v6494 = vunpack.c.l.b16 %v6222
    %v6495 = vunpack.c.l.b16 %v6223
    %v6496 = vunpack.c.l.b16 %v6224
    %v6497 = vunpack.c.l.b16 %v6225
    %v6498 = vunpack.c.l.b16 %v6226
    %v6499 = vunpack.c.l.b16 %v6227
    %v6500 = vunpack.c.l.b16 %v6228
    %v6501 = vunpack.c.l.b16 %v6229
    %v6502 = vunpack.c.l.b16 %v6230
    %v6503 = vunpack.c.l.b16 %v6231
    %v6504 = vunpack.c.l.b16 %v6232
    %v6505 = vunpack.c.l.b16 %v6233
    %v6506 = vunpack.c.l.b16 %v6234
    %v6507 = vunpack.c.l.b16 %v6235
    %v6508 = vunpack.c.l.b16 %v6236
    %v6509 = vunpack.c.l.b16 %v6237
    %v6510 = vunpack.c.l.b16 %v6238
    %v6511 = vunpack.c.l.b16 %v6239
    %v6512 = vunpack.c.l.b16 %v6240
    %v6513 = vunpack.c.l.b16 %v6241
    %v6514 = vunpack.c.l.b16 %v6242
    %v6515 = vunpack.c.l.b16 %v6243
    %v6516 = vunpack.c.l.b16 %v6244
    %v6517 = vunpack.c.l.b16 %v6245
    %v6518 = vunpack.c.l.b16 %v6246
    %v6519 = vunpack.c.l.b16 %v6247
    %v6520 = vunpack.c.l.b16 %v6248
    %v6521 = vunpack.c.l.b16 %v6249
    %v6522 = vunpack.c.l.b16 %v6250
    %v6523 = vunpack.c.l.b16 %v6251
    %v6524 = vunpack.c.l.b16 %v6252
    %v6525 = vunpack.c.l.b16 %v6253
    %v6526 = vunpack.c.l.b16 %v6254
    %v6527 = vunpack.c.l.b16 %v6255
    %v6528 = vunpack.c.l.b16 %v6256
    %v6529 = vunpack.c.l.b16 %v6257
    %v6530 = vunpack.c.l.b16 %v6258
    %v6531 = vunpack.c.l.b16 %v6259
    %v6532 = vunpack.c.l.b16 %v6260
    %v6533 = vunpack.c.l.b16 %v6261
    %v6534 = vunpack.c.l.b16 %v6262
    %v6535 = vunpack.c.l.b16 %v6263
    %v6536 = vunpack.c.l.b16 %v6264
    %v6537 = vunpack.c.l.b16 %v6265
    %v6538 = vunpack.c.l.b16 %v6266
    %v6539 = vunpack.c.l.b16 %v6267
    %v6540 = vunpack.c.l.b16 %v6268
    %v6541 = vunpack.c.l.b16 %v6269
    %v6542 = vunpack.c.l.b16 %v6270
    %v6543 = vunpack.c.l.b16 %v6271
    %v6544 = vunpack.c.l.b16 %v6272
    %v6545 = vunpack.c.l.b16 %v6273
    %v6546 = vunpack.c.l.b16 %v6274
    %v6547 = vunpack.c.l.b16 %v6275
    %v6548 = vunpack.c.l.b16 %v6276
    %v6549 = vunpack.c.l.b16 %v6277
    %v6550 = vunpack.c.l.b16 %v6278
    %v6551 = vunpack.c.l.b16 %v6279
    %v6552 = vunpack.c.l.b16 %v6280
    %v6553 = vunpack.c.l.b16 %v6281
    %v6554 = vunpack.c.l.b16 %v6282
    %v6555 = vunpack.c.l.b16 %v6283
    %v6556 = vunpack.c.l.b16 %v6284
    %v6557 = vunpack.c.l.b16 %v6285
    %v6558 = vunpack.c.l.b16 %v6286
    %v6559 = vunpack.c.l.b16 %v6287
    %v6560 = vunpack.c.l.b16 %v6288
    %v6561 = vunpack.c.l.b16 %v6289
    %v6562 = vunpack.c.l.b16 %v6290
    %v6563 = vunpack.c.l.b16 %v6291
    %v6564 = vunpack.c.l.b16 %v6292
    %v6565 = vunpack.c.l.b16 %v6293
    %v6566 = vunpack.c.l.b16 %v6294
    %v6567 = vunpack.c.l.b16 %v6295
    %v6568 = vunpack.c.l.b16 %v6296
    %v6569 = vunpack.c.l.b16 %v6297
    %v6570 = vunpack.c.l.b16 %v6298
    %v6571 = vunpack.c.l.b16 %v6299
    %v6572 = vunpack.c.l.b16 %v6300
    %v6573 = vunpack.c.l.b16 %v6301
    %v6574 = vunpack.c.l.b16 %v6302
    %v6575 = vunpack.c.l.b16 %v6303
    %v6576 = vunpack.c.l.b16 %v6304
    %v6577 = vunpack.c.l.b16 %v6305
    %v6578 = vunpack.c.l.b16 %v6306
    %v6579 = vunpack.c.l.b16 %v6307
    %v6580 = vunpack.c.l.b16 %v6308
    %v6581 = vunpack.c.l.b16 %v6309
    %v6582 = vunpack.c.l.b16 %v6310
    %v6583 = vunpack.c.l.b16 %v6311
    %v6584 = vunpack.c.l.b16 %v6312
    %v6585 = vunpack.c.l.b16 %v6313
    %v6586 = vunpack.c.l.b16 %v6314
    %v6587 = vunpack.c.l.b16 %v6315
    %v6588 = vunpack.c.l.b16 %v6316
    %v6589 = vunpack.c.l.b16 %v6317
    %v6590 = vunpack.c.l.b16 %v6318
    %v6591 = vunpack.c.l.b16 %v6319
    %v6592 = vpack.c.b16 %v6465, %v6464
    %v6593 = vpack.c.b16 %v6467, %v6466
    %v6594 = vpack.c.b16 %v6469, %v6468
    %v6595 = vpack.c.b16 %v6471, %v6470
    %v6596 = vpack.c.b16 %v6473, %v6472
    %v6597 = vpack.c.b16 %v6475, %v6474
    %v6598 = vpack.c.b16 %v6477, %v6476
    %v6599 = vpack.c.b16 %v6479, %v6478
    %v6600 = vpack.c.b16 %v6481, %v6480
    %v6601 = vpack.c.b16 %v6483, %v6482
    %v6602 = vpack.c.b16 %v6485, %v6484
    %v6603 = vpack.c.b16 %v6487, %v6486
    %v6604 = vpack.c.b16 %v6489, %v6488
    %v6605 = vpack.c.b16 %v6491, %v6490
    %v6606 = vpack.c.b16 %v6493, %v6492
    %v6607 = vpack.c.b16 %v6495, %v6494
    %v6608 = vpack.c.b16 %v6497, %v6496
    %v6609 = vpack.c.b16 %v6499, %v6498
    %v6610 = vpack.c.b16 %v6501, %v6500
    %v6611 = vpack.c.b16 %v6503, %v6502
    %v6612 = vpack.c.b16 %v6505, %v6504
    %v6613 = vpack.c.b16 %v6507, %v6506
    %v6614 = vpack.c.b16 %v6509, %v6508
    %v6615 = vpack.c.b16 %v6511, %v6510
    %v6616 = vpack.c.b16 %v6513, %v6512
    %v6617 = vpack.c.b16 %v6515, %v6514
    %v6618 = vpack.c.b16 %v6517, %v6516
    %v6619 = vpack.c.b16 %v6519, %v6518
    %v6620 = vpack.c.b16 %v6521, %v6520
    %v6621 = vpack.c.b16 %v6523, %v6522
    %v6622 = vpack.c.b16 %v6525, %v6524
    %v6623 = vpack.c.b16 %v6527, %v6526
    %v6624 = vpack.c.b16 %v6529, %v6528
    %v6625 = vpack.c.b16 %v6531, %v6530
    %v6626 = vpack.c.b16 %v6533, %v6532
    %v6627 = vpack.c.b16 %v6535, %v6534
    %v6628 = vpack.c.b16 %v6537, %v6536
    %v6629 = vpack.c.b16 %v6539, %v6538
    %v6630 = vpack.c.b16 %v6541, %v6540
    %v6631 = vpack.c.b16 %v6543, %v6542
    %v6632 = vpack.c.b16 %v6545, %v6544
    %v6633 = vpack.c.b16 %v6547, %v6546
    %v6634 = vpack.c.b16 %v6549, %v6548
    %v6635 = vpack.c.b16 %v6551, %v6550
    %v6636 = vpack.c.b16 %v6553, %v6552
    %v6637 = vpack.c.b16 %v6555, %v6554
    %v6638 = vpack.c.b16 %v6557, %v6556
    %v6639 = vpack.c.b16 %v6559, %v6558
    %v6640 = vpack.c.b16 %v6561, %v6560
    %v6641 = vpack.c.b16 %v6563, %v6562
    %v6642 = vpack.c.b16 %v6565, %v6564
    %v6643 = vpack.c.b16 %v6567, %v6566
    %v6644 = vpack.c.b16 %v6569, %v6568
    %v6645 = vpack.c.b16 %v6571, %v6570
    %v6646 = vpack.c.b16 %v6573, %v6572
    %v6647 = vpack.c.b16 %v6575, %v6574
    %v6648 = vpack.c.b16 %v6577, %v6576
    %v6649 = vpack.c.b16 %v6579, %v6578
    %v6650 = vpack.c.b16 %v6581, %v6580
    %v6651 = vpack.c.b16 %v6583, %v6582
    %v6652 = vpack.c.b16 %v6585, %v6584
    %v6653 = vpack.c.b16 %v6587, %v6586
    %v6654 = vpack.c.b16 %v6589, %v6588
    %v6655 = vpack.c.b16 %v6591, %v6590
    %6720 = vmatprep.subr.bf16.mxu0 0
    %6721 = vmatpush1.bf16.msra.mxu0 %v6599
    %6722 = vmatprep.subr.bf16.mxu0 0
    %6723 = vmatpush1.bf16.msra.mxu0 %v6598
    %6724 = vmatprep.subr.bf16.mxu0 0
    %6725 = vmatpush1.bf16.msra.mxu0 %v6597
    %6726 = vmatprep.subr.bf16.mxu0 0
    %6727 = vmatpush1.bf16.msra.mxu0 %v6596
    %6728 = vmatprep.subr.bf16.mxu0 0
    %6729 = vmatpush1.bf16.msra.mxu0 %v6595
    %6730 = vmatprep.subr.bf16.mxu0 0
    %6731 = vmatpush1.bf16.msra.mxu0 %v6594
    %6732 = vmatprep.subr.bf16.mxu0 0
    %6733 = vmatpush1.bf16.msra.mxu0 %v6593
    %6734 = vmatprep.subr.bf16.mxu0 0
    %6735 = vmatpush1.bf16.msra.mxu0 %v6592
    %6736 = vmatprep.subr.bf16.mxu0 0
    %6737 = vmatpush2.bf16.msra.mxu0 %v6607
    %6738 = vmatprep.subr.bf16.mxu0 0
    %6739 = vmatpush2.bf16.msra.mxu0 %v6606
    %6740 = vmatprep.subr.bf16.mxu0 0
    %6741 = vmatpush2.bf16.msra.mxu0 %v6605
    %6742 = vmatprep.subr.bf16.mxu0 0
    %6743 = vmatpush2.bf16.msra.mxu0 %v6604
    %6744 = vmatprep.subr.bf16.mxu0 0
    %6745 = vmatpush2.bf16.msra.mxu0 %v6603
    %6746 = vmatprep.subr.bf16.mxu0 0
    %6747 = vmatpush2.bf16.msra.mxu0 %v6602
    %6748 = vmatprep.subr.bf16.mxu0 0
    %6749 = vmatpush2.bf16.msra.mxu0 %v6601
    %6750 = vmatprep.subr.bf16.mxu0 0
    %6751 = vmatpush2.bf16.msra.mxu0 %v6600
    %6752 = vmatprep.mubr.bf16.mxu0 %v6321
    %6753 = vmatmul.mubr.bf16.gmra.mxu0 %v6320
    %v6754 = vpop.f32.mrf.mxu0
    %v6755 = vadd.f32 0.0, %v6754
    %v6756 = vpop.f32.mrf.mxu0
    %v6757 = vpop.f32.mrf.mxu0
    %v6758 = vpop.f32.mrf.mxu0
    %6759 = vdwg.mxu0
    %6760 = vmatprep.subr.bf16.mxu0 0
    %6761 = vmatpush1.bf16.msra.mxu0 %v6615
    %6762 = vmatprep.subr.bf16.mxu0 0
    %6763 = vmatpush1.bf16.msra.mxu0 %v6614
    %6764 = vmatprep.subr.bf16.mxu0 0
    %6765 = vmatpush1.bf16.msra.mxu0 %v6613
    %6766 = vmatprep.subr.bf16.mxu0 0
    %6767 = vmatpush1.bf16.msra.mxu0 %v6612
    %6768 = vmatprep.subr.bf16.mxu0 0
    %6769 = vmatpush1.bf16.msra.mxu0 %v6611
    %6770 = vmatprep.subr.bf16.mxu0 0
    %6771 = vmatpush1.bf16.msra.mxu0 %v6610
    %6772 = vmatprep.subr.bf16.mxu0 0
    %6773 = vmatpush1.bf16.msra.mxu0 %v6609
    %6774 = vmatprep.subr.bf16.mxu0 0
    %6775 = vmatpush1.bf16.msra.mxu0 %v6608
    %6776 = vmatprep.subr.bf16.mxu0 0
    %6777 = vmatpush2.bf16.msra.mxu0 %v6623
    %6778 = vmatprep.subr.bf16.mxu0 0
    %6779 = vmatpush2.bf16.msra.mxu0 %v6622
    %6780 = vmatprep.subr.bf16.mxu0 0
    %6781 = vmatpush2.bf16.msra.mxu0 %v6621
    %6782 = vmatprep.subr.bf16.mxu0 0
    %6783 = vmatpush2.bf16.msra.mxu0 %v6620
    %6784 = vmatprep.subr.bf16.mxu0 0
    %6785 = vmatpush2.bf16.msra.mxu0 %v6619
    %6786 = vmatprep.subr.bf16.mxu0 0
    %6787 = vmatpush2.bf16.msra.mxu0 %v6618
    %6788 = vmatprep.subr.bf16.mxu0 0
    %6789 = vmatpush2.bf16.msra.mxu0 %v6617
    %6790 = vmatprep.subr.bf16.mxu0 0
    %6791 = vmatpush2.bf16.msra.mxu0 %v6616
    %6792 = vmatprep.mubr.bf16.mxu0 %v6323
    %6793 = vmatmul.mubr.bf16.gmra.mxu0 %v6322
    %v6794 = vpop.f32.mrf.mxu0
    %v6795 = vadd.f32 %v6755, %v6794
    %v6796 = vpop.f32.mrf.mxu0
    %v6797 = vpop.f32.mrf.mxu0
    %v6798 = vpop.f32.mrf.mxu0
    %6799 = vdwg.mxu0
    %6800 = vmatprep.subr.bf16.mxu0 0
    %6801 = vmatpush1.bf16.msra.mxu0 %v6631
    %6802 = vmatprep.subr.bf16.mxu0 0
    %6803 = vmatpush1.bf16.msra.mxu0 %v6630
    %6804 = vmatprep.subr.bf16.mxu0 0
    %6805 = vmatpush1.bf16.msra.mxu0 %v6629
    %6806 = vmatprep.subr.bf16.mxu0 0
    %6807 = vmatpush1.bf16.msra.mxu0 %v6628
    %6808 = vmatprep.subr.bf16.mxu0 0
    %6809 = vmatpush1.bf16.msra.mxu0 %v6627
    %6810 = vmatprep.subr.bf16.mxu0 0
    %6811 = vmatpush1.bf16.msra.mxu0 %v6626
    %6812 = vmatprep.subr.bf16.mxu0 0
    %6813 = vmatpush1.bf16.msra.mxu0 %v6625
    %6814 = vmatprep.subr.bf16.mxu0 0
    %6815 = vmatpush1.bf16.msra.mxu0 %v6624
    %6816 = vmatprep.subr.bf16.mxu0 0
    %6817 = vmatpush2.bf16.msra.mxu0 %v6639
    %6818 = vmatprep.subr.bf16.mxu0 0
    %6819 = vmatpush2.bf16.msra.mxu0 %v6638
    %6820 = vmatprep.subr.bf16.mxu0 0
    %6821 = vmatpush2.bf16.msra.mxu0 %v6637
    %6822 = vmatprep.subr.bf16.mxu0 0
    %6823 = vmatpush2.bf16.msra.mxu0 %v6636
    %6824 = vmatprep.subr.bf16.mxu0 0
    %6825 = vmatpush2.bf16.msra.mxu0 %v6635
    %6826 = vmatprep.subr.bf16.mxu0 0
    %6827 = vmatpush2.bf16.msra.mxu0 %v6634
    %6828 = vmatprep.subr.bf16.mxu0 0
    %6829 = vmatpush2.bf16.msra.mxu0 %v6633
    %6830 = vmatprep.subr.bf16.mxu0 0
    %6831 = vmatpush2.bf16.msra.mxu0 %v6632
    %6832 = vmatprep.mubr.bf16.mxu0 %v6325
    %6833 = vmatmul.mubr.bf16.gmra.mxu0 %v6324
    %v6834 = vpop.f32.mrf.mxu0
    %v6835 = vadd.f32 %v6795, %v6834
    %v6836 = vpop.f32.mrf.mxu0
    %v6837 = vpop.f32.mrf.mxu0
    %v6838 = vpop.f32.mrf.mxu0
    %6839 = vdwg.mxu0
    %6840 = vmatprep.subr.bf16.mxu0 0
    %6841 = vmatpush1.bf16.msra.mxu0 %v6647
    %6842 = vmatprep.subr.bf16.mxu0 0
    %6843 = vmatpush1.bf16.msra.mxu0 %v6646
    %6844 = vmatprep.subr.bf16.mxu0 0
    %6845 = vmatpush1.bf16.msra.mxu0 %v6645
    %6846 = vmatprep.subr.bf16.mxu0 0
    %6847 = vmatpush1.bf16.msra.mxu0 %v6644
    %6848 = vmatprep.subr.bf16.mxu0 0
    %6849 = vmatpush1.bf16.msra.mxu0 %v6643
    %6850 = vmatprep.subr.bf16.mxu0 0
    %6851 = vmatpush1.bf16.msra.mxu0 %v6642
    %6852 = vmatprep.subr.bf16.mxu0 0
    %6853 = vmatpush1.bf16.msra.mxu0 %v6641
    %6854 = vmatprep.subr.bf16.mxu0 0
    %6855 = vmatpush1.bf16.msra.mxu0 %v6640
    %6856 = vmatprep.subr.bf16.mxu0 0
    %6857 = vmatpush2.bf16.msra.mxu0 %v6655
    %6858 = vmatprep.subr.bf16.mxu0 0
    %6859 = vmatpush2.bf16.msra.mxu0 %v6654
    %6860 = vmatprep.subr.bf16.mxu0 0
    %6861 = vmatpush2.bf16.msra.mxu0 %v6653
    %6862 = vmatprep.subr.bf16.mxu0 0
    %6863 = vmatpush2.bf16.msra.mxu0 %v6652
    %6864 = vmatprep.subr.bf16.mxu0 0
    %6865 = vmatpush2.bf16.msra.mxu0 %v6651
    %6866 = vmatprep.subr.bf16.mxu0 0
    %6867 = vmatpush2.bf16.msra.mxu0 %v6650
    %6868 = vmatprep.subr.bf16.mxu0 0
    %6869 = vmatpush2.bf16.msra.mxu0 %v6649
    %6870 = vmatprep.subr.bf16.mxu0 0
    %6871 = vmatpush2.bf16.msra.mxu0 %v6648
    %6872 = vmatprep.mubr.bf16.mxu0 %v6327
    %6873 = vmatmul.mubr.bf16.gmra.mxu0 %v6326
    %v6874 = vpop.f32.mrf.mxu0
    %v6875 = vadd.f32 %v6835, %v6874
    %v6876 = vpop.f32.mrf.mxu0
    %v6877 = vpop.f32.mrf.mxu0
    %v6878 = vpop.f32.mrf.mxu0
    %6879 = vdwg.mxu0
    %v6880 = vadd.f32 %v6190, %v6875
    %s6881 = scalar_lea.vmem %s2, 4608
    %v6882 = vld [vmem:[%s6881] sm:$0xf]
    %v6883 = vld [vmem:[%s6881 + $0x4] sm:$0xf]
    %v6884 = vld [vmem:[%s6881 + $0x8] sm:$0xf]
    %v6885 = vld [vmem:[%s6881 + $0xc] sm:$0xf]
    %v6886 = vld [vmem:[%s6881 + $0x10] sm:$0xf]
    %v6887 = vld [vmem:[%s6881 + $0x14] sm:$0xf]
    %v6888 = vld [vmem:[%s6881 + $0x18] sm:$0xf]
    %v6889 = vld [vmem:[%s6881 + $0x1c] sm:$0xf]
    %v6890 = vld [vmem:[%s6881 + $0x20] sm:$0xf]
    %v6891 = vld [vmem:[%s6881 + $0x24] sm:$0xf]
    %v6892 = vld [vmem:[%s6881 + $0x28] sm:$0xf]
    %v6893 = vld [vmem:[%s6881 + $0x2c] sm:$0xf]
    %v6894 = vld [vmem:[%s6881 + $0x30] sm:$0xf]
    %v6895 = vld [vmem:[%s6881 + $0x34] sm:$0xf]
    %v6896 = vld [vmem:[%s6881 + $0x38] sm:$0xf]
    %v6897 = vld [vmem:[%s6881 + $0x3c] sm:$0xf]
    %v6898 = vld [vmem:[%s6881 + $0x40] sm:$0xf]
    %v6899 = vld [vmem:[%s6881 + $0x44] sm:$0xf]
    %v6900 = vld [vmem:[%s6881 + $0x48] sm:$0xf]
    %v6901 = vld [vmem:[%s6881 + $0x4c] sm:$0xf]
    %v6902 = vld [vmem:[%s6881 + $0x50] sm:$0xf]
    %v6903 = vld [vmem:[%s6881 + $0x54] sm:$0xf]
    %v6904 = vld [vmem:[%s6881 + $0x58] sm:$0xf]
    %v6905 = vld [vmem:[%s6881 + $0x5c] sm:$0xf]
    %v6906 = vld [vmem:[%s6881 + $0x60] sm:$0xf]
    %v6907 = vld [vmem:[%s6881 + $0x64] sm:$0xf]
    %v6908 = vld [vmem:[%s6881 + $0x68] sm:$0xf]
    %v6909 = vld [vmem:[%s6881 + $0x6c] sm:$0xf]
    %v6910 = vld [vmem:[%s6881 + $0x70] sm:$0xf]
    %v6911 = vld [vmem:[%s6881 + $0x74] sm:$0xf]
    %v6912 = vld [vmem:[%s6881 + $0x78] sm:$0xf]
    %v6913 = vld [vmem:[%s6881 + $0x7c] sm:$0xf]
    %v6914 = vld [vmem:[%s6881 + $0x80] sm:$0xf]
    %v6915 = vld [vmem:[%s6881 + $0x84] sm:$0xf]
    %v6916 = vld [vmem:[%s6881 + $0x88] sm:$0xf]
    %v6917 = vld [vmem:[%s6881 + $0x8c] sm:$0xf]
    %v6918 = vld [vmem:[%s6881 + $0x90] sm:$0xf]
    %v6919 = vld [vmem:[%s6881 + $0x94] sm:$0xf]
    %v6920 = vld [vmem:[%s6881 + $0x98] sm:$0xf]
    %v6921 = vld [vmem:[%s6881 + $0x9c] sm:$0xf]
    %v6922 = vld [vmem:[%s6881 + $0xa0] sm:$0xf]
    %v6923 = vld [vmem:[%s6881 + $0xa4] sm:$0xf]
    %v6924 = vld [vmem:[%s6881 + $0xa8] sm:$0xf]
    %v6925 = vld [vmem:[%s6881 + $0xac] sm:$0xf]
    %v6926 = vld [vmem:[%s6881 + $0xb0] sm:$0xf]
    %v6927 = vld [vmem:[%s6881 + $0xb4] sm:$0xf]
    %v6928 = vld [vmem:[%s6881 + $0xb8] sm:$0xf]
    %v6929 = vld [vmem:[%s6881 + $0xbc] sm:$0xf]
    %v6930 = vld [vmem:[%s6881 + $0xc0] sm:$0xf]
    %v6931 = vld [vmem:[%s6881 + $0xc4] sm:$0xf]
    %v6932 = vld [vmem:[%s6881 + $0xc8] sm:$0xf]
    %v6933 = vld [vmem:[%s6881 + $0xcc] sm:$0xf]
    %v6934 = vld [vmem:[%s6881 + $0xd0] sm:$0xf]
    %v6935 = vld [vmem:[%s6881 + $0xd4] sm:$0xf]
    %v6936 = vld [vmem:[%s6881 + $0xd8] sm:$0xf]
    %v6937 = vld [vmem:[%s6881 + $0xdc] sm:$0xf]
    %v6938 = vld [vmem:[%s6881 + $0xe0] sm:$0xf]
    %v6939 = vld [vmem:[%s6881 + $0xe4] sm:$0xf]
    %v6940 = vld [vmem:[%s6881 + $0xe8] sm:$0xf]
    %v6941 = vld [vmem:[%s6881 + $0xec] sm:$0xf]
    %v6942 = vld [vmem:[%s6881 + $0xf0] sm:$0xf]
    %v6943 = vld [vmem:[%s6881 + $0xf4] sm:$0xf]
    %v6944 = vld [vmem:[%s6881 + $0xf8] sm:$0xf]
    %v6945 = vld [vmem:[%s6881 + $0xfc] sm:$0xf]
    %v6946 = vld [vmem:[%s6881 + $0x100] sm:$0xf]
    %v6947 = vld [vmem:[%s6881 + $0x104] sm:$0xf]
    %v6948 = vld [vmem:[%s6881 + $0x108] sm:$0xf]
    %v6949 = vld [vmem:[%s6881 + $0x10c] sm:$0xf]
    %v6950 = vld [vmem:[%s6881 + $0x110] sm:$0xf]
    %v6951 = vld [vmem:[%s6881 + $0x114] sm:$0xf]
    %v6952 = vld [vmem:[%s6881 + $0x118] sm:$0xf]
    %v6953 = vld [vmem:[%s6881 + $0x11c] sm:$0xf]
    %v6954 = vld [vmem:[%s6881 + $0x120] sm:$0xf]
    %v6955 = vld [vmem:[%s6881 + $0x124] sm:$0xf]
    %v6956 = vld [vmem:[%s6881 + $0x128] sm:$0xf]
    %v6957 = vld [vmem:[%s6881 + $0x12c] sm:$0xf]
    %v6958 = vld [vmem:[%s6881 + $0x130] sm:$0xf]
    %v6959 = vld [vmem:[%s6881 + $0x134] sm:$0xf]
    %v6960 = vld [vmem:[%s6881 + $0x138] sm:$0xf]
    %v6961 = vld [vmem:[%s6881 + $0x13c] sm:$0xf]
    %v6962 = vld [vmem:[%s6881 + $0x140] sm:$0xf]
    %v6963 = vld [vmem:[%s6881 + $0x144] sm:$0xf]
    %v6964 = vld [vmem:[%s6881 + $0x148] sm:$0xf]
    %v6965 = vld [vmem:[%s6881 + $0x14c] sm:$0xf]
    %v6966 = vld [vmem:[%s6881 + $0x150] sm:$0xf]
    %v6967 = vld [vmem:[%s6881 + $0x154] sm:$0xf]
    %v6968 = vld [vmem:[%s6881 + $0x158] sm:$0xf]
    %v6969 = vld [vmem:[%s6881 + $0x15c] sm:$0xf]
    %v6970 = vld [vmem:[%s6881 + $0x160] sm:$0xf]
    %v6971 = vld [vmem:[%s6881 + $0x164] sm:$0xf]
    %v6972 = vld [vmem:[%s6881 + $0x168] sm:$0xf]
    %v6973 = vld [vmem:[%s6881 + $0x16c] sm:$0xf]
    %v6974 = vld [vmem:[%s6881 + $0x170] sm:$0xf]
    %v6975 = vld [vmem:[%s6881 + $0x174] sm:$0xf]
    %v6976 = vld [vmem:[%s6881 + $0x178] sm:$0xf]
    %v6977 = vld [vmem:[%s6881 + $0x17c] sm:$0xf]
    %v6978 = vld [vmem:[%s6881 + $0x180] sm:$0xf]
    %v6979 = vld [vmem:[%s6881 + $0x184] sm:$0xf]
    %v6980 = vld [vmem:[%s6881 + $0x188] sm:$0xf]
    %v6981 = vld [vmem:[%s6881 + $0x18c] sm:$0xf]
    %v6982 = vld [vmem:[%s6881 + $0x190] sm:$0xf]
    %v6983 = vld [vmem:[%s6881 + $0x194] sm:$0xf]
    %v6984 = vld [vmem:[%s6881 + $0x198] sm:$0xf]
    %v6985 = vld [vmem:[%s6881 + $0x19c] sm:$0xf]
    %v6986 = vld [vmem:[%s6881 + $0x1a0] sm:$0xf]
    %v6987 = vld [vmem:[%s6881 + $0x1a4] sm:$0xf]
    %v6988 = vld [vmem:[%s6881 + $0x1a8] sm:$0xf]
    %v6989 = vld [vmem:[%s6881 + $0x1ac] sm:$0xf]
    %v6990 = vld [vmem:[%s6881 + $0x1b0] sm:$0xf]
    %v6991 = vld [vmem:[%s6881 + $0x1b4] sm:$0xf]
    %v6992 = vld [vmem:[%s6881 + $0x1b8] sm:$0xf]
    %v6993 = vld [vmem:[%s6881 + $0x1bc] sm:$0xf]
    %v6994 = vld [vmem:[%s6881 + $0x1c0] sm:$0xf]
    %v6995 = vld [vmem:[%s6881 + $0x1c4] sm:$0xf]
    %v6996 = vld [vmem:[%s6881 + $0x1c8] sm:$0xf]
    %v6997 = vld [vmem:[%s6881 + $0x1cc] sm:$0xf]
    %v6998 = vld [vmem:[%s6881 + $0x1d0] sm:$0xf]
    %v6999 = vld [vmem:[%s6881 + $0x1d4] sm:$0xf]
    %v7000 = vld [vmem:[%s6881 + $0x1d8] sm:$0xf]
    %v7001 = vld [vmem:[%s6881 + $0x1dc] sm:$0xf]
    %v7002 = vld [vmem:[%s6881 + $0x1e0] sm:$0xf]
    %v7003 = vld [vmem:[%s6881 + $0x1e4] sm:$0xf]
    %v7004 = vld [vmem:[%s6881 + $0x1e8] sm:$0xf]
    %v7005 = vld [vmem:[%s6881 + $0x1ec] sm:$0xf]
    %v7006 = vld [vmem:[%s6881 + $0x1f0] sm:$0xf]
    %v7007 = vld [vmem:[%s6881 + $0x1f4] sm:$0xf]
    %v7008 = vld [vmem:[%s6881 + $0x1f8] sm:$0xf]
    %v7009 = vld [vmem:[%s6881 + $0x1fc] sm:$0xf]
    %v7010 = vrot.slane %v1467, 4
    %v7011 = vrot.slane %v1470, 4
    %v7012 = vrot.slane %v1473, 4
    %v7013 = vrot.slane %v1476, 4
    %v7014 = vrot.slane %v1479, 4
    %v7015 = vrot.slane %v1482, 4
    %v7016 = vrot.slane %v1485, 4
    %v7017 = vrot.slane %v1488, 4
    %v7154 = vunpack.c.l.b16 %v6882
    %v7155 = vunpack.c.l.b16 %v6883
    %v7156 = vunpack.c.l.b16 %v6884
    %v7157 = vunpack.c.l.b16 %v6885
    %v7158 = vunpack.c.l.b16 %v6886
    %v7159 = vunpack.c.l.b16 %v6887
    %v7160 = vunpack.c.l.b16 %v6888
    %v7161 = vunpack.c.l.b16 %v6889
    %v7162 = vunpack.c.l.b16 %v6890
    %v7163 = vunpack.c.l.b16 %v6891
    %v7164 = vunpack.c.l.b16 %v6892
    %v7165 = vunpack.c.l.b16 %v6893
    %v7166 = vunpack.c.l.b16 %v6894
    %v7167 = vunpack.c.l.b16 %v6895
    %v7168 = vunpack.c.l.b16 %v6896
    %v7169 = vunpack.c.l.b16 %v6897
    %v7170 = vunpack.c.l.b16 %v6898
    %v7171 = vunpack.c.l.b16 %v6899
    %v7172 = vunpack.c.l.b16 %v6900
    %v7173 = vunpack.c.l.b16 %v6901
    %v7174 = vunpack.c.l.b16 %v6902
    %v7175 = vunpack.c.l.b16 %v6903
    %v7176 = vunpack.c.l.b16 %v6904
    %v7177 = vunpack.c.l.b16 %v6905
    %v7178 = vunpack.c.l.b16 %v6906
    %v7179 = vunpack.c.l.b16 %v6907
    %v7180 = vunpack.c.l.b16 %v6908
    %v7181 = vunpack.c.l.b16 %v6909
    %v7182 = vunpack.c.l.b16 %v6910
    %v7183 = vunpack.c.l.b16 %v6911
    %v7184 = vunpack.c.l.b16 %v6912
    %v7185 = vunpack.c.l.b16 %v6913
    %v7186 = vunpack.c.l.b16 %v6914
    %v7187 = vunpack.c.l.b16 %v6915
    %v7188 = vunpack.c.l.b16 %v6916
    %v7189 = vunpack.c.l.b16 %v6917
    %v7190 = vunpack.c.l.b16 %v6918
    %v7191 = vunpack.c.l.b16 %v6919
    %v7192 = vunpack.c.l.b16 %v6920
    %v7193 = vunpack.c.l.b16 %v6921
    %v7194 = vunpack.c.l.b16 %v6922
    %v7195 = vunpack.c.l.b16 %v6923
    %v7196 = vunpack.c.l.b16 %v6924
    %v7197 = vunpack.c.l.b16 %v6925
    %v7198 = vunpack.c.l.b16 %v6926
    %v7199 = vunpack.c.l.b16 %v6927
    %v7200 = vunpack.c.l.b16 %v6928
    %v7201 = vunpack.c.l.b16 %v6929
    %v7202 = vunpack.c.l.b16 %v6930
    %v7203 = vunpack.c.l.b16 %v6931
    %v7204 = vunpack.c.l.b16 %v6932
    %v7205 = vunpack.c.l.b16 %v6933
    %v7206 = vunpack.c.l.b16 %v6934
    %v7207 = vunpack.c.l.b16 %v6935
    %v7208 = vunpack.c.l.b16 %v6936
    %v7209 = vunpack.c.l.b16 %v6937
    %v7210 = vunpack.c.l.b16 %v6938
    %v7211 = vunpack.c.l.b16 %v6939
    %v7212 = vunpack.c.l.b16 %v6940
    %v7213 = vunpack.c.l.b16 %v6941
    %v7214 = vunpack.c.l.b16 %v6942
    %v7215 = vunpack.c.l.b16 %v6943
    %v7216 = vunpack.c.l.b16 %v6944
    %v7217 = vunpack.c.l.b16 %v6945
    %v7218 = vunpack.c.l.b16 %v6946
    %v7219 = vunpack.c.l.b16 %v6947
    %v7220 = vunpack.c.l.b16 %v6948
    %v7221 = vunpack.c.l.b16 %v6949
    %v7222 = vunpack.c.l.b16 %v6950
    %v7223 = vunpack.c.l.b16 %v6951
    %v7224 = vunpack.c.l.b16 %v6952
    %v7225 = vunpack.c.l.b16 %v6953
    %v7226 = vunpack.c.l.b16 %v6954
    %v7227 = vunpack.c.l.b16 %v6955
    %v7228 = vunpack.c.l.b16 %v6956
    %v7229 = vunpack.c.l.b16 %v6957
    %v7230 = vunpack.c.l.b16 %v6958
    %v7231 = vunpack.c.l.b16 %v6959
    %v7232 = vunpack.c.l.b16 %v6960
    %v7233 = vunpack.c.l.b16 %v6961
    %v7234 = vunpack.c.l.b16 %v6962
    %v7235 = vunpack.c.l.b16 %v6963
    %v7236 = vunpack.c.l.b16 %v6964
    %v7237 = vunpack.c.l.b16 %v6965
    %v7238 = vunpack.c.l.b16 %v6966
    %v7239 = vunpack.c.l.b16 %v6967
    %v7240 = vunpack.c.l.b16 %v6968
    %v7241 = vunpack.c.l.b16 %v6969
    %v7242 = vunpack.c.l.b16 %v6970
    %v7243 = vunpack.c.l.b16 %v6971
    %v7244 = vunpack.c.l.b16 %v6972
    %v7245 = vunpack.c.l.b16 %v6973
    %v7246 = vunpack.c.l.b16 %v6974
    %v7247 = vunpack.c.l.b16 %v6975
    %v7248 = vunpack.c.l.b16 %v6976
    %v7249 = vunpack.c.l.b16 %v6977
    %v7250 = vunpack.c.l.b16 %v6978
    %v7251 = vunpack.c.l.b16 %v6979
    %v7252 = vunpack.c.l.b16 %v6980
    %v7253 = vunpack.c.l.b16 %v6981
    %v7254 = vunpack.c.l.b16 %v6982
    %v7255 = vunpack.c.l.b16 %v6983
    %v7256 = vunpack.c.l.b16 %v6984
    %v7257 = vunpack.c.l.b16 %v6985
    %v7258 = vunpack.c.l.b16 %v6986
    %v7259 = vunpack.c.l.b16 %v6987
    %v7260 = vunpack.c.l.b16 %v6988
    %v7261 = vunpack.c.l.b16 %v6989
    %v7262 = vunpack.c.l.b16 %v6990
    %v7263 = vunpack.c.l.b16 %v6991
    %v7264 = vunpack.c.l.b16 %v6992
    %v7265 = vunpack.c.l.b16 %v6993
    %v7266 = vunpack.c.l.b16 %v6994
    %v7267 = vunpack.c.l.b16 %v6995
    %v7268 = vunpack.c.l.b16 %v6996
    %v7269 = vunpack.c.l.b16 %v6997
    %v7270 = vunpack.c.l.b16 %v6998
    %v7271 = vunpack.c.l.b16 %v6999
    %v7272 = vunpack.c.l.b16 %v7000
    %v7273 = vunpack.c.l.b16 %v7001
    %v7274 = vunpack.c.l.b16 %v7002
    %v7275 = vunpack.c.l.b16 %v7003
    %v7276 = vunpack.c.l.b16 %v7004
    %v7277 = vunpack.c.l.b16 %v7005
    %v7278 = vunpack.c.l.b16 %v7006
    %v7279 = vunpack.c.l.b16 %v7007
    %v7280 = vunpack.c.l.b16 %v7008
    %v7281 = vunpack.c.l.b16 %v7009
    %v7282 = vpack.c.b16 %v7155, %v7154
    %v7283 = vpack.c.b16 %v7157, %v7156
    %v7284 = vpack.c.b16 %v7159, %v7158
    %v7285 = vpack.c.b16 %v7161, %v7160
    %v7286 = vpack.c.b16 %v7163, %v7162
    %v7287 = vpack.c.b16 %v7165, %v7164
    %v7288 = vpack.c.b16 %v7167, %v7166
    %v7289 = vpack.c.b16 %v7169, %v7168
    %v7290 = vpack.c.b16 %v7171, %v7170
    %v7291 = vpack.c.b16 %v7173, %v7172
    %v7292 = vpack.c.b16 %v7175, %v7174
    %v7293 = vpack.c.b16 %v7177, %v7176
    %v7294 = vpack.c.b16 %v7179, %v7178
    %v7295 = vpack.c.b16 %v7181, %v7180
    %v7296 = vpack.c.b16 %v7183, %v7182
    %v7297 = vpack.c.b16 %v7185, %v7184
    %v7298 = vpack.c.b16 %v7187, %v7186
    %v7299 = vpack.c.b16 %v7189, %v7188
    %v7300 = vpack.c.b16 %v7191, %v7190
    %v7301 = vpack.c.b16 %v7193, %v7192
    %v7302 = vpack.c.b16 %v7195, %v7194
    %v7303 = vpack.c.b16 %v7197, %v7196
    %v7304 = vpack.c.b16 %v7199, %v7198
    %v7305 = vpack.c.b16 %v7201, %v7200
    %v7306 = vpack.c.b16 %v7203, %v7202
    %v7307 = vpack.c.b16 %v7205, %v7204
    %v7308 = vpack.c.b16 %v7207, %v7206
    %v7309 = vpack.c.b16 %v7209, %v7208
    %v7310 = vpack.c.b16 %v7211, %v7210
    %v7311 = vpack.c.b16 %v7213, %v7212
    %v7312 = vpack.c.b16 %v7215, %v7214
    %v7313 = vpack.c.b16 %v7217, %v7216
    %v7314 = vpack.c.b16 %v7219, %v7218
    %v7315 = vpack.c.b16 %v7221, %v7220
    %v7316 = vpack.c.b16 %v7223, %v7222
    %v7317 = vpack.c.b16 %v7225, %v7224
    %v7318 = vpack.c.b16 %v7227, %v7226
    %v7319 = vpack.c.b16 %v7229, %v7228
    %v7320 = vpack.c.b16 %v7231, %v7230
    %v7321 = vpack.c.b16 %v7233, %v7232
    %v7322 = vpack.c.b16 %v7235, %v7234
    %v7323 = vpack.c.b16 %v7237, %v7236
    %v7324 = vpack.c.b16 %v7239, %v7238
    %v7325 = vpack.c.b16 %v7241, %v7240
    %v7326 = vpack.c.b16 %v7243, %v7242
    %v7327 = vpack.c.b16 %v7245, %v7244
    %v7328 = vpack.c.b16 %v7247, %v7246
    %v7329 = vpack.c.b16 %v7249, %v7248
    %v7330 = vpack.c.b16 %v7251, %v7250
    %v7331 = vpack.c.b16 %v7253, %v7252
    %v7332 = vpack.c.b16 %v7255, %v7254
    %v7333 = vpack.c.b16 %v7257, %v7256
    %v7334 = vpack.c.b16 %v7259, %v7258
    %v7335 = vpack.c.b16 %v7261, %v7260
    %v7336 = vpack.c.b16 %v7263, %v7262
    %v7337 = vpack.c.b16 %v7265, %v7264
    %v7338 = vpack.c.b16 %v7267, %v7266
    %v7339 = vpack.c.b16 %v7269, %v7268
    %v7340 = vpack.c.b16 %v7271, %v7270
    %v7341 = vpack.c.b16 %v7273, %v7272
    %v7342 = vpack.c.b16 %v7275, %v7274
    %v7343 = vpack.c.b16 %v7277, %v7276
    %v7344 = vpack.c.b16 %v7279, %v7278
    %v7345 = vpack.c.b16 %v7281, %v7280
    %7410 = vmatprep.subr.bf16.mxu0 0
    %7411 = vmatpush1.bf16.msra.mxu0 %v7289
    %7412 = vmatprep.subr.bf16.mxu0 0
    %7413 = vmatpush1.bf16.msra.mxu0 %v7288
    %7414 = vmatprep.subr.bf16.mxu0 0
    %7415 = vmatpush1.bf16.msra.mxu0 %v7287
    %7416 = vmatprep.subr.bf16.mxu0 0
    %7417 = vmatpush1.bf16.msra.mxu0 %v7286
    %7418 = vmatprep.subr.bf16.mxu0 0
    %7419 = vmatpush1.bf16.msra.mxu0 %v7285
    %7420 = vmatprep.subr.bf16.mxu0 0
    %7421 = vmatpush1.bf16.msra.mxu0 %v7284
    %7422 = vmatprep.subr.bf16.mxu0 0
    %7423 = vmatpush1.bf16.msra.mxu0 %v7283
    %7424 = vmatprep.subr.bf16.mxu0 0
    %7425 = vmatpush1.bf16.msra.mxu0 %v7282
    %7426 = vmatprep.subr.bf16.mxu0 0
    %7427 = vmatpush2.bf16.msra.mxu0 %v7297
    %7428 = vmatprep.subr.bf16.mxu0 0
    %7429 = vmatpush2.bf16.msra.mxu0 %v7296
    %7430 = vmatprep.subr.bf16.mxu0 0
    %7431 = vmatpush2.bf16.msra.mxu0 %v7295
    %7432 = vmatprep.subr.bf16.mxu0 0
    %7433 = vmatpush2.bf16.msra.mxu0 %v7294
    %7434 = vmatprep.subr.bf16.mxu0 0
    %7435 = vmatpush2.bf16.msra.mxu0 %v7293
    %7436 = vmatprep.subr.bf16.mxu0 0
    %7437 = vmatpush2.bf16.msra.mxu0 %v7292
    %7438 = vmatprep.subr.bf16.mxu0 0
    %7439 = vmatpush2.bf16.msra.mxu0 %v7291
    %7440 = vmatprep.subr.bf16.mxu0 0
    %7441 = vmatpush2.bf16.msra.mxu0 %v7290
    %7442 = vmatprep.mubr.bf16.mxu0 %v7011
    %7443 = vmatmul.mubr.bf16.gmra.mxu0 %v7010
    %v7444 = vpop.f32.mrf.mxu0
    %v7445 = vadd.f32 0.0, %v7444
    %v7446 = vpop.f32.mrf.mxu0
    %v7447 = vpop.f32.mrf.mxu0
    %v7448 = vpop.f32.mrf.mxu0
    %7449 = vdwg.mxu0
    %7450 = vmatprep.subr.bf16.mxu0 0
    %7451 = vmatpush1.bf16.msra.mxu0 %v7305
    %7452 = vmatprep.subr.bf16.mxu0 0
    %7453 = vmatpush1.bf16.msra.mxu0 %v7304
    %7454 = vmatprep.subr.bf16.mxu0 0
    %7455 = vmatpush1.bf16.msra.mxu0 %v7303
    %7456 = vmatprep.subr.bf16.mxu0 0
    %7457 = vmatpush1.bf16.msra.mxu0 %v7302
    %7458 = vmatprep.subr.bf16.mxu0 0
    %7459 = vmatpush1.bf16.msra.mxu0 %v7301
    %7460 = vmatprep.subr.bf16.mxu0 0
    %7461 = vmatpush1.bf16.msra.mxu0 %v7300
    %7462 = vmatprep.subr.bf16.mxu0 0
    %7463 = vmatpush1.bf16.msra.mxu0 %v7299
    %7464 = vmatprep.subr.bf16.mxu0 0
    %7465 = vmatpush1.bf16.msra.mxu0 %v7298
    %7466 = vmatprep.subr.bf16.mxu0 0
    %7467 = vmatpush2.bf16.msra.mxu0 %v7313
    %7468 = vmatprep.subr.bf16.mxu0 0
    %7469 = vmatpush2.bf16.msra.mxu0 %v7312
    %7470 = vmatprep.subr.bf16.mxu0 0
    %7471 = vmatpush2.bf16.msra.mxu0 %v7311
    %7472 = vmatprep.subr.bf16.mxu0 0
    %7473 = vmatpush2.bf16.msra.mxu0 %v7310
    %7474 = vmatprep.subr.bf16.mxu0 0
    %7475 = vmatpush2.bf16.msra.mxu0 %v7309
    %7476 = vmatprep.subr.bf16.mxu0 0
    %7477 = vmatpush2.bf16.msra.mxu0 %v7308
    %7478 = vmatprep.subr.bf16.mxu0 0
    %7479 = vmatpush2.bf16.msra.mxu0 %v7307
    %7480 = vmatprep.subr.bf16.mxu0 0
    %7481 = vmatpush2.bf16.msra.mxu0 %v7306
    %7482 = vmatprep.mubr.bf16.mxu0 %v7013
    %7483 = vmatmul.mubr.bf16.gmra.mxu0 %v7012
    %v7484 = vpop.f32.mrf.mxu0
    %v7485 = vadd.f32 %v7445, %v7484
    %v7486 = vpop.f32.mrf.mxu0
    %v7487 = vpop.f32.mrf.mxu0
    %v7488 = vpop.f32.mrf.mxu0
    %7489 = vdwg.mxu0
    %7490 = vmatprep.subr.bf16.mxu0 0
    %7491 = vmatpush1.bf16.msra.mxu0 %v7321
    %7492 = vmatprep.subr.bf16.mxu0 0
    %7493 = vmatpush1.bf16.msra.mxu0 %v7320
    %7494 = vmatprep.subr.bf16.mxu0 0
    %7495 = vmatpush1.bf16.msra.mxu0 %v7319
    %7496 = vmatprep.subr.bf16.mxu0 0
    %7497 = vmatpush1.bf16.msra.mxu0 %v7318
    %7498 = vmatprep.subr.bf16.mxu0 0
    %7499 = vmatpush1.bf16.msra.mxu0 %v7317
    %7500 = vmatprep.subr.bf16.mxu0 0
    %7501 = vmatpush1.bf16.msra.mxu0 %v7316
    %7502 = vmatprep.subr.bf16.mxu0 0
    %7503 = vmatpush1.bf16.msra.mxu0 %v7315
    %7504 = vmatprep.subr.bf16.mxu0 0
    %7505 = vmatpush1.bf16.msra.mxu0 %v7314
    %7506 = vmatprep.subr.bf16.mxu0 0
    %7507 = vmatpush2.bf16.msra.mxu0 %v7329
    %7508 = vmatprep.subr.bf16.mxu0 0
    %7509 = vmatpush2.bf16.msra.mxu0 %v7328
    %7510 = vmatprep.subr.bf16.mxu0 0
    %7511 = vmatpush2.bf16.msra.mxu0 %v7327
    %7512 = vmatprep.subr.bf16.mxu0 0
    %7513 = vmatpush2.bf16.msra.mxu0 %v7326
    %7514 = vmatprep.subr.bf16.mxu0 0
    %7515 = vmatpush2.bf16.msra.mxu0 %v7325
    %7516 = vmatprep.subr.bf16.mxu0 0
    %7517 = vmatpush2.bf16.msra.mxu0 %v7324
    %7518 = vmatprep.subr.bf16.mxu0 0
    %7519 = vmatpush2.bf16.msra.mxu0 %v7323
    %7520 = vmatprep.subr.bf16.mxu0 0
    %7521 = vmatpush2.bf16.msra.mxu0 %v7322
    %7522 = vmatprep.mubr.bf16.mxu0 %v7015
    %7523 = vmatmul.mubr.bf16.gmra.mxu0 %v7014
    %v7524 = vpop.f32.mrf.mxu0
    %v7525 = vadd.f32 %v7485, %v7524
    %v7526 = vpop.f32.mrf.mxu0
    %v7527 = vpop.f32.mrf.mxu0
    %v7528 = vpop.f32.mrf.mxu0
    %7529 = vdwg.mxu0
    %7530 = vmatprep.subr.bf16.mxu0 0
    %7531 = vmatpush1.bf16.msra.mxu0 %v7337
    %7532 = vmatprep.subr.bf16.mxu0 0
    %7533 = vmatpush1.bf16.msra.mxu0 %v7336
    %7534 = vmatprep.subr.bf16.mxu0 0
    %7535 = vmatpush1.bf16.msra.mxu0 %v7335
    %7536 = vmatprep.subr.bf16.mxu0 0
    %7537 = vmatpush1.bf16.msra.mxu0 %v7334
    %7538 = vmatprep.subr.bf16.mxu0 0
    %7539 = vmatpush1.bf16.msra.mxu0 %v7333
    %7540 = vmatprep.subr.bf16.mxu0 0
    %7541 = vmatpush1.bf16.msra.mxu0 %v7332
    %7542 = vmatprep.subr.bf16.mxu0 0
    %7543 = vmatpush1.bf16.msra.mxu0 %v7331
    %7544 = vmatprep.subr.bf16.mxu0 0
    %7545 = vmatpush1.bf16.msra.mxu0 %v7330
    %7546 = vmatprep.subr.bf16.mxu0 0
    %7547 = vmatpush2.bf16.msra.mxu0 %v7345
    %7548 = vmatprep.subr.bf16.mxu0 0
    %7549 = vmatpush2.bf16.msra.mxu0 %v7344
    %7550 = vmatprep.subr.bf16.mxu0 0
    %7551 = vmatpush2.bf16.msra.mxu0 %v7343
    %7552 = vmatprep.subr.bf16.mxu0 0
    %7553 = vmatpush2.bf16.msra.mxu0 %v7342
    %7554 = vmatprep.subr.bf16.mxu0 0
    %7555 = vmatpush2.bf16.msra.mxu0 %v7341
    %7556 = vmatprep.subr.bf16.mxu0 0
    %7557 = vmatpush2.bf16.msra.mxu0 %v7340
    %7558 = vmatprep.subr.bf16.mxu0 0
    %7559 = vmatpush2.bf16.msra.mxu0 %v7339
    %7560 = vmatprep.subr.bf16.mxu0 0
    %7561 = vmatpush2.bf16.msra.mxu0 %v7338
    %7562 = vmatprep.mubr.bf16.mxu0 %v7017
    %7563 = vmatmul.mubr.bf16.gmra.mxu0 %v7016
    %v7564 = vpop.f32.mrf.mxu0
    %v7565 = vadd.f32 %v7525, %v7564
    %v7566 = vpop.f32.mrf.mxu0
    %v7567 = vpop.f32.mrf.mxu0
    %v7568 = vpop.f32.mrf.mxu0
    %7569 = vdwg.mxu0
    %v7570 = vadd.f32 %v6880, %v7565
    %s7571 = scalar_lea.vmem %s2, 5120
    %v7572 = vld [vmem:[%s7571] sm:$0xf]
    %v7573 = vld [vmem:[%s7571 + $0x4] sm:$0xf]
    %v7574 = vld [vmem:[%s7571 + $0x8] sm:$0xf]
    %v7575 = vld [vmem:[%s7571 + $0xc] sm:$0xf]
    %v7576 = vld [vmem:[%s7571 + $0x10] sm:$0xf]
    %v7577 = vld [vmem:[%s7571 + $0x14] sm:$0xf]
    %v7578 = vld [vmem:[%s7571 + $0x18] sm:$0xf]
    %v7579 = vld [vmem:[%s7571 + $0x1c] sm:$0xf]
    %v7580 = vld [vmem:[%s7571 + $0x20] sm:$0xf]
    %v7581 = vld [vmem:[%s7571 + $0x24] sm:$0xf]
    %v7582 = vld [vmem:[%s7571 + $0x28] sm:$0xf]
    %v7583 = vld [vmem:[%s7571 + $0x2c] sm:$0xf]
    %v7584 = vld [vmem:[%s7571 + $0x30] sm:$0xf]
    %v7585 = vld [vmem:[%s7571 + $0x34] sm:$0xf]
    %v7586 = vld [vmem:[%s7571 + $0x38] sm:$0xf]
    %v7587 = vld [vmem:[%s7571 + $0x3c] sm:$0xf]
    %v7588 = vld [vmem:[%s7571 + $0x40] sm:$0xf]
    %v7589 = vld [vmem:[%s7571 + $0x44] sm:$0xf]
    %v7590 = vld [vmem:[%s7571 + $0x48] sm:$0xf]
    %v7591 = vld [vmem:[%s7571 + $0x4c] sm:$0xf]
    %v7592 = vld [vmem:[%s7571 + $0x50] sm:$0xf]
    %v7593 = vld [vmem:[%s7571 + $0x54] sm:$0xf]
    %v7594 = vld [vmem:[%s7571 + $0x58] sm:$0xf]
    %v7595 = vld [vmem:[%s7571 + $0x5c] sm:$0xf]
    %v7596 = vld [vmem:[%s7571 + $0x60] sm:$0xf]
    %v7597 = vld [vmem:[%s7571 + $0x64] sm:$0xf]
    %v7598 = vld [vmem:[%s7571 + $0x68] sm:$0xf]
    %v7599 = vld [vmem:[%s7571 + $0x6c] sm:$0xf]
    %v7600 = vld [vmem:[%s7571 + $0x70] sm:$0xf]
    %v7601 = vld [vmem:[%s7571 + $0x74] sm:$0xf]
    %v7602 = vld [vmem:[%s7571 + $0x78] sm:$0xf]
    %v7603 = vld [vmem:[%s7571 + $0x7c] sm:$0xf]
    %v7604 = vld [vmem:[%s7571 + $0x80] sm:$0xf]
    %v7605 = vld [vmem:[%s7571 + $0x84] sm:$0xf]
    %v7606 = vld [vmem:[%s7571 + $0x88] sm:$0xf]
    %v7607 = vld [vmem:[%s7571 + $0x8c] sm:$0xf]
    %v7608 = vld [vmem:[%s7571 + $0x90] sm:$0xf]
    %v7609 = vld [vmem:[%s7571 + $0x94] sm:$0xf]
    %v7610 = vld [vmem:[%s7571 + $0x98] sm:$0xf]
    %v7611 = vld [vmem:[%s7571 + $0x9c] sm:$0xf]
    %v7612 = vld [vmem:[%s7571 + $0xa0] sm:$0xf]
    %v7613 = vld [vmem:[%s7571 + $0xa4] sm:$0xf]
    %v7614 = vld [vmem:[%s7571 + $0xa8] sm:$0xf]
    %v7615 = vld [vmem:[%s7571 + $0xac] sm:$0xf]
    %v7616 = vld [vmem:[%s7571 + $0xb0] sm:$0xf]
    %v7617 = vld [vmem:[%s7571 + $0xb4] sm:$0xf]
    %v7618 = vld [vmem:[%s7571 + $0xb8] sm:$0xf]
    %v7619 = vld [vmem:[%s7571 + $0xbc] sm:$0xf]
    %v7620 = vld [vmem:[%s7571 + $0xc0] sm:$0xf]
    %v7621 = vld [vmem:[%s7571 + $0xc4] sm:$0xf]
    %v7622 = vld [vmem:[%s7571 + $0xc8] sm:$0xf]
    %v7623 = vld [vmem:[%s7571 + $0xcc] sm:$0xf]
    %v7624 = vld [vmem:[%s7571 + $0xd0] sm:$0xf]
    %v7625 = vld [vmem:[%s7571 + $0xd4] sm:$0xf]
    %v7626 = vld [vmem:[%s7571 + $0xd8] sm:$0xf]
    %v7627 = vld [vmem:[%s7571 + $0xdc] sm:$0xf]
    %v7628 = vld [vmem:[%s7571 + $0xe0] sm:$0xf]
    %v7629 = vld [vmem:[%s7571 + $0xe4] sm:$0xf]
    %v7630 = vld [vmem:[%s7571 + $0xe8] sm:$0xf]
    %v7631 = vld [vmem:[%s7571 + $0xec] sm:$0xf]
    %v7632 = vld [vmem:[%s7571 + $0xf0] sm:$0xf]
    %v7633 = vld [vmem:[%s7571 + $0xf4] sm:$0xf]
    %v7634 = vld [vmem:[%s7571 + $0xf8] sm:$0xf]
    %v7635 = vld [vmem:[%s7571 + $0xfc] sm:$0xf]
    %v7636 = vld [vmem:[%s7571 + $0x100] sm:$0xf]
    %v7637 = vld [vmem:[%s7571 + $0x104] sm:$0xf]
    %v7638 = vld [vmem:[%s7571 + $0x108] sm:$0xf]
    %v7639 = vld [vmem:[%s7571 + $0x10c] sm:$0xf]
    %v7640 = vld [vmem:[%s7571 + $0x110] sm:$0xf]
    %v7641 = vld [vmem:[%s7571 + $0x114] sm:$0xf]
    %v7642 = vld [vmem:[%s7571 + $0x118] sm:$0xf]
    %v7643 = vld [vmem:[%s7571 + $0x11c] sm:$0xf]
    %v7644 = vld [vmem:[%s7571 + $0x120] sm:$0xf]
    %v7645 = vld [vmem:[%s7571 + $0x124] sm:$0xf]
    %v7646 = vld [vmem:[%s7571 + $0x128] sm:$0xf]
    %v7647 = vld [vmem:[%s7571 + $0x12c] sm:$0xf]
    %v7648 = vld [vmem:[%s7571 + $0x130] sm:$0xf]
    %v7649 = vld [vmem:[%s7571 + $0x134] sm:$0xf]
    %v7650 = vld [vmem:[%s7571 + $0x138] sm:$0xf]
    %v7651 = vld [vmem:[%s7571 + $0x13c] sm:$0xf]
    %v7652 = vld [vmem:[%s7571 + $0x140] sm:$0xf]
    %v7653 = vld [vmem:[%s7571 + $0x144] sm:$0xf]
    %v7654 = vld [vmem:[%s7571 + $0x148] sm:$0xf]
    %v7655 = vld [vmem:[%s7571 + $0x14c] sm:$0xf]
    %v7656 = vld [vmem:[%s7571 + $0x150] sm:$0xf]
    %v7657 = vld [vmem:[%s7571 + $0x154] sm:$0xf]
    %v7658 = vld [vmem:[%s7571 + $0x158] sm:$0xf]
    %v7659 = vld [vmem:[%s7571 + $0x15c] sm:$0xf]
    %v7660 = vld [vmem:[%s7571 + $0x160] sm:$0xf]
    %v7661 = vld [vmem:[%s7571 + $0x164] sm:$0xf]
    %v7662 = vld [vmem:[%s7571 + $0x168] sm:$0xf]
    %v7663 = vld [vmem:[%s7571 + $0x16c] sm:$0xf]
    %v7664 = vld [vmem:[%s7571 + $0x170] sm:$0xf]
    %v7665 = vld [vmem:[%s7571 + $0x174] sm:$0xf]
    %v7666 = vld [vmem:[%s7571 + $0x178] sm:$0xf]
    %v7667 = vld [vmem:[%s7571 + $0x17c] sm:$0xf]
    %v7668 = vld [vmem:[%s7571 + $0x180] sm:$0xf]
    %v7669 = vld [vmem:[%s7571 + $0x184] sm:$0xf]
    %v7670 = vld [vmem:[%s7571 + $0x188] sm:$0xf]
    %v7671 = vld [vmem:[%s7571 + $0x18c] sm:$0xf]
    %v7672 = vld [vmem:[%s7571 + $0x190] sm:$0xf]
    %v7673 = vld [vmem:[%s7571 + $0x194] sm:$0xf]
    %v7674 = vld [vmem:[%s7571 + $0x198] sm:$0xf]
    %v7675 = vld [vmem:[%s7571 + $0x19c] sm:$0xf]
    %v7676 = vld [vmem:[%s7571 + $0x1a0] sm:$0xf]
    %v7677 = vld [vmem:[%s7571 + $0x1a4] sm:$0xf]
    %v7678 = vld [vmem:[%s7571 + $0x1a8] sm:$0xf]
    %v7679 = vld [vmem:[%s7571 + $0x1ac] sm:$0xf]
    %v7680 = vld [vmem:[%s7571 + $0x1b0] sm:$0xf]
    %v7681 = vld [vmem:[%s7571 + $0x1b4] sm:$0xf]
    %v7682 = vld [vmem:[%s7571 + $0x1b8] sm:$0xf]
    %v7683 = vld [vmem:[%s7571 + $0x1bc] sm:$0xf]
    %v7684 = vld [vmem:[%s7571 + $0x1c0] sm:$0xf]
    %v7685 = vld [vmem:[%s7571 + $0x1c4] sm:$0xf]
    %v7686 = vld [vmem:[%s7571 + $0x1c8] sm:$0xf]
    %v7687 = vld [vmem:[%s7571 + $0x1cc] sm:$0xf]
    %v7688 = vld [vmem:[%s7571 + $0x1d0] sm:$0xf]
    %v7689 = vld [vmem:[%s7571 + $0x1d4] sm:$0xf]
    %v7690 = vld [vmem:[%s7571 + $0x1d8] sm:$0xf]
    %v7691 = vld [vmem:[%s7571 + $0x1dc] sm:$0xf]
    %v7692 = vld [vmem:[%s7571 + $0x1e0] sm:$0xf]
    %v7693 = vld [vmem:[%s7571 + $0x1e4] sm:$0xf]
    %v7694 = vld [vmem:[%s7571 + $0x1e8] sm:$0xf]
    %v7695 = vld [vmem:[%s7571 + $0x1ec] sm:$0xf]
    %v7696 = vld [vmem:[%s7571 + $0x1f0] sm:$0xf]
    %v7697 = vld [vmem:[%s7571 + $0x1f4] sm:$0xf]
    %v7698 = vld [vmem:[%s7571 + $0x1f8] sm:$0xf]
    %v7699 = vld [vmem:[%s7571 + $0x1fc] sm:$0xf]
    %v7700 = vrot.slane %v655, 5
    %v7701 = vrot.slane %v656, 5
    %v7702 = vrot.slane %v657, 5
    %v7703 = vrot.slane %v658, 5
    %v7704 = vrot.slane %v659, 5
    %v7705 = vrot.slane %v660, 5
    %v7706 = vrot.slane %v661, 5
    %v7707 = vrot.slane %v662, 5
    %v7844 = vunpack.c.l.b16 %v7572
    %v7845 = vunpack.c.l.b16 %v7573
    %v7846 = vunpack.c.l.b16 %v7574
    %v7847 = vunpack.c.l.b16 %v7575
    %v7848 = vunpack.c.l.b16 %v7576
    %v7849 = vunpack.c.l.b16 %v7577
    %v7850 = vunpack.c.l.b16 %v7578
    %v7851 = vunpack.c.l.b16 %v7579
    %v7852 = vunpack.c.l.b16 %v7580
    %v7853 = vunpack.c.l.b16 %v7581
    %v7854 = vunpack.c.l.b16 %v7582
    %v7855 = vunpack.c.l.b16 %v7583
    %v7856 = vunpack.c.l.b16 %v7584
    %v7857 = vunpack.c.l.b16 %v7585
    %v7858 = vunpack.c.l.b16 %v7586
    %v7859 = vunpack.c.l.b16 %v7587
    %v7860 = vunpack.c.l.b16 %v7588
    %v7861 = vunpack.c.l.b16 %v7589
    %v7862 = vunpack.c.l.b16 %v7590
    %v7863 = vunpack.c.l.b16 %v7591
    %v7864 = vunpack.c.l.b16 %v7592
    %v7865 = vunpack.c.l.b16 %v7593
    %v7866 = vunpack.c.l.b16 %v7594
    %v7867 = vunpack.c.l.b16 %v7595
    %v7868 = vunpack.c.l.b16 %v7596
    %v7869 = vunpack.c.l.b16 %v7597
    %v7870 = vunpack.c.l.b16 %v7598
    %v7871 = vunpack.c.l.b16 %v7599
    %v7872 = vunpack.c.l.b16 %v7600
    %v7873 = vunpack.c.l.b16 %v7601
    %v7874 = vunpack.c.l.b16 %v7602
    %v7875 = vunpack.c.l.b16 %v7603
    %v7876 = vunpack.c.l.b16 %v7604
    %v7877 = vunpack.c.l.b16 %v7605
    %v7878 = vunpack.c.l.b16 %v7606
    %v7879 = vunpack.c.l.b16 %v7607
    %v7880 = vunpack.c.l.b16 %v7608
    %v7881 = vunpack.c.l.b16 %v7609
    %v7882 = vunpack.c.l.b16 %v7610
    %v7883 = vunpack.c.l.b16 %v7611
    %v7884 = vunpack.c.l.b16 %v7612
    %v7885 = vunpack.c.l.b16 %v7613
    %v7886 = vunpack.c.l.b16 %v7614
    %v7887 = vunpack.c.l.b16 %v7615
    %v7888 = vunpack.c.l.b16 %v7616
    %v7889 = vunpack.c.l.b16 %v7617
    %v7890 = vunpack.c.l.b16 %v7618
    %v7891 = vunpack.c.l.b16 %v7619
    %v7892 = vunpack.c.l.b16 %v7620
    %v7893 = vunpack.c.l.b16 %v7621
    %v7894 = vunpack.c.l.b16 %v7622
    %v7895 = vunpack.c.l.b16 %v7623
    %v7896 = vunpack.c.l.b16 %v7624
    %v7897 = vunpack.c.l.b16 %v7625
    %v7898 = vunpack.c.l.b16 %v7626
    %v7899 = vunpack.c.l.b16 %v7627
    %v7900 = vunpack.c.l.b16 %v7628
    %v7901 = vunpack.c.l.b16 %v7629
    %v7902 = vunpack.c.l.b16 %v7630
    %v7903 = vunpack.c.l.b16 %v7631
    %v7904 = vunpack.c.l.b16 %v7632
    %v7905 = vunpack.c.l.b16 %v7633
    %v7906 = vunpack.c.l.b16 %v7634
    %v7907 = vunpack.c.l.b16 %v7635
    %v7908 = vunpack.c.l.b16 %v7636
    %v7909 = vunpack.c.l.b16 %v7637
    %v7910 = vunpack.c.l.b16 %v7638
    %v7911 = vunpack.c.l.b16 %v7639
    %v7912 = vunpack.c.l.b16 %v7640
    %v7913 = vunpack.c.l.b16 %v7641
    %v7914 = vunpack.c.l.b16 %v7642
    %v7915 = vunpack.c.l.b16 %v7643
    %v7916 = vunpack.c.l.b16 %v7644
    %v7917 = vunpack.c.l.b16 %v7645
    %v7918 = vunpack.c.l.b16 %v7646
    %v7919 = vunpack.c.l.b16 %v7647
    %v7920 = vunpack.c.l.b16 %v7648
    %v7921 = vunpack.c.l.b16 %v7649
    %v7922 = vunpack.c.l.b16 %v7650
    %v7923 = vunpack.c.l.b16 %v7651
    %v7924 = vunpack.c.l.b16 %v7652
    %v7925 = vunpack.c.l.b16 %v7653
    %v7926 = vunpack.c.l.b16 %v7654
    %v7927 = vunpack.c.l.b16 %v7655
    %v7928 = vunpack.c.l.b16 %v7656
    %v7929 = vunpack.c.l.b16 %v7657
    %v7930 = vunpack.c.l.b16 %v7658
    %v7931 = vunpack.c.l.b16 %v7659
    %v7932 = vunpack.c.l.b16 %v7660
    %v7933 = vunpack.c.l.b16 %v7661
    %v7934 = vunpack.c.l.b16 %v7662
    %v7935 = vunpack.c.l.b16 %v7663
    %v7936 = vunpack.c.l.b16 %v7664
    %v7937 = vunpack.c.l.b16 %v7665
    %v7938 = vunpack.c.l.b16 %v7666
    %v7939 = vunpack.c.l.b16 %v7667
    %v7940 = vunpack.c.l.b16 %v7668
    %v7941 = vunpack.c.l.b16 %v7669
    %v7942 = vunpack.c.l.b16 %v7670
    %v7943 = vunpack.c.l.b16 %v7671
    %v7944 = vunpack.c.l.b16 %v7672
    %v7945 = vunpack.c.l.b16 %v7673
    %v7946 = vunpack.c.l.b16 %v7674
    %v7947 = vunpack.c.l.b16 %v7675
    %v7948 = vunpack.c.l.b16 %v7676
    %v7949 = vunpack.c.l.b16 %v7677
    %v7950 = vunpack.c.l.b16 %v7678
    %v7951 = vunpack.c.l.b16 %v7679
    %v7952 = vunpack.c.l.b16 %v7680
    %v7953 = vunpack.c.l.b16 %v7681
    %v7954 = vunpack.c.l.b16 %v7682
    %v7955 = vunpack.c.l.b16 %v7683
    %v7956 = vunpack.c.l.b16 %v7684
    %v7957 = vunpack.c.l.b16 %v7685
    %v7958 = vunpack.c.l.b16 %v7686
    %v7959 = vunpack.c.l.b16 %v7687
    %v7960 = vunpack.c.l.b16 %v7688
    %v7961 = vunpack.c.l.b16 %v7689
    %v7962 = vunpack.c.l.b16 %v7690
    %v7963 = vunpack.c.l.b16 %v7691
    %v7964 = vunpack.c.l.b16 %v7692
    %v7965 = vunpack.c.l.b16 %v7693
    %v7966 = vunpack.c.l.b16 %v7694
    %v7967 = vunpack.c.l.b16 %v7695
    %v7968 = vunpack.c.l.b16 %v7696
    %v7969 = vunpack.c.l.b16 %v7697
    %v7970 = vunpack.c.l.b16 %v7698
    %v7971 = vunpack.c.l.b16 %v7699
    %v7972 = vpack.c.b16 %v7845, %v7844
    %v7973 = vpack.c.b16 %v7847, %v7846
    %v7974 = vpack.c.b16 %v7849, %v7848
    %v7975 = vpack.c.b16 %v7851, %v7850
    %v7976 = vpack.c.b16 %v7853, %v7852
    %v7977 = vpack.c.b16 %v7855, %v7854
    %v7978 = vpack.c.b16 %v7857, %v7856
    %v7979 = vpack.c.b16 %v7859, %v7858
    %v7980 = vpack.c.b16 %v7861, %v7860
    %v7981 = vpack.c.b16 %v7863, %v7862
    %v7982 = vpack.c.b16 %v7865, %v7864
    %v7983 = vpack.c.b16 %v7867, %v7866
    %v7984 = vpack.c.b16 %v7869, %v7868
    %v7985 = vpack.c.b16 %v7871, %v7870
    %v7986 = vpack.c.b16 %v7873, %v7872
    %v7987 = vpack.c.b16 %v7875, %v7874
    %v7988 = vpack.c.b16 %v7877, %v7876
    %v7989 = vpack.c.b16 %v7879, %v7878
    %v7990 = vpack.c.b16 %v7881, %v7880
    %v7991 = vpack.c.b16 %v7883, %v7882
    %v7992 = vpack.c.b16 %v7885, %v7884
    %v7993 = vpack.c.b16 %v7887, %v7886
    %v7994 = vpack.c.b16 %v7889, %v7888
    %v7995 = vpack.c.b16 %v7891, %v7890
    %v7996 = vpack.c.b16 %v7893, %v7892
    %v7997 = vpack.c.b16 %v7895, %v7894
    %v7998 = vpack.c.b16 %v7897, %v7896
    %v7999 = vpack.c.b16 %v7899, %v7898
    %v8000 = vpack.c.b16 %v7901, %v7900
    %v8001 = vpack.c.b16 %v7903, %v7902
    %v8002 = vpack.c.b16 %v7905, %v7904
    %v8003 = vpack.c.b16 %v7907, %v7906
    %v8004 = vpack.c.b16 %v7909, %v7908
    %v8005 = vpack.c.b16 %v7911, %v7910
    %v8006 = vpack.c.b16 %v7913, %v7912
    %v8007 = vpack.c.b16 %v7915, %v7914
    %v8008 = vpack.c.b16 %v7917, %v7916
    %v8009 = vpack.c.b16 %v7919, %v7918
    %v8010 = vpack.c.b16 %v7921, %v7920
    %v8011 = vpack.c.b16 %v7923, %v7922
    %v8012 = vpack.c.b16 %v7925, %v7924
    %v8013 = vpack.c.b16 %v7927, %v7926
    %v8014 = vpack.c.b16 %v7929, %v7928
    %v8015 = vpack.c.b16 %v7931, %v7930
    %v8016 = vpack.c.b16 %v7933, %v7932
    %v8017 = vpack.c.b16 %v7935, %v7934
    %v8018 = vpack.c.b16 %v7937, %v7936
    %v8019 = vpack.c.b16 %v7939, %v7938
    %v8020 = vpack.c.b16 %v7941, %v7940
    %v8021 = vpack.c.b16 %v7943, %v7942
    %v8022 = vpack.c.b16 %v7945, %v7944
    %v8023 = vpack.c.b16 %v7947, %v7946
    %v8024 = vpack.c.b16 %v7949, %v7948
    %v8025 = vpack.c.b16 %v7951, %v7950
    %v8026 = vpack.c.b16 %v7953, %v7952
    %v8027 = vpack.c.b16 %v7955, %v7954
    %v8028 = vpack.c.b16 %v7957, %v7956
    %v8029 = vpack.c.b16 %v7959, %v7958
    %v8030 = vpack.c.b16 %v7961, %v7960
    %v8031 = vpack.c.b16 %v7963, %v7962
    %v8032 = vpack.c.b16 %v7965, %v7964
    %v8033 = vpack.c.b16 %v7967, %v7966
    %v8034 = vpack.c.b16 %v7969, %v7968
    %v8035 = vpack.c.b16 %v7971, %v7970
    %8100 = vmatprep.subr.bf16.mxu0 0
    %8101 = vmatpush1.bf16.msra.mxu0 %v7979
    %8102 = vmatprep.subr.bf16.mxu0 0
    %8103 = vmatpush1.bf16.msra.mxu0 %v7978
    %8104 = vmatprep.subr.bf16.mxu0 0
    %8105 = vmatpush1.bf16.msra.mxu0 %v7977
    %8106 = vmatprep.subr.bf16.mxu0 0
    %8107 = vmatpush1.bf16.msra.mxu0 %v7976
    %8108 = vmatprep.subr.bf16.mxu0 0
    %8109 = vmatpush1.bf16.msra.mxu0 %v7975
    %8110 = vmatprep.subr.bf16.mxu0 0
    %8111 = vmatpush1.bf16.msra.mxu0 %v7974
    %8112 = vmatprep.subr.bf16.mxu0 0
    %8113 = vmatpush1.bf16.msra.mxu0 %v7973
    %8114 = vmatprep.subr.bf16.mxu0 0
    %8115 = vmatpush1.bf16.msra.mxu0 %v7972
    %8116 = vmatprep.subr.bf16.mxu0 0
    %8117 = vmatpush2.bf16.msra.mxu0 %v7987
    %8118 = vmatprep.subr.bf16.mxu0 0
    %8119 = vmatpush2.bf16.msra.mxu0 %v7986
    %8120 = vmatprep.subr.bf16.mxu0 0
    %8121 = vmatpush2.bf16.msra.mxu0 %v7985
    %8122 = vmatprep.subr.bf16.mxu0 0
    %8123 = vmatpush2.bf16.msra.mxu0 %v7984
    %8124 = vmatprep.subr.bf16.mxu0 0
    %8125 = vmatpush2.bf16.msra.mxu0 %v7983
    %8126 = vmatprep.subr.bf16.mxu0 0
    %8127 = vmatpush2.bf16.msra.mxu0 %v7982
    %8128 = vmatprep.subr.bf16.mxu0 0
    %8129 = vmatpush2.bf16.msra.mxu0 %v7981
    %8130 = vmatprep.subr.bf16.mxu0 0
    %8131 = vmatpush2.bf16.msra.mxu0 %v7980
    %8132 = vmatprep.mubr.bf16.mxu0 %v7701
    %8133 = vmatmul.mubr.bf16.gmra.mxu0 %v7700
    %v8134 = vpop.f32.mrf.mxu0
    %v8135 = vadd.f32 0.0, %v8134
    %v8136 = vpop.f32.mrf.mxu0
    %v8137 = vpop.f32.mrf.mxu0
    %v8138 = vpop.f32.mrf.mxu0
    %8139 = vdwg.mxu0
    %8140 = vmatprep.subr.bf16.mxu0 0
    %8141 = vmatpush1.bf16.msra.mxu0 %v7995
    %8142 = vmatprep.subr.bf16.mxu0 0
    %8143 = vmatpush1.bf16.msra.mxu0 %v7994
    %8144 = vmatprep.subr.bf16.mxu0 0
    %8145 = vmatpush1.bf16.msra.mxu0 %v7993
    %8146 = vmatprep.subr.bf16.mxu0 0
    %8147 = vmatpush1.bf16.msra.mxu0 %v7992
    %8148 = vmatprep.subr.bf16.mxu0 0
    %8149 = vmatpush1.bf16.msra.mxu0 %v7991
    %8150 = vmatprep.subr.bf16.mxu0 0
    %8151 = vmatpush1.bf16.msra.mxu0 %v7990
    %8152 = vmatprep.subr.bf16.mxu0 0
    %8153 = vmatpush1.bf16.msra.mxu0 %v7989
    %8154 = vmatprep.subr.bf16.mxu0 0
    %8155 = vmatpush1.bf16.msra.mxu0 %v7988
    %8156 = vmatprep.subr.bf16.mxu0 0
    %8157 = vmatpush2.bf16.msra.mxu0 %v8003
    %8158 = vmatprep.subr.bf16.mxu0 0
    %8159 = vmatpush2.bf16.msra.mxu0 %v8002
    %8160 = vmatprep.subr.bf16.mxu0 0
    %8161 = vmatpush2.bf16.msra.mxu0 %v8001
    %8162 = vmatprep.subr.bf16.mxu0 0
    %8163 = vmatpush2.bf16.msra.mxu0 %v8000
    %8164 = vmatprep.subr.bf16.mxu0 0
    %8165 = vmatpush2.bf16.msra.mxu0 %v7999
    %8166 = vmatprep.subr.bf16.mxu0 0
    %8167 = vmatpush2.bf16.msra.mxu0 %v7998
    %8168 = vmatprep.subr.bf16.mxu0 0
    %8169 = vmatpush2.bf16.msra.mxu0 %v7997
    %8170 = vmatprep.subr.bf16.mxu0 0
    %8171 = vmatpush2.bf16.msra.mxu0 %v7996
    %8172 = vmatprep.mubr.bf16.mxu0 %v7703
    %8173 = vmatmul.mubr.bf16.gmra.mxu0 %v7702
    %v8174 = vpop.f32.mrf.mxu0
    %v8175 = vadd.f32 %v8135, %v8174
    %v8176 = vpop.f32.mrf.mxu0
    %v8177 = vpop.f32.mrf.mxu0
    %v8178 = vpop.f32.mrf.mxu0
    %8179 = vdwg.mxu0
    %8180 = vmatprep.subr.bf16.mxu0 0
    %8181 = vmatpush1.bf16.msra.mxu0 %v8011
    %8182 = vmatprep.subr.bf16.mxu0 0
    %8183 = vmatpush1.bf16.msra.mxu0 %v8010
    %8184 = vmatprep.subr.bf16.mxu0 0
    %8185 = vmatpush1.bf16.msra.mxu0 %v8009
    %8186 = vmatprep.subr.bf16.mxu0 0
    %8187 = vmatpush1.bf16.msra.mxu0 %v8008
    %8188 = vmatprep.subr.bf16.mxu0 0
    %8189 = vmatpush1.bf16.msra.mxu0 %v8007
    %8190 = vmatprep.subr.bf16.mxu0 0
    %8191 = vmatpush1.bf16.msra.mxu0 %v8006
    %8192 = vmatprep.subr.bf16.mxu0 0
    %8193 = vmatpush1.bf16.msra.mxu0 %v8005
    %8194 = vmatprep.subr.bf16.mxu0 0
    %8195 = vmatpush1.bf16.msra.mxu0 %v8004
    %8196 = vmatprep.subr.bf16.mxu0 0
    %8197 = vmatpush2.bf16.msra.mxu0 %v8019
    %8198 = vmatprep.subr.bf16.mxu0 0
    %8199 = vmatpush2.bf16.msra.mxu0 %v8018
    %8200 = vmatprep.subr.bf16.mxu0 0
    %8201 = vmatpush2.bf16.msra.mxu0 %v8017
    %8202 = vmatprep.subr.bf16.mxu0 0
    %8203 = vmatpush2.bf16.msra.mxu0 %v8016
    %8204 = vmatprep.subr.bf16.mxu0 0
    %8205 = vmatpush2.bf16.msra.mxu0 %v8015
    %8206 = vmatprep.subr.bf16.mxu0 0
    %8207 = vmatpush2.bf16.msra.mxu0 %v8014
    %8208 = vmatprep.subr.bf16.mxu0 0
    %8209 = vmatpush2.bf16.msra.mxu0 %v8013
    %8210 = vmatprep.subr.bf16.mxu0 0
    %8211 = vmatpush2.bf16.msra.mxu0 %v8012
    %8212 = vmatprep.mubr.bf16.mxu0 %v7705
    %8213 = vmatmul.mubr.bf16.gmra.mxu0 %v7704
    %v8214 = vpop.f32.mrf.mxu0
    %v8215 = vadd.f32 %v8175, %v8214
    %v8216 = vpop.f32.mrf.mxu0
    %v8217 = vpop.f32.mrf.mxu0
    %v8218 = vpop.f32.mrf.mxu0
    %8219 = vdwg.mxu0
    %8220 = vmatprep.subr.bf16.mxu0 0
    %8221 = vmatpush1.bf16.msra.mxu0 %v8027
    %8222 = vmatprep.subr.bf16.mxu0 0
    %8223 = vmatpush1.bf16.msra.mxu0 %v8026
    %8224 = vmatprep.subr.bf16.mxu0 0
    %8225 = vmatpush1.bf16.msra.mxu0 %v8025
    %8226 = vmatprep.subr.bf16.mxu0 0
    %8227 = vmatpush1.bf16.msra.mxu0 %v8024
    %8228 = vmatprep.subr.bf16.mxu0 0
    %8229 = vmatpush1.bf16.msra.mxu0 %v8023
    %8230 = vmatprep.subr.bf16.mxu0 0
    %8231 = vmatpush1.bf16.msra.mxu0 %v8022
    %8232 = vmatprep.subr.bf16.mxu0 0
    %8233 = vmatpush1.bf16.msra.mxu0 %v8021
    %8234 = vmatprep.subr.bf16.mxu0 0
    %8235 = vmatpush1.bf16.msra.mxu0 %v8020
    %8236 = vmatprep.subr.bf16.mxu0 0
    %8237 = vmatpush2.bf16.msra.mxu0 %v8035
    %8238 = vmatprep.subr.bf16.mxu0 0
    %8239 = vmatpush2.bf16.msra.mxu0 %v8034
    %8240 = vmatprep.subr.bf16.mxu0 0
    %8241 = vmatpush2.bf16.msra.mxu0 %v8033
    %8242 = vmatprep.subr.bf16.mxu0 0
    %8243 = vmatpush2.bf16.msra.mxu0 %v8032
    %8244 = vmatprep.subr.bf16.mxu0 0
    %8245 = vmatpush2.bf16.msra.mxu0 %v8031
    %8246 = vmatprep.subr.bf16.mxu0 0
    %8247 = vmatpush2.bf16.msra.mxu0 %v8030
    %8248 = vmatprep.subr.bf16.mxu0 0
    %8249 = vmatpush2.bf16.msra.mxu0 %v8029
    %8250 = vmatprep.subr.bf16.mxu0 0
    %8251 = vmatpush2.bf16.msra.mxu0 %v8028
    %8252 = vmatprep.mubr.bf16.mxu0 %v7707
    %8253 = vmatmul.mubr.bf16.gmra.mxu0 %v7706
    %v8254 = vpop.f32.mrf.mxu0
    %v8255 = vadd.f32 %v8215, %v8254
    %v8256 = vpop.f32.mrf.mxu0
    %v8257 = vpop.f32.mrf.mxu0
    %v8258 = vpop.f32.mrf.mxu0
    %8259 = vdwg.mxu0
    %v8260 = vadd.f32 %v7570, %v8255
    %s8261 = scalar_lea.vmem %s2, 5632
    %v8262 = vld [vmem:[%s8261] sm:$0xf]
    %v8263 = vld [vmem:[%s8261 + $0x4] sm:$0xf]
    %v8264 = vld [vmem:[%s8261 + $0x8] sm:$0xf]
    %v8265 = vld [vmem:[%s8261 + $0xc] sm:$0xf]
    %v8266 = vld [vmem:[%s8261 + $0x10] sm:$0xf]
    %v8267 = vld [vmem:[%s8261 + $0x14] sm:$0xf]
    %v8268 = vld [vmem:[%s8261 + $0x18] sm:$0xf]
    %v8269 = vld [vmem:[%s8261 + $0x1c] sm:$0xf]
    %v8270 = vld [vmem:[%s8261 + $0x20] sm:$0xf]
    %v8271 = vld [vmem:[%s8261 + $0x24] sm:$0xf]
    %v8272 = vld [vmem:[%s8261 + $0x28] sm:$0xf]
    %v8273 = vld [vmem:[%s8261 + $0x2c] sm:$0xf]
    %v8274 = vld [vmem:[%s8261 + $0x30] sm:$0xf]
    %v8275 = vld [vmem:[%s8261 + $0x34] sm:$0xf]
    %v8276 = vld [vmem:[%s8261 + $0x38] sm:$0xf]
    %v8277 = vld [vmem:[%s8261 + $0x3c] sm:$0xf]
    %v8278 = vld [vmem:[%s8261 + $0x40] sm:$0xf]
    %v8279 = vld [vmem:[%s8261 + $0x44] sm:$0xf]
    %v8280 = vld [vmem:[%s8261 + $0x48] sm:$0xf]
    %v8281 = vld [vmem:[%s8261 + $0x4c] sm:$0xf]
    %v8282 = vld [vmem:[%s8261 + $0x50] sm:$0xf]
    %v8283 = vld [vmem:[%s8261 + $0x54] sm:$0xf]
    %v8284 = vld [vmem:[%s8261 + $0x58] sm:$0xf]
    %v8285 = vld [vmem:[%s8261 + $0x5c] sm:$0xf]
    %v8286 = vld [vmem:[%s8261 + $0x60] sm:$0xf]
    %v8287 = vld [vmem:[%s8261 + $0x64] sm:$0xf]
    %v8288 = vld [vmem:[%s8261 + $0x68] sm:$0xf]
    %v8289 = vld [vmem:[%s8261 + $0x6c] sm:$0xf]
    %v8290 = vld [vmem:[%s8261 + $0x70] sm:$0xf]
    %v8291 = vld [vmem:[%s8261 + $0x74] sm:$0xf]
    %v8292 = vld [vmem:[%s8261 + $0x78] sm:$0xf]
    %v8293 = vld [vmem:[%s8261 + $0x7c] sm:$0xf]
    %v8294 = vld [vmem:[%s8261 + $0x80] sm:$0xf]
    %v8295 = vld [vmem:[%s8261 + $0x84] sm:$0xf]
    %v8296 = vld [vmem:[%s8261 + $0x88] sm:$0xf]
    %v8297 = vld [vmem:[%s8261 + $0x8c] sm:$0xf]
    %v8298 = vld [vmem:[%s8261 + $0x90] sm:$0xf]
    %v8299 = vld [vmem:[%s8261 + $0x94] sm:$0xf]
    %v8300 = vld [vmem:[%s8261 + $0x98] sm:$0xf]
    %v8301 = vld [vmem:[%s8261 + $0x9c] sm:$0xf]
    %v8302 = vld [vmem:[%s8261 + $0xa0] sm:$0xf]
    %v8303 = vld [vmem:[%s8261 + $0xa4] sm:$0xf]
    %v8304 = vld [vmem:[%s8261 + $0xa8] sm:$0xf]
    %v8305 = vld [vmem:[%s8261 + $0xac] sm:$0xf]
    %v8306 = vld [vmem:[%s8261 + $0xb0] sm:$0xf]
    %v8307 = vld [vmem:[%s8261 + $0xb4] sm:$0xf]
    %v8308 = vld [vmem:[%s8261 + $0xb8] sm:$0xf]
    %v8309 = vld [vmem:[%s8261 + $0xbc] sm:$0xf]
    %v8310 = vld [vmem:[%s8261 + $0xc0] sm:$0xf]
    %v8311 = vld [vmem:[%s8261 + $0xc4] sm:$0xf]
    %v8312 = vld [vmem:[%s8261 + $0xc8] sm:$0xf]
    %v8313 = vld [vmem:[%s8261 + $0xcc] sm:$0xf]
    %v8314 = vld [vmem:[%s8261 + $0xd0] sm:$0xf]
    %v8315 = vld [vmem:[%s8261 + $0xd4] sm:$0xf]
    %v8316 = vld [vmem:[%s8261 + $0xd8] sm:$0xf]
    %v8317 = vld [vmem:[%s8261 + $0xdc] sm:$0xf]
    %v8318 = vld [vmem:[%s8261 + $0xe0] sm:$0xf]
    %v8319 = vld [vmem:[%s8261 + $0xe4] sm:$0xf]
    %v8320 = vld [vmem:[%s8261 + $0xe8] sm:$0xf]
    %v8321 = vld [vmem:[%s8261 + $0xec] sm:$0xf]
    %v8322 = vld [vmem:[%s8261 + $0xf0] sm:$0xf]
    %v8323 = vld [vmem:[%s8261 + $0xf4] sm:$0xf]
    %v8324 = vld [vmem:[%s8261 + $0xf8] sm:$0xf]
    %v8325 = vld [vmem:[%s8261 + $0xfc] sm:$0xf]
    %v8326 = vld [vmem:[%s8261 + $0x100] sm:$0xf]
    %v8327 = vld [vmem:[%s8261 + $0x104] sm:$0xf]
    %v8328 = vld [vmem:[%s8261 + $0x108] sm:$0xf]
    %v8329 = vld [vmem:[%s8261 + $0x10c] sm:$0xf]
    %v8330 = vld [vmem:[%s8261 + $0x110] sm:$0xf]
    %v8331 = vld [vmem:[%s8261 + $0x114] sm:$0xf]
    %v8332 = vld [vmem:[%s8261 + $0x118] sm:$0xf]
    %v8333 = vld [vmem:[%s8261 + $0x11c] sm:$0xf]
    %v8334 = vld [vmem:[%s8261 + $0x120] sm:$0xf]
    %v8335 = vld [vmem:[%s8261 + $0x124] sm:$0xf]
    %v8336 = vld [vmem:[%s8261 + $0x128] sm:$0xf]
    %v8337 = vld [vmem:[%s8261 + $0x12c] sm:$0xf]
    %v8338 = vld [vmem:[%s8261 + $0x130] sm:$0xf]
    %v8339 = vld [vmem:[%s8261 + $0x134] sm:$0xf]
    %v8340 = vld [vmem:[%s8261 + $0x138] sm:$0xf]
    %v8341 = vld [vmem:[%s8261 + $0x13c] sm:$0xf]
    %v8342 = vld [vmem:[%s8261 + $0x140] sm:$0xf]
    %v8343 = vld [vmem:[%s8261 + $0x144] sm:$0xf]
    %v8344 = vld [vmem:[%s8261 + $0x148] sm:$0xf]
    %v8345 = vld [vmem:[%s8261 + $0x14c] sm:$0xf]
    %v8346 = vld [vmem:[%s8261 + $0x150] sm:$0xf]
    %v8347 = vld [vmem:[%s8261 + $0x154] sm:$0xf]
    %v8348 = vld [vmem:[%s8261 + $0x158] sm:$0xf]
    %v8349 = vld [vmem:[%s8261 + $0x15c] sm:$0xf]
    %v8350 = vld [vmem:[%s8261 + $0x160] sm:$0xf]
    %v8351 = vld [vmem:[%s8261 + $0x164] sm:$0xf]
    %v8352 = vld [vmem:[%s8261 + $0x168] sm:$0xf]
    %v8353 = vld [vmem:[%s8261 + $0x16c] sm:$0xf]
    %v8354 = vld [vmem:[%s8261 + $0x170] sm:$0xf]
    %v8355 = vld [vmem:[%s8261 + $0x174] sm:$0xf]
    %v8356 = vld [vmem:[%s8261 + $0x178] sm:$0xf]
    %v8357 = vld [vmem:[%s8261 + $0x17c] sm:$0xf]
    %v8358 = vld [vmem:[%s8261 + $0x180] sm:$0xf]
    %v8359 = vld [vmem:[%s8261 + $0x184] sm:$0xf]
    %v8360 = vld [vmem:[%s8261 + $0x188] sm:$0xf]
    %v8361 = vld [vmem:[%s8261 + $0x18c] sm:$0xf]
    %v8362 = vld [vmem:[%s8261 + $0x190] sm:$0xf]
    %v8363 = vld [vmem:[%s8261 + $0x194] sm:$0xf]
    %v8364 = vld [vmem:[%s8261 + $0x198] sm:$0xf]
    %v8365 = vld [vmem:[%s8261 + $0x19c] sm:$0xf]
    %v8366 = vld [vmem:[%s8261 + $0x1a0] sm:$0xf]
    %v8367 = vld [vmem:[%s8261 + $0x1a4] sm:$0xf]
    %v8368 = vld [vmem:[%s8261 + $0x1a8] sm:$0xf]
    %v8369 = vld [vmem:[%s8261 + $0x1ac] sm:$0xf]
    %v8370 = vld [vmem:[%s8261 + $0x1b0] sm:$0xf]
    %v8371 = vld [vmem:[%s8261 + $0x1b4] sm:$0xf]
    %v8372 = vld [vmem:[%s8261 + $0x1b8] sm:$0xf]
    %v8373 = vld [vmem:[%s8261 + $0x1bc] sm:$0xf]
    %v8374 = vld [vmem:[%s8261 + $0x1c0] sm:$0xf]
    %v8375 = vld [vmem:[%s8261 + $0x1c4] sm:$0xf]
    %v8376 = vld [vmem:[%s8261 + $0x1c8] sm:$0xf]
    %v8377 = vld [vmem:[%s8261 + $0x1cc] sm:$0xf]
    %v8378 = vld [vmem:[%s8261 + $0x1d0] sm:$0xf]
    %v8379 = vld [vmem:[%s8261 + $0x1d4] sm:$0xf]
    %v8380 = vld [vmem:[%s8261 + $0x1d8] sm:$0xf]
    %v8381 = vld [vmem:[%s8261 + $0x1dc] sm:$0xf]
    %v8382 = vld [vmem:[%s8261 + $0x1e0] sm:$0xf]
    %v8383 = vld [vmem:[%s8261 + $0x1e4] sm:$0xf]
    %v8384 = vld [vmem:[%s8261 + $0x1e8] sm:$0xf]
    %v8385 = vld [vmem:[%s8261 + $0x1ec] sm:$0xf]
    %v8386 = vld [vmem:[%s8261 + $0x1f0] sm:$0xf]
    %v8387 = vld [vmem:[%s8261 + $0x1f4] sm:$0xf]
    %v8388 = vld [vmem:[%s8261 + $0x1f8] sm:$0xf]
    %v8389 = vld [vmem:[%s8261 + $0x1fc] sm:$0xf]
    %v8390 = vrot.slane %v1467, 5
    %v8391 = vrot.slane %v1470, 5
    %v8392 = vrot.slane %v1473, 5
    %v8393 = vrot.slane %v1476, 5
    %v8394 = vrot.slane %v1479, 5
    %v8395 = vrot.slane %v1482, 5
    %v8396 = vrot.slane %v1485, 5
    %v8397 = vrot.slane %v1488, 5
    %v8534 = vunpack.c.l.b16 %v8262
    %v8535 = vunpack.c.l.b16 %v8263
    %v8536 = vunpack.c.l.b16 %v8264
    %v8537 = vunpack.c.l.b16 %v8265
    %v8538 = vunpack.c.l.b16 %v8266
    %v8539 = vunpack.c.l.b16 %v8267
    %v8540 = vunpack.c.l.b16 %v8268
    %v8541 = vunpack.c.l.b16 %v8269
    %v8542 = vunpack.c.l.b16 %v8270
    %v8543 = vunpack.c.l.b16 %v8271
    %v8544 = vunpack.c.l.b16 %v8272
    %v8545 = vunpack.c.l.b16 %v8273
    %v8546 = vunpack.c.l.b16 %v8274
    %v8547 = vunpack.c.l.b16 %v8275
    %v8548 = vunpack.c.l.b16 %v8276
    %v8549 = vunpack.c.l.b16 %v8277
    %v8550 = vunpack.c.l.b16 %v8278
    %v8551 = vunpack.c.l.b16 %v8279
    %v8552 = vunpack.c.l.b16 %v8280
    %v8553 = vunpack.c.l.b16 %v8281
    %v8554 = vunpack.c.l.b16 %v8282
    %v8555 = vunpack.c.l.b16 %v8283
    %v8556 = vunpack.c.l.b16 %v8284
    %v8557 = vunpack.c.l.b16 %v8285
    %v8558 = vunpack.c.l.b16 %v8286
    %v8559 = vunpack.c.l.b16 %v8287
    %v8560 = vunpack.c.l.b16 %v8288
    %v8561 = vunpack.c.l.b16 %v8289
    %v8562 = vunpack.c.l.b16 %v8290
    %v8563 = vunpack.c.l.b16 %v8291
    %v8564 = vunpack.c.l.b16 %v8292
    %v8565 = vunpack.c.l.b16 %v8293
    %v8566 = vunpack.c.l.b16 %v8294
    %v8567 = vunpack.c.l.b16 %v8295
    %v8568 = vunpack.c.l.b16 %v8296
    %v8569 = vunpack.c.l.b16 %v8297
    %v8570 = vunpack.c.l.b16 %v8298
    %v8571 = vunpack.c.l.b16 %v8299
    %v8572 = vunpack.c.l.b16 %v8300
    %v8573 = vunpack.c.l.b16 %v8301
    %v8574 = vunpack.c.l.b16 %v8302
    %v8575 = vunpack.c.l.b16 %v8303
    %v8576 = vunpack.c.l.b16 %v8304
    %v8577 = vunpack.c.l.b16 %v8305
    %v8578 = vunpack.c.l.b16 %v8306
    %v8579 = vunpack.c.l.b16 %v8307
    %v8580 = vunpack.c.l.b16 %v8308
    %v8581 = vunpack.c.l.b16 %v8309
    %v8582 = vunpack.c.l.b16 %v8310
    %v8583 = vunpack.c.l.b16 %v8311
    %v8584 = vunpack.c.l.b16 %v8312
    %v8585 = vunpack.c.l.b16 %v8313
    %v8586 = vunpack.c.l.b16 %v8314
    %v8587 = vunpack.c.l.b16 %v8315
    %v8588 = vunpack.c.l.b16 %v8316
    %v8589 = vunpack.c.l.b16 %v8317
    %v8590 = vunpack.c.l.b16 %v8318
    %v8591 = vunpack.c.l.b16 %v8319
    %v8592 = vunpack.c.l.b16 %v8320
    %v8593 = vunpack.c.l.b16 %v8321
    %v8594 = vunpack.c.l.b16 %v8322
    %v8595 = vunpack.c.l.b16 %v8323
    %v8596 = vunpack.c.l.b16 %v8324
    %v8597 = vunpack.c.l.b16 %v8325
    %v8598 = vunpack.c.l.b16 %v8326
    %v8599 = vunpack.c.l.b16 %v8327
    %v8600 = vunpack.c.l.b16 %v8328
    %v8601 = vunpack.c.l.b16 %v8329
    %v8602 = vunpack.c.l.b16 %v8330
    %v8603 = vunpack.c.l.b16 %v8331
    %v8604 = vunpack.c.l.b16 %v8332
    %v8605 = vunpack.c.l.b16 %v8333
    %v8606 = vunpack.c.l.b16 %v8334
    %v8607 = vunpack.c.l.b16 %v8335
    %v8608 = vunpack.c.l.b16 %v8336
    %v8609 = vunpack.c.l.b16 %v8337
    %v8610 = vunpack.c.l.b16 %v8338
    %v8611 = vunpack.c.l.b16 %v8339
    %v8612 = vunpack.c.l.b16 %v8340
    %v8613 = vunpack.c.l.b16 %v8341
    %v8614 = vunpack.c.l.b16 %v8342
    %v8615 = vunpack.c.l.b16 %v8343
    %v8616 = vunpack.c.l.b16 %v8344
    %v8617 = vunpack.c.l.b16 %v8345
    %v8618 = vunpack.c.l.b16 %v8346
    %v8619 = vunpack.c.l.b16 %v8347
    %v8620 = vunpack.c.l.b16 %v8348
    %v8621 = vunpack.c.l.b16 %v8349
    %v8622 = vunpack.c.l.b16 %v8350
    %v8623 = vunpack.c.l.b16 %v8351
    %v8624 = vunpack.c.l.b16 %v8352
    %v8625 = vunpack.c.l.b16 %v8353
    %v8626 = vunpack.c.l.b16 %v8354
    %v8627 = vunpack.c.l.b16 %v8355
    %v8628 = vunpack.c.l.b16 %v8356
    %v8629 = vunpack.c.l.b16 %v8357
    %v8630 = vunpack.c.l.b16 %v8358
    %v8631 = vunpack.c.l.b16 %v8359
    %v8632 = vunpack.c.l.b16 %v8360
    %v8633 = vunpack.c.l.b16 %v8361
    %v8634 = vunpack.c.l.b16 %v8362
    %v8635 = vunpack.c.l.b16 %v8363
    %v8636 = vunpack.c.l.b16 %v8364
    %v8637 = vunpack.c.l.b16 %v8365
    %v8638 = vunpack.c.l.b16 %v8366
    %v8639 = vunpack.c.l.b16 %v8367
    %v8640 = vunpack.c.l.b16 %v8368
    %v8641 = vunpack.c.l.b16 %v8369
    %v8642 = vunpack.c.l.b16 %v8370
    %v8643 = vunpack.c.l.b16 %v8371
    %v8644 = vunpack.c.l.b16 %v8372
    %v8645 = vunpack.c.l.b16 %v8373
    %v8646 = vunpack.c.l.b16 %v8374
    %v8647 = vunpack.c.l.b16 %v8375
    %v8648 = vunpack.c.l.b16 %v8376
    %v8649 = vunpack.c.l.b16 %v8377
    %v8650 = vunpack.c.l.b16 %v8378
    %v8651 = vunpack.c.l.b16 %v8379
    %v8652 = vunpack.c.l.b16 %v8380
    %v8653 = vunpack.c.l.b16 %v8381
    %v8654 = vunpack.c.l.b16 %v8382
    %v8655 = vunpack.c.l.b16 %v8383
    %v8656 = vunpack.c.l.b16 %v8384
    %v8657 = vunpack.c.l.b16 %v8385
    %v8658 = vunpack.c.l.b16 %v8386
    %v8659 = vunpack.c.l.b16 %v8387
    %v8660 = vunpack.c.l.b16 %v8388
    %v8661 = vunpack.c.l.b16 %v8389
    %v8662 = vpack.c.b16 %v8535, %v8534
    %v8663 = vpack.c.b16 %v8537, %v8536
    %v8664 = vpack.c.b16 %v8539, %v8538
    %v8665 = vpack.c.b16 %v8541, %v8540
    %v8666 = vpack.c.b16 %v8543, %v8542
    %v8667 = vpack.c.b16 %v8545, %v8544
    %v8668 = vpack.c.b16 %v8547, %v8546
    %v8669 = vpack.c.b16 %v8549, %v8548
    %v8670 = vpack.c.b16 %v8551, %v8550
    %v8671 = vpack.c.b16 %v8553, %v8552
    %v8672 = vpack.c.b16 %v8555, %v8554
    %v8673 = vpack.c.b16 %v8557, %v8556
    %v8674 = vpack.c.b16 %v8559, %v8558
    %v8675 = vpack.c.b16 %v8561, %v8560
    %v8676 = vpack.c.b16 %v8563, %v8562
    %v8677 = vpack.c.b16 %v8565, %v8564
    %v8678 = vpack.c.b16 %v8567, %v8566
    %v8679 = vpack.c.b16 %v8569, %v8568
    %v8680 = vpack.c.b16 %v8571, %v8570
    %v8681 = vpack.c.b16 %v8573, %v8572
    %v8682 = vpack.c.b16 %v8575, %v8574
    %v8683 = vpack.c.b16 %v8577, %v8576
    %v8684 = vpack.c.b16 %v8579, %v8578
    %v8685 = vpack.c.b16 %v8581, %v8580
    %v8686 = vpack.c.b16 %v8583, %v8582
    %v8687 = vpack.c.b16 %v8585, %v8584
    %v8688 = vpack.c.b16 %v8587, %v8586
    %v8689 = vpack.c.b16 %v8589, %v8588
    %v8690 = vpack.c.b16 %v8591, %v8590
    %v8691 = vpack.c.b16 %v8593, %v8592
    %v8692 = vpack.c.b16 %v8595, %v8594
    %v8693 = vpack.c.b16 %v8597, %v8596
    %v8694 = vpack.c.b16 %v8599, %v8598
    %v8695 = vpack.c.b16 %v8601, %v8600
    %v8696 = vpack.c.b16 %v8603, %v8602
    %v8697 = vpack.c.b16 %v8605, %v8604
    %v8698 = vpack.c.b16 %v8607, %v8606
    %v8699 = vpack.c.b16 %v8609, %v8608
    %v8700 = vpack.c.b16 %v8611, %v8610
    %v8701 = vpack.c.b16 %v8613, %v8612
    %v8702 = vpack.c.b16 %v8615, %v8614
    %v8703 = vpack.c.b16 %v8617, %v8616
    %v8704 = vpack.c.b16 %v8619, %v8618
    %v8705 = vpack.c.b16 %v8621, %v8620
    %v8706 = vpack.c.b16 %v8623, %v8622
    %v8707 = vpack.c.b16 %v8625, %v8624
    %v8708 = vpack.c.b16 %v8627, %v8626
    %v8709 = vpack.c.b16 %v8629, %v8628
    %v8710 = vpack.c.b16 %v8631, %v8630
    %v8711 = vpack.c.b16 %v8633, %v8632
    %v8712 = vpack.c.b16 %v8635, %v8634
    %v8713 = vpack.c.b16 %v8637, %v8636
    %v8714 = vpack.c.b16 %v8639, %v8638
    %v8715 = vpack.c.b16 %v8641, %v8640
    %v8716 = vpack.c.b16 %v8643, %v8642
    %v8717 = vpack.c.b16 %v8645, %v8644
    %v8718 = vpack.c.b16 %v8647, %v8646
    %v8719 = vpack.c.b16 %v8649, %v8648
    %v8720 = vpack.c.b16 %v8651, %v8650
    %v8721 = vpack.c.b16 %v8653, %v8652
    %v8722 = vpack.c.b16 %v8655, %v8654
    %v8723 = vpack.c.b16 %v8657, %v8656
    %v8724 = vpack.c.b16 %v8659, %v8658
    %v8725 = vpack.c.b16 %v8661, %v8660
    %8790 = vmatprep.subr.bf16.mxu0 0
    %8791 = vmatpush1.bf16.msra.mxu0 %v8669
    %8792 = vmatprep.subr.bf16.mxu0 0
    %8793 = vmatpush1.bf16.msra.mxu0 %v8668
    %8794 = vmatprep.subr.bf16.mxu0 0
    %8795 = vmatpush1.bf16.msra.mxu0 %v8667
    %8796 = vmatprep.subr.bf16.mxu0 0
    %8797 = vmatpush1.bf16.msra.mxu0 %v8666
    %8798 = vmatprep.subr.bf16.mxu0 0
    %8799 = vmatpush1.bf16.msra.mxu0 %v8665
    %8800 = vmatprep.subr.bf16.mxu0 0
    %8801 = vmatpush1.bf16.msra.mxu0 %v8664
    %8802 = vmatprep.subr.bf16.mxu0 0
    %8803 = vmatpush1.bf16.msra.mxu0 %v8663
    %8804 = vmatprep.subr.bf16.mxu0 0
    %8805 = vmatpush1.bf16.msra.mxu0 %v8662
    %8806 = vmatprep.subr.bf16.mxu0 0
    %8807 = vmatpush2.bf16.msra.mxu0 %v8677
    %8808 = vmatprep.subr.bf16.mxu0 0
    %8809 = vmatpush2.bf16.msra.mxu0 %v8676
    %8810 = vmatprep.subr.bf16.mxu0 0
    %8811 = vmatpush2.bf16.msra.mxu0 %v8675
    %8812 = vmatprep.subr.bf16.mxu0 0
    %8813 = vmatpush2.bf16.msra.mxu0 %v8674
    %8814 = vmatprep.subr.bf16.mxu0 0
    %8815 = vmatpush2.bf16.msra.mxu0 %v8673
    %8816 = vmatprep.subr.bf16.mxu0 0
    %8817 = vmatpush2.bf16.msra.mxu0 %v8672
    %8818 = vmatprep.subr.bf16.mxu0 0
    %8819 = vmatpush2.bf16.msra.mxu0 %v8671
    %8820 = vmatprep.subr.bf16.mxu0 0
    %8821 = vmatpush2.bf16.msra.mxu0 %v8670
    %8822 = vmatprep.mubr.bf16.mxu0 %v8391
    %8823 = vmatmul.mubr.bf16.gmra.mxu0 %v8390
    %v8824 = vpop.f32.mrf.mxu0
    %v8825 = vadd.f32 0.0, %v8824
    %v8826 = vpop.f32.mrf.mxu0
    %v8827 = vpop.f32.mrf.mxu0
    %v8828 = vpop.f32.mrf.mxu0
    %8829 = vdwg.mxu0
    %8830 = vmatprep.subr.bf16.mxu0 0
    %8831 = vmatpush1.bf16.msra.mxu0 %v8685
    %8832 = vmatprep.subr.bf16.mxu0 0
    %8833 = vmatpush1.bf16.msra.mxu0 %v8684
    %8834 = vmatprep.subr.bf16.mxu0 0
    %8835 = vmatpush1.bf16.msra.mxu0 %v8683
    %8836 = vmatprep.subr.bf16.mxu0 0
    %8837 = vmatpush1.bf16.msra.mxu0 %v8682
    %8838 = vmatprep.subr.bf16.mxu0 0
    %8839 = vmatpush1.bf16.msra.mxu0 %v8681
    %8840 = vmatprep.subr.bf16.mxu0 0
    %8841 = vmatpush1.bf16.msra.mxu0 %v8680
    %8842 = vmatprep.subr.bf16.mxu0 0
    %8843 = vmatpush1.bf16.msra.mxu0 %v8679
    %8844 = vmatprep.subr.bf16.mxu0 0
    %8845 = vmatpush1.bf16.msra.mxu0 %v8678
    %8846 = vmatprep.subr.bf16.mxu0 0
    %8847 = vmatpush2.bf16.msra.mxu0 %v8693
    %8848 = vmatprep.subr.bf16.mxu0 0
    %8849 = vmatpush2.bf16.msra.mxu0 %v8692
    %8850 = vmatprep.subr.bf16.mxu0 0
    %8851 = vmatpush2.bf16.msra.mxu0 %v8691
    %8852 = vmatprep.subr.bf16.mxu0 0
    %8853 = vmatpush2.bf16.msra.mxu0 %v8690
    %8854 = vmatprep.subr.bf16.mxu0 0
    %8855 = vmatpush2.bf16.msra.mxu0 %v8689
    %8856 = vmatprep.subr.bf16.mxu0 0
    %8857 = vmatpush2.bf16.msra.mxu0 %v8688
    %8858 = vmatprep.subr.bf16.mxu0 0
    %8859 = vmatpush2.bf16.msra.mxu0 %v8687
    %8860 = vmatprep.subr.bf16.mxu0 0
    %8861 = vmatpush2.bf16.msra.mxu0 %v8686
    %8862 = vmatprep.mubr.bf16.mxu0 %v8393
    %8863 = vmatmul.mubr.bf16.gmra.mxu0 %v8392
    %v8864 = vpop.f32.mrf.mxu0
    %v8865 = vadd.f32 %v8825, %v8864
    %v8866 = vpop.f32.mrf.mxu0
    %v8867 = vpop.f32.mrf.mxu0
    %v8868 = vpop.f32.mrf.mxu0
    %8869 = vdwg.mxu0
    %8870 = vmatprep.subr.bf16.mxu0 0
    %8871 = vmatpush1.bf16.msra.mxu0 %v8701
    %8872 = vmatprep.subr.bf16.mxu0 0
    %8873 = vmatpush1.bf16.msra.mxu0 %v8700
    %8874 = vmatprep.subr.bf16.mxu0 0
    %8875 = vmatpush1.bf16.msra.mxu0 %v8699
    %8876 = vmatprep.subr.bf16.mxu0 0
    %8877 = vmatpush1.bf16.msra.mxu0 %v8698
    %8878 = vmatprep.subr.bf16.mxu0 0
    %8879 = vmatpush1.bf16.msra.mxu0 %v8697
    %8880 = vmatprep.subr.bf16.mxu0 0
    %8881 = vmatpush1.bf16.msra.mxu0 %v8696
    %8882 = vmatprep.subr.bf16.mxu0 0
    %8883 = vmatpush1.bf16.msra.mxu0 %v8695
    %8884 = vmatprep.subr.bf16.mxu0 0
    %8885 = vmatpush1.bf16.msra.mxu0 %v8694
    %8886 = vmatprep.subr.bf16.mxu0 0
    %8887 = vmatpush2.bf16.msra.mxu0 %v8709
    %8888 = vmatprep.subr.bf16.mxu0 0
    %8889 = vmatpush2.bf16.msra.mxu0 %v8708
    %8890 = vmatprep.subr.bf16.mxu0 0
    %8891 = vmatpush2.bf16.msra.mxu0 %v8707
    %8892 = vmatprep.subr.bf16.mxu0 0
    %8893 = vmatpush2.bf16.msra.mxu0 %v8706
    %8894 = vmatprep.subr.bf16.mxu0 0
    %8895 = vmatpush2.bf16.msra.mxu0 %v8705
    %8896 = vmatprep.subr.bf16.mxu0 0
    %8897 = vmatpush2.bf16.msra.mxu0 %v8704
    %8898 = vmatprep.subr.bf16.mxu0 0
    %8899 = vmatpush2.bf16.msra.mxu0 %v8703
    %8900 = vmatprep.subr.bf16.mxu0 0
    %8901 = vmatpush2.bf16.msra.mxu0 %v8702
    %8902 = vmatprep.mubr.bf16.mxu0 %v8395
    %8903 = vmatmul.mubr.bf16.gmra.mxu0 %v8394
    %v8904 = vpop.f32.mrf.mxu0
    %v8905 = vadd.f32 %v8865, %v8904
    %v8906 = vpop.f32.mrf.mxu0
    %v8907 = vpop.f32.mrf.mxu0
    %v8908 = vpop.f32.mrf.mxu0
    %8909 = vdwg.mxu0
    %8910 = vmatprep.subr.bf16.mxu0 0
    %8911 = vmatpush1.bf16.msra.mxu0 %v8717
    %8912 = vmatprep.subr.bf16.mxu0 0
    %8913 = vmatpush1.bf16.msra.mxu0 %v8716
    %8914 = vmatprep.subr.bf16.mxu0 0
    %8915 = vmatpush1.bf16.msra.mxu0 %v8715
    %8916 = vmatprep.subr.bf16.mxu0 0
    %8917 = vmatpush1.bf16.msra.mxu0 %v8714
    %8918 = vmatprep.subr.bf16.mxu0 0
    %8919 = vmatpush1.bf16.msra.mxu0 %v8713
    %8920 = vmatprep.subr.bf16.mxu0 0
    %8921 = vmatpush1.bf16.msra.mxu0 %v8712
    %8922 = vmatprep.subr.bf16.mxu0 0
    %8923 = vmatpush1.bf16.msra.mxu0 %v8711
    %8924 = vmatprep.subr.bf16.mxu0 0
    %8925 = vmatpush1.bf16.msra.mxu0 %v8710
    %8926 = vmatprep.subr.bf16.mxu0 0
    %8927 = vmatpush2.bf16.msra.mxu0 %v8725
    %8928 = vmatprep.subr.bf16.mxu0 0
    %8929 = vmatpush2.bf16.msra.mxu0 %v8724
    %8930 = vmatprep.subr.bf16.mxu0 0
    %8931 = vmatpush2.bf16.msra.mxu0 %v8723
    %8932 = vmatprep.subr.bf16.mxu0 0
    %8933 = vmatpush2.bf16.msra.mxu0 %v8722
    %8934 = vmatprep.subr.bf16.mxu0 0
    %8935 = vmatpush2.bf16.msra.mxu0 %v8721
    %8936 = vmatprep.subr.bf16.mxu0 0
    %8937 = vmatpush2.bf16.msra.mxu0 %v8720
    %8938 = vmatprep.subr.bf16.mxu0 0
    %8939 = vmatpush2.bf16.msra.mxu0 %v8719
    %8940 = vmatprep.subr.bf16.mxu0 0
    %8941 = vmatpush2.bf16.msra.mxu0 %v8718
    %8942 = vmatprep.mubr.bf16.mxu0 %v8397
    %8943 = vmatmul.mubr.bf16.gmra.mxu0 %v8396
    %v8944 = vpop.f32.mrf.mxu0
    %v8945 = vadd.f32 %v8905, %v8944
    %v8946 = vpop.f32.mrf.mxu0
    %v8947 = vpop.f32.mrf.mxu0
    %v8948 = vpop.f32.mrf.mxu0
    %8949 = vdwg.mxu0
    %v8950 = vadd.f32 %v8260, %v8945
    %v8951 = vmax.f32 %v8950, 0.0
    %v8952 = vld [vmem:[%s4] sm:$0xff]
    %v8953 = vld [vmem:[%s4 + $0x8] sm:$0xff]
    %v8954 = vld [vmem:[%s4 + $0x10] sm:$0xff]
    %v8955 = vld [vmem:[%s4 + $0x18] sm:$0xff]
    %v8956 = vld [vmem:[%s4 + $0x20] sm:$0xff]
    %v8957 = vld [vmem:[%s4 + $0x28] sm:$0xff]
    %v8958 = vld [vmem:[%s4 + $0x30] sm:$0xff]
    %v8959 = vld [vmem:[%s4 + $0x38] sm:$0xff]
    %v8960 = vld [vmem:[%s5] sm:$0x1]
    %vm8961 = vcmask 523264
    %v8963 = vsel %vm8961, %v8951, 0
    %8965 = vmatprep.subr.mxu0 0.0
    %8966 = vmatpush1.msra.mxu0 0.0
    %8967 = vmatprep.subr.mxu0 0.0
    %8968 = vmatpush1.msra.mxu0 0.0
    %8969 = vmatprep.subr.mxu0 0.0
    %8970 = vmatpush1.msra.mxu0 0.0
    %8971 = vmatprep.subr.mxu0 0.0
    %8972 = vmatpush1.msra.mxu0 0.0
    %8973 = vmatprep.subr.mxu0 0.0
    %8974 = vmatpush1.msra.mxu0 0.0
    %8975 = vmatprep.subr.mxu0 0.0
    %8976 = vmatpush1.msra.mxu0 0.0
    %8977 = vmatprep.subr.mxu0 0.0
    %8978 = vmatpush1.msra.mxu0 0.0
    %8979 = vmatprep.subr.mxu0 0.0
    %8980 = vmatpush1.msra.mxu0 0.0
    %8981 = vmatprep.subr.mxu0 0.0
    %8982 = vmatpush1.msra.mxu0 %v8959
    %8983 = vmatprep.subr.mxu0 0.0
    %8984 = vmatpush1.msra.mxu0 %v8958
    %8985 = vmatprep.subr.mxu0 0.0
    %8986 = vmatpush1.msra.mxu0 %v8957
    %8987 = vmatprep.subr.mxu0 0.0
    %8988 = vmatpush1.msra.mxu0 %v8956
    %8989 = vmatprep.subr.mxu0 0.0
    %8990 = vmatpush1.msra.mxu0 %v8955
    %8991 = vmatprep.subr.mxu0 0.0
    %8992 = vmatpush1.msra.mxu0 %v8954
    %8993 = vmatprep.subr.mxu0 0.0
    %8994 = vmatpush1.msra.mxu0 %v8953
    %8995 = vmatprep.subr.mxu0 0.0
    %8996 = vmatpush1.msra.mxu0 %v8952
    %8997 = vmatprep.subr.mxu0 0.0
    %8998 = vmatpush2.msra.mxu0 0.0
    %8999 = vmatprep.subr.mxu0 0.0
    %9000 = vmatpush2.msra.mxu0 0.0
    %9001 = vmatprep.subr.mxu0 0.0
    %9002 = vmatpush2.msra.mxu0 0.0
    %9003 = vmatprep.subr.mxu0 0.0
    %9004 = vmatpush2.msra.mxu0 0.0
    %9005 = vmatprep.subr.mxu0 0.0
    %9006 = vmatpush2.msra.mxu0 0.0
    %9007 = vmatprep.subr.mxu0 0.0
    %9008 = vmatpush2.msra.mxu0 0.0
    %9009 = vmatprep.subr.mxu0 0.0
    %9010 = vmatpush2.msra.mxu0 0.0
    %9011 = vmatprep.subr.mxu0 0.0
    %9012 = vmatpush2.msra.mxu0 0.0
    %9013 = vmatprep.subr.mxu0 0.0
    %9014 = vmatpush2.msra.mxu0 0.0
    %9015 = vmatprep.subr.mxu0 0.0
    %9016 = vmatpush2.msra.mxu0 0.0
    %9017 = vmatprep.subr.mxu0 0.0
    %9018 = vmatpush2.msra.mxu0 0.0
    %9019 = vmatprep.subr.mxu0 0.0
    %9020 = vmatpush2.msra.mxu0 0.0
    %9021 = vmatprep.subr.mxu0 0.0
    %9022 = vmatpush2.msra.mxu0 0.0
    %9023 = vmatprep.subr.mxu0 0.0
    %9024 = vmatpush2.msra.mxu0 0.0
    %9025 = vmatprep.subr.mxu0 0.0
    %9026 = vmatpush2.msra.mxu0 0.0
    %9027 = vmatprep.subr.mxu0 0.0
    %9028 = vmatpush2.msra.mxu0 0.0
    %9029 = vmatprep.mubr.f32.mxu0 0.0
    %9030 = vmatmul.mubr.f32.gmra.mxu0 %v8963
    %v9031 = vpop.f32.mrf.mxu0
    %v9032 = vadd.f32 %v8960, %v9031
    %v9033 = vpop.f32.mrf.mxu0
    %9034 = vdwg.mxu0
    %v9035 = vlaneseq
    %v9036 = vand.u32 %v9035, 127
    %v9037 = vsub.f32 0.0, %v9032
    %v9038 = vmul.f32 %v9037, 1.442695
    %v9039 = vpow.pop %v9038
    %v9040 = vadd.f32 %v9039, 1.0
    %v9041 = vrcp.pop %v9040
    %v9042 = vmul.f32 1.0, %v9041
    %vm9043 = vcmp.eq.s32.totalorder %v9036, 0
    %v9044 = vtanh.pop %v9032
    %v9045 = vsel %vm9043, %v9044, %v9042
    %vm9046 = vcmask 16384
    %9047 = vst.msk [vmem:[#allocation2] sm:$0x1] %vm9046, %v9045
    // Predicated region
    $region26: #{convnet_forward.1} parent=1 // pred_check
      _
    $region27: #{convnet_forward.1} parent=1 // pred_check_branch
      %9049 = sbr.rel (0) target = $region29
    $region28: #{convnet_forward.1} parent=1 // pred_region
      %s9051 = ssub.s32 16, 16
      %9052 = vsyncadd [#allocation3], %s9051
      %s9054 = sshll.u32 [#allocation2], 4
      %s9055 = int_to_ptr.vmem [resolvable:$true] %s9054
      %9057 = dma.vmem_to_hbm [thread:$0]  %s9055, 16, %s6, [#allocation3]
    $region29: #{convnet_forward.1} parent=1 // pred_fallthru
      _
    // Predicated region
    $region30: #{convnet_forward.1} parent=1 // pred_check
      _
    $region31: #{convnet_forward.1} parent=1 // pred_check_branch
      %9059 = sbr.rel (0) target = $region33
    $region32: #{convnet_forward.1} parent=1 // pred_region
      %9060 = dma.done [#allocation3], 16
    $region33: #{convnet_forward.1} parent=1 // pred_fallthru
      _
    %9061 = vsyncpa [#allocation3], 1

</llo_original>
